<compile_context>
chip_gen: v5e
topology: v5e:2x2
jax: 0.10.0
libtpu: 0.0.40
codegen_flags: <defaults>
</compile_context>

<pallas_src>
import math
from functools import partial

import jax
import jax.numpy as jnp
from jax import lax
from jax.experimental import pallas as pl
from jax.experimental.pallas import tpu as pltpu


# ----------------------------------------------------------------------------
# In-kernel building blocks (operate on VMEM-resident values inside the single
# fused pallas_call; nothing here touches HBM).
# ----------------------------------------------------------------------------
def _conv3x3_elu_step(x, w_ref, b_ref, pad_ref):
    """3x3 / stride 1 / pad 1 conv + bias + ELU.

    x:       (1, H, W, Cin)  f32 value
    w_ref:   (9, Cin, Cout)  tap-major HWIO weights
    b_ref:   (1, Cout)
    pad_ref: (1, H+2, W+2, Cin) f32 VMEM scratch (provides the zero border)
    returns  (1, H, W, Cout) f32 value
    """
    _, H, W, Cin = x.shape
    Cout = w_ref.shape[-1]
    # In-kernel zero padding: zero the scratch, write the interior.
    pad_ref[...] = jnp.zeros(pad_ref.shape, pad_ref.dtype)
    pad_ref[:, 1:H + 1, 1:W + 1, :] = x
    # 9 taps -> 9 shifted (H*W, Cin) @ (Cin, Cout) matmuls accumulated in f32.
    acc = jnp.zeros((H * W, Cout), jnp.float32)
    for k in range(9):
        dy, dx = k // 3, k % 3
        patch = pad_ref[:, dy:dy + H, dx:dx + W, :].reshape(H * W, Cin)
        acc = acc + jnp.dot(patch, w_ref[k], preferred_element_type=jnp.float32)
    acc = acc + b_ref[...]
    # ELU(alpha=1): x if x>0 else exp(x)-1.  (expm1 has no Pallas-TPU lowering;
    # exp(min(x,0))-1 differs from expm1 by at most ~1.2e-7 absolute.)
    acc = jnp.where(acc > 0.0, acc, jnp.exp(jnp.minimum(acc, 0.0)) - 1.0)
    return acc.reshape(1, H, W, Cout)


def _pool_conv1x1_step(x, w_ref, b_ref, pool_ref):
    """Fused AvgPool2d(2,2) + Conv2d(1x1).

    Both ops are linear and there is no nonlinearity between them in the
    reference block, so they commute; pooling first makes the 1x1 matmul 4x
    smaller.

    x:        (1, H, W, Cin) f32 value
    w_ref:    (Cin, Cout)
    b_ref:    (1, Cout)
    pool_ref: (H//2, W, Cin) f32 VMEM scratch used for the stride-2 width reads
    returns   (1, H//2, W//2, Cout) f32 value
    """
    _, H, W, Cin = x.shape
    Ho, Wo = H // 2, W // 2
    Cout = w_ref.shape[-1]
    # Pool along H: layout-trivial leading-dim reshape + one full-slab add.
    x4 = x.reshape(Ho, 2, W, Cin)
    xh = x4[:, 0, :, :] + x4[:, 1, :, :]                     # (Ho, W, Cin)
    # Pool along W: stride-2 sublane reads from a VMEM scratch.
    pool_ref[...] = xh
    even = pool_ref[:, pl.ds(0, Wo, 2), :]                   # (Ho, Wo, Cin)
    odd = pool_ref[:, pl.ds(1, Wo, 2), :]
    pooled = (even + odd) * 0.25
    y = jnp.dot(pooled.reshape(Ho * Wo, Cin), w_ref[...],
                preferred_element_type=jnp.float32) + b_ref[...]
    return y.reshape(1, Ho, Wo, Cout)


# ----------------------------------------------------------------------------
# Fused forward: plan construction + single pallas_call for the whole conv stack.
# ----------------------------------------------------------------------------
def _build_plan(layer_specs, input_dim):
    """Pair every conv1x1 with the avgpool that follows it and work out the
    (deduplicated) VMEM scratch buffers each fused step needs."""
    plan, scratch_shapes, scratch_index = [], [], {}

    def scratch_for(shape):
        if shape not in scratch_index:
            scratch_index[shape] = len(scratch_shapes)
            scratch_shapes.append(pltpu.VMEM(shape, jnp.float32))
        return scratch_index[shape]

    H = W = input_dim
    i = 0
    while i < len(layer_specs):
        kind = layer_specs[i][0]
        if kind == "conv3x3_elu":
            cin = layer_specs[i][1]
            plan.append(("conv3", i, scratch_for((1, H + 2, W + 2, cin))))
            i += 1
        elif kind == "conv1x1":
            cin = layer_specs[i][1]
            assert i + 1 < len(layer_specs) and layer_specs[i + 1][0] == "avgpool"
            plan.append(("pool_c1", i, scratch_for((H // 2, W, cin))))
            H, W = H // 2, W // 2
            i += 2                                    # consumes the avgpool too
        else:
            raise AssertionError("avgpool without a preceding conv1x1")
    return plan, scratch_shapes, (H, W)


def _make_fused_kernel(plan):
    n = len(plan)

    def kernel(*refs):
        # refs = [x, w0, b0, w1, b1, ..., out, scratch...]
        x = refs[0][...]                              # (1, H0, W0, nc)
        o_ref = refs[1 + 2 * n]
        scratch = refs[2 + 2 * n:]
        for s, (kind, _, sidx) in enumerate(plan):
            w_ref, b_ref = refs[1 + 2 * s], refs[2 + 2 * s]
            if kind == "conv3":
                x = _conv3x3_elu_step(x, w_ref, b_ref, scratch[sidx])
            else:
                x = _pool_conv1x1_step(x, w_ref, b_ref, scratch[sidx])
        _, Hf, Wf, Cf = x.shape
        o_ref[...] = x.reshape(1, Hf * Wf, Cf).astype(o_ref.dtype)

    return kernel


def _const_index_map(ndim):
    zeros = (0,) * ndim
    return lambda b: zeros


def encoder_features(x_nhwc, layer_specs, params):
    """One fused pallas_call for the whole conv stack.  Returns (B, 8*8, C)
    features in NHWC-flatten order (spatial major, channel minor)."""
    B, H0, W0, nc = x_nhwc.shape
    plan, scratch_shapes, (Hf, Wf) = _build_plan(layer_specs, H0)
    c_final = layer_specs[-1][2]

    kernel_inputs = [x_nhwc]
    in_specs = [pl.BlockSpec((1, H0, W0, nc), lambda b: (b, 0, 0, 0))]
    for kind, spec_i, _ in plan:
        w, bias = params[spec_i]
        if kind == "conv3":
            cin, cout = w.shape[2], w.shape[3]
            w = w.reshape(9, cin, cout)               # tap-major HWIO
        bias = bias.reshape(1, -1)
        for t in (w, bias):
            kernel_inputs.append(t)
            in_specs.append(pl.BlockSpec(t.shape, _const_index_map(t.ndim)))

    out_shape = jax.ShapeDtypeStruct((B, Hf * Wf, c_final), x_nhwc.dtype)
    out_spec = pl.BlockSpec((1, Hf * Wf, c_final), lambda b: (b, 0, 0))

    return pl.pallas_call(
        _make_fused_kernel(plan),
        out_shape=out_shape,
        grid_spec=pltpu.PrefetchScalarGridSpec(
            num_scalar_prefetch=0,
            grid=(B,),
            in_specs=in_specs,
            out_specs=out_spec,
            scratch_shapes=scratch_shapes),
        compiler_params=pltpu.CompilerParams(
            dimension_semantics=("parallel",)),        # batch across v7x cores
    )(*kernel_inputs)


# ----------------------------------------------------------------------------
# Final embedding (small second pallas_call).
# ----------------------------------------------------------------------------
def _linear_kernel(x_ref, w_ref, b_ref, o_ref):
    o_ref[...] = (jnp.dot(x_ref[...], w_ref[...], preferred_element_type=jnp.float32)
                  + b_ref[...]).astype(o_ref.dtype)


def linear(x, w, b):
    vspec = pl.BlockSpec(memory_space=pltpu.MemorySpace.VMEM)
    return pl.pallas_call(
        _linear_kernel,
        out_shape=jax.ShapeDtypeStruct((x.shape[0], w.shape[-1]), x.dtype),
        in_specs=[vspec, vspec, vspec],
        out_specs=vspec,
    )(x, w, b.reshape(1, -1))


def _permute_embed_rows(embed_w, C, S):
    # PyTorch flattens NCHW (row r = c*S*S + h*S + w); the fused kernel emits the
    # NHWC-flatten order (row q = (h*S + w)*C + c).  Permute the weight rows once
    # so the kernel path needs no activation transpose.
    q = jnp.arange(S * S * C)
    c = q % C
    hw = q // C
    h = hw // S
    w = hw % S
    return embed_w[c * (S * S) + h * S + w, :]


def encoder_forward(x_nchw, layer_specs, params, embed_w, embed_b):
    x = jnp.transpose(x_nchw, (0, 2, 3, 1))                      # NCHW -> NHWC
    feats = encoder_features(x, layer_specs, params)             # (B, 64, C)
    B, S2, C = feats.shape
    flat = feats.reshape(B, S2 * C)                              # contiguous NHWC flatten
    w_nhwc = _permute_embed_rows(embed_w, C, math.isqrt(S2))
    return linear(flat, w_nhwc, embed_b)


# ----------------------------------------------------------------------------
# Encoder construction (mirrors the PyTorch __init__) and pure-JAX reference.
# ----------------------------------------------------------------------------
def make_encoder_params(key, nc, ndf, n_layers, hidden_dim, input_dim, exp, std=0.02):
    power_f = math.log(input_dim / 8, 2)
    if not power_f.is_integer():
        raise ValueError("The input size should be the power of 2.")
    if input_dim <= 8:
        raise ValueError("The input should have width / height larger than 8.")
    power = int(power_f)

    layer_specs = []

    def add_conv_block(in_dim, out_dim):
        for _ in range(n_layers):
            layer_specs.append(("conv3x3_elu", in_dim, in_dim))
        layer_specs.append(("conv1x1", in_dim, out_dim))
        layer_specs.append(("avgpool",))

    layer_factor = 2
    layer_specs.append(("conv3x3_elu", nc, ndf))                 # conv1 head
    add_conv_block(ndf, ndf * layer_factor)
    for _ in range(power - 1):                                   # conv2
        nxt = layer_factor * 2 if exp else layer_factor + 1
        add_conv_block(ndf * layer_factor, ndf * nxt)
        layer_factor = nxt
    c3 = ndf * layer_factor                                      # conv3
    layer_specs.append(("conv3x3_elu", c3, c3))
    layer_specs.append(("conv3x3_elu", c3, c3))

    params = []
    for spec in layer_specs:
        if spec[0] == "avgpool":
            params.append(None)
            continue
        cin, cout = spec[1], spec[2]
        key, kw, kb = jax.random.split(key, 3)
        if spec[0] == "conv3x3_elu":
            w = std * jax.random.normal(kw, (3, 3, cin, cout), dtype=jnp.float32)  # HWIO
        else:
            w = std * jax.random.normal(kw, (cin, cout), dtype=jnp.float32)
        b = 0.1 * jax.random.normal(kb, (cout,), dtype=jnp.float32)
        params.append((w, b))

    key, kw, kb = jax.random.split(key, 3)
    embed_w = std * jax.random.normal(kw, (c3 * 8 * 8, hidden_dim), dtype=jnp.float32)
    embed_b = 0.1 * jax.random.normal(kb, (hidden_dim,), dtype=jnp.float32)
    return layer_specs, params, embed_w, embed_b


def encoder_reference(x_nchw, layer_specs, params, embed_w, embed_b):
    hi = lax.Precision.HIGHEST
    x = jnp.transpose(x_nchw, (0, 2, 3, 1))
    for spec, p in zip(layer_specs, params):
        kind = spec[0]
        if kind == "conv3x3_elu":
            w, b = p
            y = lax.conv_general_dilated(
                x, w, window_strides=(1, 1), padding="SAME",
                dimension_numbers=("NHWC", "HWIO", "NHWC"), precision=hi) + b
            x = jnp.where(y > 0.0, y, jnp.expm1(y))
        elif kind == "conv1x1":
            w, b = p
            x = jnp.einsum("bhwi,io->bhwo", x, w, precision=hi) + b
        else:
            B, H, W, C = x.shape
            x = x.reshape(B, H // 2, 2, W // 2, 2, C).mean(axis=(2, 4))
    B = x.shape[0]
    flat = jnp.transpose(x, (0, 3, 1, 2)).reshape(B, -1)          # PyTorch NCHW flatten
    return jnp.dot(flat, embed_w, precision=hi) + embed_b


if __name__ == "__main__":
    # Smallest valid config for this module: input_dim=16 (power=1).
    nc, ndf, n_layers, hidden_dim, input_dim, exp = 4, 8, 2, 32, 16, False

    key = jax.random.PRNGKey(0)
    kx, kp = jax.random.split(key)
    x = jax.random.normal(kx, (2, nc, input_dim, input_dim), dtype=jnp.float32)  # NCHW

    layer_specs, params, embed_w, embed_b = make_encoder_params(
        kp, nc, ndf, n_layers, hidden_dim, input_dim, exp)

    fwd = jax.jit(partial(encoder_forward, layer_specs=layer_specs, params=params,
                          embed_w=embed_w, embed_b=embed_b))
    out = jax.block_until_ready(fwd(x))
    assert out.shape == (2, hidden_dim), out.shape

    ref = encoder_reference(x, layer_specs, params, embed_w, embed_b)
    # f32 paths typically agree to ~1e-6; the bound leaves headroom in case the MXU
    # evaluates f32 matmuls via bf16 passes, while still catching any real layout /
    # permutation / conv-alignment bug (those show up at O(1e-1)).
    if not jnp.allclose(out, ref, rtol=2e-3, atol=2e-3):
        raise AssertionError(
            f"kernel/reference mismatch, max abs diff = {float(jnp.max(jnp.abs(out - ref)))}")

    print("KERNEL_OK")
</pallas_src>

<mosaic_0001>
module attributes {stable_mosaic.version = 11 : i64} {
  func.func @kernel(%arg0: i32, %arg1: memref<1x16x16x4xf32, #tpu.memory_space<vmem>>, %arg2: memref<9x4x8xf32, #tpu.memory_space<vmem>>, %arg3: memref<1x8xf32, #tpu.memory_space<vmem>>, %arg4: memref<9x8x8xf32, #tpu.memory_space<vmem>>, %arg5: memref<1x8xf32, #tpu.memory_space<vmem>>, %arg6: memref<9x8x8xf32, #tpu.memory_space<vmem>>, %arg7: memref<1x8xf32, #tpu.memory_space<vmem>>, %arg8: memref<8x16xf32, #tpu.memory_space<vmem>>, %arg9: memref<1x16xf32, #tpu.memory_space<vmem>>, %arg10: memref<9x16x16xf32, #tpu.memory_space<vmem>>, %arg11: memref<1x16xf32, #tpu.memory_space<vmem>>, %arg12: memref<9x16x16xf32, #tpu.memory_space<vmem>>, %arg13: memref<1x16xf32, #tpu.memory_space<vmem>>, %arg14: memref<1x64x16xf32, #tpu.memory_space<vmem>>, %arg15: memref<1x18x18x4xf32, #tpu.memory_space<vmem>>, %arg16: memref<1x18x18x8xf32, #tpu.memory_space<vmem>>, %arg17: memref<8x16x8xf32, #tpu.memory_space<vmem>>, %arg18: memref<1x10x10x16xf32, #tpu.memory_space<vmem>>) attributes {dimension_semantics = [#tpu.dimension_semantics<parallel>], iteration_bounds = array<i64: 2>, scalar_prefetch = 0 : i64, scratch_operands = 4 : i64, tpu.core_type = #tpu.core_type<tc>, window_params = [{transform_indices = @transform_0, window_bounds = array<i64: 1, 16, 16, 4>}, {pipeline_mode = #tpu.pipeline_mode<synchronous>, transform_indices = @transform_1, window_bounds = array<i64: 9, 4, 8>}, {pipeline_mode = #tpu.pipeline_mode<synchronous>, transform_indices = @transform_2, window_bounds = array<i64: 1, 8>}, {pipeline_mode = #tpu.pipeline_mode<synchronous>, transform_indices = @transform_3, window_bounds = array<i64: 9, 8, 8>}, {pipeline_mode = #tpu.pipeline_mode<synchronous>, transform_indices = @transform_4, window_bounds = array<i64: 1, 8>}, {pipeline_mode = #tpu.pipeline_mode<synchronous>, transform_indices = @transform_5, window_bounds = array<i64: 9, 8, 8>}, {pipeline_mode = #tpu.pipeline_mode<synchronous>, transform_indices = @transform_6, window_bounds = array<i64: 1, 8>}, {pipeline_mode = #tpu.pipeline_mode<synchronous>, transform_indices = @transform_7, window_bounds = array<i64: 8, 16>}, {pipeline_mode = #tpu.pipeline_mode<synchronous>, transform_indices = @transform_8, window_bounds = array<i64: 1, 16>}, {pipeline_mode = #tpu.pipeline_mode<synchronous>, transform_indices = @transform_9, window_bounds = array<i64: 9, 16, 16>}, {pipeline_mode = #tpu.pipeline_mode<synchronous>, transform_indices = @transform_10, window_bounds = array<i64: 1, 16>}, {pipeline_mode = #tpu.pipeline_mode<synchronous>, transform_indices = @transform_11, window_bounds = array<i64: 9, 16, 16>}, {pipeline_mode = #tpu.pipeline_mode<synchronous>, transform_indices = @transform_12, window_bounds = array<i64: 1, 16>}, {transform_indices = @transform_13, window_bounds = array<i64: 1, 64, 16>}]} {
    %c0 = arith.constant 0 : index
    %c0_0 = arith.constant 0 : index
    %c0_1 = arith.constant 0 : index
    %c0_2 = arith.constant 0 : index
    %0 = vector.load %arg1[%c0, %c0_0, %c0_1, %c0_2] : memref<1x16x16x4xf32, #tpu.memory_space<vmem>>, vector<1x16x16x4xf32>
    %cst = arith.constant 0.000000e+00 : f32
    %1 = vector.broadcast %cst : f32 to vector<1x18x18x4xf32>
    %c0_3 = arith.constant 0 : index
    %c0_4 = arith.constant 0 : index
    %c0_5 = arith.constant 0 : index
    %c0_6 = arith.constant 0 : index
    %2 = vector.load %arg15[%c0_3, %c0_4, %c0_5, %c0_6] : memref<1x18x18x4xf32, #tpu.memory_space<vmem>>, vector<1x18x18x4xf32>
    tpu.vector_store %arg15[%c0_3, %c0_4, %c0_5, %c0_6], %1 {strides = array<i32>} : memref<1x18x18x4xf32, #tpu.memory_space<vmem>>, vector<1x18x18x4xf32>,
    %c0_7 = arith.constant 0 : index
    %c1 = arith.constant 1 : index
    %c1_8 = arith.constant 1 : index
    %c0_9 = arith.constant 0 : index
    %3 = vector.load %arg15[%c0_7, %c1, %c1_8, %c0_9] : memref<1x18x18x4xf32, #tpu.memory_space<vmem>>, vector<1x16x16x4xf32>
    tpu.vector_store %arg15[%c0_7, %c1, %c1_8, %c0_9], %0 {strides = array<i32>} : memref<1x18x18x4xf32, #tpu.memory_space<vmem>>, vector<1x16x16x4xf32>,
    %cst_10 = arith.constant 0.000000e+00 : f32
    %4 = vector.broadcast %cst_10 : f32 to vector<256x8xf32>
    %c0_11 = arith.constant 0 : index
    %c0_12 = arith.constant 0 : index
    %c0_13 = arith.constant 0 : index
    %c0_14 = arith.constant 0 : index
    %5 = vector.load %arg15[%c0_11, %c0_12, %c0_13, %c0_14] : memref<1x18x18x4xf32, #tpu.memory_space<vmem>>, vector<1x16x16x4xf32>
    %6 = vector.shape_cast %5 : vector<1x16x16x4xf32> to vector<256x4xf32>
    %c0_15 = arith.constant 0 : index
    %c0_16 = arith.constant 0 : index
    %c0_17 = arith.constant 0 : index
    %7 = vector.load %arg2[%c0_15, %c0_16, %c0_17] : memref<9x4x8xf32, #tpu.memory_space<vmem>>, vector<1x4x8xf32>
    %8 = vector.shape_cast %7 : vector<1x4x8xf32> to vector<4x8xf32>
    %cst_18 = arith.constant dense<0.000000e+00> : vector<256x8xf32>
    %9 = tpu.matmul %6, %8, %cst_18 {dimension_numbers = #tpu.dot_dimension_numbers<[1], [0], [0], [1], [0, 0, 1, 1], [], []>} : vector<256x4xf32>, vector<4x8xf32>, vector<256x8xf32> -> vector<256x8xf32>
    %10 = arith.addf %4, %9 : vector<256x8xf32>
    %c0_19 = arith.constant 0 : index
    %c0_20 = arith.constant 0 : index
    %c1_21 = arith.constant 1 : index
    %c0_22 = arith.constant 0 : index
    %11 = vector.load %arg15[%c0_19, %c0_20, %c1_21, %c0_22] : memref<1x18x18x4xf32, #tpu.memory_space<vmem>>, vector<1x16x16x4xf32>
    %12 = vector.shape_cast %11 : vector<1x16x16x4xf32> to vector<256x4xf32>
    %c1_23 = arith.constant 1 : index
    %c0_24 = arith.constant 0 : index
    %c0_25 = arith.constant 0 : index
    %13 = vector.load %arg2[%c1_23, %c0_24, %c0_25] : memref<9x4x8xf32, #tpu.memory_space<vmem>>, vector<1x4x8xf32>
    %14 = vector.shape_cast %13 : vector<1x4x8xf32> to vector<4x8xf32>
    %cst_26 = arith.constant dense<0.000000e+00> : vector<256x8xf32>
    %15 = tpu.matmul %12, %14, %cst_26 {dimension_numbers = #tpu.dot_dimension_numbers<[1], [0], [0], [1], [0, 0, 1, 1], [], []>} : vector<256x4xf32>, vector<4x8xf32>, vector<256x8xf32> -> vector<256x8xf32>
    %16 = arith.addf %10, %15 : vector<256x8xf32>
    %c0_27 = arith.constant 0 : index
    %c0_28 = arith.constant 0 : index
    %c2 = arith.constant 2 : index
    %c0_29 = arith.constant 0 : index
    %17 = vector.load %arg15[%c0_27, %c0_28, %c2, %c0_29] : memref<1x18x18x4xf32, #tpu.memory_space<vmem>>, vector<1x16x16x4xf32>
    %18 = vector.shape_cast %17 : vector<1x16x16x4xf32> to vector<256x4xf32>
    %c2_30 = arith.constant 2 : index
    %c0_31 = arith.constant 0 : index
    %c0_32 = arith.constant 0 : index
    %19 = vector.load %arg2[%c2_30, %c0_31, %c0_32] : memref<9x4x8xf32, #tpu.memory_space<vmem>>, vector<1x4x8xf32>
    %20 = vector.shape_cast %19 : vector<1x4x8xf32> to vector<4x8xf32>
    %cst_33 = arith.constant dense<0.000000e+00> : vector<256x8xf32>
    %21 = tpu.matmul %18, %20, %cst_33 {dimension_numbers = #tpu.dot_dimension_numbers<[1], [0], [0], [1], [0, 0, 1, 1], [], []>} : vector<256x4xf32>, vector<4x8xf32>, vector<256x8xf32> -> vector<256x8xf32>
    %22 = arith.addf %16, %21 : vector<256x8xf32>
    %c0_34 = arith.constant 0 : index
    %c1_35 = arith.constant 1 : index
    %c0_36 = arith.constant 0 : index
    %c0_37 = arith.constant 0 : index
    %23 = vector.load %arg15[%c0_34, %c1_35, %c0_36, %c0_37] : memref<1x18x18x4xf32, #tpu.memory_space<vmem>>, vector<1x16x16x4xf32>
    %24 = vector.shape_cast %23 : vector<1x16x16x4xf32> to vector<256x4xf32>
    %c3 = arith.constant 3 : index
    %c0_38 = arith.constant 0 : index
    %c0_39 = arith.constant 0 : index
    %25 = vector.load %arg2[%c3, %c0_38, %c0_39] : memref<9x4x8xf32, #tpu.memory_space<vmem>>, vector<1x4x8xf32>
    %26 = vector.shape_cast %25 : vector<1x4x8xf32> to vector<4x8xf32>
    %cst_40 = arith.constant dense<0.000000e+00> : vector<256x8xf32>
    %27 = tpu.matmul %24, %26, %cst_40 {dimension_numbers = #tpu.dot_dimension_numbers<[1], [0], [0], [1], [0, 0, 1, 1], [], []>} : vector<256x4xf32>, vector<4x8xf32>, vector<256x8xf32> -> vector<256x8xf32>
    %28 = arith.addf %22, %27 : vector<256x8xf32>
    %c0_41 = arith.constant 0 : index
    %c1_42 = arith.constant 1 : index
    %c1_43 = arith.constant 1 : index
    %c0_44 = arith.constant 0 : index
    %29 = vector.load %arg15[%c0_41, %c1_42, %c1_43, %c0_44] : memref<1x18x18x4xf32, #tpu.memory_space<vmem>>, vector<1x16x16x4xf32>
    %30 = vector.shape_cast %29 : vector<1x16x16x4xf32> to vector<256x4xf32>
    %c4 = arith.constant 4 : index
    %c0_45 = arith.constant 0 : index
    %c0_46 = arith.constant 0 : index
    %31 = vector.load %arg2[%c4, %c0_45, %c0_46] : memref<9x4x8xf32, #tpu.memory_space<vmem>>, vector<1x4x8xf32>
    %32 = vector.shape_cast %31 : vector<1x4x8xf32> to vector<4x8xf32>
    %cst_47 = arith.constant dense<0.000000e+00> : vector<256x8xf32>
    %33 = tpu.matmul %30, %32, %cst_47 {dimension_numbers = #tpu.dot_dimension_numbers<[1], [0], [0], [1], [0, 0, 1, 1], [], []>} : vector<256x4xf32>, vector<4x8xf32>, vector<256x8xf32> -> vector<256x8xf32>
    %34 = arith.addf %28, %33 : vector<256x8xf32>
    %c0_48 = arith.constant 0 : index
    %c1_49 = arith.constant 1 : index
    %c2_50 = arith.constant 2 : index
    %c0_51 = arith.constant 0 : index
    %35 = vector.load %arg15[%c0_48, %c1_49, %c2_50, %c0_51] : memref<1x18x18x4xf32, #tpu.memory_space<vmem>>, vector<1x16x16x4xf32>
    %36 = vector.shape_cast %35 : vector<1x16x16x4xf32> to vector<256x4xf32>
    %c5 = arith.constant 5 : index
    %c0_52 = arith.constant 0 : index
    %c0_53 = arith.constant 0 : index
    %37 = vector.load %arg2[%c5, %c0_52, %c0_53] : memref<9x4x8xf32, #tpu.memory_space<vmem>>, vector<1x4x8xf32>
    %38 = vector.shape_cast %37 : vector<1x4x8xf32> to vector<4x8xf32>
    %cst_54 = arith.constant dense<0.000000e+00> : vector<256x8xf32>
    %39 = tpu.matmul %36, %38, %cst_54 {dimension_numbers = #tpu.dot_dimension_numbers<[1], [0], [0], [1], [0, 0, 1, 1], [], []>} : vector<256x4xf32>, vector<4x8xf32>, vector<256x8xf32> -> vector<256x8xf32>
    %40 = arith.addf %34, %39 : vector<256x8xf32>
    %c0_55 = arith.constant 0 : index
    %c2_56 = arith.constant 2 : index
    %c0_57 = arith.constant 0 : index
    %c0_58 = arith.constant 0 : index
    %41 = vector.load %arg15[%c0_55, %c2_56, %c0_57, %c0_58] : memref<1x18x18x4xf32, #tpu.memory_space<vmem>>, vector<1x16x16x4xf32>
    %42 = vector.shape_cast %41 : vector<1x16x16x4xf32> to vector<256x4xf32>
    %c6 = arith.constant 6 : index
    %c0_59 = arith.constant 0 : index
    %c0_60 = arith.constant 0 : index
    %43 = vector.load %arg2[%c6, %c0_59, %c0_60] : memref<9x4x8xf32, #tpu.memory_space<vmem>>, vector<1x4x8xf32>
    %44 = vector.shape_cast %43 : vector<1x4x8xf32> to vector<4x8xf32>
    %cst_61 = arith.constant dense<0.000000e+00> : vector<256x8xf32>
    %45 = tpu.matmul %42, %44, %cst_61 {dimension_numbers = #tpu.dot_dimension_numbers<[1], [0], [0], [1], [0, 0, 1, 1], [], []>} : vector<256x4xf32>, vector<4x8xf32>, vector<256x8xf32> -> vector<256x8xf32>
    %46 = arith.addf %40, %45 : vector<256x8xf32>
    %c0_62 = arith.constant 0 : index
    %c2_63 = arith.constant 2 : index
    %c1_64 = arith.constant 1 : index
    %c0_65 = arith.constant 0 : index
    %47 = vector.load %arg15[%c0_62, %c2_63, %c1_64, %c0_65] : memref<1x18x18x4xf32, #tpu.memory_space<vmem>>, vector<1x16x16x4xf32>
    %48 = vector.shape_cast %47 : vector<1x16x16x4xf32> to vector<256x4xf32>
    %c7 = arith.constant 7 : index
    %c0_66 = arith.constant 0 : index
    %c0_67 = arith.constant 0 : index
    %49 = vector.load %arg2[%c7, %c0_66, %c0_67] : memref<9x4x8xf32, #tpu.memory_space<vmem>>, vector<1x4x8xf32>
    %50 = vector.shape_cast %49 : vector<1x4x8xf32> to vector<4x8xf32>
    %cst_68 = arith.constant dense<0.000000e+00> : vector<256x8xf32>
    %51 = tpu.matmul %48, %50, %cst_68 {dimension_numbers = #tpu.dot_dimension_numbers<[1], [0], [0], [1], [0, 0, 1, 1], [], []>} : vector<256x4xf32>, vector<4x8xf32>, vector<256x8xf32> -> vector<256x8xf32>
    %52 = arith.addf %46, %51 : vector<256x8xf32>
    %c0_69 = arith.constant 0 : index
    %c2_70 = arith.constant 2 : index
    %c2_71 = arith.constant 2 : index
    %c0_72 = arith.constant 0 : index
    %53 = vector.load %arg15[%c0_69, %c2_70, %c2_71, %c0_72] : memref<1x18x18x4xf32, #tpu.memory_space<vmem>>, vector<1x16x16x4xf32>
    %54 = vector.shape_cast %53 : vector<1x16x16x4xf32> to vector<256x4xf32>
    %c8 = arith.constant 8 : index
    %c0_73 = arith.constant 0 : index
    %c0_74 = arith.constant 0 : index
    %55 = vector.load %arg2[%c8, %c0_73, %c0_74] : memref<9x4x8xf32, #tpu.memory_space<vmem>>, vector<1x4x8xf32>
    %56 = vector.shape_cast %55 : vector<1x4x8xf32> to vector<4x8xf32>
    %cst_75 = arith.constant dense<0.000000e+00> : vector<256x8xf32>
    %57 = tpu.matmul %54, %56, %cst_75 {dimension_numbers = #tpu.dot_dimension_numbers<[1], [0], [0], [1], [0, 0, 1, 1], [], []>} : vector<256x4xf32>, vector<4x8xf32>, vector<256x8xf32> -> vector<256x8xf32>
    %58 = arith.addf %52, %57 : vector<256x8xf32>
    %c0_76 = arith.constant 0 : index
    %c0_77 = arith.constant 0 : index
    %59 = vector.load %arg3[%c0_76, %c0_77] : memref<1x8xf32, #tpu.memory_space<vmem>>, vector<1x8xf32>
    %60 = vector.broadcast %59 : vector<1x8xf32> to vector<256x8xf32>
    %61 = arith.addf %58, %60 : vector<256x8xf32>
    %cst_78 = arith.constant 0.000000e+00 : f32
    %62 = vector.broadcast %cst_78 : f32 to vector<256x8xf32>
    %63 = arith.cmpf ogt, %61, %62 : vector<256x8xf32>
    %cst_79 = arith.constant 0.000000e+00 : f32
    %64 = vector.broadcast %cst_79 : f32 to vector<256x8xf32>
    %65 = arith.minimumf %61, %64 : vector<256x8xf32>
    %66 = math.exp %65 : vector<256x8xf32>
    %cst_80 = arith.constant 1.000000e+00 : f32
    %67 = vector.broadcast %cst_80 : f32 to vector<256x8xf32>
    %68 = arith.subf %66, %67 : vector<256x8xf32>
    %69 = arith.select %63, %61, %68 : vector<256x8xi1>, vector<256x8xf32>
    %70 = vector.shape_cast %69 : vector<256x8xf32> to vector<1x16x16x8xf32>
    %cst_81 = arith.constant 0.000000e+00 : f32
    %71 = vector.broadcast %cst_81 : f32 to vector<1x18x18x8xf32>
    %c0_82 = arith.constant 0 : index
    %c0_83 = arith.constant 0 : index
    %c0_84 = arith.constant 0 : index
    %c0_85 = arith.constant 0 : index
    %72 = vector.load %arg16[%c0_82, %c0_83, %c0_84, %c0_85] : memref<1x18x18x8xf32, #tpu.memory_space<vmem>>, vector<1x18x18x8xf32>
    tpu.vector_store %arg16[%c0_82, %c0_83, %c0_84, %c0_85], %71 {strides = array<i32>} : memref<1x18x18x8xf32, #tpu.memory_space<vmem>>, vector<1x18x18x8xf32>,
    %c0_86 = arith.constant 0 : index
    %c1_87 = arith.constant 1 : index
    %c1_88 = arith.constant 1 : index
    %c0_89 = arith.constant 0 : index
    %73 = vector.load %arg16[%c0_86, %c1_87, %c1_88, %c0_89] : memref<1x18x18x8xf32, #tpu.memory_space<vmem>>, vector<1x16x16x8xf32>
    tpu.vector_store %arg16[%c0_86, %c1_87, %c1_88, %c0_89], %70 {strides = array<i32>} : memref<1x18x18x8xf32, #tpu.memory_space<vmem>>, vector<1x16x16x8xf32>,
    %cst_90 = arith.constant 0.000000e+00 : f32
    %74 = vector.broadcast %cst_90 : f32 to vector<256x8xf32>
    %c0_91 = arith.constant 0 : index
    %c0_92 = arith.constant 0 : index
    %c0_93 = arith.constant 0 : index
    %c0_94 = arith.constant 0 : index
    %75 = vector.load %arg16[%c0_91, %c0_92, %c0_93, %c0_94] : memref<1x18x18x8xf32, #tpu.memory_space<vmem>>, vector<1x16x16x8xf32>
    %76 = vector.shape_cast %75 : vector<1x16x16x8xf32> to vector<256x8xf32>
    %c0_95 = arith.constant 0 : index
    %c0_96 = arith.constant 0 : index
    %c0_97 = arith.constant 0 : index
    %77 = vector.load %arg4[%c0_95, %c0_96, %c0_97] : memref<9x8x8xf32, #tpu.memory_space<vmem>>, vector<1x8x8xf32>
    %78 = vector.shape_cast %77 : vector<1x8x8xf32> to vector<8x8xf32>
    %cst_98 = arith.constant dense<0.000000e+00> : vector<256x8xf32>
    %79 = tpu.matmul %76, %78, %cst_98 {dimension_numbers = #tpu.dot_dimension_numbers<[1], [0], [0], [1], [0, 0, 1, 1], [], []>} : vector<256x8xf32>, vector<8x8xf32>, vector<256x8xf32> -> vector<256x8xf32>
    %80 = arith.addf %74, %79 : vector<256x8xf32>
    %c0_99 = arith.constant 0 : index
    %c0_100 = arith.constant 0 : index
    %c1_101 = arith.constant 1 : index
    %c0_102 = arith.constant 0 : index
    %81 = vector.load %arg16[%c0_99, %c0_100, %c1_101, %c0_102] : memref<1x18x18x8xf32, #tpu.memory_space<vmem>>, vector<1x16x16x8xf32>
    %82 = vector.shape_cast %81 : vector<1x16x16x8xf32> to vector<256x8xf32>
    %c1_103 = arith.constant 1 : index
    %c0_104 = arith.constant 0 : index
    %c0_105 = arith.constant 0 : index
    %83 = vector.load %arg4[%c1_103, %c0_104, %c0_105] : memref<9x8x8xf32, #tpu.memory_space<vmem>>, vector<1x8x8xf32>
    %84 = vector.shape_cast %83 : vector<1x8x8xf32> to vector<8x8xf32>
    %cst_106 = arith.constant dense<0.000000e+00> : vector<256x8xf32>
    %85 = tpu.matmul %82, %84, %cst_106 {dimension_numbers = #tpu.dot_dimension_numbers<[1], [0], [0], [1], [0, 0, 1, 1], [], []>} : vector<256x8xf32>, vector<8x8xf32>, vector<256x8xf32> -> vector<256x8xf32>
    %86 = arith.addf %80, %85 : vector<256x8xf32>
    %c0_107 = arith.constant 0 : index
    %c0_108 = arith.constant 0 : index
    %c2_109 = arith.constant 2 : index
    %c0_110 = arith.constant 0 : index
    %87 = vector.load %arg16[%c0_107, %c0_108, %c2_109, %c0_110] : memref<1x18x18x8xf32, #tpu.memory_space<vmem>>, vector<1x16x16x8xf32>
    %88 = vector.shape_cast %87 : vector<1x16x16x8xf32> to vector<256x8xf32>
    %c2_111 = arith.constant 2 : index
    %c0_112 = arith.constant 0 : index
    %c0_113 = arith.constant 0 : index
    %89 = vector.load %arg4[%c2_111, %c0_112, %c0_113] : memref<9x8x8xf32, #tpu.memory_space<vmem>>, vector<1x8x8xf32>
    %90 = vector.shape_cast %89 : vector<1x8x8xf32> to vector<8x8xf32>
    %cst_114 = arith.constant dense<0.000000e+00> : vector<256x8xf32>
    %91 = tpu.matmul %88, %90, %cst_114 {dimension_numbers = #tpu.dot_dimension_numbers<[1], [0], [0], [1], [0, 0, 1, 1], [], []>} : vector<256x8xf32>, vector<8x8xf32>, vector<256x8xf32> -> vector<256x8xf32>
    %92 = arith.addf %86, %91 : vector<256x8xf32>
    %c0_115 = arith.constant 0 : index
    %c1_116 = arith.constant 1 : index
    %c0_117 = arith.constant 0 : index
    %c0_118 = arith.constant 0 : index
    %93 = vector.load %arg16[%c0_115, %c1_116, %c0_117, %c0_118] : memref<1x18x18x8xf32, #tpu.memory_space<vmem>>, vector<1x16x16x8xf32>
    %94 = vector.shape_cast %93 : vector<1x16x16x8xf32> to vector<256x8xf32>
    %c3_119 = arith.constant 3 : index
    %c0_120 = arith.constant 0 : index
    %c0_121 = arith.constant 0 : index
    %95 = vector.load %arg4[%c3_119, %c0_120, %c0_121] : memref<9x8x8xf32, #tpu.memory_space<vmem>>, vector<1x8x8xf32>
    %96 = vector.shape_cast %95 : vector<1x8x8xf32> to vector<8x8xf32>
    %cst_122 = arith.constant dense<0.000000e+00> : vector<256x8xf32>
    %97 = tpu.matmul %94, %96, %cst_122 {dimension_numbers = #tpu.dot_dimension_numbers<[1], [0], [0], [1], [0, 0, 1, 1], [], []>} : vector<256x8xf32>, vector<8x8xf32>, vector<256x8xf32> -> vector<256x8xf32>
    %98 = arith.addf %92, %97 : vector<256x8xf32>
    %c0_123 = arith.constant 0 : index
    %c1_124 = arith.constant 1 : index
    %c1_125 = arith.constant 1 : index
    %c0_126 = arith.constant 0 : index
    %99 = vector.load %arg16[%c0_123, %c1_124, %c1_125, %c0_126] : memref<1x18x18x8xf32, #tpu.memory_space<vmem>>, vector<1x16x16x8xf32>
    %100 = vector.shape_cast %99 : vector<1x16x16x8xf32> to vector<256x8xf32>
    %c4_127 = arith.constant 4 : index
    %c0_128 = arith.constant 0 : index
    %c0_129 = arith.constant 0 : index
    %101 = vector.load %arg4[%c4_127, %c0_128, %c0_129] : memref<9x8x8xf32, #tpu.memory_space<vmem>>, vector<1x8x8xf32>
    %102 = vector.shape_cast %101 : vector<1x8x8xf32> to vector<8x8xf32>
    %cst_130 = arith.constant dense<0.000000e+00> : vector<256x8xf32>
    %103 = tpu.matmul %100, %102, %cst_130 {dimension_numbers = #tpu.dot_dimension_numbers<[1], [0], [0], [1], [0, 0, 1, 1], [], []>} : vector<256x8xf32>, vector<8x8xf32>, vector<256x8xf32> -> vector<256x8xf32>
    %104 = arith.addf %98, %103 : vector<256x8xf32>
    %c0_131 = arith.constant 0 : index
    %c1_132 = arith.constant 1 : index
    %c2_133 = arith.constant 2 : index
    %c0_134 = arith.constant 0 : index
    %105 = vector.load %arg16[%c0_131, %c1_132, %c2_133, %c0_134] : memref<1x18x18x8xf32, #tpu.memory_space<vmem>>, vector<1x16x16x8xf32>
    %106 = vector.shape_cast %105 : vector<1x16x16x8xf32> to vector<256x8xf32>
    %c5_135 = arith.constant 5 : index
    %c0_136 = arith.constant 0 : index
    %c0_137 = arith.constant 0 : index
    %107 = vector.load %arg4[%c5_135, %c0_136, %c0_137] : memref<9x8x8xf32, #tpu.memory_space<vmem>>, vector<1x8x8xf32>
    %108 = vector.shape_cast %107 : vector<1x8x8xf32> to vector<8x8xf32>
    %cst_138 = arith.constant dense<0.000000e+00> : vector<256x8xf32>
    %109 = tpu.matmul %106, %108, %cst_138 {dimension_numbers = #tpu.dot_dimension_numbers<[1], [0], [0], [1], [0, 0, 1, 1], [], []>} : vector<256x8xf32>, vector<8x8xf32>, vector<256x8xf32> -> vector<256x8xf32>
    %110 = arith.addf %104, %109 : vector<256x8xf32>
    %c0_139 = arith.constant 0 : index
    %c2_140 = arith.constant 2 : index
    %c0_141 = arith.constant 0 : index
    %c0_142 = arith.constant 0 : index
    %111 = vector.load %arg16[%c0_139, %c2_140, %c0_141, %c0_142] : memref<1x18x18x8xf32, #tpu.memory_space<vmem>>, vector<1x16x16x8xf32>
    %112 = vector.shape_cast %111 : vector<1x16x16x8xf32> to vector<256x8xf32>
    %c6_143 = arith.constant 6 : index
    %c0_144 = arith.constant 0 : index
    %c0_145 = arith.constant 0 : index
    %113 = vector.load %arg4[%c6_143, %c0_144, %c0_145] : memref<9x8x8xf32, #tpu.memory_space<vmem>>, vector<1x8x8xf32>
    %114 = vector.shape_cast %113 : vector<1x8x8xf32> to vector<8x8xf32>
    %cst_146 = arith.constant dense<0.000000e+00> : vector<256x8xf32>
    %115 = tpu.matmul %112, %114, %cst_146 {dimension_numbers = #tpu.dot_dimension_numbers<[1], [0], [0], [1], [0, 0, 1, 1], [], []>} : vector<256x8xf32>, vector<8x8xf32>, vector<256x8xf32> -> vector<256x8xf32>
    %116 = arith.addf %110, %115 : vector<256x8xf32>
    %c0_147 = arith.constant 0 : index
    %c2_148 = arith.constant 2 : index
    %c1_149 = arith.constant 1 : index
    %c0_150 = arith.constant 0 : index
    %117 = vector.load %arg16[%c0_147, %c2_148, %c1_149, %c0_150] : memref<1x18x18x8xf32, #tpu.memory_space<vmem>>, vector<1x16x16x8xf32>
    %118 = vector.shape_cast %117 : vector<1x16x16x8xf32> to vector<256x8xf32>
    %c7_151 = arith.constant 7 : index
    %c0_152 = arith.constant 0 : index
    %c0_153 = arith.constant 0 : index
    %119 = vector.load %arg4[%c7_151, %c0_152, %c0_153] : memref<9x8x8xf32, #tpu.memory_space<vmem>>, vector<1x8x8xf32>
    %120 = vector.shape_cast %119 : vector<1x8x8xf32> to vector<8x8xf32>
    %cst_154 = arith.constant dense<0.000000e+00> : vector<256x8xf32>
    %121 = tpu.matmul %118, %120, %cst_154 {dimension_numbers = #tpu.dot_dimension_numbers<[1], [0], [0], [1], [0, 0, 1, 1], [], []>} : vector<256x8xf32>, vector<8x8xf32>, vector<256x8xf32> -> vector<256x8xf32>
    %122 = arith.addf %116, %121 : vector<256x8xf32>
    %c0_155 = arith.constant 0 : index
    %c2_156 = arith.constant 2 : index
    %c2_157 = arith.constant 2 : index
    %c0_158 = arith.constant 0 : index
    %123 = vector.load %arg16[%c0_155, %c2_156, %c2_157, %c0_158] : memref<1x18x18x8xf32, #tpu.memory_space<vmem>>, vector<1x16x16x8xf32>
    %124 = vector.shape_cast %123 : vector<1x16x16x8xf32> to vector<256x8xf32>
    %c8_159 = arith.constant 8 : index
    %c0_160 = arith.constant 0 : index
    %c0_161 = arith.constant 0 : index
    %125 = vector.load %arg4[%c8_159, %c0_160, %c0_161] : memref<9x8x8xf32, #tpu.memory_space<vmem>>, vector<1x8x8xf32>
    %126 = vector.shape_cast %125 : vector<1x8x8xf32> to vector<8x8xf32>
    %cst_162 = arith.constant dense<0.000000e+00> : vector<256x8xf32>
    %127 = tpu.matmul %124, %126, %cst_162 {dimension_numbers = #tpu.dot_dimension_numbers<[1], [0], [0], [1], [0, 0, 1, 1], [], []>} : vector<256x8xf32>, vector<8x8xf32>, vector<256x8xf32> -> vector<256x8xf32>
    %128 = arith.addf %122, %127 : vector<256x8xf32>
    %c0_163 = arith.constant 0 : index
    %c0_164 = arith.constant 0 : index
    %129 = vector.load %arg5[%c0_163, %c0_164] : memref<1x8xf32, #tpu.memory_space<vmem>>, vector<1x8xf32>
    %130 = vector.broadcast %129 : vector<1x8xf32> to vector<256x8xf32>
    %131 = arith.addf %128, %130 : vector<256x8xf32>
    %cst_165 = arith.constant 0.000000e+00 : f32
    %132 = vector.broadcast %cst_165 : f32 to vector<256x8xf32>
    %133 = arith.cmpf ogt, %131, %132 : vector<256x8xf32>
    %cst_166 = arith.constant 0.000000e+00 : f32
    %134 = vector.broadcast %cst_166 : f32 to vector<256x8xf32>
    %135 = arith.minimumf %131, %134 : vector<256x8xf32>
    %136 = math.exp %135 : vector<256x8xf32>
    %cst_167 = arith.constant 1.000000e+00 : f32
    %137 = vector.broadcast %cst_167 : f32 to vector<256x8xf32>
    %138 = arith.subf %136, %137 : vector<256x8xf32>
    %139 = arith.select %133, %131, %138 : vector<256x8xi1>, vector<256x8xf32>
    %140 = vector.shape_cast %139 : vector<256x8xf32> to vector<1x16x16x8xf32>
    %cst_168 = arith.constant 0.000000e+00 : f32
    %141 = vector.broadcast %cst_168 : f32 to vector<1x18x18x8xf32>
    %c0_169 = arith.constant 0 : index
    %c0_170 = arith.constant 0 : index
    %c0_171 = arith.constant 0 : index
    %c0_172 = arith.constant 0 : index
    %142 = vector.load %arg16[%c0_169, %c0_170, %c0_171, %c0_172] : memref<1x18x18x8xf32, #tpu.memory_space<vmem>>, vector<1x18x18x8xf32>
    tpu.vector_store %arg16[%c0_169, %c0_170, %c0_171, %c0_172], %141 {strides = array<i32>} : memref<1x18x18x8xf32, #tpu.memory_space<vmem>>, vector<1x18x18x8xf32>,
    %c0_173 = arith.constant 0 : index
    %c1_174 = arith.constant 1 : index
    %c1_175 = arith.constant 1 : index
    %c0_176 = arith.constant 0 : index
    %143 = vector.load %arg16[%c0_173, %c1_174, %c1_175, %c0_176] : memref<1x18x18x8xf32, #tpu.memory_space<vmem>>, vector<1x16x16x8xf32>
    tpu.vector_store %arg16[%c0_173, %c1_174, %c1_175, %c0_176], %140 {strides = array<i32>} : memref<1x18x18x8xf32, #tpu.memory_space<vmem>>, vector<1x16x16x8xf32>,
    %cst_177 = arith.constant 0.000000e+00 : f32
    %144 = vector.broadcast %cst_177 : f32 to vector<256x8xf32>
    %c0_178 = arith.constant 0 : index
    %c0_179 = arith.constant 0 : index
    %c0_180 = arith.constant 0 : index
    %c0_181 = arith.constant 0 : index
    %145 = vector.load %arg16[%c0_178, %c0_179, %c0_180, %c0_181] : memref<1x18x18x8xf32, #tpu.memory_space<vmem>>, vector<1x16x16x8xf32>
    %146 = vector.shape_cast %145 : vector<1x16x16x8xf32> to vector<256x8xf32>
    %c0_182 = arith.constant 0 : index
    %c0_183 = arith.constant 0 : index
    %c0_184 = arith.constant 0 : index
    %147 = vector.load %arg6[%c0_182, %c0_183, %c0_184] : memref<9x8x8xf32, #tpu.memory_space<vmem>>, vector<1x8x8xf32>
    %148 = vector.shape_cast %147 : vector<1x8x8xf32> to vector<8x8xf32>
    %cst_185 = arith.constant dense<0.000000e+00> : vector<256x8xf32>
    %149 = tpu.matmul %146, %148, %cst_185 {dimension_numbers = #tpu.dot_dimension_numbers<[1], [0], [0], [1], [0, 0, 1, 1], [], []>} : vector<256x8xf32>, vector<8x8xf32>, vector<256x8xf32> -> vector<256x8xf32>
    %150 = arith.addf %144, %149 : vector<256x8xf32>
    %c0_186 = arith.constant 0 : index
    %c0_187 = arith.constant 0 : index
    %c1_188 = arith.constant 1 : index
    %c0_189 = arith.constant 0 : index
    %151 = vector.load %arg16[%c0_186, %c0_187, %c1_188, %c0_189] : memref<1x18x18x8xf32, #tpu.memory_space<vmem>>, vector<1x16x16x8xf32>
    %152 = vector.shape_cast %151 : vector<1x16x16x8xf32> to vector<256x8xf32>
    %c1_190 = arith.constant 1 : index
    %c0_191 = arith.constant 0 : index
    %c0_192 = arith.constant 0 : index
    %153 = vector.load %arg6[%c1_190, %c0_191, %c0_192] : memref<9x8x8xf32, #tpu.memory_space<vmem>>, vector<1x8x8xf32>
    %154 = vector.shape_cast %153 : vector<1x8x8xf32> to vector<8x8xf32>
    %cst_193 = arith.constant dense<0.000000e+00> : vector<256x8xf32>
    %155 = tpu.matmul %152, %154, %cst_193 {dimension_numbers = #tpu.dot_dimension_numbers<[1], [0], [0], [1], [0, 0, 1, 1], [], []>} : vector<256x8xf32>, vector<8x8xf32>, vector<256x8xf32> -> vector<256x8xf32>
    %156 = arith.addf %150, %155 : vector<256x8xf32>
    %c0_194 = arith.constant 0 : index
    %c0_195 = arith.constant 0 : index
    %c2_196 = arith.constant 2 : index
    %c0_197 = arith.constant 0 : index
    %157 = vector.load %arg16[%c0_194, %c0_195, %c2_196, %c0_197] : memref<1x18x18x8xf32, #tpu.memory_space<vmem>>, vector<1x16x16x8xf32>
    %158 = vector.shape_cast %157 : vector<1x16x16x8xf32> to vector<256x8xf32>
    %c2_198 = arith.constant 2 : index
    %c0_199 = arith.constant 0 : index
    %c0_200 = arith.constant 0 : index
    %159 = vector.load %arg6[%c2_198, %c0_199, %c0_200] : memref<9x8x8xf32, #tpu.memory_space<vmem>>, vector<1x8x8xf32>
    %160 = vector.shape_cast %159 : vector<1x8x8xf32> to vector<8x8xf32>
    %cst_201 = arith.constant dense<0.000000e+00> : vector<256x8xf32>
    %161 = tpu.matmul %158, %160, %cst_201 {dimension_numbers = #tpu.dot_dimension_numbers<[1], [0], [0], [1], [0, 0, 1, 1], [], []>} : vector<256x8xf32>, vector<8x8xf32>, vector<256x8xf32> -> vector<256x8xf32>
    %162 = arith.addf %156, %161 : vector<256x8xf32>
    %c0_202 = arith.constant 0 : index
    %c1_203 = arith.constant 1 : index
    %c0_204 = arith.constant 0 : index
    %c0_205 = arith.constant 0 : index
    %163 = vector.load %arg16[%c0_202, %c1_203, %c0_204, %c0_205] : memref<1x18x18x8xf32, #tpu.memory_space<vmem>>, vector<1x16x16x8xf32>
    %164 = vector.shape_cast %163 : vector<1x16x16x8xf32> to vector<256x8xf32>
    %c3_206 = arith.constant 3 : index
    %c0_207 = arith.constant 0 : index
    %c0_208 = arith.constant 0 : index
    %165 = vector.load %arg6[%c3_206, %c0_207, %c0_208] : memref<9x8x8xf32, #tpu.memory_space<vmem>>, vector<1x8x8xf32>
    %166 = vector.shape_cast %165 : vector<1x8x8xf32> to vector<8x8xf32>
    %cst_209 = arith.constant dense<0.000000e+00> : vector<256x8xf32>
    %167 = tpu.matmul %164, %166, %cst_209 {dimension_numbers = #tpu.dot_dimension_numbers<[1], [0], [0], [1], [0, 0, 1, 1], [], []>} : vector<256x8xf32>, vector<8x8xf32>, vector<256x8xf32> -> vector<256x8xf32>
    %168 = arith.addf %162, %167 : vector<256x8xf32>
    %c0_210 = arith.constant 0 : index
    %c1_211 = arith.constant 1 : index
    %c1_212 = arith.constant 1 : index
    %c0_213 = arith.constant 0 : index
    %169 = vector.load %arg16[%c0_210, %c1_211, %c1_212, %c0_213] : memref<1x18x18x8xf32, #tpu.memory_space<vmem>>, vector<1x16x16x8xf32>
    %170 = vector.shape_cast %169 : vector<1x16x16x8xf32> to vector<256x8xf32>
    %c4_214 = arith.constant 4 : index
    %c0_215 = arith.constant 0 : index
    %c0_216 = arith.constant 0 : index
    %171 = vector.load %arg6[%c4_214, %c0_215, %c0_216] : memref<9x8x8xf32, #tpu.memory_space<vmem>>, vector<1x8x8xf32>
    %172 = vector.shape_cast %171 : vector<1x8x8xf32> to vector<8x8xf32>
    %cst_217 = arith.constant dense<0.000000e+00> : vector<256x8xf32>
    %173 = tpu.matmul %170, %172, %cst_217 {dimension_numbers = #tpu.dot_dimension_numbers<[1], [0], [0], [1], [0, 0, 1, 1], [], []>} : vector<256x8xf32>, vector<8x8xf32>, vector<256x8xf32> -> vector<256x8xf32>
    %174 = arith.addf %168, %173 : vector<256x8xf32>
    %c0_218 = arith.constant 0 : index
    %c1_219 = arith.constant 1 : index
    %c2_220 = arith.constant 2 : index
    %c0_221 = arith.constant 0 : index
    %175 = vector.load %arg16[%c0_218, %c1_219, %c2_220, %c0_221] : memref<1x18x18x8xf32, #tpu.memory_space<vmem>>, vector<1x16x16x8xf32>
    %176 = vector.shape_cast %175 : vector<1x16x16x8xf32> to vector<256x8xf32>
    %c5_222 = arith.constant 5 : index
    %c0_223 = arith.constant 0 : index
    %c0_224 = arith.constant 0 : index
    %177 = vector.load %arg6[%c5_222, %c0_223, %c0_224] : memref<9x8x8xf32, #tpu.memory_space<vmem>>, vector<1x8x8xf32>
    %178 = vector.shape_cast %177 : vector<1x8x8xf32> to vector<8x8xf32>
    %cst_225 = arith.constant dense<0.000000e+00> : vector<256x8xf32>
    %179 = tpu.matmul %176, %178, %cst_225 {dimension_numbers = #tpu.dot_dimension_numbers<[1], [0], [0], [1], [0, 0, 1, 1], [], []>} : vector<256x8xf32>, vector<8x8xf32>, vector<256x8xf32> -> vector<256x8xf32>
    %180 = arith.addf %174, %179 : vector<256x8xf32>
    %c0_226 = arith.constant 0 : index
    %c2_227 = arith.constant 2 : index
    %c0_228 = arith.constant 0 : index
    %c0_229 = arith.constant 0 : index
    %181 = vector.load %arg16[%c0_226, %c2_227, %c0_228, %c0_229] : memref<1x18x18x8xf32, #tpu.memory_space<vmem>>, vector<1x16x16x8xf32>
    %182 = vector.shape_cast %181 : vector<1x16x16x8xf32> to vector<256x8xf32>
    %c6_230 = arith.constant 6 : index
    %c0_231 = arith.constant 0 : index
    %c0_232 = arith.constant 0 : index
    %183 = vector.load %arg6[%c6_230, %c0_231, %c0_232] : memref<9x8x8xf32, #tpu.memory_space<vmem>>, vector<1x8x8xf32>
    %184 = vector.shape_cast %183 : vector<1x8x8xf32> to vector<8x8xf32>
    %cst_233 = arith.constant dense<0.000000e+00> : vector<256x8xf32>
    %185 = tpu.matmul %182, %184, %cst_233 {dimension_numbers = #tpu.dot_dimension_numbers<[1], [0], [0], [1], [0, 0, 1, 1], [], []>} : vector<256x8xf32>, vector<8x8xf32>, vector<256x8xf32> -> vector<256x8xf32>
    %186 = arith.addf %180, %185 : vector<256x8xf32>
    %c0_234 = arith.constant 0 : index
    %c2_235 = arith.constant 2 : index
    %c1_236 = arith.constant 1 : index
    %c0_237 = arith.constant 0 : index
    %187 = vector.load %arg16[%c0_234, %c2_235, %c1_236, %c0_237] : memref<1x18x18x8xf32, #tpu.memory_space<vmem>>, vector<1x16x16x8xf32>
    %188 = vector.shape_cast %187 : vector<1x16x16x8xf32> to vector<256x8xf32>
    %c7_238 = arith.constant 7 : index
    %c0_239 = arith.constant 0 : index
    %c0_240 = arith.constant 0 : index
    %189 = vector.load %arg6[%c7_238, %c0_239, %c0_240] : memref<9x8x8xf32, #tpu.memory_space<vmem>>, vector<1x8x8xf32>
    %190 = vector.shape_cast %189 : vector<1x8x8xf32> to vector<8x8xf32>
    %cst_241 = arith.constant dense<0.000000e+00> : vector<256x8xf32>
    %191 = tpu.matmul %188, %190, %cst_241 {dimension_numbers = #tpu.dot_dimension_numbers<[1], [0], [0], [1], [0, 0, 1, 1], [], []>} : vector<256x8xf32>, vector<8x8xf32>, vector<256x8xf32> -> vector<256x8xf32>
    %192 = arith.addf %186, %191 : vector<256x8xf32>
    %c0_242 = arith.constant 0 : index
    %c2_243 = arith.constant 2 : index
    %c2_244 = arith.constant 2 : index
    %c0_245 = arith.constant 0 : index
    %193 = vector.load %arg16[%c0_242, %c2_243, %c2_244, %c0_245] : memref<1x18x18x8xf32, #tpu.memory_space<vmem>>, vector<1x16x16x8xf32>
    %194 = vector.shape_cast %193 : vector<1x16x16x8xf32> to vector<256x8xf32>
    %c8_246 = arith.constant 8 : index
    %c0_247 = arith.constant 0 : index
    %c0_248 = arith.constant 0 : index
    %195 = vector.load %arg6[%c8_246, %c0_247, %c0_248] : memref<9x8x8xf32, #tpu.memory_space<vmem>>, vector<1x8x8xf32>
    %196 = vector.shape_cast %195 : vector<1x8x8xf32> to vector<8x8xf32>
    %cst_249 = arith.constant dense<0.000000e+00> : vector<256x8xf32>
    %197 = tpu.matmul %194, %196, %cst_249 {dimension_numbers = #tpu.dot_dimension_numbers<[1], [0], [0], [1], [0, 0, 1, 1], [], []>} : vector<256x8xf32>, vector<8x8xf32>, vector<256x8xf32> -> vector<256x8xf32>
    %198 = arith.addf %192, %197 : vector<256x8xf32>
    %c0_250 = arith.constant 0 : index
    %c0_251 = arith.constant 0 : index
    %199 = vector.load %arg7[%c0_250, %c0_251] : memref<1x8xf32, #tpu.memory_space<vmem>>, vector<1x8xf32>
    %200 = vector.broadcast %199 : vector<1x8xf32> to vector<256x8xf32>
    %201 = arith.addf %198, %200 : vector<256x8xf32>
    %cst_252 = arith.constant 0.000000e+00 : f32
    %202 = vector.broadcast %cst_252 : f32 to vector<256x8xf32>
    %203 = arith.cmpf ogt, %201, %202 : vector<256x8xf32>
    %cst_253 = arith.constant 0.000000e+00 : f32
    %204 = vector.broadcast %cst_253 : f32 to vector<256x8xf32>
    %205 = arith.minimumf %201, %204 : vector<256x8xf32>
    %206 = math.exp %205 : vector<256x8xf32>
    %cst_254 = arith.constant 1.000000e+00 : f32
    %207 = vector.broadcast %cst_254 : f32 to vector<256x8xf32>
    %208 = arith.subf %206, %207 : vector<256x8xf32>
    %209 = arith.select %203, %201, %208 : vector<256x8xi1>, vector<256x8xf32>
    %210 = vector.shape_cast %209 : vector<256x8xf32> to vector<1x16x16x8xf32>
    %211 = vector.shape_cast %210 : vector<1x16x16x8xf32> to vector<8x2x16x8xf32>
    %212 = vector.extract_strided_slice %211 {offsets = [0, 0, 0, 0], sizes = [8, 1, 16, 8], strides = [1, 1, 1, 1]} : vector<8x2x16x8xf32> to vector<8x1x16x8xf32>
    %213 = vector.shape_cast %212 : vector<8x1x16x8xf32> to vector<8x16x8xf32>
    %214 = vector.extract_strided_slice %211 {offsets = [0, 1, 0, 0], sizes = [8, 1, 16, 8], strides = [1, 1, 1, 1]} : vector<8x2x16x8xf32> to vector<8x1x16x8xf32>
    %215 = vector.shape_cast %214 : vector<8x1x16x8xf32> to vector<8x16x8xf32>
    %216 = arith.addf %213, %215 : vector<8x16x8xf32>
    %c0_255 = arith.constant 0 : index
    %c0_256 = arith.constant 0 : index
    %c0_257 = arith.constant 0 : index
    %217 = vector.load %arg17[%c0_255, %c0_256, %c0_257] : memref<8x16x8xf32, #tpu.memory_space<vmem>>, vector<8x16x8xf32>
    tpu.vector_store %arg17[%c0_255, %c0_256, %c0_257], %216 {strides = array<i32>} : memref<8x16x8xf32, #tpu.memory_space<vmem>>, vector<8x16x8xf32>,
    %c0_258 = arith.constant 0 : index
    %c0_259 = arith.constant 0 : index
    %c0_260 = arith.constant 0 : index
    %218 = tpu.strided_load %arg17[%c0_258, %c0_259, %c0_260] {strides = array<i32: 1, 2, 1>} : memref<8x16x8xf32, #tpu.memory_space<vmem>>, vector<8x8x8xf32>
    %c0_261 = arith.constant 0 : index
    %c1_262 = arith.constant 1 : index
    %c0_263 = arith.constant 0 : index
    %219 = tpu.strided_load %arg17[%c0_261, %c1_262, %c0_263] {strides = array<i32: 1, 2, 1>} : memref<8x16x8xf32, #tpu.memory_space<vmem>>, vector<8x8x8xf32>
    %220 = arith.addf %218, %219 : vector<8x8x8xf32>
    %cst_264 = arith.constant 2.500000e-01 : f32
    %221 = vector.broadcast %cst_264 : f32 to vector<8x8x8xf32>
    %222 = arith.mulf %220, %221 : vector<8x8x8xf32>
    %223 = vector.shape_cast %222 : vector<8x8x8xf32> to vector<64x8xf32>
    %c0_265 = arith.constant 0 : index
    %c0_266 = arith.constant 0 : index
    %224 = vector.load %arg8[%c0_265, %c0_266] : memref<8x16xf32, #tpu.memory_space<vmem>>, vector<8x16xf32>
    %cst_267 = arith.constant dense<0.000000e+00> : vector<64x16xf32>
    %225 = tpu.matmul %223, %224, %cst_267 {dimension_numbers = #tpu.dot_dimension_numbers<[1], [0], [0], [1], [0, 0, 1, 1], [], []>} : vector<64x8xf32>, vector<8x16xf32>, vector<64x16xf32> -> vector<64x16xf32>
    %c0_268 = arith.constant 0 : index
    %c0_269 = arith.constant 0 : index
    %226 = vector.load %arg9[%c0_268, %c0_269] : memref<1x16xf32, #tpu.memory_space<vmem>>, vector<1x16xf32>
    %227 = vector.broadcast %226 : vector<1x16xf32> to vector<64x16xf32>
    %228 = arith.addf %225, %227 : vector<64x16xf32>
    %229 = vector.shape_cast %228 : vector<64x16xf32> to vector<1x8x8x16xf32>
    %cst_270 = arith.constant 0.000000e+00 : f32
    %230 = vector.broadcast %cst_270 : f32 to vector<1x10x10x16xf32>
    %c0_271 = arith.constant 0 : index
    %c0_272 = arith.constant 0 : index
    %c0_273 = arith.constant 0 : index
    %c0_274 = arith.constant 0 : index
    %231 = vector.load %arg18[%c0_271, %c0_272, %c0_273, %c0_274] : memref<1x10x10x16xf32, #tpu.memory_space<vmem>>, vector<1x10x10x16xf32>
    tpu.vector_store %arg18[%c0_271, %c0_272, %c0_273, %c0_274], %230 {strides = array<i32>} : memref<1x10x10x16xf32, #tpu.memory_space<vmem>>, vector<1x10x10x16xf32>,
    %c0_275 = arith.constant 0 : index
    %c1_276 = arith.constant 1 : index
    %c1_277 = arith.constant 1 : index
    %c0_278 = arith.constant 0 : index
    %232 = vector.load %arg18[%c0_275, %c1_276, %c1_277, %c0_278] : memref<1x10x10x16xf32, #tpu.memory_space<vmem>>, vector<1x8x8x16xf32>
    tpu.vector_store %arg18[%c0_275, %c1_276, %c1_277, %c0_278], %229 {strides = array<i32>} : memref<1x10x10x16xf32, #tpu.memory_space<vmem>>, vector<1x8x8x16xf32>,
    %cst_279 = arith.constant 0.000000e+00 : f32
    %233 = vector.broadcast %cst_279 : f32 to vector<64x16xf32>
    %c0_280 = arith.constant 0 : index
    %c0_281 = arith.constant 0 : index
    %c0_282 = arith.constant 0 : index
    %c0_283 = arith.constant 0 : index
    %234 = vector.load %arg18[%c0_280, %c0_281, %c0_282, %c0_283] : memref<1x10x10x16xf32, #tpu.memory_space<vmem>>, vector<1x8x8x16xf32>
    %235 = vector.shape_cast %234 : vector<1x8x8x16xf32> to vector<64x16xf32>
    %c0_284 = arith.constant 0 : index
    %c0_285 = arith.constant 0 : index
    %c0_286 = arith.constant 0 : index
    %236 = vector.load %arg10[%c0_284, %c0_285, %c0_286] : memref<9x16x16xf32, #tpu.memory_space<vmem>>, vector<1x16x16xf32>
    %237 = vector.shape_cast %236 : vector<1x16x16xf32> to vector<16x16xf32>
    %cst_287 = arith.constant dense<0.000000e+00> : vector<64x16xf32>
    %238 = tpu.matmul %235, %237, %cst_287 {dimension_numbers = #tpu.dot_dimension_numbers<[1], [0], [0], [1], [0, 0, 1, 1], [], []>} : vector<64x16xf32>, vector<16x16xf32>, vector<64x16xf32> -> vector<64x16xf32>
    %239 = arith.addf %233, %238 : vector<64x16xf32>
    %c0_288 = arith.constant 0 : index
    %c0_289 = arith.constant 0 : index
    %c1_290 = arith.constant 1 : index
    %c0_291 = arith.constant 0 : index
    %240 = vector.load %arg18[%c0_288, %c0_289, %c1_290, %c0_291] : memref<1x10x10x16xf32, #tpu.memory_space<vmem>>, vector<1x8x8x16xf32>
    %241 = vector.shape_cast %240 : vector<1x8x8x16xf32> to vector<64x16xf32>
    %c1_292 = arith.constant 1 : index
    %c0_293 = arith.constant 0 : index
    %c0_294 = arith.constant 0 : index
    %242 = vector.load %arg10[%c1_292, %c0_293, %c0_294] : memref<9x16x16xf32, #tpu.memory_space<vmem>>, vector<1x16x16xf32>
    %243 = vector.shape_cast %242 : vector<1x16x16xf32> to vector<16x16xf32>
    %cst_295 = arith.constant dense<0.000000e+00> : vector<64x16xf32>
    %244 = tpu.matmul %241, %243, %cst_295 {dimension_numbers = #tpu.dot_dimension_numbers<[1], [0], [0], [1], [0, 0, 1, 1], [], []>} : vector<64x16xf32>, vector<16x16xf32>, vector<64x16xf32> -> vector<64x16xf32>
    %245 = arith.addf %239, %244 : vector<64x16xf32>
    %c0_296 = arith.constant 0 : index
    %c0_297 = arith.constant 0 : index
    %c2_298 = arith.constant 2 : index
    %c0_299 = arith.constant 0 : index
    %246 = vector.load %arg18[%c0_296, %c0_297, %c2_298, %c0_299] : memref<1x10x10x16xf32, #tpu.memory_space<vmem>>, vector<1x8x8x16xf32>
    %247 = vector.shape_cast %246 : vector<1x8x8x16xf32> to vector<64x16xf32>
    %c2_300 = arith.constant 2 : index
    %c0_301 = arith.constant 0 : index
    %c0_302 = arith.constant 0 : index
    %248 = vector.load %arg10[%c2_300, %c0_301, %c0_302] : memref<9x16x16xf32, #tpu.memory_space<vmem>>, vector<1x16x16xf32>
    %249 = vector.shape_cast %248 : vector<1x16x16xf32> to vector<16x16xf32>
    %cst_303 = arith.constant dense<0.000000e+00> : vector<64x16xf32>
    %250 = tpu.matmul %247, %249, %cst_303 {dimension_numbers = #tpu.dot_dimension_numbers<[1], [0], [0], [1], [0, 0, 1, 1], [], []>} : vector<64x16xf32>, vector<16x16xf32>, vector<64x16xf32> -> vector<64x16xf32>
    %251 = arith.addf %245, %250 : vector<64x16xf32>
    %c0_304 = arith.constant 0 : index
    %c1_305 = arith.constant 1 : index
    %c0_306 = arith.constant 0 : index
    %c0_307 = arith.constant 0 : index
    %252 = vector.load %arg18[%c0_304, %c1_305, %c0_306, %c0_307] : memref<1x10x10x16xf32, #tpu.memory_space<vmem>>, vector<1x8x8x16xf32>
    %253 = vector.shape_cast %252 : vector<1x8x8x16xf32> to vector<64x16xf32>
    %c3_308 = arith.constant 3 : index
    %c0_309 = arith.constant 0 : index
    %c0_310 = arith.constant 0 : index
    %254 = vector.load %arg10[%c3_308, %c0_309, %c0_310] : memref<9x16x16xf32, #tpu.memory_space<vmem>>, vector<1x16x16xf32>
    %255 = vector.shape_cast %254 : vector<1x16x16xf32> to vector<16x16xf32>
    %cst_311 = arith.constant dense<0.000000e+00> : vector<64x16xf32>
    %256 = tpu.matmul %253, %255, %cst_311 {dimension_numbers = #tpu.dot_dimension_numbers<[1], [0], [0], [1], [0, 0, 1, 1], [], []>} : vector<64x16xf32>, vector<16x16xf32>, vector<64x16xf32> -> vector<64x16xf32>
    %257 = arith.addf %251, %256 : vector<64x16xf32>
    %c0_312 = arith.constant 0 : index
    %c1_313 = arith.constant 1 : index
    %c1_314 = arith.constant 1 : index
    %c0_315 = arith.constant 0 : index
    %258 = vector.load %arg18[%c0_312, %c1_313, %c1_314, %c0_315] : memref<1x10x10x16xf32, #tpu.memory_space<vmem>>, vector<1x8x8x16xf32>
    %259 = vector.shape_cast %258 : vector<1x8x8x16xf32> to vector<64x16xf32>
    %c4_316 = arith.constant 4 : index
    %c0_317 = arith.constant 0 : index
    %c0_318 = arith.constant 0 : index
    %260 = vector.load %arg10[%c4_316, %c0_317, %c0_318] : memref<9x16x16xf32, #tpu.memory_space<vmem>>, vector<1x16x16xf32>
    %261 = vector.shape_cast %260 : vector<1x16x16xf32> to vector<16x16xf32>
    %cst_319 = arith.constant dense<0.000000e+00> : vector<64x16xf32>
    %262 = tpu.matmul %259, %261, %cst_319 {dimension_numbers = #tpu.dot_dimension_numbers<[1], [0], [0], [1], [0, 0, 1, 1], [], []>} : vector<64x16xf32>, vector<16x16xf32>, vector<64x16xf32> -> vector<64x16xf32>
    %263 = arith.addf %257, %262 : vector<64x16xf32>
    %c0_320 = arith.constant 0 : index
    %c1_321 = arith.constant 1 : index
    %c2_322 = arith.constant 2 : index
    %c0_323 = arith.constant 0 : index
    %264 = vector.load %arg18[%c0_320, %c1_321, %c2_322, %c0_323] : memref<1x10x10x16xf32, #tpu.memory_space<vmem>>, vector<1x8x8x16xf32>
    %265 = vector.shape_cast %264 : vector<1x8x8x16xf32> to vector<64x16xf32>
    %c5_324 = arith.constant 5 : index
    %c0_325 = arith.constant 0 : index
    %c0_326 = arith.constant 0 : index
    %266 = vector.load %arg10[%c5_324, %c0_325, %c0_326] : memref<9x16x16xf32, #tpu.memory_space<vmem>>, vector<1x16x16xf32>
    %267 = vector.shape_cast %266 : vector<1x16x16xf32> to vector<16x16xf32>
    %cst_327 = arith.constant dense<0.000000e+00> : vector<64x16xf32>
    %268 = tpu.matmul %265, %267, %cst_327 {dimension_numbers = #tpu.dot_dimension_numbers<[1], [0], [0], [1], [0, 0, 1, 1], [], []>} : vector<64x16xf32>, vector<16x16xf32>, vector<64x16xf32> -> vector<64x16xf32>
    %269 = arith.addf %263, %268 : vector<64x16xf32>
    %c0_328 = arith.constant 0 : index
    %c2_329 = arith.constant 2 : index
    %c0_330 = arith.constant 0 : index
    %c0_331 = arith.constant 0 : index
    %270 = vector.load %arg18[%c0_328, %c2_329, %c0_330, %c0_331] : memref<1x10x10x16xf32, #tpu.memory_space<vmem>>, vector<1x8x8x16xf32>
    %271 = vector.shape_cast %270 : vector<1x8x8x16xf32> to vector<64x16xf32>
    %c6_332 = arith.constant 6 : index
    %c0_333 = arith.constant 0 : index
    %c0_334 = arith.constant 0 : index
    %272 = vector.load %arg10[%c6_332, %c0_333, %c0_334] : memref<9x16x16xf32, #tpu.memory_space<vmem>>, vector<1x16x16xf32>
    %273 = vector.shape_cast %272 : vector<1x16x16xf32> to vector<16x16xf32>
    %cst_335 = arith.constant dense<0.000000e+00> : vector<64x16xf32>
    %274 = tpu.matmul %271, %273, %cst_335 {dimension_numbers = #tpu.dot_dimension_numbers<[1], [0], [0], [1], [0, 0, 1, 1], [], []>} : vector<64x16xf32>, vector<16x16xf32>, vector<64x16xf32> -> vector<64x16xf32>
    %275 = arith.addf %269, %274 : vector<64x16xf32>
    %c0_336 = arith.constant 0 : index
    %c2_337 = arith.constant 2 : index
    %c1_338 = arith.constant 1 : index
    %c0_339 = arith.constant 0 : index
    %276 = vector.load %arg18[%c0_336, %c2_337, %c1_338, %c0_339] : memref<1x10x10x16xf32, #tpu.memory_space<vmem>>, vector<1x8x8x16xf32>
    %277 = vector.shape_cast %276 : vector<1x8x8x16xf32> to vector<64x16xf32>
    %c7_340 = arith.constant 7 : index
    %c0_341 = arith.constant 0 : index
    %c0_342 = arith.constant 0 : index
    %278 = vector.load %arg10[%c7_340, %c0_341, %c0_342] : memref<9x16x16xf32, #tpu.memory_space<vmem>>, vector<1x16x16xf32>
    %279 = vector.shape_cast %278 : vector<1x16x16xf32> to vector<16x16xf32>
    %cst_343 = arith.constant dense<0.000000e+00> : vector<64x16xf32>
    %280 = tpu.matmul %277, %279, %cst_343 {dimension_numbers = #tpu.dot_dimension_numbers<[1], [0], [0], [1], [0, 0, 1, 1], [], []>} : vector<64x16xf32>, vector<16x16xf32>, vector<64x16xf32> -> vector<64x16xf32>
    %281 = arith.addf %275, %280 : vector<64x16xf32>
    %c0_344 = arith.constant 0 : index
    %c2_345 = arith.constant 2 : index
    %c2_346 = arith.constant 2 : index
    %c0_347 = arith.constant 0 : index
    %282 = vector.load %arg18[%c0_344, %c2_345, %c2_346, %c0_347] : memref<1x10x10x16xf32, #tpu.memory_space<vmem>>, vector<1x8x8x16xf32>
    %283 = vector.shape_cast %282 : vector<1x8x8x16xf32> to vector<64x16xf32>
    %c8_348 = arith.constant 8 : index
    %c0_349 = arith.constant 0 : index
    %c0_350 = arith.constant 0 : index
    %284 = vector.load %arg10[%c8_348, %c0_349, %c0_350] : memref<9x16x16xf32, #tpu.memory_space<vmem>>, vector<1x16x16xf32>
    %285 = vector.shape_cast %284 : vector<1x16x16xf32> to vector<16x16xf32>
    %cst_351 = arith.constant dense<0.000000e+00> : vector<64x16xf32>
    %286 = tpu.matmul %283, %285, %cst_351 {dimension_numbers = #tpu.dot_dimension_numbers<[1], [0], [0], [1], [0, 0, 1, 1], [], []>} : vector<64x16xf32>, vector<16x16xf32>, vector<64x16xf32> -> vector<64x16xf32>
    %287 = arith.addf %281, %286 : vector<64x16xf32>
    %c0_352 = arith.constant 0 : index
    %c0_353 = arith.constant 0 : index
    %288 = vector.load %arg11[%c0_352, %c0_353] : memref<1x16xf32, #tpu.memory_space<vmem>>, vector<1x16xf32>
    %289 = vector.broadcast %288 : vector<1x16xf32> to vector<64x16xf32>
    %290 = arith.addf %287, %289 : vector<64x16xf32>
    %cst_354 = arith.constant 0.000000e+00 : f32
    %291 = vector.broadcast %cst_354 : f32 to vector<64x16xf32>
    %292 = arith.cmpf ogt, %290, %291 : vector<64x16xf32>
    %cst_355 = arith.constant 0.000000e+00 : f32
    %293 = vector.broadcast %cst_355 : f32 to vector<64x16xf32>
    %294 = arith.minimumf %290, %293 : vector<64x16xf32>
    %295 = math.exp %294 : vector<64x16xf32>
    %cst_356 = arith.constant 1.000000e+00 : f32
    %296 = vector.broadcast %cst_356 : f32 to vector<64x16xf32>
    %297 = arith.subf %295, %296 : vector<64x16xf32>
    %298 = arith.select %292, %290, %297 : vector<64x16xi1>, vector<64x16xf32>
    %299 = vector.shape_cast %298 : vector<64x16xf32> to vector<1x8x8x16xf32>
    %cst_357 = arith.constant 0.000000e+00 : f32
    %300 = vector.broadcast %cst_357 : f32 to vector<1x10x10x16xf32>
    %c0_358 = arith.constant 0 : index
    %c0_359 = arith.constant 0 : index
    %c0_360 = arith.constant 0 : index
    %c0_361 = arith.constant 0 : index
    %301 = vector.load %arg18[%c0_358, %c0_359, %c0_360, %c0_361] : memref<1x10x10x16xf32, #tpu.memory_space<vmem>>, vector<1x10x10x16xf32>
    tpu.vector_store %arg18[%c0_358, %c0_359, %c0_360, %c0_361], %300 {strides = array<i32>} : memref<1x10x10x16xf32, #tpu.memory_space<vmem>>, vector<1x10x10x16xf32>,
    %c0_362 = arith.constant 0 : index
    %c1_363 = arith.constant 1 : index
    %c1_364 = arith.constant 1 : index
    %c0_365 = arith.constant 0 : index
    %302 = vector.load %arg18[%c0_362, %c1_363, %c1_364, %c0_365] : memref<1x10x10x16xf32, #tpu.memory_space<vmem>>, vector<1x8x8x16xf32>
    tpu.vector_store %arg18[%c0_362, %c1_363, %c1_364, %c0_365], %299 {strides = array<i32>} : memref<1x10x10x16xf32, #tpu.memory_space<vmem>>, vector<1x8x8x16xf32>,
    %cst_366 = arith.constant 0.000000e+00 : f32
    %303 = vector.broadcast %cst_366 : f32 to vector<64x16xf32>
    %c0_367 = arith.constant 0 : index
    %c0_368 = arith.constant 0 : index
    %c0_369 = arith.constant 0 : index
    %c0_370 = arith.constant 0 : index
    %304 = vector.load %arg18[%c0_367, %c0_368, %c0_369, %c0_370] : memref<1x10x10x16xf32, #tpu.memory_space<vmem>>, vector<1x8x8x16xf32>
    %305 = vector.shape_cast %304 : vector<1x8x8x16xf32> to vector<64x16xf32>
    %c0_371 = arith.constant 0 : index
    %c0_372 = arith.constant 0 : index
    %c0_373 = arith.constant 0 : index
    %306 = vector.load %arg12[%c0_371, %c0_372, %c0_373] : memref<9x16x16xf32, #tpu.memory_space<vmem>>, vector<1x16x16xf32>
    %307 = vector.shape_cast %306 : vector<1x16x16xf32> to vector<16x16xf32>
    %cst_374 = arith.constant dense<0.000000e+00> : vector<64x16xf32>
    %308 = tpu.matmul %305, %307, %cst_374 {dimension_numbers = #tpu.dot_dimension_numbers<[1], [0], [0], [1], [0, 0, 1, 1], [], []>} : vector<64x16xf32>, vector<16x16xf32>, vector<64x16xf32> -> vector<64x16xf32>
    %309 = arith.addf %303, %308 : vector<64x16xf32>
    %c0_375 = arith.constant 0 : index
    %c0_376 = arith.constant 0 : index
    %c1_377 = arith.constant 1 : index
    %c0_378 = arith.constant 0 : index
    %310 = vector.load %arg18[%c0_375, %c0_376, %c1_377, %c0_378] : memref<1x10x10x16xf32, #tpu.memory_space<vmem>>, vector<1x8x8x16xf32>
    %311 = vector.shape_cast %310 : vector<1x8x8x16xf32> to vector<64x16xf32>
    %c1_379 = arith.constant 1 : index
    %c0_380 = arith.constant 0 : index
    %c0_381 = arith.constant 0 : index
    %312 = vector.load %arg12[%c1_379, %c0_380, %c0_381] : memref<9x16x16xf32, #tpu.memory_space<vmem>>, vector<1x16x16xf32>
    %313 = vector.shape_cast %312 : vector<1x16x16xf32> to vector<16x16xf32>
    %cst_382 = arith.constant dense<0.000000e+00> : vector<64x16xf32>
    %314 = tpu.matmul %311, %313, %cst_382 {dimension_numbers = #tpu.dot_dimension_numbers<[1], [0], [0], [1], [0, 0, 1, 1], [], []>} : vector<64x16xf32>, vector<16x16xf32>, vector<64x16xf32> -> vector<64x16xf32>
    %315 = arith.addf %309, %314 : vector<64x16xf32>
    %c0_383 = arith.constant 0 : index
    %c0_384 = arith.constant 0 : index
    %c2_385 = arith.constant 2 : index
    %c0_386 = arith.constant 0 : index
    %316 = vector.load %arg18[%c0_383, %c0_384, %c2_385, %c0_386] : memref<1x10x10x16xf32, #tpu.memory_space<vmem>>, vector<1x8x8x16xf32>
    %317 = vector.shape_cast %316 : vector<1x8x8x16xf32> to vector<64x16xf32>
    %c2_387 = arith.constant 2 : index
    %c0_388 = arith.constant 0 : index
    %c0_389 = arith.constant 0 : index
    %318 = vector.load %arg12[%c2_387, %c0_388, %c0_389] : memref<9x16x16xf32, #tpu.memory_space<vmem>>, vector<1x16x16xf32>
    %319 = vector.shape_cast %318 : vector<1x16x16xf32> to vector<16x16xf32>
    %cst_390 = arith.constant dense<0.000000e+00> : vector<64x16xf32>
    %320 = tpu.matmul %317, %319, %cst_390 {dimension_numbers = #tpu.dot_dimension_numbers<[1], [0], [0], [1], [0, 0, 1, 1], [], []>} : vector<64x16xf32>, vector<16x16xf32>, vector<64x16xf32> -> vector<64x16xf32>
    %321 = arith.addf %315, %320 : vector<64x16xf32>
    %c0_391 = arith.constant 0 : index
    %c1_392 = arith.constant 1 : index
    %c0_393 = arith.constant 0 : index
    %c0_394 = arith.constant 0 : index
    %322 = vector.load %arg18[%c0_391, %c1_392, %c0_393, %c0_394] : memref<1x10x10x16xf32, #tpu.memory_space<vmem>>, vector<1x8x8x16xf32>
    %323 = vector.shape_cast %322 : vector<1x8x8x16xf32> to vector<64x16xf32>
    %c3_395 = arith.constant 3 : index
    %c0_396 = arith.constant 0 : index
    %c0_397 = arith.constant 0 : index
    %324 = vector.load %arg12[%c3_395, %c0_396, %c0_397] : memref<9x16x16xf32, #tpu.memory_space<vmem>>, vector<1x16x16xf32>
    %325 = vector.shape_cast %324 : vector<1x16x16xf32> to vector<16x16xf32>
    %cst_398 = arith.constant dense<0.000000e+00> : vector<64x16xf32>
    %326 = tpu.matmul %323, %325, %cst_398 {dimension_numbers = #tpu.dot_dimension_numbers<[1], [0], [0], [1], [0, 0, 1, 1], [], []>} : vector<64x16xf32>, vector<16x16xf32>, vector<64x16xf32> -> vector<64x16xf32>
    %327 = arith.addf %321, %326 : vector<64x16xf32>
    %c0_399 = arith.constant 0 : index
    %c1_400 = arith.constant 1 : index
    %c1_401 = arith.constant 1 : index
    %c0_402 = arith.constant 0 : index
    %328 = vector.load %arg18[%c0_399, %c1_400, %c1_401, %c0_402] : memref<1x10x10x16xf32, #tpu.memory_space<vmem>>, vector<1x8x8x16xf32>
    %329 = vector.shape_cast %328 : vector<1x8x8x16xf32> to vector<64x16xf32>
    %c4_403 = arith.constant 4 : index
    %c0_404 = arith.constant 0 : index
    %c0_405 = arith.constant 0 : index
    %330 = vector.load %arg12[%c4_403, %c0_404, %c0_405] : memref<9x16x16xf32, #tpu.memory_space<vmem>>, vector<1x16x16xf32>
    %331 = vector.shape_cast %330 : vector<1x16x16xf32> to vector<16x16xf32>
    %cst_406 = arith.constant dense<0.000000e+00> : vector<64x16xf32>
    %332 = tpu.matmul %329, %331, %cst_406 {dimension_numbers = #tpu.dot_dimension_numbers<[1], [0], [0], [1], [0, 0, 1, 1], [], []>} : vector<64x16xf32>, vector<16x16xf32>, vector<64x16xf32> -> vector<64x16xf32>
    %333 = arith.addf %327, %332 : vector<64x16xf32>
    %c0_407 = arith.constant 0 : index
    %c1_408 = arith.constant 1 : index
    %c2_409 = arith.constant 2 : index
    %c0_410 = arith.constant 0 : index
    %334 = vector.load %arg18[%c0_407, %c1_408, %c2_409, %c0_410] : memref<1x10x10x16xf32, #tpu.memory_space<vmem>>, vector<1x8x8x16xf32>
    %335 = vector.shape_cast %334 : vector<1x8x8x16xf32> to vector<64x16xf32>
    %c5_411 = arith.constant 5 : index
    %c0_412 = arith.constant 0 : index
    %c0_413 = arith.constant 0 : index
    %336 = vector.load %arg12[%c5_411, %c0_412, %c0_413] : memref<9x16x16xf32, #tpu.memory_space<vmem>>, vector<1x16x16xf32>
    %337 = vector.shape_cast %336 : vector<1x16x16xf32> to vector<16x16xf32>
    %cst_414 = arith.constant dense<0.000000e+00> : vector<64x16xf32>
    %338 = tpu.matmul %335, %337, %cst_414 {dimension_numbers = #tpu.dot_dimension_numbers<[1], [0], [0], [1], [0, 0, 1, 1], [], []>} : vector<64x16xf32>, vector<16x16xf32>, vector<64x16xf32> -> vector<64x16xf32>
    %339 = arith.addf %333, %338 : vector<64x16xf32>
    %c0_415 = arith.constant 0 : index
    %c2_416 = arith.constant 2 : index
    %c0_417 = arith.constant 0 : index
    %c0_418 = arith.constant 0 : index
    %340 = vector.load %arg18[%c0_415, %c2_416, %c0_417, %c0_418] : memref<1x10x10x16xf32, #tpu.memory_space<vmem>>, vector<1x8x8x16xf32>
    %341 = vector.shape_cast %340 : vector<1x8x8x16xf32> to vector<64x16xf32>
    %c6_419 = arith.constant 6 : index
    %c0_420 = arith.constant 0 : index
    %c0_421 = arith.constant 0 : index
    %342 = vector.load %arg12[%c6_419, %c0_420, %c0_421] : memref<9x16x16xf32, #tpu.memory_space<vmem>>, vector<1x16x16xf32>
    %343 = vector.shape_cast %342 : vector<1x16x16xf32> to vector<16x16xf32>
    %cst_422 = arith.constant dense<0.000000e+00> : vector<64x16xf32>
    %344 = tpu.matmul %341, %343, %cst_422 {dimension_numbers = #tpu.dot_dimension_numbers<[1], [0], [0], [1], [0, 0, 1, 1], [], []>} : vector<64x16xf32>, vector<16x16xf32>, vector<64x16xf32> -> vector<64x16xf32>
    %345 = arith.addf %339, %344 : vector<64x16xf32>
    %c0_423 = arith.constant 0 : index
    %c2_424 = arith.constant 2 : index
    %c1_425 = arith.constant 1 : index
    %c0_426 = arith.constant 0 : index
    %346 = vector.load %arg18[%c0_423, %c2_424, %c1_425, %c0_426] : memref<1x10x10x16xf32, #tpu.memory_space<vmem>>, vector<1x8x8x16xf32>
    %347 = vector.shape_cast %346 : vector<1x8x8x16xf32> to vector<64x16xf32>
    %c7_427 = arith.constant 7 : index
    %c0_428 = arith.constant 0 : index
    %c0_429 = arith.constant 0 : index
    %348 = vector.load %arg12[%c7_427, %c0_428, %c0_429] : memref<9x16x16xf32, #tpu.memory_space<vmem>>, vector<1x16x16xf32>
    %349 = vector.shape_cast %348 : vector<1x16x16xf32> to vector<16x16xf32>
    %cst_430 = arith.constant dense<0.000000e+00> : vector<64x16xf32>
    %350 = tpu.matmul %347, %349, %cst_430 {dimension_numbers = #tpu.dot_dimension_numbers<[1], [0], [0], [1], [0, 0, 1, 1], [], []>} : vector<64x16xf32>, vector<16x16xf32>, vector<64x16xf32> -> vector<64x16xf32>
    %351 = arith.addf %345, %350 : vector<64x16xf32>
    %c0_431 = arith.constant 0 : index
    %c2_432 = arith.constant 2 : index
    %c2_433 = arith.constant 2 : index
    %c0_434 = arith.constant 0 : index
    %352 = vector.load %arg18[%c0_431, %c2_432, %c2_433, %c0_434] : memref<1x10x10x16xf32, #tpu.memory_space<vmem>>, vector<1x8x8x16xf32>
    %353 = vector.shape_cast %352 : vector<1x8x8x16xf32> to vector<64x16xf32>
    %c8_435 = arith.constant 8 : index
    %c0_436 = arith.constant 0 : index
    %c0_437 = arith.constant 0 : index
    %354 = vector.load %arg12[%c8_435, %c0_436, %c0_437] : memref<9x16x16xf32, #tpu.memory_space<vmem>>, vector<1x16x16xf32>
    %355 = vector.shape_cast %354 : vector<1x16x16xf32> to vector<16x16xf32>
    %cst_438 = arith.constant dense<0.000000e+00> : vector<64x16xf32>
    %356 = tpu.matmul %353, %355, %cst_438 {dimension_numbers = #tpu.dot_dimension_numbers<[1], [0], [0], [1], [0, 0, 1, 1], [], []>} : vector<64x16xf32>, vector<16x16xf32>, vector<64x16xf32> -> vector<64x16xf32>
    %357 = arith.addf %351, %356 : vector<64x16xf32>
    %c0_439 = arith.constant 0 : index
    %c0_440 = arith.constant 0 : index
    %358 = vector.load %arg13[%c0_439, %c0_440] : memref<1x16xf32, #tpu.memory_space<vmem>>, vector<1x16xf32>
    %359 = vector.broadcast %358 : vector<1x16xf32> to vector<64x16xf32>
    %360 = arith.addf %357, %359 : vector<64x16xf32>
    %cst_441 = arith.constant 0.000000e+00 : f32
    %361 = vector.broadcast %cst_441 : f32 to vector<64x16xf32>
    %362 = arith.cmpf ogt, %360, %361 : vector<64x16xf32>
    %cst_442 = arith.constant 0.000000e+00 : f32
    %363 = vector.broadcast %cst_442 : f32 to vector<64x16xf32>
    %364 = arith.minimumf %360, %363 : vector<64x16xf32>
    %365 = math.exp %364 : vector<64x16xf32>
    %cst_443 = arith.constant 1.000000e+00 : f32
    %366 = vector.broadcast %cst_443 : f32 to vector<64x16xf32>
    %367 = arith.subf %365, %366 : vector<64x16xf32>
    %368 = arith.select %362, %360, %367 : vector<64x16xi1>, vector<64x16xf32>
    %369 = vector.shape_cast %368 : vector<64x16xf32> to vector<1x8x8x16xf32>
    %370 = vector.shape_cast %369 : vector<1x8x8x16xf32> to vector<1x64x16xf32>
    %c0_444 = arith.constant 0 : index
    %c0_445 = arith.constant 0 : index
    %c0_446 = arith.constant 0 : index
    %371 = vector.load %arg14[%c0_444, %c0_445, %c0_446] : memref<1x64x16xf32, #tpu.memory_space<vmem>>, vector<1x64x16xf32>
    tpu.vector_store %arg14[%c0_444, %c0_445, %c0_446], %370 {strides = array<i32>} : memref<1x64x16xf32, #tpu.memory_space<vmem>>, vector<1x64x16xf32>,
    return
  }
  func.func @transform_0(%arg0: i32) -> (i32, i32, i32, i32) {
    %c0_i32 = arith.constant 0 : i32
    %c0_i32_0 = arith.constant 0 : i32
    %c0_i32_1 = arith.constant 0 : i32
    %c0_i32_2 = arith.constant 0 : i32
    return %arg0, %c0_i32, %c0_i32_0, %c0_i32_1 : i32, i32, i32, i32
  }
  func.func @transform_1(%arg0: i32) -> (i32, i32, i32) {
    %c0_i32 = arith.constant 0 : i32
    %c0_i32_0 = arith.constant 0 : i32
    %c0_i32_1 = arith.constant 0 : i32
    %c0_i32_2 = arith.constant 0 : i32
    return %c0_i32, %c0_i32_0, %c0_i32_1 : i32, i32, i32
  }
  func.func @transform_2(%arg0: i32) -> (i32, i32) {
    %c0_i32 = arith.constant 0 : i32
    %c0_i32_0 = arith.constant 0 : i32
    %c0_i32_1 = arith.constant 0 : i32
    return %c0_i32, %c0_i32_0 : i32, i32
  }
  func.func @transform_3(%arg0: i32) -> (i32, i32, i32) {
    %c0_i32 = arith.constant 0 : i32
    %c0_i32_0 = arith.constant 0 : i32
    %c0_i32_1 = arith.constant 0 : i32
    %c0_i32_2 = arith.constant 0 : i32
    return %c0_i32, %c0_i32_0, %c0_i32_1 : i32, i32, i32
  }
  func.func @transform_4(%arg0: i32) -> (i32, i32) {
    %c0_i32 = arith.constant 0 : i32
    %c0_i32_0 = arith.constant 0 : i32
    %c0_i32_1 = arith.constant 0 : i32
    return %c0_i32, %c0_i32_0 : i32, i32
  }
  func.func @transform_5(%arg0: i32) -> (i32, i32, i32) {
    %c0_i32 = arith.constant 0 : i32
    %c0_i32_0 = arith.constant 0 : i32
    %c0_i32_1 = arith.constant 0 : i32
    %c0_i32_2 = arith.constant 0 : i32
    return %c0_i32, %c0_i32_0, %c0_i32_1 : i32, i32, i32
  }
  func.func @transform_6(%arg0: i32) -> (i32, i32) {
    %c0_i32 = arith.constant 0 : i32
    %c0_i32_0 = arith.constant 0 : i32
    %c0_i32_1 = arith.constant 0 : i32
    return %c0_i32, %c0_i32_0 : i32, i32
  }
  func.func @transform_7(%arg0: i32) -> (i32, i32) {
    %c0_i32 = arith.constant 0 : i32
    %c0_i32_0 = arith.constant 0 : i32
    %c0_i32_1 = arith.constant 0 : i32
    return %c0_i32, %c0_i32_0 : i32, i32
  }
  func.func @transform_8(%arg0: i32) -> (i32, i32) {
    %c0_i32 = arith.constant 0 : i32
    %c0_i32_0 = arith.constant 0 : i32
    %c0_i32_1 = arith.constant 0 : i32
    return %c0_i32, %c0_i32_0 : i32, i32
  }
  func.func @transform_9(%arg0: i32) -> (i32, i32, i32) {
    %c0_i32 = arith.constant 0 : i32
    %c0_i32_0 = arith.constant 0 : i32
    %c0_i32_1 = arith.constant 0 : i32
    %c0_i32_2 = arith.constant 0 : i32
    return %c0_i32, %c0_i32_0, %c0_i32_1 : i32, i32, i32
  }
  func.func @transform_10(%arg0: i32) -> (i32, i32) {
    %c0_i32 = arith.constant 0 : i32
    %c0_i32_0 = arith.constant 0 : i32
    %c0_i32_1 = arith.constant 0 : i32
    return %c0_i32, %c0_i32_0 : i32, i32
  }
  func.func @transform_11(%arg0: i32) -> (i32, i32, i32) {
    %c0_i32 = arith.constant 0 : i32
    %c0_i32_0 = arith.constant 0 : i32
    %c0_i32_1 = arith.constant 0 : i32
    %c0_i32_2 = arith.constant 0 : i32
    return %c0_i32, %c0_i32_0, %c0_i32_1 : i32, i32, i32
  }
  func.func @transform_12(%arg0: i32) -> (i32, i32) {
    %c0_i32 = arith.constant 0 : i32
    %c0_i32_0 = arith.constant 0 : i32
    %c0_i32_1 = arith.constant 0 : i32
    return %c0_i32, %c0_i32_0 : i32, i32
  }
  func.func @transform_13(%arg0: i32) -> (i32, i32, i32) {
    %c0_i32 = arith.constant 0 : i32
    %c0_i32_0 = arith.constant 0 : i32
    %c0_i32_1 = arith.constant 0 : i32
    return %arg0, %c0_i32, %c0_i32_0 : i32, i32, i32
  }
}

module attributes {stable_mosaic.version = 11 : i64} {
  func.func @_linear_kernel(%arg0: memref<2x1024xf32, #tpu.memory_space<vmem>>, %arg1: memref<1024x32xf32, #tpu.memory_space<vmem>>, %arg2: memref<1x32xf32, #tpu.memory_space<vmem>>, %arg3: memref<2x32xf32, #tpu.memory_space<vmem>>) attributes {dimension_semantics = [], scalar_prefetch = 0 : i64, scratch_operands = 0 : i64, tpu.core_type = #tpu.core_type<tc>} {
    %c0 = arith.constant 0 : index
    %c0_0 = arith.constant 0 : index
    %0 = vector.load %arg0[%c0, %c0_0] : memref<2x1024xf32, #tpu.memory_space<vmem>>, vector<2x1024xf32>
    %c0_1 = arith.constant 0 : index
    %c0_2 = arith.constant 0 : index
    %1 = vector.load %arg1[%c0_1, %c0_2] : memref<1024x32xf32, #tpu.memory_space<vmem>>, vector<1024x32xf32>
    %cst = arith.constant dense<0.000000e+00> : vector<2x32xf32>
    %2 = tpu.matmul %0, %1, %cst {dimension_numbers = #tpu.dot_dimension_numbers<[1], [0], [0], [1], [0, 0, 1, 1], [], []>} : vector<2x1024xf32>, vector<1024x32xf32>, vector<2x32xf32> -> vector<2x32xf32>
    %c0_3 = arith.constant 0 : index
    %c0_4 = arith.constant 0 : index
    %3 = vector.load %arg2[%c0_3, %c0_4] : memref<1x32xf32, #tpu.memory_space<vmem>>, vector<1x32xf32>
    %4 = vector.broadcast %3 : vector<1x32xf32> to vector<2x32xf32>
    %5 = arith.addf %2, %4 : vector<2x32xf32>
    %c0_5 = arith.constant 0 : index
    %c0_6 = arith.constant 0 : index
    %6 = vector.load %arg3[%c0_5, %c0_6] : memref<2x32xf32, #tpu.memory_space<vmem>>, vector<2x32xf32>
    tpu.vector_store %arg3[%c0_5, %c0_6], %5 {strides = array<i32>} : memref<2x32xf32, #tpu.memory_space<vmem>>, vector<2x32xf32>,
    return
  }
}

</mosaic_0001>

<llo_original>
// kernel: encoder_forward.3
$region0: #{encoder_forward.3}
  #allocation0 [shape = 'u32[]', space=smem, size = 0x4, offset = 0x4, fixed_abs, tag = 'smem constant byte address 0x4 - core index']
  #allocation1 [shape = 'u32[72,128]{1,0:T(1,128)}', space=vmem, size = 0x9000, scoped, tag = 'internal scratch']
  %s0 = inlined_call_operand.vmem [shape: f32[2,1024], index: 0, kind: input, shape index: {}]
  %s1 = inlined_call_operand.vmem [shape: f32[1024,32], index: 1, kind: input, shape index: {}]
  %s2 = inlined_call_operand.vmem [shape: f32[1,32], index: 2, kind: input, shape index: {}]
  %s3 = inlined_call_operand.hbm [shape: f32[2,32], index: 3, kind: output, shape index: {}]
  %s4 = sld [smem:[#allocation0]]
  $region22: #{encoder_forward.3} parent=0
    _
  %s6 = ssub.s32 1, %s4
  %s7 = scalar_select 0, %s6, %s4
  $region1: #{encoder_forward.3} parent=0
    #allocation2 [shape = 'u8[1024]{0}', space=vmem, size = 0x400, scoped, tag = 'output window, operand 0, single buffered']
    #allocation3 [shape = 's32[1]{0}', space=sflag, size = 0x4, scoped, tag = 'scoped memory for encoder_forward.3']
    %8 = vsyncpa [#allocation3], 0
    // Predicated region
    $region2: #{encoder_forward.3} parent=1 // pred_check
      _
    $region3: #{encoder_forward.3} parent=1 // pred_check_branch
      %10 = sbr.rel (0) target = $region5
    $region4: #{encoder_forward.3} parent=1 // pred_region
      _
    $region5: #{encoder_forward.3} parent=1 // pred_fallthru
      _
    // Predicated region
    $region6: #{encoder_forward.3} parent=1 // pred_check
      _
    $region7: #{encoder_forward.3} parent=1 // pred_check_branch
      %12 = sbr.rel (0) target = $region9
    $region8: #{encoder_forward.3} parent=1 // pred_region
      _
    $region9: #{encoder_forward.3} parent=1 // pred_fallthru
      _
    // Predicated region
    $region10: #{encoder_forward.3} parent=1 // pred_check
      _
    $region11: #{encoder_forward.3} parent=1 // pred_check_branch
      %14 = sbr.rel (0) target = $region13
    $region12: #{encoder_forward.3} parent=1 // pred_region
      _
    $region13: #{encoder_forward.3} parent=1 // pred_fallthru
      _
    %v15 = vld [vmem:[%s0] sm:$0xff]
    %v16 = vld [vmem:[%s0 + $0x8] sm:$0xff]
    %v17 = vld [vmem:[%s1] sm:$0xff]
    %v18 = vld [vmem:[%s1 + $0x8] sm:$0xff]
    %v19 = vld [vmem:[%s1 + $0x10] sm:$0xff]
    %v20 = vld [vmem:[%s1 + $0x18] sm:$0xff]
    %v21 = vld [vmem:[%s1 + $0x20] sm:$0xff]
    %v22 = vld [vmem:[%s1 + $0x28] sm:$0xff]
    %v23 = vld [vmem:[%s1 + $0x30] sm:$0xff]
    %v24 = vld [vmem:[%s1 + $0x38] sm:$0xff]
    %v25 = vld [vmem:[%s1 + $0x40] sm:$0xff]
    %v26 = vld [vmem:[%s1 + $0x48] sm:$0xff]
    %v27 = vld [vmem:[%s1 + $0x50] sm:$0xff]
    %v28 = vld [vmem:[%s1 + $0x58] sm:$0xff]
    %v29 = vld [vmem:[%s1 + $0x60] sm:$0xff]
    %v30 = vld [vmem:[%s1 + $0x68] sm:$0xff]
    %v31 = vld [vmem:[%s1 + $0x70] sm:$0xff]
    %v32 = vld [vmem:[%s1 + $0x78] sm:$0xff]
    %v33 = vld [vmem:[%s1 + $0x80] sm:$0xff]
    %v34 = vld [vmem:[%s1 + $0x88] sm:$0xff]
    %v35 = vld [vmem:[%s1 + $0x90] sm:$0xff]
    %v36 = vld [vmem:[%s1 + $0x98] sm:$0xff]
    %v37 = vld [vmem:[%s1 + $0xa0] sm:$0xff]
    %v38 = vld [vmem:[%s1 + $0xa8] sm:$0xff]
    %v39 = vld [vmem:[%s1 + $0xb0] sm:$0xff]
    %v40 = vld [vmem:[%s1 + $0xb8] sm:$0xff]
    %v41 = vld [vmem:[%s1 + $0xc0] sm:$0xff]
    %v42 = vld [vmem:[%s1 + $0xc8] sm:$0xff]
    %v43 = vld [vmem:[%s1 + $0xd0] sm:$0xff]
    %v44 = vld [vmem:[%s1 + $0xd8] sm:$0xff]
    %v45 = vld [vmem:[%s1 + $0xe0] sm:$0xff]
    %v46 = vld [vmem:[%s1 + $0xe8] sm:$0xff]
    %v47 = vld [vmem:[%s1 + $0xf0] sm:$0xff]
    %v48 = vld [vmem:[%s1 + $0xf8] sm:$0xff]
    %v49 = vld [vmem:[%s1 + $0x100] sm:$0xff]
    %v50 = vld [vmem:[%s1 + $0x108] sm:$0xff]
    %v51 = vld [vmem:[%s1 + $0x110] sm:$0xff]
    %v52 = vld [vmem:[%s1 + $0x118] sm:$0xff]
    %v53 = vld [vmem:[%s1 + $0x120] sm:$0xff]
    %v54 = vld [vmem:[%s1 + $0x128] sm:$0xff]
    %v55 = vld [vmem:[%s1 + $0x130] sm:$0xff]
    %v56 = vld [vmem:[%s1 + $0x138] sm:$0xff]
    %v57 = vld [vmem:[%s1 + $0x140] sm:$0xff]
    %v58 = vld [vmem:[%s1 + $0x148] sm:$0xff]
    %v59 = vld [vmem:[%s1 + $0x150] sm:$0xff]
    %v60 = vld [vmem:[%s1 + $0x158] sm:$0xff]
    %v61 = vld [vmem:[%s1 + $0x160] sm:$0xff]
    %v62 = vld [vmem:[%s1 + $0x168] sm:$0xff]
    %v63 = vld [vmem:[%s1 + $0x170] sm:$0xff]
    %v64 = vld [vmem:[%s1 + $0x178] sm:$0xff]
    %v65 = vld [vmem:[%s1 + $0x180] sm:$0xff]
    %v66 = vld [vmem:[%s1 + $0x188] sm:$0xff]
    %v67 = vld [vmem:[%s1 + $0x190] sm:$0xff]
    %v68 = vld [vmem:[%s1 + $0x198] sm:$0xff]
    %v69 = vld [vmem:[%s1 + $0x1a0] sm:$0xff]
    %v70 = vld [vmem:[%s1 + $0x1a8] sm:$0xff]
    %v71 = vld [vmem:[%s1 + $0x1b0] sm:$0xff]
    %v72 = vld [vmem:[%s1 + $0x1b8] sm:$0xff]
    %v73 = vld [vmem:[%s1 + $0x1c0] sm:$0xff]
    %v74 = vld [vmem:[%s1 + $0x1c8] sm:$0xff]
    %v75 = vld [vmem:[%s1 + $0x1d0] sm:$0xff]
    %v76 = vld [vmem:[%s1 + $0x1d8] sm:$0xff]
    %v77 = vld [vmem:[%s1 + $0x1e0] sm:$0xff]
    %v78 = vld [vmem:[%s1 + $0x1e8] sm:$0xff]
    %v79 = vld [vmem:[%s1 + $0x1f0] sm:$0xff]
    %v80 = vld [vmem:[%s1 + $0x1f8] sm:$0xff]
    %v81 = vld [vmem:[%s1 + $0x200] sm:$0xff]
    %v82 = vld [vmem:[%s1 + $0x208] sm:$0xff]
    %v83 = vld [vmem:[%s1 + $0x210] sm:$0xff]
    %v84 = vld [vmem:[%s1 + $0x218] sm:$0xff]
    %v85 = vld [vmem:[%s1 + $0x220] sm:$0xff]
    %v86 = vld [vmem:[%s1 + $0x228] sm:$0xff]
    %v87 = vld [vmem:[%s1 + $0x230] sm:$0xff]
    %v88 = vld [vmem:[%s1 + $0x238] sm:$0xff]
    %v89 = vld [vmem:[%s1 + $0x240] sm:$0xff]
    %v90 = vld [vmem:[%s1 + $0x248] sm:$0xff]
    %v91 = vld [vmem:[%s1 + $0x250] sm:$0xff]
    %v92 = vld [vmem:[%s1 + $0x258] sm:$0xff]
    %v93 = vld [vmem:[%s1 + $0x260] sm:$0xff]
    %v94 = vld [vmem:[%s1 + $0x268] sm:$0xff]
    %v95 = vld [vmem:[%s1 + $0x270] sm:$0xff]
    %v96 = vld [vmem:[%s1 + $0x278] sm:$0xff]
    %v97 = vld [vmem:[%s1 + $0x280] sm:$0xff]
    %v98 = vld [vmem:[%s1 + $0x288] sm:$0xff]
    %v99 = vld [vmem:[%s1 + $0x290] sm:$0xff]
    %v100 = vld [vmem:[%s1 + $0x298] sm:$0xff]
    %v101 = vld [vmem:[%s1 + $0x2a0] sm:$0xff]
    %v102 = vld [vmem:[%s1 + $0x2a8] sm:$0xff]
    %v103 = vld [vmem:[%s1 + $0x2b0] sm:$0xff]
    %v104 = vld [vmem:[%s1 + $0x2b8] sm:$0xff]
    %v105 = vld [vmem:[%s1 + $0x2c0] sm:$0xff]
    %v106 = vld [vmem:[%s1 + $0x2c8] sm:$0xff]
    %v107 = vld [vmem:[%s1 + $0x2d0] sm:$0xff]
    %v108 = vld [vmem:[%s1 + $0x2d8] sm:$0xff]
    %v109 = vld [vmem:[%s1 + $0x2e0] sm:$0xff]
    %v110 = vld [vmem:[%s1 + $0x2e8] sm:$0xff]
    %v111 = vld [vmem:[%s1 + $0x2f0] sm:$0xff]
    %v112 = vld [vmem:[%s1 + $0x2f8] sm:$0xff]
    %v113 = vld [vmem:[%s1 + $0x300] sm:$0xff]
    %v114 = vld [vmem:[%s1 + $0x308] sm:$0xff]
    %v115 = vld [vmem:[%s1 + $0x310] sm:$0xff]
    %v116 = vld [vmem:[%s1 + $0x318] sm:$0xff]
    %v117 = vld [vmem:[%s1 + $0x320] sm:$0xff]
    %v118 = vld [vmem:[%s1 + $0x328] sm:$0xff]
    %v119 = vld [vmem:[%s1 + $0x330] sm:$0xff]
    %v120 = vld [vmem:[%s1 + $0x338] sm:$0xff]
    %v121 = vld [vmem:[%s1 + $0x340] sm:$0xff]
    %v122 = vld [vmem:[%s1 + $0x348] sm:$0xff]
    %v123 = vld [vmem:[%s1 + $0x350] sm:$0xff]
    %v124 = vld [vmem:[%s1 + $0x358] sm:$0xff]
    %v125 = vld [vmem:[%s1 + $0x360] sm:$0xff]
    %v126 = vld [vmem:[%s1 + $0x368] sm:$0xff]
    %v127 = vld [vmem:[%s1 + $0x370] sm:$0xff]
    %v128 = vld [vmem:[%s1 + $0x378] sm:$0xff]
    %v129 = vld [vmem:[%s1 + $0x380] sm:$0xff]
    %v130 = vld [vmem:[%s1 + $0x388] sm:$0xff]
    %v131 = vld [vmem:[%s1 + $0x390] sm:$0xff]
    %v132 = vld [vmem:[%s1 + $0x398] sm:$0xff]
    %v133 = vld [vmem:[%s1 + $0x3a0] sm:$0xff]
    %v134 = vld [vmem:[%s1 + $0x3a8] sm:$0xff]
    %v135 = vld [vmem:[%s1 + $0x3b0] sm:$0xff]
    %v136 = vld [vmem:[%s1 + $0x3b8] sm:$0xff]
    %v137 = vld [vmem:[%s1 + $0x3c0] sm:$0xff]
    %v138 = vld [vmem:[%s1 + $0x3c8] sm:$0xff]
    %v139 = vld [vmem:[%s1 + $0x3d0] sm:$0xff]
    %v140 = vld [vmem:[%s1 + $0x3d8] sm:$0xff]
    %v141 = vld [vmem:[%s1 + $0x3e0] sm:$0xff]
    %v142 = vld [vmem:[%s1 + $0x3e8] sm:$0xff]
    %v143 = vld [vmem:[%s1 + $0x3f0] sm:$0xff]
    %v144 = vld [vmem:[%s1 + $0x3f8] sm:$0xff]
    %v145 = vld [vmem:[%s2] sm:$0x1]
    %v147 = vperm.slane %v145, 0
    %151 = vst [vmem:[#allocation1] ss:$4 sm:$0xff] %v15
    %s152 = scalar_lea.vmem [#allocation1], 32
    %153 = vst [vmem:[%s152] ss:$4 sm:$0xff] %v16
    %v154 = vld.sshfl [vmem:[#allocation1] sm:$0xff pattern:$0x73625140]
    %v155 = vld.sshfl [vmem:[#allocation1 + $0x8] sm:$0xff pattern:$0x73625140]
    %v156 = vld.sshfl [vmem:[#allocation1 + $0x10] sm:$0xff pattern:$0x73625140]
    %v157 = vld.sshfl [vmem:[#allocation1 + $0x18] sm:$0xff pattern:$0x73625140]
    %v158 = vld.sshfl [vmem:[#allocation1 + $0x20] sm:$0xff pattern:$0x73625140]
    %v159 = vld.sshfl [vmem:[#allocation1 + $0x28] sm:$0xff pattern:$0x73625140]
    %v160 = vld.sshfl [vmem:[#allocation1 + $0x30] sm:$0xff pattern:$0x73625140]
    %v161 = vld.sshfl [vmem:[#allocation1 + $0x38] sm:$0xff pattern:$0x73625140]
    %170 = vmatpush.msra.mxu0 %v32
    %171 = vmatpush.msra.mxu0 %v31
    %172 = vmatpush.msra.mxu0 %v30
    %173 = vmatpush.msra.mxu0 %v29
    %174 = vmatpush.msra.mxu0 %v28
    %175 = vmatpush.msra.mxu0 %v27
    %176 = vmatpush.msra.mxu0 %v26
    %177 = vmatpush.msra.mxu0 %v25
    %178 = vmatpush.msra.mxu0 %v24
    %179 = vmatpush.msra.mxu0 %v23
    %180 = vmatpush.msra.mxu0 %v22
    %181 = vmatpush.msra.mxu0 %v21
    %182 = vmatpush.msra.mxu0 %v20
    %183 = vmatpush.msra.mxu0 %v19
    %184 = vmatpush.msra.mxu0 %v18
    %185 = vmatpush.msra.mxu0 %v17
    %186 = vmatmul.f32.gmra.mxu0 %v154
    %v187 = vpop.f32.mrf.mxu0
    %v188 = vadd.f32 %v147, %v187
    %189 = vdwg.mxu0
    %190 = vmatpush.msra.mxu0 %v48
    %191 = vmatpush.msra.mxu0 %v47
    %192 = vmatpush.msra.mxu0 %v46
    %193 = vmatpush.msra.mxu0 %v45
    %194 = vmatpush.msra.mxu0 %v44
    %195 = vmatpush.msra.mxu0 %v43
    %196 = vmatpush.msra.mxu0 %v42
    %197 = vmatpush.msra.mxu0 %v41
    %198 = vmatpush.msra.mxu0 %v40
    %199 = vmatpush.msra.mxu0 %v39
    %200 = vmatpush.msra.mxu0 %v38
    %201 = vmatpush.msra.mxu0 %v37
    %202 = vmatpush.msra.mxu0 %v36
    %203 = vmatpush.msra.mxu0 %v35
    %204 = vmatpush.msra.mxu0 %v34
    %205 = vmatpush.msra.mxu0 %v33
    %206 = vmatmul.f32.gmra.mxu0 %v155
    %v207 = vpop.f32.mrf.mxu0
    %v208 = vadd.f32 %v188, %v207
    %209 = vdwg.mxu0
    %210 = vmatpush.msra.mxu0 %v64
    %211 = vmatpush.msra.mxu0 %v63
    %212 = vmatpush.msra.mxu0 %v62
    %213 = vmatpush.msra.mxu0 %v61
    %214 = vmatpush.msra.mxu0 %v60
    %215 = vmatpush.msra.mxu0 %v59
    %216 = vmatpush.msra.mxu0 %v58
    %217 = vmatpush.msra.mxu0 %v57
    %218 = vmatpush.msra.mxu0 %v56
    %219 = vmatpush.msra.mxu0 %v55
    %220 = vmatpush.msra.mxu0 %v54
    %221 = vmatpush.msra.mxu0 %v53
    %222 = vmatpush.msra.mxu0 %v52
    %223 = vmatpush.msra.mxu0 %v51
    %224 = vmatpush.msra.mxu0 %v50
    %225 = vmatpush.msra.mxu0 %v49
    %226 = vmatmul.f32.gmra.mxu0 %v156
    %v227 = vpop.f32.mrf.mxu0
    %v228 = vadd.f32 %v208, %v227
    %229 = vdwg.mxu0
    %230 = vmatpush.msra.mxu0 %v80
    %231 = vmatpush.msra.mxu0 %v79
    %232 = vmatpush.msra.mxu0 %v78
    %233 = vmatpush.msra.mxu0 %v77
    %234 = vmatpush.msra.mxu0 %v76
    %235 = vmatpush.msra.mxu0 %v75
    %236 = vmatpush.msra.mxu0 %v74
    %237 = vmatpush.msra.mxu0 %v73
    %238 = vmatpush.msra.mxu0 %v72
    %239 = vmatpush.msra.mxu0 %v71
    %240 = vmatpush.msra.mxu0 %v70
    %241 = vmatpush.msra.mxu0 %v69
    %242 = vmatpush.msra.mxu0 %v68
    %243 = vmatpush.msra.mxu0 %v67
    %244 = vmatpush.msra.mxu0 %v66
    %245 = vmatpush.msra.mxu0 %v65
    %246 = vmatmul.f32.gmra.mxu0 %v157
    %v247 = vpop.f32.mrf.mxu0
    %v248 = vadd.f32 %v228, %v247
    %249 = vdwg.mxu0
    %250 = vmatpush.msra.mxu0 %v96
    %251 = vmatpush.msra.mxu0 %v95
    %252 = vmatpush.msra.mxu0 %v94
    %253 = vmatpush.msra.mxu0 %v93
    %254 = vmatpush.msra.mxu0 %v92
    %255 = vmatpush.msra.mxu0 %v91
    %256 = vmatpush.msra.mxu0 %v90
    %257 = vmatpush.msra.mxu0 %v89
    %258 = vmatpush.msra.mxu0 %v88
    %259 = vmatpush.msra.mxu0 %v87
    %260 = vmatpush.msra.mxu0 %v86
    %261 = vmatpush.msra.mxu0 %v85
    %262 = vmatpush.msra.mxu0 %v84
    %263 = vmatpush.msra.mxu0 %v83
    %264 = vmatpush.msra.mxu0 %v82
    %265 = vmatpush.msra.mxu0 %v81
    %266 = vmatmul.f32.gmra.mxu0 %v158
    %v267 = vpop.f32.mrf.mxu0
    %v268 = vadd.f32 %v248, %v267
    %269 = vdwg.mxu0
    %270 = vmatpush.msra.mxu0 %v112
    %271 = vmatpush.msra.mxu0 %v111
    %272 = vmatpush.msra.mxu0 %v110
    %273 = vmatpush.msra.mxu0 %v109
    %274 = vmatpush.msra.mxu0 %v108
    %275 = vmatpush.msra.mxu0 %v107
    %276 = vmatpush.msra.mxu0 %v106
    %277 = vmatpush.msra.mxu0 %v105
    %278 = vmatpush.msra.mxu0 %v104
    %279 = vmatpush.msra.mxu0 %v103
    %280 = vmatpush.msra.mxu0 %v102
    %281 = vmatpush.msra.mxu0 %v101
    %282 = vmatpush.msra.mxu0 %v100
    %283 = vmatpush.msra.mxu0 %v99
    %284 = vmatpush.msra.mxu0 %v98
    %285 = vmatpush.msra.mxu0 %v97
    %286 = vmatmul.f32.gmra.mxu0 %v159
    %v287 = vpop.f32.mrf.mxu0
    %v288 = vadd.f32 %v268, %v287
    %289 = vdwg.mxu0
    %290 = vmatpush.msra.mxu0 %v128
    %291 = vmatpush.msra.mxu0 %v127
    %292 = vmatpush.msra.mxu0 %v126
    %293 = vmatpush.msra.mxu0 %v125
    %294 = vmatpush.msra.mxu0 %v124
    %295 = vmatpush.msra.mxu0 %v123
    %296 = vmatpush.msra.mxu0 %v122
    %297 = vmatpush.msra.mxu0 %v121
    %298 = vmatpush.msra.mxu0 %v120
    %299 = vmatpush.msra.mxu0 %v119
    %300 = vmatpush.msra.mxu0 %v118
    %301 = vmatpush.msra.mxu0 %v117
    %302 = vmatpush.msra.mxu0 %v116
    %303 = vmatpush.msra.mxu0 %v115
    %304 = vmatpush.msra.mxu0 %v114
    %305 = vmatpush.msra.mxu0 %v113
    %306 = vmatmul.f32.gmra.mxu0 %v160
    %v307 = vpop.f32.mrf.mxu0
    %v308 = vadd.f32 %v288, %v307
    %309 = vdwg.mxu0
    %310 = vmatpush.msra.mxu0 %v144
    %311 = vmatpush.msra.mxu0 %v143
    %312 = vmatpush.msra.mxu0 %v142
    %313 = vmatpush.msra.mxu0 %v141
    %314 = vmatpush.msra.mxu0 %v140
    %315 = vmatpush.msra.mxu0 %v139
    %316 = vmatpush.msra.mxu0 %v138
    %317 = vmatpush.msra.mxu0 %v137
    %318 = vmatpush.msra.mxu0 %v136
    %319 = vmatpush.msra.mxu0 %v135
    %320 = vmatpush.msra.mxu0 %v134
    %321 = vmatpush.msra.mxu0 %v133
    %322 = vmatpush.msra.mxu0 %v132
    %323 = vmatpush.msra.mxu0 %v131
    %324 = vmatpush.msra.mxu0 %v130
    %325 = vmatpush.msra.mxu0 %v129
    %326 = vmatmul.f32.gmra.mxu0 %v161
    %v327 = vpop.f32.mrf.mxu0
    %v328 = vadd.f32 %v308, %v327
    %329 = vdwg.mxu0
    %vm330 = vcmask 254976
    %331 = vst.msk [vmem:[#allocation2] sm:$0x3] %vm330, %v328
    // Predicated region
    $region14: #{encoder_forward.3} parent=1 // pred_check
      _
    $region15: #{encoder_forward.3} parent=1 // pred_check_branch
      %333 = sbr.rel (0) target = $region17
    $region16: #{encoder_forward.3} parent=1 // pred_region
      %335 = vsyncadd [#allocation3], 0
      %s337 = sshll.u32 [#allocation2], 4
      %s338 = int_to_ptr.vmem [resolvable:$true] %s337
      %s339 = sshll.u32 %s3, 4
      %s340 = int_to_ptr.hbm [resolvable:$true] %s339
      %342 = dma.vmem_to_hbm [thread:$0]  %s338, 32, %s340, [#allocation3]
    $region17: #{encoder_forward.3} parent=1 // pred_fallthru
      _
    // Predicated region
    $region18: #{encoder_forward.3} parent=1 // pred_check
      _
    $region19: #{encoder_forward.3} parent=1 // pred_check_branch
      %344 = sbr.rel (0) target = $region21
    $region20: #{encoder_forward.3} parent=1 // pred_region
      %346 = dma.done [#allocation3], 32
    $region21: #{encoder_forward.3} parent=1 // pred_fallthru
      _
    %347 = vsyncpa [#allocation3], 1

// kernel: encoder_forward.2
$region0: #{encoder_forward.2}
  #allocation0 [shape = 'u32[]', space=smem, size = 0x4, offset = 0x4, fixed_abs, tag = 'smem constant byte address 0x4 - core index']
  #allocation1 [shape = 'u32[72,128]{1,0:T(1,128)}', space=vmem, size = 0x9000, scoped, tag = 'internal scratch']
  #allocation2 [shape = 'f32[1,18,18,4]{3,2,1,0:T(8,128)}', space=vmem, size = 0x36000, scoped, tag = 'scratch operand']
  #allocation3 [shape = 'f32[1,18,18,8]{3,2,1,0:T(8,128)}', space=vmem, size = 0x36000, scoped, tag = 'scratch operand']
  #allocation4 [shape = 'f32[8,16,8]{2,1,0:T(8,128)}', space=vmem, size = 0x10000, scoped, tag = 'scratch operand']
  #allocation5 [shape = 'f32[1,10,10,16]{3,2,1,0:T(8,128)}', space=vmem, size = 0x14000, scoped, tag = 'scratch operand']
  %s0 = inlined_call_operand.vmem [shape: f32[2,16,16,4], index: 0, kind: input, shape index: {}]
  %s1 = inlined_call_operand.vmem [shape: f32[9,4,8], index: 1, kind: input, shape index: {}]
  %s2 = inlined_call_operand.vmem [shape: f32[1,8], index: 2, kind: input, shape index: {}]
  %s3 = inlined_call_operand.vmem [shape: f32[9,8,8], index: 3, kind: input, shape index: {}]
  %s4 = inlined_call_operand.vmem [shape: f32[1,8], index: 4, kind: input, shape index: {}]
  %s5 = inlined_call_operand.vmem [shape: f32[9,8,8], index: 5, kind: input, shape index: {}]
  %s6 = inlined_call_operand.vmem [shape: f32[1,8], index: 6, kind: input, shape index: {}]
  %s7 = inlined_call_operand.vmem [shape: f32[8,16], index: 7, kind: input, shape index: {}]
  %s8 = inlined_call_operand.vmem [shape: f32[1,16], index: 8, kind: input, shape index: {}]
  %s9 = inlined_call_operand.vmem [shape: f32[9,16,16], index: 9, kind: input, shape index: {}]
  %s10 = inlined_call_operand.vmem [shape: f32[1,16], index: 10, kind: input, shape index: {}]
  %s11 = inlined_call_operand.vmem [shape: f32[9,16,16], index: 11, kind: input, shape index: {}]
  %s12 = inlined_call_operand.vmem [shape: f32[1,16], index: 12, kind: input, shape index: {}]
  %s13 = inlined_call_operand.vmem [shape: f32[2,64,16], index: 13, kind: output, shape index: {}]
  %s14 = sld [smem:[#allocation0]]
  $region85: #{encoder_forward.2} parent=0
    _
  %s16 = ssub.s32 1, %s14
  %s17 = scalar_select 0, %s16, %s14
  loop: start=0, step=1, limit=4
  $region2: #{encoder_forward.2} parent=0 // loop_pre_header
    _
  $region3: #{encoder_forward.2} parent=0 // loop_header
    %s19 = sphi 0, %s23
    %p20 = scmp.ge.s32.totalorder %s19, 4
    %s29 = sphi 0, %s31
    %s32 = sphi 0, %s29
    %s33 = sphi 0, %s32
    %s49 = sphi 0, %s33
    %s53 = sphi 0, %s53
    %s55 = sphi 0, %s53
    %s56 = sphi 0, %s55
    %s70 = sphi 0, %s56
    %s74 = sphi 0, %s74
    %s76 = sphi 0, %s74
    %s77 = sphi 0, %s76
    %s91 = sphi 0, %s77
    %s95 = sphi 0, %s95
    %s97 = sphi 0, %s95
    %s98 = sphi 0, %s97
    %s112 = sphi 0, %s98
    %s116 = sphi 0, %s116
    %s118 = sphi 0, %s116
    %s119 = sphi 0, %s118
    %s133 = sphi 0, %s119
    %s137 = sphi 0, %s137
    %s139 = sphi 0, %s137
    %s140 = sphi 0, %s139
    %s154 = sphi 0, %s140
    %s158 = sphi 0, %s158
    %s160 = sphi 0, %s158
    %s161 = sphi 0, %s160
    %s175 = sphi 0, %s161
    %s179 = sphi 0, %s179
    %s181 = sphi 0, %s179
    %s182 = sphi 0, %s181
    %s196 = sphi 0, %s182
    %s200 = sphi 0, %s200
    %s202 = sphi 0, %s200
    %s203 = sphi 0, %s202
    %s217 = sphi 0, %s203
    %s221 = sphi 0, %s221
    %s223 = sphi 0, %s221
    %s224 = sphi 0, %s223
    %s238 = sphi 0, %s224
    %s242 = sphi 0, %s242
    %s244 = sphi 0, %s242
    %s245 = sphi 0, %s244
    %s259 = sphi 0, %s245
    %s263 = sphi 0, %s263
    %s265 = sphi 0, %s263
    %s266 = sphi 0, %s265
    %s280 = sphi 0, %s266
    %s284 = sphi 0, %s284
    %s286 = sphi 0, %s284
    %s287 = sphi 0, %s286
    %s301 = sphi 0, %s287
    %s307 = sphi 0, %s309
    %s310 = sphi 0, %s307
    %s311 = sphi 0, %s310
    %s327 = sphi 0, %s311
  $region4: #{encoder_forward.2} parent=0 // loop_header_branch
    %22 = sbr.rel (%p20) target = $region8
  $region5: #{encoder_forward.2} parent=0 // loop_body
    %s24 = ssub.s32 %s19, 1
    %s25 = ssub.s32 %s19, 2
    %s26 = sadd.s32 %s19, 1
    %s27 = ssub.s32 %s19, %s26
    %p28 = scmp.eq.s32.totalorder %s27, 0
    %s30 = sadd.s32 %s29, 1
    %s31 = scalar_select %p28, %s29, %s30
    %p34 = pneg %p28
    %p35 = scmp.eq.s32.totalorder %s19, 1
    %p36 = por %p34, %p35
    %p37 = scmp.ne.s32.totalorder %s29, %s32
    %p38 = scmp.eq.s32.totalorder %s19, 0
    %p39 = por %p37, %p38
    %p40 = scmp.ne.s32.totalorder %s29, %s32
    %p41 = scmp.eq.s32.totalorder %s24, 1
    %p42 = por %p40, %p41
    %p43 = scmp.ne.s32.totalorder %s32, %s33
    %p44 = scmp.eq.s32.totalorder %s24, 0
    %p45 = por %p43, %p44
    %p46 = scmp.ne.s32.totalorder %s32, %s33
    %p47 = scmp.eq.s32.totalorder %s25, 1
    %p48 = por %p46, %p47
    %p50 = scmp.ne.s32.totalorder %s33, %s49
    %p51 = scmp.eq.s32.totalorder %s25, 0
    %p52 = por %p50, %p51
    %s54 = sadd.s32 %s53, 1
    %p57 = scmp.eq.s32.totalorder %s19, 1
    %p58 = scmp.ne.s32.totalorder %s53, %s55
    %p59 = scmp.eq.s32.totalorder %s19, 0
    %p60 = por %p58, %p59
    %p61 = scmp.ne.s32.totalorder %s53, %s55
    %p62 = scmp.eq.s32.totalorder %s24, 1
    %p63 = por %p61, %p62
    %p64 = scmp.ne.s32.totalorder %s55, %s56
    %p65 = scmp.eq.s32.totalorder %s24, 0
    %p66 = por %p64, %p65
    %p67 = scmp.ne.s32.totalorder %s55, %s56
    %p68 = scmp.eq.s32.totalorder %s25, 1
    %p69 = por %p67, %p68
    %p71 = scmp.ne.s32.totalorder %s56, %s70
    %p72 = scmp.eq.s32.totalorder %s25, 0
    %p73 = por %p71, %p72
    %s75 = sadd.s32 %s74, 1
    %p78 = scmp.eq.s32.totalorder %s19, 1
    %p79 = scmp.ne.s32.totalorder %s74, %s76
    %p80 = scmp.eq.s32.totalorder %s19, 0
    %p81 = por %p79, %p80
    %p82 = scmp.ne.s32.totalorder %s74, %s76
    %p83 = scmp.eq.s32.totalorder %s24, 1
    %p84 = por %p82, %p83
    %p85 = scmp.ne.s32.totalorder %s76, %s77
    %p86 = scmp.eq.s32.totalorder %s24, 0
    %p87 = por %p85, %p86
    %p88 = scmp.ne.s32.totalorder %s76, %s77
    %p89 = scmp.eq.s32.totalorder %s25, 1
    %p90 = por %p88, %p89
    %p92 = scmp.ne.s32.totalorder %s77, %s91
    %p93 = scmp.eq.s32.totalorder %s25, 0
    %p94 = por %p92, %p93
    %s96 = sadd.s32 %s95, 1
    %p99 = scmp.eq.s32.totalorder %s19, 1
    %p100 = scmp.ne.s32.totalorder %s95, %s97
    %p101 = scmp.eq.s32.totalorder %s19, 0
    %p102 = por %p100, %p101
    %p103 = scmp.ne.s32.totalorder %s95, %s97
    %p104 = scmp.eq.s32.totalorder %s24, 1
    %p105 = por %p103, %p104
    %p106 = scmp.ne.s32.totalorder %s97, %s98
    %p107 = scmp.eq.s32.totalorder %s24, 0
    %p108 = por %p106, %p107
    %p109 = scmp.ne.s32.totalorder %s97, %s98
    %p110 = scmp.eq.s32.totalorder %s25, 1
    %p111 = por %p109, %p110
    %p113 = scmp.ne.s32.totalorder %s98, %s112
    %p114 = scmp.eq.s32.totalorder %s25, 0
    %p115 = por %p113, %p114
    %s117 = sadd.s32 %s116, 1
    %p120 = scmp.eq.s32.totalorder %s19, 1
    %p121 = scmp.ne.s32.totalorder %s116, %s118
    %p122 = scmp.eq.s32.totalorder %s19, 0
    %p123 = por %p121, %p122
    %p124 = scmp.ne.s32.totalorder %s116, %s118
    %p125 = scmp.eq.s32.totalorder %s24, 1
    %p126 = por %p124, %p125
    %p127 = scmp.ne.s32.totalorder %s118, %s119
    %p128 = scmp.eq.s32.totalorder %s24, 0
    %p129 = por %p127, %p128
    %p130 = scmp.ne.s32.totalorder %s118, %s119
    %p131 = scmp.eq.s32.totalorder %s25, 1
    %p132 = por %p130, %p131
    %p134 = scmp.ne.s32.totalorder %s119, %s133
    %p135 = scmp.eq.s32.totalorder %s25, 0
    %p136 = por %p134, %p135
    %s138 = sadd.s32 %s137, 1
    %p141 = scmp.eq.s32.totalorder %s19, 1
    %p142 = scmp.ne.s32.totalorder %s137, %s139
    %p143 = scmp.eq.s32.totalorder %s19, 0
    %p144 = por %p142, %p143
    %p145 = scmp.ne.s32.totalorder %s137, %s139
    %p146 = scmp.eq.s32.totalorder %s24, 1
    %p147 = por %p145, %p146
    %p148 = scmp.ne.s32.totalorder %s139, %s140
    %p149 = scmp.eq.s32.totalorder %s24, 0
    %p150 = por %p148, %p149
    %p151 = scmp.ne.s32.totalorder %s139, %s140
    %p152 = scmp.eq.s32.totalorder %s25, 1
    %p153 = por %p151, %p152
    %p155 = scmp.ne.s32.totalorder %s140, %s154
    %p156 = scmp.eq.s32.totalorder %s25, 0
    %p157 = por %p155, %p156
    %s159 = sadd.s32 %s158, 1
    %p162 = scmp.eq.s32.totalorder %s19, 1
    %p163 = scmp.ne.s32.totalorder %s158, %s160
    %p164 = scmp.eq.s32.totalorder %s19, 0
    %p165 = por %p163, %p164
    %p166 = scmp.ne.s32.totalorder %s158, %s160
    %p167 = scmp.eq.s32.totalorder %s24, 1
    %p168 = por %p166, %p167
    %p169 = scmp.ne.s32.totalorder %s160, %s161
    %p170 = scmp.eq.s32.totalorder %s24, 0
    %p171 = por %p169, %p170
    %p172 = scmp.ne.s32.totalorder %s160, %s161
    %p173 = scmp.eq.s32.totalorder %s25, 1
    %p174 = por %p172, %p173
    %p176 = scmp.ne.s32.totalorder %s161, %s175
    %p177 = scmp.eq.s32.totalorder %s25, 0
    %p178 = por %p176, %p177
    %s180 = sadd.s32 %s179, 1
    %p183 = scmp.eq.s32.totalorder %s19, 1
    %p184 = scmp.ne.s32.totalorder %s179, %s181
    %p185 = scmp.eq.s32.totalorder %s19, 0
    %p186 = por %p184, %p185
    %p187 = scmp.ne.s32.totalorder %s179, %s181
    %p188 = scmp.eq.s32.totalorder %s24, 1
    %p189 = por %p187, %p188
    %p190 = scmp.ne.s32.totalorder %s181, %s182
    %p191 = scmp.eq.s32.totalorder %s24, 0
    %p192 = por %p190, %p191
    %p193 = scmp.ne.s32.totalorder %s181, %s182
    %p194 = scmp.eq.s32.totalorder %s25, 1
    %p195 = por %p193, %p194
    %p197 = scmp.ne.s32.totalorder %s182, %s196
    %p198 = scmp.eq.s32.totalorder %s25, 0
    %p199 = por %p197, %p198
    %s201 = sadd.s32 %s200, 1
    %p204 = scmp.eq.s32.totalorder %s19, 1
    %p205 = scmp.ne.s32.totalorder %s200, %s202
    %p206 = scmp.eq.s32.totalorder %s19, 0
    %p207 = por %p205, %p206
    %p208 = scmp.ne.s32.totalorder %s200, %s202
    %p209 = scmp.eq.s32.totalorder %s24, 1
    %p210 = por %p208, %p209
    %p211 = scmp.ne.s32.totalorder %s202, %s203
    %p212 = scmp.eq.s32.totalorder %s24, 0
    %p213 = por %p211, %p212
    %p214 = scmp.ne.s32.totalorder %s202, %s203
    %p215 = scmp.eq.s32.totalorder %s25, 1
    %p216 = por %p214, %p215
    %p218 = scmp.ne.s32.totalorder %s203, %s217
    %p219 = scmp.eq.s32.totalorder %s25, 0
    %p220 = por %p218, %p219
    %s222 = sadd.s32 %s221, 1
    %p225 = scmp.eq.s32.totalorder %s19, 1
    %p226 = scmp.ne.s32.totalorder %s221, %s223
    %p227 = scmp.eq.s32.totalorder %s19, 0
    %p228 = por %p226, %p227
    %p229 = scmp.ne.s32.totalorder %s221, %s223
    %p230 = scmp.eq.s32.totalorder %s24, 1
    %p231 = por %p229, %p230
    %p232 = scmp.ne.s32.totalorder %s223, %s224
    %p233 = scmp.eq.s32.totalorder %s24, 0
    %p234 = por %p232, %p233
    %p235 = scmp.ne.s32.totalorder %s223, %s224
    %p236 = scmp.eq.s32.totalorder %s25, 1
    %p237 = por %p235, %p236
    %p239 = scmp.ne.s32.totalorder %s224, %s238
    %p240 = scmp.eq.s32.totalorder %s25, 0
    %p241 = por %p239, %p240
    %s243 = sadd.s32 %s242, 1
    %p246 = scmp.eq.s32.totalorder %s19, 1
    %p247 = scmp.ne.s32.totalorder %s242, %s244
    %p248 = scmp.eq.s32.totalorder %s19, 0
    %p249 = por %p247, %p248
    %p250 = scmp.ne.s32.totalorder %s242, %s244
    %p251 = scmp.eq.s32.totalorder %s24, 1
    %p252 = por %p250, %p251
    %p253 = scmp.ne.s32.totalorder %s244, %s245
    %p254 = scmp.eq.s32.totalorder %s24, 0
    %p255 = por %p253, %p254
    %p256 = scmp.ne.s32.totalorder %s244, %s245
    %p257 = scmp.eq.s32.totalorder %s25, 1
    %p258 = por %p256, %p257
    %p260 = scmp.ne.s32.totalorder %s245, %s259
    %p261 = scmp.eq.s32.totalorder %s25, 0
    %p262 = por %p260, %p261
    %s264 = sadd.s32 %s263, 1
    %p267 = scmp.eq.s32.totalorder %s19, 1
    %p268 = scmp.ne.s32.totalorder %s263, %s265
    %p269 = scmp.eq.s32.totalorder %s19, 0
    %p270 = por %p268, %p269
    %p271 = scmp.ne.s32.totalorder %s263, %s265
    %p272 = scmp.eq.s32.totalorder %s24, 1
    %p273 = por %p271, %p272
    %p274 = scmp.ne.s32.totalorder %s265, %s266
    %p275 = scmp.eq.s32.totalorder %s24, 0
    %p276 = por %p274, %p275
    %p277 = scmp.ne.s32.totalorder %s265, %s266
    %p278 = scmp.eq.s32.totalorder %s25, 1
    %p279 = por %p277, %p278
    %p281 = scmp.ne.s32.totalorder %s266, %s280
    %p282 = scmp.eq.s32.totalorder %s25, 0
    %p283 = por %p281, %p282
    %s285 = sadd.s32 %s284, 1
    %p288 = scmp.eq.s32.totalorder %s19, 1
    %p289 = scmp.ne.s32.totalorder %s284, %s286
    %p290 = scmp.eq.s32.totalorder %s19, 0
    %p291 = por %p289, %p290
    %p292 = scmp.ne.s32.totalorder %s284, %s286
    %p293 = scmp.eq.s32.totalorder %s24, 1
    %p294 = por %p292, %p293
    %p295 = scmp.ne.s32.totalorder %s286, %s287
    %p296 = scmp.eq.s32.totalorder %s24, 0
    %p297 = por %p295, %p296
    %p298 = scmp.ne.s32.totalorder %s286, %s287
    %p299 = scmp.eq.s32.totalorder %s25, 1
    %p300 = por %p298, %p299
    %p302 = scmp.ne.s32.totalorder %s287, %s301
    %p303 = scmp.eq.s32.totalorder %s25, 0
    %p304 = por %p302, %p303
    %s305 = ssub.s32 %s19, %s26
    %p306 = scmp.eq.s32.totalorder %s305, 0
    %s308 = sadd.s32 %s307, 1
    %s309 = scalar_select %p306, %s307, %s308
    %p312 = pneg %p306
    %p313 = scmp.eq.s32.totalorder %s19, 1
    %p314 = por %p312, %p313
    %p315 = scmp.ne.s32.totalorder %s307, %s310
    %p316 = scmp.eq.s32.totalorder %s19, 0
    %p317 = por %p315, %p316
    %p318 = scmp.ne.s32.totalorder %s307, %s310
    %p319 = scmp.eq.s32.totalorder %s24, 1
    %p320 = por %p318, %p319
    %p321 = scmp.ne.s32.totalorder %s310, %s311
    %p322 = scmp.eq.s32.totalorder %s24, 0
    %p323 = por %p321, %p322
    %p324 = scmp.ne.s32.totalorder %s310, %s311
    %p325 = scmp.eq.s32.totalorder %s25, 1
    %p326 = por %p324, %p325
    %p328 = scmp.ne.s32.totalorder %s311, %s327
    %p329 = scmp.eq.s32.totalorder %s25, 0
    %p330 = por %p328, %p329
    %p331 = scmp.le.s32.totalorder 1, %s19
    %p332 = scmp.lt.s32.totalorder %s19, 3
    %p333 = pnand %p331, %p332
    %p334 = pneg %p333
    // Predicated region
    $region9: #{encoder_forward.2} parent=5 // pred_check
      _
    $region10: #{encoder_forward.2} parent=5 // pred_check_branch
      %336 = sbr.rel (%p333) target = $region12
    $region11: #{encoder_forward.2} parent=5 // pred_region
      %s337 = ssub.s32 %s19, 1
      // Predicated region
      $region13: #{encoder_forward.2} parent=11 // pred_check
        %p338 = pneg %p66
      $region14: #{encoder_forward.2} parent=11 // pred_check_branch
        %340 = sbr.rel (%p338) target = $region16
      $region15: #{encoder_forward.2} parent=11 // pred_region
        _
      $region16: #{encoder_forward.2} parent=11 // pred_fallthru
        _
      // Predicated region
      $region17: #{encoder_forward.2} parent=11 // pred_check
        %p341 = pneg %p87
      $region18: #{encoder_forward.2} parent=11 // pred_check_branch
        %343 = sbr.rel (%p341) target = $region20
      $region19: #{encoder_forward.2} parent=11 // pred_region
        _
      $region20: #{encoder_forward.2} parent=11 // pred_fallthru
        _
      // Predicated region
      $region21: #{encoder_forward.2} parent=11 // pred_check
        %p344 = pneg %p108
      $region22: #{encoder_forward.2} parent=11 // pred_check_branch
        %346 = sbr.rel (%p344) target = $region24
      $region23: #{encoder_forward.2} parent=11 // pred_region
        _
      $region24: #{encoder_forward.2} parent=11 // pred_fallthru
        _
      // Predicated region
      $region25: #{encoder_forward.2} parent=11 // pred_check
        %p347 = pneg %p129
      $region26: #{encoder_forward.2} parent=11 // pred_check_branch
        %349 = sbr.rel (%p347) target = $region28
      $region27: #{encoder_forward.2} parent=11 // pred_region
        _
      $region28: #{encoder_forward.2} parent=11 // pred_fallthru
        _
      // Predicated region
      $region29: #{encoder_forward.2} parent=11 // pred_check
        %p350 = pneg %p150
      $region30: #{encoder_forward.2} parent=11 // pred_check_branch
        %352 = sbr.rel (%p350) target = $region32
      $region31: #{encoder_forward.2} parent=11 // pred_region
        _
      $region32: #{encoder_forward.2} parent=11 // pred_fallthru
        _
      // Predicated region
      $region33: #{encoder_forward.2} parent=11 // pred_check
        %p353 = pneg %p171
      $region34: #{encoder_forward.2} parent=11 // pred_check_branch
        %355 = sbr.rel (%p353) target = $region36
      $region35: #{encoder_forward.2} parent=11 // pred_region
        _
      $region36: #{encoder_forward.2} parent=11 // pred_fallthru
        _
      // Predicated region
      $region37: #{encoder_forward.2} parent=11 // pred_check
        %p356 = pneg %p192
      $region38: #{encoder_forward.2} parent=11 // pred_check_branch
        %358 = sbr.rel (%p356) target = $region40
      $region39: #{encoder_forward.2} parent=11 // pred_region
        _
      $region40: #{encoder_forward.2} parent=11 // pred_fallthru
        _
      // Predicated region
      $region41: #{encoder_forward.2} parent=11 // pred_check
        %p359 = pneg %p213
      $region42: #{encoder_forward.2} parent=11 // pred_check_branch
        %361 = sbr.rel (%p359) target = $region44
      $region43: #{encoder_forward.2} parent=11 // pred_region
        _
      $region44: #{encoder_forward.2} parent=11 // pred_fallthru
        _
      // Predicated region
      $region45: #{encoder_forward.2} parent=11 // pred_check
        %p362 = pneg %p234
      $region46: #{encoder_forward.2} parent=11 // pred_check_branch
        %364 = sbr.rel (%p362) target = $region48
      $region47: #{encoder_forward.2} parent=11 // pred_region
        _
      $region48: #{encoder_forward.2} parent=11 // pred_fallthru
        _
      // Predicated region
      $region49: #{encoder_forward.2} parent=11 // pred_check
        %p365 = pneg %p255
      $region50: #{encoder_forward.2} parent=11 // pred_check_branch
        %367 = sbr.rel (%p365) target = $region52
      $region51: #{encoder_forward.2} parent=11 // pred_region
        _
      $region52: #{encoder_forward.2} parent=11 // pred_fallthru
        _
      // Predicated region
      $region53: #{encoder_forward.2} parent=11 // pred_check
        %p368 = pneg %p276
      $region54: #{encoder_forward.2} parent=11 // pred_check_branch
        %370 = sbr.rel (%p368) target = $region56
      $region55: #{encoder_forward.2} parent=11 // pred_region
        _
      $region56: #{encoder_forward.2} parent=11 // pred_fallthru
        _
      // Predicated region
      $region57: #{encoder_forward.2} parent=11 // pred_check
        %p371 = pneg %p297
      $region58: #{encoder_forward.2} parent=11 // pred_check_branch
        %373 = sbr.rel (%p371) target = $region60
      $region59: #{encoder_forward.2} parent=11 // pred_region
        _
      $region60: #{encoder_forward.2} parent=11 // pred_fallthru
        _
    $region12: #{encoder_forward.2} parent=5 // pred_fallthru
      _
    %p374 = scmp.lt.s32.totalorder %s19, 2
    // Predicated region
    $region61: #{encoder_forward.2} parent=5 // pred_check
      %p375 = pneg %p374
    $region62: #{encoder_forward.2} parent=5 // pred_check_branch
      %377 = sbr.rel (%p375) target = $region64
    $region63: #{encoder_forward.2} parent=5 // pred_region
      // Predicated region
      $region65: #{encoder_forward.2} parent=63 // pred_check
        %p378 = pneg %p39
      $region66: #{encoder_forward.2} parent=63 // pred_check_branch
        %380 = sbr.rel (%p378) target = $region68
      $region67: #{encoder_forward.2} parent=63 // pred_region
        %p381 = scmp.lt.s32.totalorder %s19, 1
        %s382 = scalar_select %p381, %s19, 1
        %s383 = smul.addr %s382, 32
        %s384 = smul.addr %s383, 8
        %s385 = scalar_lea.vmem %s0, %s384
      $region68: #{encoder_forward.2} parent=63 // pred_fallthru
        _
    $region64: #{encoder_forward.2} parent=5 // pred_fallthru
      _
    %p386 = scmp.le.s32.totalorder 1, %s19
    %p387 = scmp.lt.s32.totalorder %s19, 3
    %p388 = pnand %p386, %p387
    %p389 = pneg %p388
    // Predicated region
    $region69: #{encoder_forward.2} parent=5 // pred_check
      _
    $region70: #{encoder_forward.2} parent=5 // pred_check_branch
      %391 = sbr.rel (%p388) target = $region72
    $region71: #{encoder_forward.2} parent=5 // pred_region
      %s392 = ssub.s32 %s19, 1
      %p393 = scmp.lt.s32.totalorder %s24, 1
      %s394 = scalar_select %p393, %s24, 1
      %s395 = smul.addr %s394, 32
      %s396 = smul.addr %s395, 8
      %s397 = scalar_lea.vmem %s0, %s396
      %p398 = pneg %p45
      %p399 = pneg %p42
      %p400 = pneg %p66
      %p401 = pneg %p63
      %p402 = pneg %p87
      %p403 = pneg %p84
      %p404 = pneg %p108
      %p405 = pneg %p105
      %p406 = pneg %p129
      %p407 = pneg %p126
      %p408 = pneg %p150
      %p409 = pneg %p147
      %p410 = pneg %p171
      %p411 = pneg %p168
      %p412 = pneg %p192
      %p413 = pneg %p189
      %p414 = pneg %p213
      %p415 = pneg %p210
      %p416 = pneg %p234
      %p417 = pneg %p231
      %p418 = pneg %p255
      %p419 = pneg %p252
      %p420 = pneg %p276
      %p421 = pneg %p273
      %p422 = pneg %p297
      %p423 = pneg %p294
      %p424 = pneg %p323
      %p425 = pneg %p320
      %p426 = scmp.lt.s32.totalorder %s24, 1
      %s427 = scalar_select %p426, %s24, 1
      %s428 = smul.addr %s427, 8
      %s429 = smul.addr %s428, 8
      %s430 = scalar_lea.vmem %s13, %s429
      %p431 = scmp.lt.s32.totalorder %s24, 1
      %s432 = scalar_select %p431, %s24, 1
      %s433 = smul.addr %s432, 32
      %s434 = smul.addr %s433, 8
      %s435 = scalar_lea.vmem %s0, %s434
      %p436 = scmp.lt.s32.totalorder %s24, 1
      %s437 = scalar_select %p436, %s24, 1
      %s438 = smul.addr %s437, 8
      %s439 = smul.addr %s438, 8
      %s440 = scalar_lea.vmem %s13, %s439
      %v441 = vld [vmem:[%s435] sm:$0xff]
      %v442 = vld [vmem:[%s435 + $0x8] sm:$0xff]
      %v443 = vld [vmem:[%s435 + $0x10] sm:$0xff]
      %v444 = vld [vmem:[%s435 + $0x18] sm:$0xff]
      %v445 = vld [vmem:[%s435 + $0x20] sm:$0xff]
      %v446 = vld [vmem:[%s435 + $0x28] sm:$0xff]
      %v447 = vld [vmem:[%s435 + $0x30] sm:$0xff]
      %v448 = vld [vmem:[%s435 + $0x38] sm:$0xff]
      %v449 = vld [vmem:[%s435 + $0x40] sm:$0xff]
      %v450 = vld [vmem:[%s435 + $0x48] sm:$0xff]
      %v451 = vld [vmem:[%s435 + $0x50] sm:$0xff]
      %v452 = vld [vmem:[%s435 + $0x58] sm:$0xff]
      %v453 = vld [vmem:[%s435 + $0x60] sm:$0xff]
      %v454 = vld [vmem:[%s435 + $0x68] sm:$0xff]
      %v455 = vld [vmem:[%s435 + $0x70] sm:$0xff]
      %v456 = vld [vmem:[%s435 + $0x78] sm:$0xff]
      %v457 = vld [vmem:[%s435 + $0x80] sm:$0xff]
      %v458 = vld [vmem:[%s435 + $0x88] sm:$0xff]
      %v459 = vld [vmem:[%s435 + $0x90] sm:$0xff]
      %v460 = vld [vmem:[%s435 + $0x98] sm:$0xff]
      %v461 = vld [vmem:[%s435 + $0xa0] sm:$0xff]
      %v462 = vld [vmem:[%s435 + $0xa8] sm:$0xff]
      %v463 = vld [vmem:[%s435 + $0xb0] sm:$0xff]
      %v464 = vld [vmem:[%s435 + $0xb8] sm:$0xff]
      %v465 = vld [vmem:[%s435 + $0xc0] sm:$0xff]
      %v466 = vld [vmem:[%s435 + $0xc8] sm:$0xff]
      %v467 = vld [vmem:[%s435 + $0xd0] sm:$0xff]
      %v468 = vld [vmem:[%s435 + $0xd8] sm:$0xff]
      %v469 = vld [vmem:[%s435 + $0xe0] sm:$0xff]
      %v470 = vld [vmem:[%s435 + $0xe8] sm:$0xff]
      %v471 = vld [vmem:[%s435 + $0xf0] sm:$0xff]
      %v472 = vld [vmem:[%s435 + $0xf8] sm:$0xff]
      %vm473 = vcmask 31744
      %474 = vst.msk [vmem:[#allocation2] sm:$0xff] %vm473, 0.0
      %475 = vst.msk [vmem:[#allocation2 + $0x8] sm:$0xff] %vm473, 0.0
      %vm476 = vcmask 25600
      %477 = vst.msk [vmem:[#allocation2 + $0x10] sm:$0x3] %vm476, 0.0
      %478 = vst.msk [vmem:[#allocation2 + $0x18] sm:$0xff] %vm473, 0.0
      %479 = vst.msk [vmem:[#allocation2 + $0x20] sm:$0xff] %vm473, 0.0
      %480 = vst.msk [vmem:[#allocation2 + $0x28] sm:$0x3] %vm476, 0.0
      %481 = vst.msk [vmem:[#allocation2 + $0x30] sm:$0xff] %vm473, 0.0
      %482 = vst.msk [vmem:[#allocation2 + $0x38] sm:$0xff] %vm473, 0.0
      %483 = vst.msk [vmem:[#allocation2 + $0x40] sm:$0x3] %vm476, 0.0
      %484 = vst.msk [vmem:[#allocation2 + $0x48] sm:$0xff] %vm473, 0.0
      %485 = vst.msk [vmem:[#allocation2 + $0x50] sm:$0xff] %vm473, 0.0
      %486 = vst.msk [vmem:[#allocation2 + $0x58] sm:$0x3] %vm476, 0.0
      %487 = vst.msk [vmem:[#allocation2 + $0x60] sm:$0xff] %vm473, 0.0
      %488 = vst.msk [vmem:[#allocation2 + $0x68] sm:$0xff] %vm473, 0.0
      %489 = vst.msk [vmem:[#allocation2 + $0x70] sm:$0x3] %vm476, 0.0
      %490 = vst.msk [vmem:[#allocation2 + $0x78] sm:$0xff] %vm473, 0.0
      %491 = vst.msk [vmem:[#allocation2 + $0x80] sm:$0xff] %vm473, 0.0
      %492 = vst.msk [vmem:[#allocation2 + $0x88] sm:$0x3] %vm476, 0.0
      %493 = vst.msk [vmem:[#allocation2 + $0x90] sm:$0xff] %vm473, 0.0
      %494 = vst.msk [vmem:[#allocation2 + $0x98] sm:$0xff] %vm473, 0.0
      %495 = vst.msk [vmem:[#allocation2 + $0xa0] sm:$0x3] %vm476, 0.0
      %496 = vst.msk [vmem:[#allocation2 + $0xa8] sm:$0xff] %vm473, 0.0
      %497 = vst.msk [vmem:[#allocation2 + $0xb0] sm:$0xff] %vm473, 0.0
      %498 = vst.msk [vmem:[#allocation2 + $0xb8] sm:$0x3] %vm476, 0.0
      %499 = vst.msk [vmem:[#allocation2 + $0xc0] sm:$0xff] %vm473, 0.0
      %500 = vst.msk [vmem:[#allocation2 + $0xc8] sm:$0xff] %vm473, 0.0
      %501 = vst.msk [vmem:[#allocation2 + $0xd0] sm:$0x3] %vm476, 0.0
      %502 = vst.msk [vmem:[#allocation2 + $0xd8] sm:$0xff] %vm473, 0.0
      %503 = vst.msk [vmem:[#allocation2 + $0xe0] sm:$0xff] %vm473, 0.0
      %504 = vst.msk [vmem:[#allocation2 + $0xe8] sm:$0x3] %vm476, 0.0
      %505 = vst.msk [vmem:[#allocation2 + $0xf0] sm:$0xff] %vm473, 0.0
      %506 = vst.msk [vmem:[#allocation2 + $0xf8] sm:$0xff] %vm473, 0.0
      %507 = vst.msk [vmem:[#allocation2 + $0x100] sm:$0x3] %vm476, 0.0
      %508 = vst.msk [vmem:[#allocation2 + $0x108] sm:$0xff] %vm473, 0.0
      %509 = vst.msk [vmem:[#allocation2 + $0x110] sm:$0xff] %vm473, 0.0
      %510 = vst.msk [vmem:[#allocation2 + $0x118] sm:$0x3] %vm476, 0.0
      %511 = vst.msk [vmem:[#allocation2 + $0x120] sm:$0xff] %vm473, 0.0
      %512 = vst.msk [vmem:[#allocation2 + $0x128] sm:$0xff] %vm473, 0.0
      %513 = vst.msk [vmem:[#allocation2 + $0x130] sm:$0x3] %vm476, 0.0
      %514 = vst.msk [vmem:[#allocation2 + $0x138] sm:$0xff] %vm473, 0.0
      %515 = vst.msk [vmem:[#allocation2 + $0x140] sm:$0xff] %vm473, 0.0
      %516 = vst.msk [vmem:[#allocation2 + $0x148] sm:$0x3] %vm476, 0.0
      %517 = vst.msk [vmem:[#allocation2 + $0x150] sm:$0xff] %vm473, 0.0
      %518 = vst.msk [vmem:[#allocation2 + $0x158] sm:$0xff] %vm473, 0.0
      %519 = vst.msk [vmem:[#allocation2 + $0x160] sm:$0x3] %vm476, 0.0
      %520 = vst.msk [vmem:[#allocation2 + $0x168] sm:$0xff] %vm473, 0.0
      %521 = vst.msk [vmem:[#allocation2 + $0x170] sm:$0xff] %vm473, 0.0
      %522 = vst.msk [vmem:[#allocation2 + $0x178] sm:$0x3] %vm476, 0.0
      %523 = vst.msk [vmem:[#allocation2 + $0x180] sm:$0xff] %vm473, 0.0
      %524 = vst.msk [vmem:[#allocation2 + $0x188] sm:$0xff] %vm473, 0.0
      %525 = vst.msk [vmem:[#allocation2 + $0x190] sm:$0x3] %vm476, 0.0
      %526 = vst.msk [vmem:[#allocation2 + $0x198] sm:$0xff] %vm473, 0.0
      %527 = vst.msk [vmem:[#allocation2 + $0x1a0] sm:$0xff] %vm473, 0.0
      %528 = vst.msk [vmem:[#allocation2 + $0x1a8] sm:$0x3] %vm476, 0.0
      %s529 = scalar_lea.vmem [#allocation2], 24
      %530 = vst.msk [vmem:[%s529 + $0x1] sm:$0xff] %vm473, %v441
      %531 = vst.msk [vmem:[%s529 + $0x9] sm:$0xff] %vm473, %v442
      %532 = vst.msk [vmem:[%s529 + $0x19] sm:$0xff] %vm473, %v443
      %533 = vst.msk [vmem:[%s529 + $0x21] sm:$0xff] %vm473, %v444
      %534 = vst.msk [vmem:[%s529 + $0x31] sm:$0xff] %vm473, %v445
      %535 = vst.msk [vmem:[%s529 + $0x39] sm:$0xff] %vm473, %v446
      %536 = vst.msk [vmem:[%s529 + $0x49] sm:$0xff] %vm473, %v447
      %537 = vst.msk [vmem:[%s529 + $0x51] sm:$0xff] %vm473, %v448
      %538 = vst.msk [vmem:[%s529 + $0x61] sm:$0xff] %vm473, %v449
      %539 = vst.msk [vmem:[%s529 + $0x69] sm:$0xff] %vm473, %v450
      %540 = vst.msk [vmem:[%s529 + $0x79] sm:$0xff] %vm473, %v451
      %541 = vst.msk [vmem:[%s529 + $0x81] sm:$0xff] %vm473, %v452
      %542 = vst.msk [vmem:[%s529 + $0x91] sm:$0xff] %vm473, %v453
      %543 = vst.msk [vmem:[%s529 + $0x99] sm:$0xff] %vm473, %v454
      %544 = vst.msk [vmem:[%s529 + $0xa9] sm:$0xff] %vm473, %v455
      %545 = vst.msk [vmem:[%s529 + $0xb1] sm:$0xff] %vm473, %v456
      %546 = vst.msk [vmem:[%s529 + $0xc1] sm:$0xff] %vm473, %v457
      %547 = vst.msk [vmem:[%s529 + $0xc9] sm:$0xff] %vm473, %v458
      %548 = vst.msk [vmem:[%s529 + $0xd9] sm:$0xff] %vm473, %v459
      %549 = vst.msk [vmem:[%s529 + $0xe1] sm:$0xff] %vm473, %v460
      %550 = vst.msk [vmem:[%s529 + $0xf1] sm:$0xff] %vm473, %v461
      %551 = vst.msk [vmem:[%s529 + $0xf9] sm:$0xff] %vm473, %v462
      %552 = vst.msk [vmem:[%s529 + $0x109] sm:$0xff] %vm473, %v463
      %553 = vst.msk [vmem:[%s529 + $0x111] sm:$0xff] %vm473, %v464
      %554 = vst.msk [vmem:[%s529 + $0x121] sm:$0xff] %vm473, %v465
      %555 = vst.msk [vmem:[%s529 + $0x129] sm:$0xff] %vm473, %v466
      %556 = vst.msk [vmem:[%s529 + $0x139] sm:$0xff] %vm473, %v467
      %557 = vst.msk [vmem:[%s529 + $0x141] sm:$0xff] %vm473, %v468
      %558 = vst.msk [vmem:[%s529 + $0x151] sm:$0xff] %vm473, %v469
      %559 = vst.msk [vmem:[%s529 + $0x159] sm:$0xff] %vm473, %v470
      %560 = vst.msk [vmem:[%s529 + $0x169] sm:$0xff] %vm473, %v471
      %561 = vst.msk [vmem:[%s529 + $0x171] sm:$0xff] %vm473, %v472
      %v562 = vld [vmem:[#allocation2] sm:$0xff]
      %v563 = vld [vmem:[#allocation2 + $0x8] sm:$0xff]
      %v564 = vld [vmem:[#allocation2 + $0x18] sm:$0xff]
      %v565 = vld [vmem:[#allocation2 + $0x20] sm:$0xff]
      %v566 = vld [vmem:[#allocation2 + $0x30] sm:$0xff]
      %v567 = vld [vmem:[#allocation2 + $0x38] sm:$0xff]
      %v568 = vld [vmem:[#allocation2 + $0x48] sm:$0xff]
      %v569 = vld [vmem:[#allocation2 + $0x50] sm:$0xff]
      %v570 = vld [vmem:[#allocation2 + $0x60] sm:$0xff]
      %v571 = vld [vmem:[#allocation2 + $0x68] sm:$0xff]
      %v572 = vld [vmem:[#allocation2 + $0x78] sm:$0xff]
      %v573 = vld [vmem:[#allocation2 + $0x80] sm:$0xff]
      %v574 = vld [vmem:[#allocation2 + $0x90] sm:$0xff]
      %v575 = vld [vmem:[#allocation2 + $0x98] sm:$0xff]
      %v576 = vld [vmem:[#allocation2 + $0xa8] sm:$0xff]
      %v577 = vld [vmem:[#allocation2 + $0xb0] sm:$0xff]
      %v578 = vld [vmem:[#allocation2 + $0xc0] sm:$0xff]
      %v579 = vld [vmem:[#allocation2 + $0xc8] sm:$0xff]
      %v580 = vld [vmem:[#allocation2 + $0xd8] sm:$0xff]
      %v581 = vld [vmem:[#allocation2 + $0xe0] sm:$0xff]
      %v582 = vld [vmem:[#allocation2 + $0xf0] sm:$0xff]
      %v583 = vld [vmem:[#allocation2 + $0xf8] sm:$0xff]
      %v584 = vld [vmem:[#allocation2 + $0x108] sm:$0xff]
      %v585 = vld [vmem:[#allocation2 + $0x110] sm:$0xff]
      %v586 = vld [vmem:[#allocation2 + $0x120] sm:$0xff]
      %v587 = vld [vmem:[#allocation2 + $0x128] sm:$0xff]
      %v588 = vld [vmem:[#allocation2 + $0x138] sm:$0xff]
      %v589 = vld [vmem:[#allocation2 + $0x140] sm:$0xff]
      %v590 = vld [vmem:[#allocation2 + $0x150] sm:$0xff]
      %v591 = vld [vmem:[#allocation2 + $0x158] sm:$0xff]
      %v592 = vld [vmem:[#allocation2 + $0x168] sm:$0xff]
      %v593 = vld [vmem:[#allocation2 + $0x170] sm:$0xff]
      %v594 = vld [vmem:[%s1] sm:$0xf]
      %v595 = vld [vmem:[#allocation2 + $0x1] sm:$0xff]
      %v596 = vld [vmem:[#allocation2 + $0x9] sm:$0xff]
      %v597 = vld [vmem:[#allocation2 + $0x19] sm:$0xff]
      %v598 = vld [vmem:[#allocation2 + $0x21] sm:$0xff]
      %v599 = vld [vmem:[#allocation2 + $0x31] sm:$0xff]
      %v600 = vld [vmem:[#allocation2 + $0x39] sm:$0xff]
      %v601 = vld [vmem:[#allocation2 + $0x49] sm:$0xff]
      %v602 = vld [vmem:[#allocation2 + $0x51] sm:$0xff]
      %v603 = vld [vmem:[#allocation2 + $0x61] sm:$0xff]
      %v604 = vld [vmem:[#allocation2 + $0x69] sm:$0xff]
      %v605 = vld [vmem:[#allocation2 + $0x79] sm:$0xff]
      %v606 = vld [vmem:[#allocation2 + $0x81] sm:$0xff]
      %v607 = vld [vmem:[#allocation2 + $0x91] sm:$0xff]
      %v608 = vld [vmem:[#allocation2 + $0x99] sm:$0xff]
      %v609 = vld [vmem:[#allocation2 + $0xa9] sm:$0xff]
      %v610 = vld [vmem:[#allocation2 + $0xb1] sm:$0xff]
      %v611 = vld [vmem:[#allocation2 + $0xc1] sm:$0xff]
      %v612 = vld [vmem:[#allocation2 + $0xc9] sm:$0xff]
      %v613 = vld [vmem:[#allocation2 + $0xd9] sm:$0xff]
      %v614 = vld [vmem:[#allocation2 + $0xe1] sm:$0xff]
      %v615 = vld [vmem:[#allocation2 + $0xf1] sm:$0xff]
      %v616 = vld [vmem:[#allocation2 + $0xf9] sm:$0xff]
      %v617 = vld [vmem:[#allocation2 + $0x109] sm:$0xff]
      %v618 = vld [vmem:[#allocation2 + $0x111] sm:$0xff]
      %v619 = vld [vmem:[#allocation2 + $0x121] sm:$0xff]
      %v620 = vld [vmem:[#allocation2 + $0x129] sm:$0xff]
      %v621 = vld [vmem:[#allocation2 + $0x139] sm:$0xff]
      %v622 = vld [vmem:[#allocation2 + $0x141] sm:$0xff]
      %v623 = vld [vmem:[#allocation2 + $0x151] sm:$0xff]
      %v624 = vld [vmem:[#allocation2 + $0x159] sm:$0xff]
      %v625 = vld [vmem:[#allocation2 + $0x169] sm:$0xff]
      %v626 = vld [vmem:[#allocation2 + $0x171] sm:$0xff]
      %s627 = scalar_lea.vmem %s1, 4
      %v628 = vld [vmem:[%s627] sm:$0xf]
      %v630 = vsel %vm473, %v595, 0
      %v633 = vsel %vm473, %v596, 0
      %v636 = vsel %vm473, %v597, 0
      %v639 = vsel %vm473, %v598, 0
      %v642 = vsel %vm473, %v599, 0
      %v645 = vsel %vm473, %v600, 0
      %v648 = vsel %vm473, %v601, 0
      %v651 = vsel %vm473, %v602, 0
      %v654 = vsel %vm473, %v603, 0
      %v657 = vsel %vm473, %v604, 0
      %v660 = vsel %vm473, %v605, 0
      %v663 = vsel %vm473, %v606, 0
      %v666 = vsel %vm473, %v607, 0
      %v669 = vsel %vm473, %v608, 0
      %v672 = vsel %vm473, %v609, 0
      %v675 = vsel %vm473, %v610, 0
      %v678 = vsel %vm473, %v611, 0
      %v681 = vsel %vm473, %v612, 0
      %v684 = vsel %vm473, %v613, 0
      %v687 = vsel %vm473, %v614, 0
      %v690 = vsel %vm473, %v615, 0
      %v693 = vsel %vm473, %v616, 0
      %v696 = vsel %vm473, %v617, 0
      %v699 = vsel %vm473, %v618, 0
      %v702 = vsel %vm473, %v619, 0
      %v705 = vsel %vm473, %v620, 0
      %v708 = vsel %vm473, %v621, 0
      %v711 = vsel %vm473, %v622, 0
      %v714 = vsel %vm473, %v623, 0
      %v717 = vsel %vm473, %v624, 0
      %v720 = vsel %vm473, %v625, 0
      %v723 = vsel %vm473, %v626, 0
      %vm725 = vcmask 1043456
      %v727 = vsel %vm725, %v628, 0
      %729 = vmatpush.msra.mxu0 0.0
      %730 = vmatpush.msra.mxu0 0.0
      %731 = vmatpush.msra.mxu0 0.0
      %732 = vmatpush.msra.mxu0 0.0
      %733 = vmatpush.msra.mxu0 0.0
      %734 = vmatpush.msra.mxu0 0.0
      %735 = vmatpush.msra.mxu0 0.0
      %736 = vmatpush.msra.mxu0 0.0
      %737 = vmatpush.msra.mxu0 0.0
      %738 = vmatpush.msra.mxu0 0.0
      %739 = vmatpush.msra.mxu0 0.0
      %740 = vmatpush.msra.mxu0 0.0
      %741 = vmatpush.msra.mxu0 0.0
      %742 = vmatpush.msra.mxu0 0.0
      %743 = vmatpush.msra.mxu0 0.0
      %744 = vmatpush.msra.mxu0 %v727
      %745 = vmatmul.f32.gmra.mxu0 %v630
      %v746 = vpop.f32.mrf.mxu0
      %v747 = vadd.f32 0.0, %v746
      %748 = vmatmul.f32.gmra.mxu0 %v633
      %v749 = vpop.f32.mrf.mxu0
      %v750 = vadd.f32 0.0, %v749
      %751 = vmatmul.f32.gmra.mxu0 %v636
      %v752 = vpop.f32.mrf.mxu0
      %v753 = vadd.f32 0.0, %v752
      %754 = vmatmul.f32.gmra.mxu0 %v639
      %v755 = vpop.f32.mrf.mxu0
      %v756 = vadd.f32 0.0, %v755
      %757 = vmatmul.f32.gmra.mxu0 %v642
      %v758 = vpop.f32.mrf.mxu0
      %v759 = vadd.f32 0.0, %v758
      %760 = vmatmul.f32.gmra.mxu0 %v645
      %v761 = vpop.f32.mrf.mxu0
      %v762 = vadd.f32 0.0, %v761
      %763 = vmatmul.f32.gmra.mxu0 %v648
      %v764 = vpop.f32.mrf.mxu0
      %v765 = vadd.f32 0.0, %v764
      %766 = vmatmul.f32.gmra.mxu0 %v651
      %v767 = vpop.f32.mrf.mxu0
      %v768 = vadd.f32 0.0, %v767
      %769 = vmatmul.f32.gmra.mxu0 %v654
      %v770 = vpop.f32.mrf.mxu0
      %v771 = vadd.f32 0.0, %v770
      %772 = vmatmul.f32.gmra.mxu0 %v657
      %v773 = vpop.f32.mrf.mxu0
      %v774 = vadd.f32 0.0, %v773
      %775 = vmatmul.f32.gmra.mxu0 %v660
      %v776 = vpop.f32.mrf.mxu0
      %v777 = vadd.f32 0.0, %v776
      %778 = vmatmul.f32.gmra.mxu0 %v663
      %v779 = vpop.f32.mrf.mxu0
      %v780 = vadd.f32 0.0, %v779
      %781 = vmatmul.f32.gmra.mxu0 %v666
      %v782 = vpop.f32.mrf.mxu0
      %v783 = vadd.f32 0.0, %v782
      %784 = vmatmul.f32.gmra.mxu0 %v669
      %v785 = vpop.f32.mrf.mxu0
      %v786 = vadd.f32 0.0, %v785
      %787 = vmatmul.f32.gmra.mxu0 %v672
      %v788 = vpop.f32.mrf.mxu0
      %v789 = vadd.f32 0.0, %v788
      %790 = vmatmul.f32.gmra.mxu0 %v675
      %v791 = vpop.f32.mrf.mxu0
      %v792 = vadd.f32 0.0, %v791
      %793 = vmatmul.f32.gmra.mxu0 %v678
      %v794 = vpop.f32.mrf.mxu0
      %v795 = vadd.f32 0.0, %v794
      %796 = vmatmul.f32.gmra.mxu0 %v681
      %v797 = vpop.f32.mrf.mxu0
      %v798 = vadd.f32 0.0, %v797
      %799 = vmatmul.f32.gmra.mxu0 %v684
      %v800 = vpop.f32.mrf.mxu0
      %v801 = vadd.f32 0.0, %v800
      %802 = vmatmul.f32.gmra.mxu0 %v687
      %v803 = vpop.f32.mrf.mxu0
      %v804 = vadd.f32 0.0, %v803
      %805 = vmatmul.f32.gmra.mxu0 %v690
      %v806 = vpop.f32.mrf.mxu0
      %v807 = vadd.f32 0.0, %v806
      %808 = vmatmul.f32.gmra.mxu0 %v693
      %v809 = vpop.f32.mrf.mxu0
      %v810 = vadd.f32 0.0, %v809
      %811 = vmatmul.f32.gmra.mxu0 %v696
      %v812 = vpop.f32.mrf.mxu0
      %v813 = vadd.f32 0.0, %v812
      %814 = vmatmul.f32.gmra.mxu0 %v699
      %v815 = vpop.f32.mrf.mxu0
      %v816 = vadd.f32 0.0, %v815
      %817 = vmatmul.f32.gmra.mxu0 %v702
      %v818 = vpop.f32.mrf.mxu0
      %v819 = vadd.f32 0.0, %v818
      %820 = vmatmul.f32.gmra.mxu0 %v705
      %v821 = vpop.f32.mrf.mxu0
      %v822 = vadd.f32 0.0, %v821
      %823 = vmatmul.f32.gmra.mxu0 %v708
      %v824 = vpop.f32.mrf.mxu0
      %v825 = vadd.f32 0.0, %v824
      %826 = vmatmul.f32.gmra.mxu0 %v711
      %v827 = vpop.f32.mrf.mxu0
      %v828 = vadd.f32 0.0, %v827
      %829 = vmatmul.f32.gmra.mxu0 %v714
      %v830 = vpop.f32.mrf.mxu0
      %v831 = vadd.f32 0.0, %v830
      %832 = vmatmul.f32.gmra.mxu0 %v717
      %v833 = vpop.f32.mrf.mxu0
      %v834 = vadd.f32 0.0, %v833
      %835 = vmatmul.f32.gmra.mxu0 %v720
      %v836 = vpop.f32.mrf.mxu0
      %v837 = vadd.f32 0.0, %v836
      %838 = vmatmul.f32.gmra.mxu0 %v723
      %v839 = vpop.f32.mrf.mxu0
      %v840 = vadd.f32 0.0, %v839
      %841 = vdwg.mxu0
      %v843 = vsel %vm473, %v562, 0
      %v846 = vsel %vm473, %v563, 0
      %v849 = vsel %vm473, %v564, 0
      %v852 = vsel %vm473, %v565, 0
      %v855 = vsel %vm473, %v566, 0
      %v858 = vsel %vm473, %v567, 0
      %v861 = vsel %vm473, %v568, 0
      %v864 = vsel %vm473, %v569, 0
      %v867 = vsel %vm473, %v570, 0
      %v870 = vsel %vm473, %v571, 0
      %v873 = vsel %vm473, %v572, 0
      %v876 = vsel %vm473, %v573, 0
      %v879 = vsel %vm473, %v574, 0
      %v882 = vsel %vm473, %v575, 0
      %v885 = vsel %vm473, %v576, 0
      %v888 = vsel %vm473, %v577, 0
      %v891 = vsel %vm473, %v578, 0
      %v894 = vsel %vm473, %v579, 0
      %v897 = vsel %vm473, %v580, 0
      %v900 = vsel %vm473, %v581, 0
      %v903 = vsel %vm473, %v582, 0
      %v906 = vsel %vm473, %v583, 0
      %v909 = vsel %vm473, %v584, 0
      %v912 = vsel %vm473, %v585, 0
      %v915 = vsel %vm473, %v586, 0
      %v918 = vsel %vm473, %v587, 0
      %v921 = vsel %vm473, %v588, 0
      %v924 = vsel %vm473, %v589, 0
      %v927 = vsel %vm473, %v590, 0
      %v930 = vsel %vm473, %v591, 0
      %v933 = vsel %vm473, %v592, 0
      %v936 = vsel %vm473, %v593, 0
      %v939 = vsel %vm725, %v594, 0
      %941 = vmatpush.msra.mxu0 0.0
      %942 = vmatpush.msra.mxu0 0.0
      %943 = vmatpush.msra.mxu0 0.0
      %944 = vmatpush.msra.mxu0 0.0
      %945 = vmatpush.msra.mxu0 0.0
      %946 = vmatpush.msra.mxu0 0.0
      %947 = vmatpush.msra.mxu0 0.0
      %948 = vmatpush.msra.mxu0 0.0
      %949 = vmatpush.msra.mxu0 0.0
      %950 = vmatpush.msra.mxu0 0.0
      %951 = vmatpush.msra.mxu0 0.0
      %952 = vmatpush.msra.mxu0 0.0
      %953 = vmatpush.msra.mxu0 0.0
      %954 = vmatpush.msra.mxu0 0.0
      %955 = vmatpush.msra.mxu0 0.0
      %956 = vmatpush.msra.mxu0 %v939
      %957 = vmatmul.f32.gmra.mxu0 %v843
      %v958 = vpop.f32.mrf.mxu0
      %v959 = vadd.f32 %v747, %v958
      %960 = vmatmul.f32.gmra.mxu0 %v846
      %v961 = vpop.f32.mrf.mxu0
      %v962 = vadd.f32 %v750, %v961
      %963 = vmatmul.f32.gmra.mxu0 %v849
      %v964 = vpop.f32.mrf.mxu0
      %v965 = vadd.f32 %v753, %v964
      %966 = vmatmul.f32.gmra.mxu0 %v852
      %v967 = vpop.f32.mrf.mxu0
      %v968 = vadd.f32 %v756, %v967
      %969 = vmatmul.f32.gmra.mxu0 %v855
      %v970 = vpop.f32.mrf.mxu0
      %v971 = vadd.f32 %v759, %v970
      %972 = vmatmul.f32.gmra.mxu0 %v858
      %v973 = vpop.f32.mrf.mxu0
      %v974 = vadd.f32 %v762, %v973
      %975 = vmatmul.f32.gmra.mxu0 %v861
      %v976 = vpop.f32.mrf.mxu0
      %v977 = vadd.f32 %v765, %v976
      %978 = vmatmul.f32.gmra.mxu0 %v864
      %v979 = vpop.f32.mrf.mxu0
      %v980 = vadd.f32 %v768, %v979
      %981 = vmatmul.f32.gmra.mxu0 %v867
      %v982 = vpop.f32.mrf.mxu0
      %v983 = vadd.f32 %v771, %v982
      %984 = vmatmul.f32.gmra.mxu0 %v870
      %v985 = vpop.f32.mrf.mxu0
      %v986 = vadd.f32 %v774, %v985
      %987 = vmatmul.f32.gmra.mxu0 %v873
      %v988 = vpop.f32.mrf.mxu0
      %v989 = vadd.f32 %v777, %v988
      %990 = vmatmul.f32.gmra.mxu0 %v876
      %v991 = vpop.f32.mrf.mxu0
      %v992 = vadd.f32 %v780, %v991
      %993 = vmatmul.f32.gmra.mxu0 %v879
      %v994 = vpop.f32.mrf.mxu0
      %v995 = vadd.f32 %v783, %v994
      %996 = vmatmul.f32.gmra.mxu0 %v882
      %v997 = vpop.f32.mrf.mxu0
      %v998 = vadd.f32 %v786, %v997
      %999 = vmatmul.f32.gmra.mxu0 %v885
      %v1000 = vpop.f32.mrf.mxu0
      %v1001 = vadd.f32 %v789, %v1000
      %1002 = vmatmul.f32.gmra.mxu0 %v888
      %v1003 = vpop.f32.mrf.mxu0
      %v1004 = vadd.f32 %v792, %v1003
      %1005 = vmatmul.f32.gmra.mxu0 %v891
      %v1006 = vpop.f32.mrf.mxu0
      %v1007 = vadd.f32 %v795, %v1006
      %1008 = vmatmul.f32.gmra.mxu0 %v894
      %v1009 = vpop.f32.mrf.mxu0
      %v1010 = vadd.f32 %v798, %v1009
      %1011 = vmatmul.f32.gmra.mxu0 %v897
      %v1012 = vpop.f32.mrf.mxu0
      %v1013 = vadd.f32 %v801, %v1012
      %1014 = vmatmul.f32.gmra.mxu0 %v900
      %v1015 = vpop.f32.mrf.mxu0
      %v1016 = vadd.f32 %v804, %v1015
      %1017 = vmatmul.f32.gmra.mxu0 %v903
      %v1018 = vpop.f32.mrf.mxu0
      %v1019 = vadd.f32 %v807, %v1018
      %1020 = vmatmul.f32.gmra.mxu0 %v906
      %v1021 = vpop.f32.mrf.mxu0
      %v1022 = vadd.f32 %v810, %v1021
      %1023 = vmatmul.f32.gmra.mxu0 %v909
      %v1024 = vpop.f32.mrf.mxu0
      %v1025 = vadd.f32 %v813, %v1024
      %1026 = vmatmul.f32.gmra.mxu0 %v912
      %v1027 = vpop.f32.mrf.mxu0
      %v1028 = vadd.f32 %v816, %v1027
      %1029 = vmatmul.f32.gmra.mxu0 %v915
      %v1030 = vpop.f32.mrf.mxu0
      %v1031 = vadd.f32 %v819, %v1030
      %1032 = vmatmul.f32.gmra.mxu0 %v918
      %v1033 = vpop.f32.mrf.mxu0
      %v1034 = vadd.f32 %v822, %v1033
      %1035 = vmatmul.f32.gmra.mxu0 %v921
      %v1036 = vpop.f32.mrf.mxu0
      %v1037 = vadd.f32 %v825, %v1036
      %1038 = vmatmul.f32.gmra.mxu0 %v924
      %v1039 = vpop.f32.mrf.mxu0
      %v1040 = vadd.f32 %v828, %v1039
      %1041 = vmatmul.f32.gmra.mxu0 %v927
      %v1042 = vpop.f32.mrf.mxu0
      %v1043 = vadd.f32 %v831, %v1042
      %1044 = vmatmul.f32.gmra.mxu0 %v930
      %v1045 = vpop.f32.mrf.mxu0
      %v1046 = vadd.f32 %v834, %v1045
      %1047 = vmatmul.f32.gmra.mxu0 %v933
      %v1048 = vpop.f32.mrf.mxu0
      %v1049 = vadd.f32 %v837, %v1048
      %1050 = vmatmul.f32.gmra.mxu0 %v936
      %v1051 = vpop.f32.mrf.mxu0
      %v1052 = vadd.f32 %v840, %v1051
      %1053 = vdwg.mxu0
      %v1054 = vld [vmem:[#allocation2 + $0x2] sm:$0xff]
      %v1055 = vld [vmem:[#allocation2 + $0xa] sm:$0xff]
      %v1056 = vld [vmem:[#allocation2 + $0x1a] sm:$0xff]
      %v1057 = vld [vmem:[#allocation2 + $0x22] sm:$0xff]
      %v1058 = vld [vmem:[#allocation2 + $0x32] sm:$0xff]
      %v1059 = vld [vmem:[#allocation2 + $0x3a] sm:$0xff]
      %v1060 = vld [vmem:[#allocation2 + $0x4a] sm:$0xff]
      %v1061 = vld [vmem:[#allocation2 + $0x52] sm:$0xff]
      %v1062 = vld [vmem:[#allocation2 + $0x62] sm:$0xff]
      %v1063 = vld [vmem:[#allocation2 + $0x6a] sm:$0xff]
      %v1064 = vld [vmem:[#allocation2 + $0x7a] sm:$0xff]
      %v1065 = vld [vmem:[#allocation2 + $0x82] sm:$0xff]
      %v1066 = vld [vmem:[#allocation2 + $0x92] sm:$0xff]
      %v1067 = vld [vmem:[#allocation2 + $0x9a] sm:$0xff]
      %v1068 = vld [vmem:[#allocation2 + $0xaa] sm:$0xff]
      %v1069 = vld [vmem:[#allocation2 + $0xb2] sm:$0xff]
      %v1070 = vld [vmem:[#allocation2 + $0xc2] sm:$0xff]
      %v1071 = vld [vmem:[#allocation2 + $0xca] sm:$0xff]
      %v1072 = vld [vmem:[#allocation2 + $0xda] sm:$0xff]
      %v1073 = vld [vmem:[#allocation2 + $0xe2] sm:$0xff]
      %v1074 = vld [vmem:[#allocation2 + $0xf2] sm:$0xff]
      %v1075 = vld [vmem:[#allocation2 + $0xfa] sm:$0xff]
      %v1076 = vld [vmem:[#allocation2 + $0x10a] sm:$0xff]
      %v1077 = vld [vmem:[#allocation2 + $0x112] sm:$0xff]
      %v1078 = vld [vmem:[#allocation2 + $0x122] sm:$0xff]
      %v1079 = vld [vmem:[#allocation2 + $0x12a] sm:$0xff]
      %v1080 = vld [vmem:[#allocation2 + $0x13a] sm:$0xff]
      %v1081 = vld [vmem:[#allocation2 + $0x142] sm:$0xff]
      %v1082 = vld [vmem:[#allocation2 + $0x152] sm:$0xff]
      %v1083 = vld [vmem:[#allocation2 + $0x15a] sm:$0xff]
      %v1084 = vld [vmem:[#allocation2 + $0x16a] sm:$0xff]
      %v1085 = vld [vmem:[#allocation2 + $0x172] sm:$0xff]
      %s1086 = scalar_lea.vmem %s1, 8
      %v1087 = vld [vmem:[%s1086] sm:$0xf]
      %v1089 = vsel %vm473, %v1054, 0
      %v1092 = vsel %vm473, %v1055, 0
      %v1095 = vsel %vm473, %v1056, 0
      %v1098 = vsel %vm473, %v1057, 0
      %v1101 = vsel %vm473, %v1058, 0
      %v1104 = vsel %vm473, %v1059, 0
      %v1107 = vsel %vm473, %v1060, 0
      %v1110 = vsel %vm473, %v1061, 0
      %v1113 = vsel %vm473, %v1062, 0
      %v1116 = vsel %vm473, %v1063, 0
      %v1119 = vsel %vm473, %v1064, 0
      %v1122 = vsel %vm473, %v1065, 0
      %v1125 = vsel %vm473, %v1066, 0
      %v1128 = vsel %vm473, %v1067, 0
      %v1131 = vsel %vm473, %v1068, 0
      %v1134 = vsel %vm473, %v1069, 0
      %v1137 = vsel %vm473, %v1070, 0
      %v1140 = vsel %vm473, %v1071, 0
      %v1143 = vsel %vm473, %v1072, 0
      %v1146 = vsel %vm473, %v1073, 0
      %v1149 = vsel %vm473, %v1074, 0
      %v1152 = vsel %vm473, %v1075, 0
      %v1155 = vsel %vm473, %v1076, 0
      %v1158 = vsel %vm473, %v1077, 0
      %v1161 = vsel %vm473, %v1078, 0
      %v1164 = vsel %vm473, %v1079, 0
      %v1167 = vsel %vm473, %v1080, 0
      %v1170 = vsel %vm473, %v1081, 0
      %v1173 = vsel %vm473, %v1082, 0
      %v1176 = vsel %vm473, %v1083, 0
      %v1179 = vsel %vm473, %v1084, 0
      %v1182 = vsel %vm473, %v1085, 0
      %v1185 = vsel %vm725, %v1087, 0
      %1187 = vmatpush.msra.mxu0 0.0
      %1188 = vmatpush.msra.mxu0 0.0
      %1189 = vmatpush.msra.mxu0 0.0
      %1190 = vmatpush.msra.mxu0 0.0
      %1191 = vmatpush.msra.mxu0 0.0
      %1192 = vmatpush.msra.mxu0 0.0
      %1193 = vmatpush.msra.mxu0 0.0
      %1194 = vmatpush.msra.mxu0 0.0
      %1195 = vmatpush.msra.mxu0 0.0
      %1196 = vmatpush.msra.mxu0 0.0
      %1197 = vmatpush.msra.mxu0 0.0
      %1198 = vmatpush.msra.mxu0 0.0
      %1199 = vmatpush.msra.mxu0 0.0
      %1200 = vmatpush.msra.mxu0 0.0
      %1201 = vmatpush.msra.mxu0 0.0
      %1202 = vmatpush.msra.mxu0 %v1185
      %1203 = vmatmul.f32.gmra.mxu0 %v1089
      %v1204 = vpop.f32.mrf.mxu0
      %v1205 = vadd.f32 0.0, %v1204
      %1206 = vmatmul.f32.gmra.mxu0 %v1092
      %v1207 = vpop.f32.mrf.mxu0
      %v1208 = vadd.f32 0.0, %v1207
      %1209 = vmatmul.f32.gmra.mxu0 %v1095
      %v1210 = vpop.f32.mrf.mxu0
      %v1211 = vadd.f32 0.0, %v1210
      %1212 = vmatmul.f32.gmra.mxu0 %v1098
      %v1213 = vpop.f32.mrf.mxu0
      %v1214 = vadd.f32 0.0, %v1213
      %1215 = vmatmul.f32.gmra.mxu0 %v1101
      %v1216 = vpop.f32.mrf.mxu0
      %v1217 = vadd.f32 0.0, %v1216
      %1218 = vmatmul.f32.gmra.mxu0 %v1104
      %v1219 = vpop.f32.mrf.mxu0
      %v1220 = vadd.f32 0.0, %v1219
      %1221 = vmatmul.f32.gmra.mxu0 %v1107
      %v1222 = vpop.f32.mrf.mxu0
      %v1223 = vadd.f32 0.0, %v1222
      %1224 = vmatmul.f32.gmra.mxu0 %v1110
      %v1225 = vpop.f32.mrf.mxu0
      %v1226 = vadd.f32 0.0, %v1225
      %1227 = vmatmul.f32.gmra.mxu0 %v1113
      %v1228 = vpop.f32.mrf.mxu0
      %v1229 = vadd.f32 0.0, %v1228
      %1230 = vmatmul.f32.gmra.mxu0 %v1116
      %v1231 = vpop.f32.mrf.mxu0
      %v1232 = vadd.f32 0.0, %v1231
      %1233 = vmatmul.f32.gmra.mxu0 %v1119
      %v1234 = vpop.f32.mrf.mxu0
      %v1235 = vadd.f32 0.0, %v1234
      %1236 = vmatmul.f32.gmra.mxu0 %v1122
      %v1237 = vpop.f32.mrf.mxu0
      %v1238 = vadd.f32 0.0, %v1237
      %1239 = vmatmul.f32.gmra.mxu0 %v1125
      %v1240 = vpop.f32.mrf.mxu0
      %v1241 = vadd.f32 0.0, %v1240
      %1242 = vmatmul.f32.gmra.mxu0 %v1128
      %v1243 = vpop.f32.mrf.mxu0
      %v1244 = vadd.f32 0.0, %v1243
      %1245 = vmatmul.f32.gmra.mxu0 %v1131
      %v1246 = vpop.f32.mrf.mxu0
      %v1247 = vadd.f32 0.0, %v1246
      %1248 = vmatmul.f32.gmra.mxu0 %v1134
      %v1249 = vpop.f32.mrf.mxu0
      %v1250 = vadd.f32 0.0, %v1249
      %1251 = vmatmul.f32.gmra.mxu0 %v1137
      %v1252 = vpop.f32.mrf.mxu0
      %v1253 = vadd.f32 0.0, %v1252
      %1254 = vmatmul.f32.gmra.mxu0 %v1140
      %v1255 = vpop.f32.mrf.mxu0
      %v1256 = vadd.f32 0.0, %v1255
      %1257 = vmatmul.f32.gmra.mxu0 %v1143
      %v1258 = vpop.f32.mrf.mxu0
      %v1259 = vadd.f32 0.0, %v1258
      %1260 = vmatmul.f32.gmra.mxu0 %v1146
      %v1261 = vpop.f32.mrf.mxu0
      %v1262 = vadd.f32 0.0, %v1261
      %1263 = vmatmul.f32.gmra.mxu0 %v1149
      %v1264 = vpop.f32.mrf.mxu0
      %v1265 = vadd.f32 0.0, %v1264
      %1266 = vmatmul.f32.gmra.mxu0 %v1152
      %v1267 = vpop.f32.mrf.mxu0
      %v1268 = vadd.f32 0.0, %v1267
      %1269 = vmatmul.f32.gmra.mxu0 %v1155
      %v1270 = vpop.f32.mrf.mxu0
      %v1271 = vadd.f32 0.0, %v1270
      %1272 = vmatmul.f32.gmra.mxu0 %v1158
      %v1273 = vpop.f32.mrf.mxu0
      %v1274 = vadd.f32 0.0, %v1273
      %1275 = vmatmul.f32.gmra.mxu0 %v1161
      %v1276 = vpop.f32.mrf.mxu0
      %v1277 = vadd.f32 0.0, %v1276
      %1278 = vmatmul.f32.gmra.mxu0 %v1164
      %v1279 = vpop.f32.mrf.mxu0
      %v1280 = vadd.f32 0.0, %v1279
      %1281 = vmatmul.f32.gmra.mxu0 %v1167
      %v1282 = vpop.f32.mrf.mxu0
      %v1283 = vadd.f32 0.0, %v1282
      %1284 = vmatmul.f32.gmra.mxu0 %v1170
      %v1285 = vpop.f32.mrf.mxu0
      %v1286 = vadd.f32 0.0, %v1285
      %1287 = vmatmul.f32.gmra.mxu0 %v1173
      %v1288 = vpop.f32.mrf.mxu0
      %v1289 = vadd.f32 0.0, %v1288
      %1290 = vmatmul.f32.gmra.mxu0 %v1176
      %v1291 = vpop.f32.mrf.mxu0
      %v1292 = vadd.f32 0.0, %v1291
      %1293 = vmatmul.f32.gmra.mxu0 %v1179
      %v1294 = vpop.f32.mrf.mxu0
      %v1295 = vadd.f32 0.0, %v1294
      %1296 = vmatmul.f32.gmra.mxu0 %v1182
      %v1297 = vpop.f32.mrf.mxu0
      %v1298 = vadd.f32 0.0, %v1297
      %1299 = vdwg.mxu0
      %v1300 = vadd.f32 %v959, %v1205
      %v1301 = vadd.f32 %v962, %v1208
      %v1302 = vadd.f32 %v965, %v1211
      %v1303 = vadd.f32 %v968, %v1214
      %v1304 = vadd.f32 %v971, %v1217
      %v1305 = vadd.f32 %v974, %v1220
      %v1306 = vadd.f32 %v977, %v1223
      %v1307 = vadd.f32 %v980, %v1226
      %v1308 = vadd.f32 %v983, %v1229
      %v1309 = vadd.f32 %v986, %v1232
      %v1310 = vadd.f32 %v989, %v1235
      %v1311 = vadd.f32 %v992, %v1238
      %v1312 = vadd.f32 %v995, %v1241
      %v1313 = vadd.f32 %v998, %v1244
      %v1314 = vadd.f32 %v1001, %v1247
      %v1315 = vadd.f32 %v1004, %v1250
      %v1316 = vadd.f32 %v1007, %v1253
      %v1317 = vadd.f32 %v1010, %v1256
      %v1318 = vadd.f32 %v1013, %v1259
      %v1319 = vadd.f32 %v1016, %v1262
      %v1320 = vadd.f32 %v1019, %v1265
      %v1321 = vadd.f32 %v1022, %v1268
      %v1322 = vadd.f32 %v1025, %v1271
      %v1323 = vadd.f32 %v1028, %v1274
      %v1324 = vadd.f32 %v1031, %v1277
      %v1325 = vadd.f32 %v1034, %v1280
      %v1326 = vadd.f32 %v1037, %v1283
      %v1327 = vadd.f32 %v1040, %v1286
      %v1328 = vadd.f32 %v1043, %v1289
      %v1329 = vadd.f32 %v1046, %v1292
      %v1330 = vadd.f32 %v1049, %v1295
      %v1331 = vadd.f32 %v1052, %v1298
      %v1332 = vld [vmem:[%s529] sm:$0xff]
      %v1333 = vld [vmem:[%s529 + $0x8] sm:$0xff]
      %v1334 = vld [vmem:[%s529 + $0x18] sm:$0xff]
      %v1335 = vld [vmem:[%s529 + $0x20] sm:$0xff]
      %v1336 = vld [vmem:[%s529 + $0x30] sm:$0xff]
      %v1337 = vld [vmem:[%s529 + $0x38] sm:$0xff]
      %v1338 = vld [vmem:[%s529 + $0x48] sm:$0xff]
      %v1339 = vld [vmem:[%s529 + $0x50] sm:$0xff]
      %v1340 = vld [vmem:[%s529 + $0x60] sm:$0xff]
      %v1341 = vld [vmem:[%s529 + $0x68] sm:$0xff]
      %v1342 = vld [vmem:[%s529 + $0x78] sm:$0xff]
      %v1343 = vld [vmem:[%s529 + $0x80] sm:$0xff]
      %v1344 = vld [vmem:[%s529 + $0x90] sm:$0xff]
      %v1345 = vld [vmem:[%s529 + $0x98] sm:$0xff]
      %v1346 = vld [vmem:[%s529 + $0xa8] sm:$0xff]
      %v1347 = vld [vmem:[%s529 + $0xb0] sm:$0xff]
      %v1348 = vld [vmem:[%s529 + $0xc0] sm:$0xff]
      %v1349 = vld [vmem:[%s529 + $0xc8] sm:$0xff]
      %v1350 = vld [vmem:[%s529 + $0xd8] sm:$0xff]
      %v1351 = vld [vmem:[%s529 + $0xe0] sm:$0xff]
      %v1352 = vld [vmem:[%s529 + $0xf0] sm:$0xff]
      %v1353 = vld [vmem:[%s529 + $0xf8] sm:$0xff]
      %v1354 = vld [vmem:[%s529 + $0x108] sm:$0xff]
      %v1355 = vld [vmem:[%s529 + $0x110] sm:$0xff]
      %v1356 = vld [vmem:[%s529 + $0x120] sm:$0xff]
      %v1357 = vld [vmem:[%s529 + $0x128] sm:$0xff]
      %v1358 = vld [vmem:[%s529 + $0x138] sm:$0xff]
      %v1359 = vld [vmem:[%s529 + $0x140] sm:$0xff]
      %v1360 = vld [vmem:[%s529 + $0x150] sm:$0xff]
      %v1361 = vld [vmem:[%s529 + $0x158] sm:$0xff]
      %v1362 = vld [vmem:[%s529 + $0x168] sm:$0xff]
      %v1363 = vld [vmem:[%s529 + $0x170] sm:$0xff]
      %s1364 = scalar_lea.vmem %s1, 12
      %v1365 = vld [vmem:[%s1364] sm:$0xf]
      %v1367 = vsel %vm473, %v1332, 0
      %v1370 = vsel %vm473, %v1333, 0
      %v1373 = vsel %vm473, %v1334, 0
      %v1376 = vsel %vm473, %v1335, 0
      %v1379 = vsel %vm473, %v1336, 0
      %v1382 = vsel %vm473, %v1337, 0
      %v1385 = vsel %vm473, %v1338, 0
      %v1388 = vsel %vm473, %v1339, 0
      %v1391 = vsel %vm473, %v1340, 0
      %v1394 = vsel %vm473, %v1341, 0
      %v1397 = vsel %vm473, %v1342, 0
      %v1400 = vsel %vm473, %v1343, 0
      %v1403 = vsel %vm473, %v1344, 0
      %v1406 = vsel %vm473, %v1345, 0
      %v1409 = vsel %vm473, %v1346, 0
      %v1412 = vsel %vm473, %v1347, 0
      %v1415 = vsel %vm473, %v1348, 0
      %v1418 = vsel %vm473, %v1349, 0
      %v1421 = vsel %vm473, %v1350, 0
      %v1424 = vsel %vm473, %v1351, 0
      %v1427 = vsel %vm473, %v1352, 0
      %v1430 = vsel %vm473, %v1353, 0
      %v1433 = vsel %vm473, %v1354, 0
      %v1436 = vsel %vm473, %v1355, 0
      %v1439 = vsel %vm473, %v1356, 0
      %v1442 = vsel %vm473, %v1357, 0
      %v1445 = vsel %vm473, %v1358, 0
      %v1448 = vsel %vm473, %v1359, 0
      %v1451 = vsel %vm473, %v1360, 0
      %v1454 = vsel %vm473, %v1361, 0
      %v1457 = vsel %vm473, %v1362, 0
      %v1460 = vsel %vm473, %v1363, 0
      %v1463 = vsel %vm725, %v1365, 0
      %1465 = vmatpush.msra.mxu0 0.0
      %1466 = vmatpush.msra.mxu0 0.0
      %1467 = vmatpush.msra.mxu0 0.0
      %1468 = vmatpush.msra.mxu0 0.0
      %1469 = vmatpush.msra.mxu0 0.0
      %1470 = vmatpush.msra.mxu0 0.0
      %1471 = vmatpush.msra.mxu0 0.0
      %1472 = vmatpush.msra.mxu0 0.0
      %1473 = vmatpush.msra.mxu0 0.0
      %1474 = vmatpush.msra.mxu0 0.0
      %1475 = vmatpush.msra.mxu0 0.0
      %1476 = vmatpush.msra.mxu0 0.0
      %1477 = vmatpush.msra.mxu0 0.0
      %1478 = vmatpush.msra.mxu0 0.0
      %1479 = vmatpush.msra.mxu0 0.0
      %1480 = vmatpush.msra.mxu0 %v1463
      %1481 = vmatmul.f32.gmra.mxu0 %v1367
      %v1482 = vpop.f32.mrf.mxu0
      %v1483 = vadd.f32 0.0, %v1482
      %1484 = vmatmul.f32.gmra.mxu0 %v1370
      %v1485 = vpop.f32.mrf.mxu0
      %v1486 = vadd.f32 0.0, %v1485
      %1487 = vmatmul.f32.gmra.mxu0 %v1373
      %v1488 = vpop.f32.mrf.mxu0
      %v1489 = vadd.f32 0.0, %v1488
      %1490 = vmatmul.f32.gmra.mxu0 %v1376
      %v1491 = vpop.f32.mrf.mxu0
      %v1492 = vadd.f32 0.0, %v1491
      %1493 = vmatmul.f32.gmra.mxu0 %v1379
      %v1494 = vpop.f32.mrf.mxu0
      %v1495 = vadd.f32 0.0, %v1494
      %1496 = vmatmul.f32.gmra.mxu0 %v1382
      %v1497 = vpop.f32.mrf.mxu0
      %v1498 = vadd.f32 0.0, %v1497
      %1499 = vmatmul.f32.gmra.mxu0 %v1385
      %v1500 = vpop.f32.mrf.mxu0
      %v1501 = vadd.f32 0.0, %v1500
      %1502 = vmatmul.f32.gmra.mxu0 %v1388
      %v1503 = vpop.f32.mrf.mxu0
      %v1504 = vadd.f32 0.0, %v1503
      %1505 = vmatmul.f32.gmra.mxu0 %v1391
      %v1506 = vpop.f32.mrf.mxu0
      %v1507 = vadd.f32 0.0, %v1506
      %1508 = vmatmul.f32.gmra.mxu0 %v1394
      %v1509 = vpop.f32.mrf.mxu0
      %v1510 = vadd.f32 0.0, %v1509
      %1511 = vmatmul.f32.gmra.mxu0 %v1397
      %v1512 = vpop.f32.mrf.mxu0
      %v1513 = vadd.f32 0.0, %v1512
      %1514 = vmatmul.f32.gmra.mxu0 %v1400
      %v1515 = vpop.f32.mrf.mxu0
      %v1516 = vadd.f32 0.0, %v1515
      %1517 = vmatmul.f32.gmra.mxu0 %v1403
      %v1518 = vpop.f32.mrf.mxu0
      %v1519 = vadd.f32 0.0, %v1518
      %1520 = vmatmul.f32.gmra.mxu0 %v1406
      %v1521 = vpop.f32.mrf.mxu0
      %v1522 = vadd.f32 0.0, %v1521
      %1523 = vmatmul.f32.gmra.mxu0 %v1409
      %v1524 = vpop.f32.mrf.mxu0
      %v1525 = vadd.f32 0.0, %v1524
      %1526 = vmatmul.f32.gmra.mxu0 %v1412
      %v1527 = vpop.f32.mrf.mxu0
      %v1528 = vadd.f32 0.0, %v1527
      %1529 = vmatmul.f32.gmra.mxu0 %v1415
      %v1530 = vpop.f32.mrf.mxu0
      %v1531 = vadd.f32 0.0, %v1530
      %1532 = vmatmul.f32.gmra.mxu0 %v1418
      %v1533 = vpop.f32.mrf.mxu0
      %v1534 = vadd.f32 0.0, %v1533
      %1535 = vmatmul.f32.gmra.mxu0 %v1421
      %v1536 = vpop.f32.mrf.mxu0
      %v1537 = vadd.f32 0.0, %v1536
      %1538 = vmatmul.f32.gmra.mxu0 %v1424
      %v1539 = vpop.f32.mrf.mxu0
      %v1540 = vadd.f32 0.0, %v1539
      %1541 = vmatmul.f32.gmra.mxu0 %v1427
      %v1542 = vpop.f32.mrf.mxu0
      %v1543 = vadd.f32 0.0, %v1542
      %1544 = vmatmul.f32.gmra.mxu0 %v1430
      %v1545 = vpop.f32.mrf.mxu0
      %v1546 = vadd.f32 0.0, %v1545
      %1547 = vmatmul.f32.gmra.mxu0 %v1433
      %v1548 = vpop.f32.mrf.mxu0
      %v1549 = vadd.f32 0.0, %v1548
      %1550 = vmatmul.f32.gmra.mxu0 %v1436
      %v1551 = vpop.f32.mrf.mxu0
      %v1552 = vadd.f32 0.0, %v1551
      %1553 = vmatmul.f32.gmra.mxu0 %v1439
      %v1554 = vpop.f32.mrf.mxu0
      %v1555 = vadd.f32 0.0, %v1554
      %1556 = vmatmul.f32.gmra.mxu0 %v1442
      %v1557 = vpop.f32.mrf.mxu0
      %v1558 = vadd.f32 0.0, %v1557
      %1559 = vmatmul.f32.gmra.mxu0 %v1445
      %v1560 = vpop.f32.mrf.mxu0
      %v1561 = vadd.f32 0.0, %v1560
      %1562 = vmatmul.f32.gmra.mxu0 %v1448
      %v1563 = vpop.f32.mrf.mxu0
      %v1564 = vadd.f32 0.0, %v1563
      %1565 = vmatmul.f32.gmra.mxu0 %v1451
      %v1566 = vpop.f32.mrf.mxu0
      %v1567 = vadd.f32 0.0, %v1566
      %1568 = vmatmul.f32.gmra.mxu0 %v1454
      %v1569 = vpop.f32.mrf.mxu0
      %v1570 = vadd.f32 0.0, %v1569
      %1571 = vmatmul.f32.gmra.mxu0 %v1457
      %v1572 = vpop.f32.mrf.mxu0
      %v1573 = vadd.f32 0.0, %v1572
      %1574 = vmatmul.f32.gmra.mxu0 %v1460
      %v1575 = vpop.f32.mrf.mxu0
      %v1576 = vadd.f32 0.0, %v1575
      %1577 = vdwg.mxu0
      %v1578 = vadd.f32 %v1300, %v1483
      %v1579 = vadd.f32 %v1301, %v1486
      %v1580 = vadd.f32 %v1302, %v1489
      %v1581 = vadd.f32 %v1303, %v1492
      %v1582 = vadd.f32 %v1304, %v1495
      %v1583 = vadd.f32 %v1305, %v1498
      %v1584 = vadd.f32 %v1306, %v1501
      %v1585 = vadd.f32 %v1307, %v1504
      %v1586 = vadd.f32 %v1308, %v1507
      %v1587 = vadd.f32 %v1309, %v1510
      %v1588 = vadd.f32 %v1310, %v1513
      %v1589 = vadd.f32 %v1311, %v1516
      %v1590 = vadd.f32 %v1312, %v1519
      %v1591 = vadd.f32 %v1313, %v1522
      %v1592 = vadd.f32 %v1314, %v1525
      %v1593 = vadd.f32 %v1315, %v1528
      %v1594 = vadd.f32 %v1316, %v1531
      %v1595 = vadd.f32 %v1317, %v1534
      %v1596 = vadd.f32 %v1318, %v1537
      %v1597 = vadd.f32 %v1319, %v1540
      %v1598 = vadd.f32 %v1320, %v1543
      %v1599 = vadd.f32 %v1321, %v1546
      %v1600 = vadd.f32 %v1322, %v1549
      %v1601 = vadd.f32 %v1323, %v1552
      %v1602 = vadd.f32 %v1324, %v1555
      %v1603 = vadd.f32 %v1325, %v1558
      %v1604 = vadd.f32 %v1326, %v1561
      %v1605 = vadd.f32 %v1327, %v1564
      %v1606 = vadd.f32 %v1328, %v1567
      %v1607 = vadd.f32 %v1329, %v1570
      %v1608 = vadd.f32 %v1330, %v1573
      %v1609 = vadd.f32 %v1331, %v1576
      %v1610 = vld [vmem:[%s529 + $0x1] sm:$0xff]
      %v1611 = vld [vmem:[%s529 + $0x9] sm:$0xff]
      %v1612 = vld [vmem:[%s529 + $0x19] sm:$0xff]
      %v1613 = vld [vmem:[%s529 + $0x21] sm:$0xff]
      %v1614 = vld [vmem:[%s529 + $0x31] sm:$0xff]
      %v1615 = vld [vmem:[%s529 + $0x39] sm:$0xff]
      %v1616 = vld [vmem:[%s529 + $0x49] sm:$0xff]
      %v1617 = vld [vmem:[%s529 + $0x51] sm:$0xff]
      %v1618 = vld [vmem:[%s529 + $0x61] sm:$0xff]
      %v1619 = vld [vmem:[%s529 + $0x69] sm:$0xff]
      %v1620 = vld [vmem:[%s529 + $0x79] sm:$0xff]
      %v1621 = vld [vmem:[%s529 + $0x81] sm:$0xff]
      %v1622 = vld [vmem:[%s529 + $0x91] sm:$0xff]
      %v1623 = vld [vmem:[%s529 + $0x99] sm:$0xff]
      %v1624 = vld [vmem:[%s529 + $0xa9] sm:$0xff]
      %v1625 = vld [vmem:[%s529 + $0xb1] sm:$0xff]
      %v1626 = vld [vmem:[%s529 + $0xc1] sm:$0xff]
      %v1627 = vld [vmem:[%s529 + $0xc9] sm:$0xff]
      %v1628 = vld [vmem:[%s529 + $0xd9] sm:$0xff]
      %v1629 = vld [vmem:[%s529 + $0xe1] sm:$0xff]
      %v1630 = vld [vmem:[%s529 + $0xf1] sm:$0xff]
      %v1631 = vld [vmem:[%s529 + $0xf9] sm:$0xff]
      %v1632 = vld [vmem:[%s529 + $0x109] sm:$0xff]
      %v1633 = vld [vmem:[%s529 + $0x111] sm:$0xff]
      %v1634 = vld [vmem:[%s529 + $0x121] sm:$0xff]
      %v1635 = vld [vmem:[%s529 + $0x129] sm:$0xff]
      %v1636 = vld [vmem:[%s529 + $0x139] sm:$0xff]
      %v1637 = vld [vmem:[%s529 + $0x141] sm:$0xff]
      %v1638 = vld [vmem:[%s529 + $0x151] sm:$0xff]
      %v1639 = vld [vmem:[%s529 + $0x159] sm:$0xff]
      %v1640 = vld [vmem:[%s529 + $0x169] sm:$0xff]
      %v1641 = vld [vmem:[%s529 + $0x171] sm:$0xff]
      %s1642 = scalar_lea.vmem %s1, 16
      %v1643 = vld [vmem:[%s1642] sm:$0xf]
      %v1645 = vsel %vm473, %v1610, 0
      %v1648 = vsel %vm473, %v1611, 0
      %v1651 = vsel %vm473, %v1612, 0
      %v1654 = vsel %vm473, %v1613, 0
      %v1657 = vsel %vm473, %v1614, 0
      %v1660 = vsel %vm473, %v1615, 0
      %v1663 = vsel %vm473, %v1616, 0
      %v1666 = vsel %vm473, %v1617, 0
      %v1669 = vsel %vm473, %v1618, 0
      %v1672 = vsel %vm473, %v1619, 0
      %v1675 = vsel %vm473, %v1620, 0
      %v1678 = vsel %vm473, %v1621, 0
      %v1681 = vsel %vm473, %v1622, 0
      %v1684 = vsel %vm473, %v1623, 0
      %v1687 = vsel %vm473, %v1624, 0
      %v1690 = vsel %vm473, %v1625, 0
      %v1693 = vsel %vm473, %v1626, 0
      %v1696 = vsel %vm473, %v1627, 0
      %v1699 = vsel %vm473, %v1628, 0
      %v1702 = vsel %vm473, %v1629, 0
      %v1705 = vsel %vm473, %v1630, 0
      %v1708 = vsel %vm473, %v1631, 0
      %v1711 = vsel %vm473, %v1632, 0
      %v1714 = vsel %vm473, %v1633, 0
      %v1717 = vsel %vm473, %v1634, 0
      %v1720 = vsel %vm473, %v1635, 0
      %v1723 = vsel %vm473, %v1636, 0
      %v1726 = vsel %vm473, %v1637, 0
      %v1729 = vsel %vm473, %v1638, 0
      %v1732 = vsel %vm473, %v1639, 0
      %v1735 = vsel %vm473, %v1640, 0
      %v1738 = vsel %vm473, %v1641, 0
      %v1741 = vsel %vm725, %v1643, 0
      %1743 = vmatpush.msra.mxu0 0.0
      %1744 = vmatpush.msra.mxu0 0.0
      %1745 = vmatpush.msra.mxu0 0.0
      %1746 = vmatpush.msra.mxu0 0.0
      %1747 = vmatpush.msra.mxu0 0.0
      %1748 = vmatpush.msra.mxu0 0.0
      %1749 = vmatpush.msra.mxu0 0.0
      %1750 = vmatpush.msra.mxu0 0.0
      %1751 = vmatpush.msra.mxu0 0.0
      %1752 = vmatpush.msra.mxu0 0.0
      %1753 = vmatpush.msra.mxu0 0.0
      %1754 = vmatpush.msra.mxu0 0.0
      %1755 = vmatpush.msra.mxu0 0.0
      %1756 = vmatpush.msra.mxu0 0.0
      %1757 = vmatpush.msra.mxu0 0.0
      %1758 = vmatpush.msra.mxu0 %v1741
      %1759 = vmatmul.f32.gmra.mxu0 %v1645
      %v1760 = vpop.f32.mrf.mxu0
      %v1761 = vadd.f32 0.0, %v1760
      %1762 = vmatmul.f32.gmra.mxu0 %v1648
      %v1763 = vpop.f32.mrf.mxu0
      %v1764 = vadd.f32 0.0, %v1763
      %1765 = vmatmul.f32.gmra.mxu0 %v1651
      %v1766 = vpop.f32.mrf.mxu0
      %v1767 = vadd.f32 0.0, %v1766
      %1768 = vmatmul.f32.gmra.mxu0 %v1654
      %v1769 = vpop.f32.mrf.mxu0
      %v1770 = vadd.f32 0.0, %v1769
      %1771 = vmatmul.f32.gmra.mxu0 %v1657
      %v1772 = vpop.f32.mrf.mxu0
      %v1773 = vadd.f32 0.0, %v1772
      %1774 = vmatmul.f32.gmra.mxu0 %v1660
      %v1775 = vpop.f32.mrf.mxu0
      %v1776 = vadd.f32 0.0, %v1775
      %1777 = vmatmul.f32.gmra.mxu0 %v1663
      %v1778 = vpop.f32.mrf.mxu0
      %v1779 = vadd.f32 0.0, %v1778
      %1780 = vmatmul.f32.gmra.mxu0 %v1666
      %v1781 = vpop.f32.mrf.mxu0
      %v1782 = vadd.f32 0.0, %v1781
      %1783 = vmatmul.f32.gmra.mxu0 %v1669
      %v1784 = vpop.f32.mrf.mxu0
      %v1785 = vadd.f32 0.0, %v1784
      %1786 = vmatmul.f32.gmra.mxu0 %v1672
      %v1787 = vpop.f32.mrf.mxu0
      %v1788 = vadd.f32 0.0, %v1787
      %1789 = vmatmul.f32.gmra.mxu0 %v1675
      %v1790 = vpop.f32.mrf.mxu0
      %v1791 = vadd.f32 0.0, %v1790
      %1792 = vmatmul.f32.gmra.mxu0 %v1678
      %v1793 = vpop.f32.mrf.mxu0
      %v1794 = vadd.f32 0.0, %v1793
      %1795 = vmatmul.f32.gmra.mxu0 %v1681
      %v1796 = vpop.f32.mrf.mxu0
      %v1797 = vadd.f32 0.0, %v1796
      %1798 = vmatmul.f32.gmra.mxu0 %v1684
      %v1799 = vpop.f32.mrf.mxu0
      %v1800 = vadd.f32 0.0, %v1799
      %1801 = vmatmul.f32.gmra.mxu0 %v1687
      %v1802 = vpop.f32.mrf.mxu0
      %v1803 = vadd.f32 0.0, %v1802
      %1804 = vmatmul.f32.gmra.mxu0 %v1690
      %v1805 = vpop.f32.mrf.mxu0
      %v1806 = vadd.f32 0.0, %v1805
      %1807 = vmatmul.f32.gmra.mxu0 %v1693
      %v1808 = vpop.f32.mrf.mxu0
      %v1809 = vadd.f32 0.0, %v1808
      %1810 = vmatmul.f32.gmra.mxu0 %v1696
      %v1811 = vpop.f32.mrf.mxu0
      %v1812 = vadd.f32 0.0, %v1811
      %1813 = vmatmul.f32.gmra.mxu0 %v1699
      %v1814 = vpop.f32.mrf.mxu0
      %v1815 = vadd.f32 0.0, %v1814
      %1816 = vmatmul.f32.gmra.mxu0 %v1702
      %v1817 = vpop.f32.mrf.mxu0
      %v1818 = vadd.f32 0.0, %v1817
      %1819 = vmatmul.f32.gmra.mxu0 %v1705
      %v1820 = vpop.f32.mrf.mxu0
      %v1821 = vadd.f32 0.0, %v1820
      %1822 = vmatmul.f32.gmra.mxu0 %v1708
      %v1823 = vpop.f32.mrf.mxu0
      %v1824 = vadd.f32 0.0, %v1823
      %1825 = vmatmul.f32.gmra.mxu0 %v1711
      %v1826 = vpop.f32.mrf.mxu0
      %v1827 = vadd.f32 0.0, %v1826
      %1828 = vmatmul.f32.gmra.mxu0 %v1714
      %v1829 = vpop.f32.mrf.mxu0
      %v1830 = vadd.f32 0.0, %v1829
      %1831 = vmatmul.f32.gmra.mxu0 %v1717
      %v1832 = vpop.f32.mrf.mxu0
      %v1833 = vadd.f32 0.0, %v1832
      %1834 = vmatmul.f32.gmra.mxu0 %v1720
      %v1835 = vpop.f32.mrf.mxu0
      %v1836 = vadd.f32 0.0, %v1835
      %1837 = vmatmul.f32.gmra.mxu0 %v1723
      %v1838 = vpop.f32.mrf.mxu0
      %v1839 = vadd.f32 0.0, %v1838
      %1840 = vmatmul.f32.gmra.mxu0 %v1726
      %v1841 = vpop.f32.mrf.mxu0
      %v1842 = vadd.f32 0.0, %v1841
      %1843 = vmatmul.f32.gmra.mxu0 %v1729
      %v1844 = vpop.f32.mrf.mxu0
      %v1845 = vadd.f32 0.0, %v1844
      %1846 = vmatmul.f32.gmra.mxu0 %v1732
      %v1847 = vpop.f32.mrf.mxu0
      %v1848 = vadd.f32 0.0, %v1847
      %1849 = vmatmul.f32.gmra.mxu0 %v1735
      %v1850 = vpop.f32.mrf.mxu0
      %v1851 = vadd.f32 0.0, %v1850
      %1852 = vmatmul.f32.gmra.mxu0 %v1738
      %v1853 = vpop.f32.mrf.mxu0
      %v1854 = vadd.f32 0.0, %v1853
      %1855 = vdwg.mxu0
      %v1856 = vadd.f32 %v1578, %v1761
      %v1857 = vadd.f32 %v1579, %v1764
      %v1858 = vadd.f32 %v1580, %v1767
      %v1859 = vadd.f32 %v1581, %v1770
      %v1860 = vadd.f32 %v1582, %v1773
      %v1861 = vadd.f32 %v1583, %v1776
      %v1862 = vadd.f32 %v1584, %v1779
      %v1863 = vadd.f32 %v1585, %v1782
      %v1864 = vadd.f32 %v1586, %v1785
      %v1865 = vadd.f32 %v1587, %v1788
      %v1866 = vadd.f32 %v1588, %v1791
      %v1867 = vadd.f32 %v1589, %v1794
      %v1868 = vadd.f32 %v1590, %v1797
      %v1869 = vadd.f32 %v1591, %v1800
      %v1870 = vadd.f32 %v1592, %v1803
      %v1871 = vadd.f32 %v1593, %v1806
      %v1872 = vadd.f32 %v1594, %v1809
      %v1873 = vadd.f32 %v1595, %v1812
      %v1874 = vadd.f32 %v1596, %v1815
      %v1875 = vadd.f32 %v1597, %v1818
      %v1876 = vadd.f32 %v1598, %v1821
      %v1877 = vadd.f32 %v1599, %v1824
      %v1878 = vadd.f32 %v1600, %v1827
      %v1879 = vadd.f32 %v1601, %v1830
      %v1880 = vadd.f32 %v1602, %v1833
      %v1881 = vadd.f32 %v1603, %v1836
      %v1882 = vadd.f32 %v1604, %v1839
      %v1883 = vadd.f32 %v1605, %v1842
      %v1884 = vadd.f32 %v1606, %v1845
      %v1885 = vadd.f32 %v1607, %v1848
      %v1886 = vadd.f32 %v1608, %v1851
      %v1887 = vadd.f32 %v1609, %v1854
      %v1888 = vld [vmem:[%s529 + $0x2] sm:$0xff]
      %v1889 = vld [vmem:[%s529 + $0xa] sm:$0xff]
      %v1890 = vld [vmem:[%s529 + $0x1a] sm:$0xff]
      %v1891 = vld [vmem:[%s529 + $0x22] sm:$0xff]
      %v1892 = vld [vmem:[%s529 + $0x32] sm:$0xff]
      %v1893 = vld [vmem:[%s529 + $0x3a] sm:$0xff]
      %v1894 = vld [vmem:[%s529 + $0x4a] sm:$0xff]
      %v1895 = vld [vmem:[%s529 + $0x52] sm:$0xff]
      %v1896 = vld [vmem:[%s529 + $0x62] sm:$0xff]
      %v1897 = vld [vmem:[%s529 + $0x6a] sm:$0xff]
      %v1898 = vld [vmem:[%s529 + $0x7a] sm:$0xff]
      %v1899 = vld [vmem:[%s529 + $0x82] sm:$0xff]
      %v1900 = vld [vmem:[%s529 + $0x92] sm:$0xff]
      %v1901 = vld [vmem:[%s529 + $0x9a] sm:$0xff]
      %v1902 = vld [vmem:[%s529 + $0xaa] sm:$0xff]
      %v1903 = vld [vmem:[%s529 + $0xb2] sm:$0xff]
      %v1904 = vld [vmem:[%s529 + $0xc2] sm:$0xff]
      %v1905 = vld [vmem:[%s529 + $0xca] sm:$0xff]
      %v1906 = vld [vmem:[%s529 + $0xda] sm:$0xff]
      %v1907 = vld [vmem:[%s529 + $0xe2] sm:$0xff]
      %v1908 = vld [vmem:[%s529 + $0xf2] sm:$0xff]
      %v1909 = vld [vmem:[%s529 + $0xfa] sm:$0xff]
      %v1910 = vld [vmem:[%s529 + $0x10a] sm:$0xff]
      %v1911 = vld [vmem:[%s529 + $0x112] sm:$0xff]
      %v1912 = vld [vmem:[%s529 + $0x122] sm:$0xff]
      %v1913 = vld [vmem:[%s529 + $0x12a] sm:$0xff]
      %v1914 = vld [vmem:[%s529 + $0x13a] sm:$0xff]
      %v1915 = vld [vmem:[%s529 + $0x142] sm:$0xff]
      %v1916 = vld [vmem:[%s529 + $0x152] sm:$0xff]
      %v1917 = vld [vmem:[%s529 + $0x15a] sm:$0xff]
      %v1918 = vld [vmem:[%s529 + $0x16a] sm:$0xff]
      %v1919 = vld [vmem:[%s529 + $0x172] sm:$0xff]
      %s1920 = scalar_lea.vmem %s1, 20
      %v1921 = vld [vmem:[%s1920] sm:$0xf]
      %v1923 = vsel %vm473, %v1888, 0
      %v1926 = vsel %vm473, %v1889, 0
      %v1929 = vsel %vm473, %v1890, 0
      %v1932 = vsel %vm473, %v1891, 0
      %v1935 = vsel %vm473, %v1892, 0
      %v1938 = vsel %vm473, %v1893, 0
      %v1941 = vsel %vm473, %v1894, 0
      %v1944 = vsel %vm473, %v1895, 0
      %v1947 = vsel %vm473, %v1896, 0
      %v1950 = vsel %vm473, %v1897, 0
      %v1953 = vsel %vm473, %v1898, 0
      %v1956 = vsel %vm473, %v1899, 0
      %v1959 = vsel %vm473, %v1900, 0
      %v1962 = vsel %vm473, %v1901, 0
      %v1965 = vsel %vm473, %v1902, 0
      %v1968 = vsel %vm473, %v1903, 0
      %v1971 = vsel %vm473, %v1904, 0
      %v1974 = vsel %vm473, %v1905, 0
      %v1977 = vsel %vm473, %v1906, 0
      %v1980 = vsel %vm473, %v1907, 0
      %v1983 = vsel %vm473, %v1908, 0
      %v1986 = vsel %vm473, %v1909, 0
      %v1989 = vsel %vm473, %v1910, 0
      %v1992 = vsel %vm473, %v1911, 0
      %v1995 = vsel %vm473, %v1912, 0
      %v1998 = vsel %vm473, %v1913, 0
      %v2001 = vsel %vm473, %v1914, 0
      %v2004 = vsel %vm473, %v1915, 0
      %v2007 = vsel %vm473, %v1916, 0
      %v2010 = vsel %vm473, %v1917, 0
      %v2013 = vsel %vm473, %v1918, 0
      %v2016 = vsel %vm473, %v1919, 0
      %v2019 = vsel %vm725, %v1921, 0
      %2021 = vmatpush.msra.mxu0 0.0
      %2022 = vmatpush.msra.mxu0 0.0
      %2023 = vmatpush.msra.mxu0 0.0
      %2024 = vmatpush.msra.mxu0 0.0
      %2025 = vmatpush.msra.mxu0 0.0
      %2026 = vmatpush.msra.mxu0 0.0
      %2027 = vmatpush.msra.mxu0 0.0
      %2028 = vmatpush.msra.mxu0 0.0
      %2029 = vmatpush.msra.mxu0 0.0
      %2030 = vmatpush.msra.mxu0 0.0
      %2031 = vmatpush.msra.mxu0 0.0
      %2032 = vmatpush.msra.mxu0 0.0
      %2033 = vmatpush.msra.mxu0 0.0
      %2034 = vmatpush.msra.mxu0 0.0
      %2035 = vmatpush.msra.mxu0 0.0
      %2036 = vmatpush.msra.mxu0 %v2019
      %2037 = vmatmul.f32.gmra.mxu0 %v1923
      %v2038 = vpop.f32.mrf.mxu0
      %v2039 = vadd.f32 0.0, %v2038
      %2040 = vmatmul.f32.gmra.mxu0 %v1926
      %v2041 = vpop.f32.mrf.mxu0
      %v2042 = vadd.f32 0.0, %v2041
      %2043 = vmatmul.f32.gmra.mxu0 %v1929
      %v2044 = vpop.f32.mrf.mxu0
      %v2045 = vadd.f32 0.0, %v2044
      %2046 = vmatmul.f32.gmra.mxu0 %v1932
      %v2047 = vpop.f32.mrf.mxu0
      %v2048 = vadd.f32 0.0, %v2047
      %2049 = vmatmul.f32.gmra.mxu0 %v1935
      %v2050 = vpop.f32.mrf.mxu0
      %v2051 = vadd.f32 0.0, %v2050
      %2052 = vmatmul.f32.gmra.mxu0 %v1938
      %v2053 = vpop.f32.mrf.mxu0
      %v2054 = vadd.f32 0.0, %v2053
      %2055 = vmatmul.f32.gmra.mxu0 %v1941
      %v2056 = vpop.f32.mrf.mxu0
      %v2057 = vadd.f32 0.0, %v2056
      %2058 = vmatmul.f32.gmra.mxu0 %v1944
      %v2059 = vpop.f32.mrf.mxu0
      %v2060 = vadd.f32 0.0, %v2059
      %2061 = vmatmul.f32.gmra.mxu0 %v1947
      %v2062 = vpop.f32.mrf.mxu0
      %v2063 = vadd.f32 0.0, %v2062
      %2064 = vmatmul.f32.gmra.mxu0 %v1950
      %v2065 = vpop.f32.mrf.mxu0
      %v2066 = vadd.f32 0.0, %v2065
      %2067 = vmatmul.f32.gmra.mxu0 %v1953
      %v2068 = vpop.f32.mrf.mxu0
      %v2069 = vadd.f32 0.0, %v2068
      %2070 = vmatmul.f32.gmra.mxu0 %v1956
      %v2071 = vpop.f32.mrf.mxu0
      %v2072 = vadd.f32 0.0, %v2071
      %2073 = vmatmul.f32.gmra.mxu0 %v1959
      %v2074 = vpop.f32.mrf.mxu0
      %v2075 = vadd.f32 0.0, %v2074
      %2076 = vmatmul.f32.gmra.mxu0 %v1962
      %v2077 = vpop.f32.mrf.mxu0
      %v2078 = vadd.f32 0.0, %v2077
      %2079 = vmatmul.f32.gmra.mxu0 %v1965
      %v2080 = vpop.f32.mrf.mxu0
      %v2081 = vadd.f32 0.0, %v2080
      %2082 = vmatmul.f32.gmra.mxu0 %v1968
      %v2083 = vpop.f32.mrf.mxu0
      %v2084 = vadd.f32 0.0, %v2083
      %2085 = vmatmul.f32.gmra.mxu0 %v1971
      %v2086 = vpop.f32.mrf.mxu0
      %v2087 = vadd.f32 0.0, %v2086
      %2088 = vmatmul.f32.gmra.mxu0 %v1974
      %v2089 = vpop.f32.mrf.mxu0
      %v2090 = vadd.f32 0.0, %v2089
      %2091 = vmatmul.f32.gmra.mxu0 %v1977
      %v2092 = vpop.f32.mrf.mxu0
      %v2093 = vadd.f32 0.0, %v2092
      %2094 = vmatmul.f32.gmra.mxu0 %v1980
      %v2095 = vpop.f32.mrf.mxu0
      %v2096 = vadd.f32 0.0, %v2095
      %2097 = vmatmul.f32.gmra.mxu0 %v1983
      %v2098 = vpop.f32.mrf.mxu0
      %v2099 = vadd.f32 0.0, %v2098
      %2100 = vmatmul.f32.gmra.mxu0 %v1986
      %v2101 = vpop.f32.mrf.mxu0
      %v2102 = vadd.f32 0.0, %v2101
      %2103 = vmatmul.f32.gmra.mxu0 %v1989
      %v2104 = vpop.f32.mrf.mxu0
      %v2105 = vadd.f32 0.0, %v2104
      %2106 = vmatmul.f32.gmra.mxu0 %v1992
      %v2107 = vpop.f32.mrf.mxu0
      %v2108 = vadd.f32 0.0, %v2107
      %2109 = vmatmul.f32.gmra.mxu0 %v1995
      %v2110 = vpop.f32.mrf.mxu0
      %v2111 = vadd.f32 0.0, %v2110
      %2112 = vmatmul.f32.gmra.mxu0 %v1998
      %v2113 = vpop.f32.mrf.mxu0
      %v2114 = vadd.f32 0.0, %v2113
      %2115 = vmatmul.f32.gmra.mxu0 %v2001
      %v2116 = vpop.f32.mrf.mxu0
      %v2117 = vadd.f32 0.0, %v2116
      %2118 = vmatmul.f32.gmra.mxu0 %v2004
      %v2119 = vpop.f32.mrf.mxu0
      %v2120 = vadd.f32 0.0, %v2119
      %2121 = vmatmul.f32.gmra.mxu0 %v2007
      %v2122 = vpop.f32.mrf.mxu0
      %v2123 = vadd.f32 0.0, %v2122
      %2124 = vmatmul.f32.gmra.mxu0 %v2010
      %v2125 = vpop.f32.mrf.mxu0
      %v2126 = vadd.f32 0.0, %v2125
      %2127 = vmatmul.f32.gmra.mxu0 %v2013
      %v2128 = vpop.f32.mrf.mxu0
      %v2129 = vadd.f32 0.0, %v2128
      %2130 = vmatmul.f32.gmra.mxu0 %v2016
      %v2131 = vpop.f32.mrf.mxu0
      %v2132 = vadd.f32 0.0, %v2131
      %2133 = vdwg.mxu0
      %v2134 = vadd.f32 %v1856, %v2039
      %v2135 = vadd.f32 %v1857, %v2042
      %v2136 = vadd.f32 %v1858, %v2045
      %v2137 = vadd.f32 %v1859, %v2048
      %v2138 = vadd.f32 %v1860, %v2051
      %v2139 = vadd.f32 %v1861, %v2054
      %v2140 = vadd.f32 %v1862, %v2057
      %v2141 = vadd.f32 %v1863, %v2060
      %v2142 = vadd.f32 %v1864, %v2063
      %v2143 = vadd.f32 %v1865, %v2066
      %v2144 = vadd.f32 %v1866, %v2069
      %v2145 = vadd.f32 %v1867, %v2072
      %v2146 = vadd.f32 %v1868, %v2075
      %v2147 = vadd.f32 %v1869, %v2078
      %v2148 = vadd.f32 %v1870, %v2081
      %v2149 = vadd.f32 %v1871, %v2084
      %v2150 = vadd.f32 %v1872, %v2087
      %v2151 = vadd.f32 %v1873, %v2090
      %v2152 = vadd.f32 %v1874, %v2093
      %v2153 = vadd.f32 %v1875, %v2096
      %v2154 = vadd.f32 %v1876, %v2099
      %v2155 = vadd.f32 %v1877, %v2102
      %v2156 = vadd.f32 %v1878, %v2105
      %v2157 = vadd.f32 %v1879, %v2108
      %v2158 = vadd.f32 %v1880, %v2111
      %v2159 = vadd.f32 %v1881, %v2114
      %v2160 = vadd.f32 %v1882, %v2117
      %v2161 = vadd.f32 %v1883, %v2120
      %v2162 = vadd.f32 %v1884, %v2123
      %v2163 = vadd.f32 %v1885, %v2126
      %v2164 = vadd.f32 %v1886, %v2129
      %v2165 = vadd.f32 %v1887, %v2132
      %s2166 = scalar_lea.vmem [#allocation2], 48
      %v2167 = vld [vmem:[%s2166] sm:$0xff]
      %v2168 = vld [vmem:[%s2166 + $0x8] sm:$0xff]
      %v2169 = vld [vmem:[%s2166 + $0x18] sm:$0xff]
      %v2170 = vld [vmem:[%s2166 + $0x20] sm:$0xff]
      %v2171 = vld [vmem:[%s2166 + $0x30] sm:$0xff]
      %v2172 = vld [vmem:[%s2166 + $0x38] sm:$0xff]
      %v2173 = vld [vmem:[%s2166 + $0x48] sm:$0xff]
      %v2174 = vld [vmem:[%s2166 + $0x50] sm:$0xff]
      %v2175 = vld [vmem:[%s2166 + $0x60] sm:$0xff]
      %v2176 = vld [vmem:[%s2166 + $0x68] sm:$0xff]
      %v2177 = vld [vmem:[%s2166 + $0x78] sm:$0xff]
      %v2178 = vld [vmem:[%s2166 + $0x80] sm:$0xff]
      %v2179 = vld [vmem:[%s2166 + $0x90] sm:$0xff]
      %v2180 = vld [vmem:[%s2166 + $0x98] sm:$0xff]
      %v2181 = vld [vmem:[%s2166 + $0xa8] sm:$0xff]
      %v2182 = vld [vmem:[%s2166 + $0xb0] sm:$0xff]
      %v2183 = vld [vmem:[%s2166 + $0xc0] sm:$0xff]
      %v2184 = vld [vmem:[%s2166 + $0xc8] sm:$0xff]
      %v2185 = vld [vmem:[%s2166 + $0xd8] sm:$0xff]
      %v2186 = vld [vmem:[%s2166 + $0xe0] sm:$0xff]
      %v2187 = vld [vmem:[%s2166 + $0xf0] sm:$0xff]
      %v2188 = vld [vmem:[%s2166 + $0xf8] sm:$0xff]
      %v2189 = vld [vmem:[%s2166 + $0x108] sm:$0xff]
      %v2190 = vld [vmem:[%s2166 + $0x110] sm:$0xff]
      %v2191 = vld [vmem:[%s2166 + $0x120] sm:$0xff]
      %v2192 = vld [vmem:[%s2166 + $0x128] sm:$0xff]
      %v2193 = vld [vmem:[%s2166 + $0x138] sm:$0xff]
      %v2194 = vld [vmem:[%s2166 + $0x140] sm:$0xff]
      %v2195 = vld [vmem:[%s2166 + $0x150] sm:$0xff]
      %v2196 = vld [vmem:[%s2166 + $0x158] sm:$0xff]
      %v2197 = vld [vmem:[%s2166 + $0x168] sm:$0xff]
      %v2198 = vld [vmem:[%s2166 + $0x170] sm:$0xff]
      %s2199 = scalar_lea.vmem %s1, 24
      %v2200 = vld [vmem:[%s2199] sm:$0xf]
      %v2202 = vsel %vm473, %v2167, 0
      %v2205 = vsel %vm473, %v2168, 0
      %v2208 = vsel %vm473, %v2169, 0
      %v2211 = vsel %vm473, %v2170, 0
      %v2214 = vsel %vm473, %v2171, 0
      %v2217 = vsel %vm473, %v2172, 0
      %v2220 = vsel %vm473, %v2173, 0
      %v2223 = vsel %vm473, %v2174, 0
      %v2226 = vsel %vm473, %v2175, 0
      %v2229 = vsel %vm473, %v2176, 0
      %v2232 = vsel %vm473, %v2177, 0
      %v2235 = vsel %vm473, %v2178, 0
      %v2238 = vsel %vm473, %v2179, 0
      %v2241 = vsel %vm473, %v2180, 0
      %v2244 = vsel %vm473, %v2181, 0
      %v2247 = vsel %vm473, %v2182, 0
      %v2250 = vsel %vm473, %v2183, 0
      %v2253 = vsel %vm473, %v2184, 0
      %v2256 = vsel %vm473, %v2185, 0
      %v2259 = vsel %vm473, %v2186, 0
      %v2262 = vsel %vm473, %v2187, 0
      %v2265 = vsel %vm473, %v2188, 0
      %v2268 = vsel %vm473, %v2189, 0
      %v2271 = vsel %vm473, %v2190, 0
      %v2274 = vsel %vm473, %v2191, 0
      %v2277 = vsel %vm473, %v2192, 0
      %v2280 = vsel %vm473, %v2193, 0
      %v2283 = vsel %vm473, %v2194, 0
      %v2286 = vsel %vm473, %v2195, 0
      %v2289 = vsel %vm473, %v2196, 0
      %v2292 = vsel %vm473, %v2197, 0
      %v2295 = vsel %vm473, %v2198, 0
      %v2298 = vsel %vm725, %v2200, 0
      %2300 = vmatpush.msra.mxu0 0.0
      %2301 = vmatpush.msra.mxu0 0.0
      %2302 = vmatpush.msra.mxu0 0.0
      %2303 = vmatpush.msra.mxu0 0.0
      %2304 = vmatpush.msra.mxu0 0.0
      %2305 = vmatpush.msra.mxu0 0.0
      %2306 = vmatpush.msra.mxu0 0.0
      %2307 = vmatpush.msra.mxu0 0.0
      %2308 = vmatpush.msra.mxu0 0.0
      %2309 = vmatpush.msra.mxu0 0.0
      %2310 = vmatpush.msra.mxu0 0.0
      %2311 = vmatpush.msra.mxu0 0.0
      %2312 = vmatpush.msra.mxu0 0.0
      %2313 = vmatpush.msra.mxu0 0.0
      %2314 = vmatpush.msra.mxu0 0.0
      %2315 = vmatpush.msra.mxu0 %v2298
      %2316 = vmatmul.f32.gmra.mxu0 %v2202
      %v2317 = vpop.f32.mrf.mxu0
      %v2318 = vadd.f32 0.0, %v2317
      %2319 = vmatmul.f32.gmra.mxu0 %v2205
      %v2320 = vpop.f32.mrf.mxu0
      %v2321 = vadd.f32 0.0, %v2320
      %2322 = vmatmul.f32.gmra.mxu0 %v2208
      %v2323 = vpop.f32.mrf.mxu0
      %v2324 = vadd.f32 0.0, %v2323
      %2325 = vmatmul.f32.gmra.mxu0 %v2211
      %v2326 = vpop.f32.mrf.mxu0
      %v2327 = vadd.f32 0.0, %v2326
      %2328 = vmatmul.f32.gmra.mxu0 %v2214
      %v2329 = vpop.f32.mrf.mxu0
      %v2330 = vadd.f32 0.0, %v2329
      %2331 = vmatmul.f32.gmra.mxu0 %v2217
      %v2332 = vpop.f32.mrf.mxu0
      %v2333 = vadd.f32 0.0, %v2332
      %2334 = vmatmul.f32.gmra.mxu0 %v2220
      %v2335 = vpop.f32.mrf.mxu0
      %v2336 = vadd.f32 0.0, %v2335
      %2337 = vmatmul.f32.gmra.mxu0 %v2223
      %v2338 = vpop.f32.mrf.mxu0
      %v2339 = vadd.f32 0.0, %v2338
      %2340 = vmatmul.f32.gmra.mxu0 %v2226
      %v2341 = vpop.f32.mrf.mxu0
      %v2342 = vadd.f32 0.0, %v2341
      %2343 = vmatmul.f32.gmra.mxu0 %v2229
      %v2344 = vpop.f32.mrf.mxu0
      %v2345 = vadd.f32 0.0, %v2344
      %2346 = vmatmul.f32.gmra.mxu0 %v2232
      %v2347 = vpop.f32.mrf.mxu0
      %v2348 = vadd.f32 0.0, %v2347
      %2349 = vmatmul.f32.gmra.mxu0 %v2235
      %v2350 = vpop.f32.mrf.mxu0
      %v2351 = vadd.f32 0.0, %v2350
      %2352 = vmatmul.f32.gmra.mxu0 %v2238
      %v2353 = vpop.f32.mrf.mxu0
      %v2354 = vadd.f32 0.0, %v2353
      %2355 = vmatmul.f32.gmra.mxu0 %v2241
      %v2356 = vpop.f32.mrf.mxu0
      %v2357 = vadd.f32 0.0, %v2356
      %2358 = vmatmul.f32.gmra.mxu0 %v2244
      %v2359 = vpop.f32.mrf.mxu0
      %v2360 = vadd.f32 0.0, %v2359
      %2361 = vmatmul.f32.gmra.mxu0 %v2247
      %v2362 = vpop.f32.mrf.mxu0
      %v2363 = vadd.f32 0.0, %v2362
      %2364 = vmatmul.f32.gmra.mxu0 %v2250
      %v2365 = vpop.f32.mrf.mxu0
      %v2366 = vadd.f32 0.0, %v2365
      %2367 = vmatmul.f32.gmra.mxu0 %v2253
      %v2368 = vpop.f32.mrf.mxu0
      %v2369 = vadd.f32 0.0, %v2368
      %2370 = vmatmul.f32.gmra.mxu0 %v2256
      %v2371 = vpop.f32.mrf.mxu0
      %v2372 = vadd.f32 0.0, %v2371
      %2373 = vmatmul.f32.gmra.mxu0 %v2259
      %v2374 = vpop.f32.mrf.mxu0
      %v2375 = vadd.f32 0.0, %v2374
      %2376 = vmatmul.f32.gmra.mxu0 %v2262
      %v2377 = vpop.f32.mrf.mxu0
      %v2378 = vadd.f32 0.0, %v2377
      %2379 = vmatmul.f32.gmra.mxu0 %v2265
      %v2380 = vpop.f32.mrf.mxu0
      %v2381 = vadd.f32 0.0, %v2380
      %2382 = vmatmul.f32.gmra.mxu0 %v2268
      %v2383 = vpop.f32.mrf.mxu0
      %v2384 = vadd.f32 0.0, %v2383
      %2385 = vmatmul.f32.gmra.mxu0 %v2271
      %v2386 = vpop.f32.mrf.mxu0
      %v2387 = vadd.f32 0.0, %v2386
      %2388 = vmatmul.f32.gmra.mxu0 %v2274
      %v2389 = vpop.f32.mrf.mxu0
      %v2390 = vadd.f32 0.0, %v2389
      %2391 = vmatmul.f32.gmra.mxu0 %v2277
      %v2392 = vpop.f32.mrf.mxu0
      %v2393 = vadd.f32 0.0, %v2392
      %2394 = vmatmul.f32.gmra.mxu0 %v2280
      %v2395 = vpop.f32.mrf.mxu0
      %v2396 = vadd.f32 0.0, %v2395
      %2397 = vmatmul.f32.gmra.mxu0 %v2283
      %v2398 = vpop.f32.mrf.mxu0
      %v2399 = vadd.f32 0.0, %v2398
      %2400 = vmatmul.f32.gmra.mxu0 %v2286
      %v2401 = vpop.f32.mrf.mxu0
      %v2402 = vadd.f32 0.0, %v2401
      %2403 = vmatmul.f32.gmra.mxu0 %v2289
      %v2404 = vpop.f32.mrf.mxu0
      %v2405 = vadd.f32 0.0, %v2404
      %2406 = vmatmul.f32.gmra.mxu0 %v2292
      %v2407 = vpop.f32.mrf.mxu0
      %v2408 = vadd.f32 0.0, %v2407
      %2409 = vmatmul.f32.gmra.mxu0 %v2295
      %v2410 = vpop.f32.mrf.mxu0
      %v2411 = vadd.f32 0.0, %v2410
      %2412 = vdwg.mxu0
      %v2413 = vadd.f32 %v2134, %v2318
      %v2414 = vadd.f32 %v2135, %v2321
      %v2415 = vadd.f32 %v2136, %v2324
      %v2416 = vadd.f32 %v2137, %v2327
      %v2417 = vadd.f32 %v2138, %v2330
      %v2418 = vadd.f32 %v2139, %v2333
      %v2419 = vadd.f32 %v2140, %v2336
      %v2420 = vadd.f32 %v2141, %v2339
      %v2421 = vadd.f32 %v2142, %v2342
      %v2422 = vadd.f32 %v2143, %v2345
      %v2423 = vadd.f32 %v2144, %v2348
      %v2424 = vadd.f32 %v2145, %v2351
      %v2425 = vadd.f32 %v2146, %v2354
      %v2426 = vadd.f32 %v2147, %v2357
      %v2427 = vadd.f32 %v2148, %v2360
      %v2428 = vadd.f32 %v2149, %v2363
      %v2429 = vadd.f32 %v2150, %v2366
      %v2430 = vadd.f32 %v2151, %v2369
      %v2431 = vadd.f32 %v2152, %v2372
      %v2432 = vadd.f32 %v2153, %v2375
      %v2433 = vadd.f32 %v2154, %v2378
      %v2434 = vadd.f32 %v2155, %v2381
      %v2435 = vadd.f32 %v2156, %v2384
      %v2436 = vadd.f32 %v2157, %v2387
      %v2437 = vadd.f32 %v2158, %v2390
      %v2438 = vadd.f32 %v2159, %v2393
      %v2439 = vadd.f32 %v2160, %v2396
      %v2440 = vadd.f32 %v2161, %v2399
      %v2441 = vadd.f32 %v2162, %v2402
      %v2442 = vadd.f32 %v2163, %v2405
      %v2443 = vadd.f32 %v2164, %v2408
      %v2444 = vadd.f32 %v2165, %v2411
      %v2445 = vld [vmem:[%s2166 + $0x1] sm:$0xff]
      %v2446 = vld [vmem:[%s2166 + $0x9] sm:$0xff]
      %v2447 = vld [vmem:[%s2166 + $0x19] sm:$0xff]
      %v2448 = vld [vmem:[%s2166 + $0x21] sm:$0xff]
      %v2449 = vld [vmem:[%s2166 + $0x31] sm:$0xff]
      %v2450 = vld [vmem:[%s2166 + $0x39] sm:$0xff]
      %v2451 = vld [vmem:[%s2166 + $0x49] sm:$0xff]
      %v2452 = vld [vmem:[%s2166 + $0x51] sm:$0xff]
      %v2453 = vld [vmem:[%s2166 + $0x61] sm:$0xff]
      %v2454 = vld [vmem:[%s2166 + $0x69] sm:$0xff]
      %v2455 = vld [vmem:[%s2166 + $0x79] sm:$0xff]
      %v2456 = vld [vmem:[%s2166 + $0x81] sm:$0xff]
      %v2457 = vld [vmem:[%s2166 + $0x91] sm:$0xff]
      %v2458 = vld [vmem:[%s2166 + $0x99] sm:$0xff]
      %v2459 = vld [vmem:[%s2166 + $0xa9] sm:$0xff]
      %v2460 = vld [vmem:[%s2166 + $0xb1] sm:$0xff]
      %v2461 = vld [vmem:[%s2166 + $0xc1] sm:$0xff]
      %v2462 = vld [vmem:[%s2166 + $0xc9] sm:$0xff]
      %v2463 = vld [vmem:[%s2166 + $0xd9] sm:$0xff]
      %v2464 = vld [vmem:[%s2166 + $0xe1] sm:$0xff]
      %v2465 = vld [vmem:[%s2166 + $0xf1] sm:$0xff]
      %v2466 = vld [vmem:[%s2166 + $0xf9] sm:$0xff]
      %v2467 = vld [vmem:[%s2166 + $0x109] sm:$0xff]
      %v2468 = vld [vmem:[%s2166 + $0x111] sm:$0xff]
      %v2469 = vld [vmem:[%s2166 + $0x121] sm:$0xff]
      %v2470 = vld [vmem:[%s2166 + $0x129] sm:$0xff]
      %v2471 = vld [vmem:[%s2166 + $0x139] sm:$0xff]
      %v2472 = vld [vmem:[%s2166 + $0x141] sm:$0xff]
      %v2473 = vld [vmem:[%s2166 + $0x151] sm:$0xff]
      %v2474 = vld [vmem:[%s2166 + $0x159] sm:$0xff]
      %v2475 = vld [vmem:[%s2166 + $0x169] sm:$0xff]
      %v2476 = vld [vmem:[%s2166 + $0x171] sm:$0xff]
      %s2477 = scalar_lea.vmem %s1, 28
      %v2478 = vld [vmem:[%s2477] sm:$0xf]
      %v2480 = vsel %vm473, %v2445, 0
      %v2483 = vsel %vm473, %v2446, 0
      %v2486 = vsel %vm473, %v2447, 0
      %v2489 = vsel %vm473, %v2448, 0
      %v2492 = vsel %vm473, %v2449, 0
      %v2495 = vsel %vm473, %v2450, 0
      %v2498 = vsel %vm473, %v2451, 0
      %v2501 = vsel %vm473, %v2452, 0
      %v2504 = vsel %vm473, %v2453, 0
      %v2507 = vsel %vm473, %v2454, 0
      %v2510 = vsel %vm473, %v2455, 0
      %v2513 = vsel %vm473, %v2456, 0
      %v2516 = vsel %vm473, %v2457, 0
      %v2519 = vsel %vm473, %v2458, 0
      %v2522 = vsel %vm473, %v2459, 0
      %v2525 = vsel %vm473, %v2460, 0
      %v2528 = vsel %vm473, %v2461, 0
      %v2531 = vsel %vm473, %v2462, 0
      %v2534 = vsel %vm473, %v2463, 0
      %v2537 = vsel %vm473, %v2464, 0
      %v2540 = vsel %vm473, %v2465, 0
      %v2543 = vsel %vm473, %v2466, 0
      %v2546 = vsel %vm473, %v2467, 0
      %v2549 = vsel %vm473, %v2468, 0
      %v2552 = vsel %vm473, %v2469, 0
      %v2555 = vsel %vm473, %v2470, 0
      %v2558 = vsel %vm473, %v2471, 0
      %v2561 = vsel %vm473, %v2472, 0
      %v2564 = vsel %vm473, %v2473, 0
      %v2567 = vsel %vm473, %v2474, 0
      %v2570 = vsel %vm473, %v2475, 0
      %v2573 = vsel %vm473, %v2476, 0
      %v2576 = vsel %vm725, %v2478, 0
      %2578 = vmatpush.msra.mxu0 0.0
      %2579 = vmatpush.msra.mxu0 0.0
      %2580 = vmatpush.msra.mxu0 0.0
      %2581 = vmatpush.msra.mxu0 0.0
      %2582 = vmatpush.msra.mxu0 0.0
      %2583 = vmatpush.msra.mxu0 0.0
      %2584 = vmatpush.msra.mxu0 0.0
      %2585 = vmatpush.msra.mxu0 0.0
      %2586 = vmatpush.msra.mxu0 0.0
      %2587 = vmatpush.msra.mxu0 0.0
      %2588 = vmatpush.msra.mxu0 0.0
      %2589 = vmatpush.msra.mxu0 0.0
      %2590 = vmatpush.msra.mxu0 0.0
      %2591 = vmatpush.msra.mxu0 0.0
      %2592 = vmatpush.msra.mxu0 0.0
      %2593 = vmatpush.msra.mxu0 %v2576
      %2594 = vmatmul.f32.gmra.mxu0 %v2480
      %v2595 = vpop.f32.mrf.mxu0
      %v2596 = vadd.f32 0.0, %v2595
      %2597 = vmatmul.f32.gmra.mxu0 %v2483
      %v2598 = vpop.f32.mrf.mxu0
      %v2599 = vadd.f32 0.0, %v2598
      %2600 = vmatmul.f32.gmra.mxu0 %v2486
      %v2601 = vpop.f32.mrf.mxu0
      %v2602 = vadd.f32 0.0, %v2601
      %2603 = vmatmul.f32.gmra.mxu0 %v2489
      %v2604 = vpop.f32.mrf.mxu0
      %v2605 = vadd.f32 0.0, %v2604
      %2606 = vmatmul.f32.gmra.mxu0 %v2492
      %v2607 = vpop.f32.mrf.mxu0
      %v2608 = vadd.f32 0.0, %v2607
      %2609 = vmatmul.f32.gmra.mxu0 %v2495
      %v2610 = vpop.f32.mrf.mxu0
      %v2611 = vadd.f32 0.0, %v2610
      %2612 = vmatmul.f32.gmra.mxu0 %v2498
      %v2613 = vpop.f32.mrf.mxu0
      %v2614 = vadd.f32 0.0, %v2613
      %2615 = vmatmul.f32.gmra.mxu0 %v2501
      %v2616 = vpop.f32.mrf.mxu0
      %v2617 = vadd.f32 0.0, %v2616
      %2618 = vmatmul.f32.gmra.mxu0 %v2504
      %v2619 = vpop.f32.mrf.mxu0
      %v2620 = vadd.f32 0.0, %v2619
      %2621 = vmatmul.f32.gmra.mxu0 %v2507
      %v2622 = vpop.f32.mrf.mxu0
      %v2623 = vadd.f32 0.0, %v2622
      %2624 = vmatmul.f32.gmra.mxu0 %v2510
      %v2625 = vpop.f32.mrf.mxu0
      %v2626 = vadd.f32 0.0, %v2625
      %2627 = vmatmul.f32.gmra.mxu0 %v2513
      %v2628 = vpop.f32.mrf.mxu0
      %v2629 = vadd.f32 0.0, %v2628
      %2630 = vmatmul.f32.gmra.mxu0 %v2516
      %v2631 = vpop.f32.mrf.mxu0
      %v2632 = vadd.f32 0.0, %v2631
      %2633 = vmatmul.f32.gmra.mxu0 %v2519
      %v2634 = vpop.f32.mrf.mxu0
      %v2635 = vadd.f32 0.0, %v2634
      %2636 = vmatmul.f32.gmra.mxu0 %v2522
      %v2637 = vpop.f32.mrf.mxu0
      %v2638 = vadd.f32 0.0, %v2637
      %2639 = vmatmul.f32.gmra.mxu0 %v2525
      %v2640 = vpop.f32.mrf.mxu0
      %v2641 = vadd.f32 0.0, %v2640
      %2642 = vmatmul.f32.gmra.mxu0 %v2528
      %v2643 = vpop.f32.mrf.mxu0
      %v2644 = vadd.f32 0.0, %v2643
      %2645 = vmatmul.f32.gmra.mxu0 %v2531
      %v2646 = vpop.f32.mrf.mxu0
      %v2647 = vadd.f32 0.0, %v2646
      %2648 = vmatmul.f32.gmra.mxu0 %v2534
      %v2649 = vpop.f32.mrf.mxu0
      %v2650 = vadd.f32 0.0, %v2649
      %2651 = vmatmul.f32.gmra.mxu0 %v2537
      %v2652 = vpop.f32.mrf.mxu0
      %v2653 = vadd.f32 0.0, %v2652
      %2654 = vmatmul.f32.gmra.mxu0 %v2540
      %v2655 = vpop.f32.mrf.mxu0
      %v2656 = vadd.f32 0.0, %v2655
      %2657 = vmatmul.f32.gmra.mxu0 %v2543
      %v2658 = vpop.f32.mrf.mxu0
      %v2659 = vadd.f32 0.0, %v2658
      %2660 = vmatmul.f32.gmra.mxu0 %v2546
      %v2661 = vpop.f32.mrf.mxu0
      %v2662 = vadd.f32 0.0, %v2661
      %2663 = vmatmul.f32.gmra.mxu0 %v2549
      %v2664 = vpop.f32.mrf.mxu0
      %v2665 = vadd.f32 0.0, %v2664
      %2666 = vmatmul.f32.gmra.mxu0 %v2552
      %v2667 = vpop.f32.mrf.mxu0
      %v2668 = vadd.f32 0.0, %v2667
      %2669 = vmatmul.f32.gmra.mxu0 %v2555
      %v2670 = vpop.f32.mrf.mxu0
      %v2671 = vadd.f32 0.0, %v2670
      %2672 = vmatmul.f32.gmra.mxu0 %v2558
      %v2673 = vpop.f32.mrf.mxu0
      %v2674 = vadd.f32 0.0, %v2673
      %2675 = vmatmul.f32.gmra.mxu0 %v2561
      %v2676 = vpop.f32.mrf.mxu0
      %v2677 = vadd.f32 0.0, %v2676
      %2678 = vmatmul.f32.gmra.mxu0 %v2564
      %v2679 = vpop.f32.mrf.mxu0
      %v2680 = vadd.f32 0.0, %v2679
      %2681 = vmatmul.f32.gmra.mxu0 %v2567
      %v2682 = vpop.f32.mrf.mxu0
      %v2683 = vadd.f32 0.0, %v2682
      %2684 = vmatmul.f32.gmra.mxu0 %v2570
      %v2685 = vpop.f32.mrf.mxu0
      %v2686 = vadd.f32 0.0, %v2685
      %2687 = vmatmul.f32.gmra.mxu0 %v2573
      %v2688 = vpop.f32.mrf.mxu0
      %v2689 = vadd.f32 0.0, %v2688
      %2690 = vdwg.mxu0
      %v2691 = vadd.f32 %v2413, %v2596
      %v2692 = vadd.f32 %v2414, %v2599
      %v2693 = vadd.f32 %v2415, %v2602
      %v2694 = vadd.f32 %v2416, %v2605
      %v2695 = vadd.f32 %v2417, %v2608
      %v2696 = vadd.f32 %v2418, %v2611
      %v2697 = vadd.f32 %v2419, %v2614
      %v2698 = vadd.f32 %v2420, %v2617
      %v2699 = vadd.f32 %v2421, %v2620
      %v2700 = vadd.f32 %v2422, %v2623
      %v2701 = vadd.f32 %v2423, %v2626
      %v2702 = vadd.f32 %v2424, %v2629
      %v2703 = vadd.f32 %v2425, %v2632
      %v2704 = vadd.f32 %v2426, %v2635
      %v2705 = vadd.f32 %v2427, %v2638
      %v2706 = vadd.f32 %v2428, %v2641
      %v2707 = vadd.f32 %v2429, %v2644
      %v2708 = vadd.f32 %v2430, %v2647
      %v2709 = vadd.f32 %v2431, %v2650
      %v2710 = vadd.f32 %v2432, %v2653
      %v2711 = vadd.f32 %v2433, %v2656
      %v2712 = vadd.f32 %v2434, %v2659
      %v2713 = vadd.f32 %v2435, %v2662
      %v2714 = vadd.f32 %v2436, %v2665
      %v2715 = vadd.f32 %v2437, %v2668
      %v2716 = vadd.f32 %v2438, %v2671
      %v2717 = vadd.f32 %v2439, %v2674
      %v2718 = vadd.f32 %v2440, %v2677
      %v2719 = vadd.f32 %v2441, %v2680
      %v2720 = vadd.f32 %v2442, %v2683
      %v2721 = vadd.f32 %v2443, %v2686
      %v2722 = vadd.f32 %v2444, %v2689
      %v2723 = vld [vmem:[%s2166 + $0x2] sm:$0xff]
      %v2724 = vld [vmem:[%s2166 + $0xa] sm:$0xff]
      %v2725 = vld [vmem:[%s2166 + $0x1a] sm:$0xff]
      %v2726 = vld [vmem:[%s2166 + $0x22] sm:$0xff]
      %v2727 = vld [vmem:[%s2166 + $0x32] sm:$0xff]
      %v2728 = vld [vmem:[%s2166 + $0x3a] sm:$0xff]
      %v2729 = vld [vmem:[%s2166 + $0x4a] sm:$0xff]
      %v2730 = vld [vmem:[%s2166 + $0x52] sm:$0xff]
      %v2731 = vld [vmem:[%s2166 + $0x62] sm:$0xff]
      %v2732 = vld [vmem:[%s2166 + $0x6a] sm:$0xff]
      %v2733 = vld [vmem:[%s2166 + $0x7a] sm:$0xff]
      %v2734 = vld [vmem:[%s2166 + $0x82] sm:$0xff]
      %v2735 = vld [vmem:[%s2166 + $0x92] sm:$0xff]
      %v2736 = vld [vmem:[%s2166 + $0x9a] sm:$0xff]
      %v2737 = vld [vmem:[%s2166 + $0xaa] sm:$0xff]
      %v2738 = vld [vmem:[%s2166 + $0xb2] sm:$0xff]
      %v2739 = vld [vmem:[%s2166 + $0xc2] sm:$0xff]
      %v2740 = vld [vmem:[%s2166 + $0xca] sm:$0xff]
      %v2741 = vld [vmem:[%s2166 + $0xda] sm:$0xff]
      %v2742 = vld [vmem:[%s2166 + $0xe2] sm:$0xff]
      %v2743 = vld [vmem:[%s2166 + $0xf2] sm:$0xff]
      %v2744 = vld [vmem:[%s2166 + $0xfa] sm:$0xff]
      %v2745 = vld [vmem:[%s2166 + $0x10a] sm:$0xff]
      %v2746 = vld [vmem:[%s2166 + $0x112] sm:$0xff]
      %v2747 = vld [vmem:[%s2166 + $0x122] sm:$0xff]
      %v2748 = vld [vmem:[%s2166 + $0x12a] sm:$0xff]
      %v2749 = vld [vmem:[%s2166 + $0x13a] sm:$0xff]
      %v2750 = vld [vmem:[%s2166 + $0x142] sm:$0xff]
      %v2751 = vld [vmem:[%s2166 + $0x152] sm:$0xff]
      %v2752 = vld [vmem:[%s2166 + $0x15a] sm:$0xff]
      %v2753 = vld [vmem:[%s2166 + $0x16a] sm:$0xff]
      %v2754 = vld [vmem:[%s2166 + $0x172] sm:$0xff]
      %s2755 = scalar_lea.vmem %s1, 32
      %v2756 = vld [vmem:[%s2755] sm:$0xf]
      %v2758 = vsel %vm473, %v2723, 0
      %v2761 = vsel %vm473, %v2724, 0
      %v2764 = vsel %vm473, %v2725, 0
      %v2767 = vsel %vm473, %v2726, 0
      %v2770 = vsel %vm473, %v2727, 0
      %v2773 = vsel %vm473, %v2728, 0
      %v2776 = vsel %vm473, %v2729, 0
      %v2779 = vsel %vm473, %v2730, 0
      %v2782 = vsel %vm473, %v2731, 0
      %v2785 = vsel %vm473, %v2732, 0
      %v2788 = vsel %vm473, %v2733, 0
      %v2791 = vsel %vm473, %v2734, 0
      %v2794 = vsel %vm473, %v2735, 0
      %v2797 = vsel %vm473, %v2736, 0
      %v2800 = vsel %vm473, %v2737, 0
      %v2803 = vsel %vm473, %v2738, 0
      %v2806 = vsel %vm473, %v2739, 0
      %v2809 = vsel %vm473, %v2740, 0
      %v2812 = vsel %vm473, %v2741, 0
      %v2815 = vsel %vm473, %v2742, 0
      %v2818 = vsel %vm473, %v2743, 0
      %v2821 = vsel %vm473, %v2744, 0
      %v2824 = vsel %vm473, %v2745, 0
      %v2827 = vsel %vm473, %v2746, 0
      %v2830 = vsel %vm473, %v2747, 0
      %v2833 = vsel %vm473, %v2748, 0
      %v2836 = vsel %vm473, %v2749, 0
      %v2839 = vsel %vm473, %v2750, 0
      %v2842 = vsel %vm473, %v2751, 0
      %v2845 = vsel %vm473, %v2752, 0
      %v2848 = vsel %vm473, %v2753, 0
      %v2851 = vsel %vm473, %v2754, 0
      %v2854 = vsel %vm725, %v2756, 0
      %2856 = vmatpush.msra.mxu0 0.0
      %2857 = vmatpush.msra.mxu0 0.0
      %2858 = vmatpush.msra.mxu0 0.0
      %2859 = vmatpush.msra.mxu0 0.0
      %2860 = vmatpush.msra.mxu0 0.0
      %2861 = vmatpush.msra.mxu0 0.0
      %2862 = vmatpush.msra.mxu0 0.0
      %2863 = vmatpush.msra.mxu0 0.0
      %2864 = vmatpush.msra.mxu0 0.0
      %2865 = vmatpush.msra.mxu0 0.0
      %2866 = vmatpush.msra.mxu0 0.0
      %2867 = vmatpush.msra.mxu0 0.0
      %2868 = vmatpush.msra.mxu0 0.0
      %2869 = vmatpush.msra.mxu0 0.0
      %2870 = vmatpush.msra.mxu0 0.0
      %2871 = vmatpush.msra.mxu0 %v2854
      %2872 = vmatmul.f32.gmra.mxu0 %v2758
      %v2873 = vpop.f32.mrf.mxu0
      %v2874 = vadd.f32 0.0, %v2873
      %2875 = vmatmul.f32.gmra.mxu0 %v2761
      %v2876 = vpop.f32.mrf.mxu0
      %v2877 = vadd.f32 0.0, %v2876
      %2878 = vmatmul.f32.gmra.mxu0 %v2764
      %v2879 = vpop.f32.mrf.mxu0
      %v2880 = vadd.f32 0.0, %v2879
      %2881 = vmatmul.f32.gmra.mxu0 %v2767
      %v2882 = vpop.f32.mrf.mxu0
      %v2883 = vadd.f32 0.0, %v2882
      %2884 = vmatmul.f32.gmra.mxu0 %v2770
      %v2885 = vpop.f32.mrf.mxu0
      %v2886 = vadd.f32 0.0, %v2885
      %2887 = vmatmul.f32.gmra.mxu0 %v2773
      %v2888 = vpop.f32.mrf.mxu0
      %v2889 = vadd.f32 0.0, %v2888
      %2890 = vmatmul.f32.gmra.mxu0 %v2776
      %v2891 = vpop.f32.mrf.mxu0
      %v2892 = vadd.f32 0.0, %v2891
      %2893 = vmatmul.f32.gmra.mxu0 %v2779
      %v2894 = vpop.f32.mrf.mxu0
      %v2895 = vadd.f32 0.0, %v2894
      %2896 = vmatmul.f32.gmra.mxu0 %v2782
      %v2897 = vpop.f32.mrf.mxu0
      %v2898 = vadd.f32 0.0, %v2897
      %2899 = vmatmul.f32.gmra.mxu0 %v2785
      %v2900 = vpop.f32.mrf.mxu0
      %v2901 = vadd.f32 0.0, %v2900
      %2902 = vmatmul.f32.gmra.mxu0 %v2788
      %v2903 = vpop.f32.mrf.mxu0
      %v2904 = vadd.f32 0.0, %v2903
      %2905 = vmatmul.f32.gmra.mxu0 %v2791
      %v2906 = vpop.f32.mrf.mxu0
      %v2907 = vadd.f32 0.0, %v2906
      %2908 = vmatmul.f32.gmra.mxu0 %v2794
      %v2909 = vpop.f32.mrf.mxu0
      %v2910 = vadd.f32 0.0, %v2909
      %2911 = vmatmul.f32.gmra.mxu0 %v2797
      %v2912 = vpop.f32.mrf.mxu0
      %v2913 = vadd.f32 0.0, %v2912
      %2914 = vmatmul.f32.gmra.mxu0 %v2800
      %v2915 = vpop.f32.mrf.mxu0
      %v2916 = vadd.f32 0.0, %v2915
      %2917 = vmatmul.f32.gmra.mxu0 %v2803
      %v2918 = vpop.f32.mrf.mxu0
      %v2919 = vadd.f32 0.0, %v2918
      %2920 = vmatmul.f32.gmra.mxu0 %v2806
      %v2921 = vpop.f32.mrf.mxu0
      %v2922 = vadd.f32 0.0, %v2921
      %2923 = vmatmul.f32.gmra.mxu0 %v2809
      %v2924 = vpop.f32.mrf.mxu0
      %v2925 = vadd.f32 0.0, %v2924
      %2926 = vmatmul.f32.gmra.mxu0 %v2812
      %v2927 = vpop.f32.mrf.mxu0
      %v2928 = vadd.f32 0.0, %v2927
      %2929 = vmatmul.f32.gmra.mxu0 %v2815
      %v2930 = vpop.f32.mrf.mxu0
      %v2931 = vadd.f32 0.0, %v2930
      %2932 = vmatmul.f32.gmra.mxu0 %v2818
      %v2933 = vpop.f32.mrf.mxu0
      %v2934 = vadd.f32 0.0, %v2933
      %2935 = vmatmul.f32.gmra.mxu0 %v2821
      %v2936 = vpop.f32.mrf.mxu0
      %v2937 = vadd.f32 0.0, %v2936
      %2938 = vmatmul.f32.gmra.mxu0 %v2824
      %v2939 = vpop.f32.mrf.mxu0
      %v2940 = vadd.f32 0.0, %v2939
      %2941 = vmatmul.f32.gmra.mxu0 %v2827
      %v2942 = vpop.f32.mrf.mxu0
      %v2943 = vadd.f32 0.0, %v2942
      %2944 = vmatmul.f32.gmra.mxu0 %v2830
      %v2945 = vpop.f32.mrf.mxu0
      %v2946 = vadd.f32 0.0, %v2945
      %2947 = vmatmul.f32.gmra.mxu0 %v2833
      %v2948 = vpop.f32.mrf.mxu0
      %v2949 = vadd.f32 0.0, %v2948
      %2950 = vmatmul.f32.gmra.mxu0 %v2836
      %v2951 = vpop.f32.mrf.mxu0
      %v2952 = vadd.f32 0.0, %v2951
      %2953 = vmatmul.f32.gmra.mxu0 %v2839
      %v2954 = vpop.f32.mrf.mxu0
      %v2955 = vadd.f32 0.0, %v2954
      %2956 = vmatmul.f32.gmra.mxu0 %v2842
      %v2957 = vpop.f32.mrf.mxu0
      %v2958 = vadd.f32 0.0, %v2957
      %2959 = vmatmul.f32.gmra.mxu0 %v2845
      %v2960 = vpop.f32.mrf.mxu0
      %v2961 = vadd.f32 0.0, %v2960
      %2962 = vmatmul.f32.gmra.mxu0 %v2848
      %v2963 = vpop.f32.mrf.mxu0
      %v2964 = vadd.f32 0.0, %v2963
      %2965 = vmatmul.f32.gmra.mxu0 %v2851
      %v2966 = vpop.f32.mrf.mxu0
      %v2967 = vadd.f32 0.0, %v2966
      %2968 = vdwg.mxu0
      %v2969 = vadd.f32 %v2691, %v2874
      %v2970 = vadd.f32 %v2692, %v2877
      %v2971 = vadd.f32 %v2693, %v2880
      %v2972 = vadd.f32 %v2694, %v2883
      %v2973 = vadd.f32 %v2695, %v2886
      %v2974 = vadd.f32 %v2696, %v2889
      %v2975 = vadd.f32 %v2697, %v2892
      %v2976 = vadd.f32 %v2698, %v2895
      %v2977 = vadd.f32 %v2699, %v2898
      %v2978 = vadd.f32 %v2700, %v2901
      %v2979 = vadd.f32 %v2701, %v2904
      %v2980 = vadd.f32 %v2702, %v2907
      %v2981 = vadd.f32 %v2703, %v2910
      %v2982 = vadd.f32 %v2704, %v2913
      %v2983 = vadd.f32 %v2705, %v2916
      %v2984 = vadd.f32 %v2706, %v2919
      %v2985 = vadd.f32 %v2707, %v2922
      %v2986 = vadd.f32 %v2708, %v2925
      %v2987 = vadd.f32 %v2709, %v2928
      %v2988 = vadd.f32 %v2710, %v2931
      %v2989 = vadd.f32 %v2711, %v2934
      %v2990 = vadd.f32 %v2712, %v2937
      %v2991 = vadd.f32 %v2713, %v2940
      %v2992 = vadd.f32 %v2714, %v2943
      %v2993 = vadd.f32 %v2715, %v2946
      %v2994 = vadd.f32 %v2716, %v2949
      %v2995 = vadd.f32 %v2717, %v2952
      %v2996 = vadd.f32 %v2718, %v2955
      %v2997 = vadd.f32 %v2719, %v2958
      %v2998 = vadd.f32 %v2720, %v2961
      %v2999 = vadd.f32 %v2721, %v2964
      %v3000 = vadd.f32 %v2722, %v2967
      %v3001 = vld [vmem:[%s2] sm:$0x1]
      %v3003 = vperm.slane %v3001, 0
      %v3005 = vadd.f32 %v2969, %v3003
      %v3006 = vadd.f32 %v2970, %v3003
      %v3007 = vadd.f32 %v2971, %v3003
      %v3008 = vadd.f32 %v2972, %v3003
      %v3009 = vadd.f32 %v2973, %v3003
      %v3010 = vadd.f32 %v2974, %v3003
      %v3011 = vadd.f32 %v2975, %v3003
      %v3012 = vadd.f32 %v2976, %v3003
      %v3013 = vadd.f32 %v2977, %v3003
      %v3014 = vadd.f32 %v2978, %v3003
      %v3015 = vadd.f32 %v2979, %v3003
      %v3016 = vadd.f32 %v2980, %v3003
      %v3017 = vadd.f32 %v2981, %v3003
      %v3018 = vadd.f32 %v2982, %v3003
      %v3019 = vadd.f32 %v2983, %v3003
      %v3020 = vadd.f32 %v2984, %v3003
      %v3021 = vadd.f32 %v2985, %v3003
      %v3022 = vadd.f32 %v2986, %v3003
      %v3023 = vadd.f32 %v2987, %v3003
      %v3024 = vadd.f32 %v2988, %v3003
      %v3025 = vadd.f32 %v2989, %v3003
      %v3026 = vadd.f32 %v2990, %v3003
      %v3027 = vadd.f32 %v2991, %v3003
      %v3028 = vadd.f32 %v2992, %v3003
      %v3029 = vadd.f32 %v2993, %v3003
      %v3030 = vadd.f32 %v2994, %v3003
      %v3031 = vadd.f32 %v2995, %v3003
      %v3032 = vadd.f32 %v2996, %v3003
      %v3033 = vadd.f32 %v2997, %v3003
      %v3034 = vadd.f32 %v2998, %v3003
      %v3035 = vadd.f32 %v2999, %v3003
      %v3036 = vadd.f32 %v3000, %v3003
      %vm3037 = vcmp.gt.f32.partialorder %v3005, 0.0
      %vm3038 = vcmp.gt.f32.partialorder %v3006, 0.0
      %vm3039 = vcmp.gt.f32.partialorder %v3007, 0.0
      %vm3040 = vcmp.gt.f32.partialorder %v3008, 0.0
      %vm3041 = vcmp.gt.f32.partialorder %v3009, 0.0
      %vm3042 = vcmp.gt.f32.partialorder %v3010, 0.0
      %vm3043 = vcmp.gt.f32.partialorder %v3011, 0.0
      %vm3044 = vcmp.gt.f32.partialorder %v3012, 0.0
      %vm3045 = vcmp.gt.f32.partialorder %v3013, 0.0
      %vm3046 = vcmp.gt.f32.partialorder %v3014, 0.0
      %vm3047 = vcmp.gt.f32.partialorder %v3015, 0.0
      %vm3048 = vcmp.gt.f32.partialorder %v3016, 0.0
      %vm3049 = vcmp.gt.f32.partialorder %v3017, 0.0
      %vm3050 = vcmp.gt.f32.partialorder %v3018, 0.0
      %vm3051 = vcmp.gt.f32.partialorder %v3019, 0.0
      %vm3052 = vcmp.gt.f32.partialorder %v3020, 0.0
      %vm3053 = vcmp.gt.f32.partialorder %v3021, 0.0
      %vm3054 = vcmp.gt.f32.partialorder %v3022, 0.0
      %vm3055 = vcmp.gt.f32.partialorder %v3023, 0.0
      %vm3056 = vcmp.gt.f32.partialorder %v3024, 0.0
      %vm3057 = vcmp.gt.f32.partialorder %v3025, 0.0
      %vm3058 = vcmp.gt.f32.partialorder %v3026, 0.0
      %vm3059 = vcmp.gt.f32.partialorder %v3027, 0.0
      %vm3060 = vcmp.gt.f32.partialorder %v3028, 0.0
      %vm3061 = vcmp.gt.f32.partialorder %v3029, 0.0
      %vm3062 = vcmp.gt.f32.partialorder %v3030, 0.0
      %vm3063 = vcmp.gt.f32.partialorder %v3031, 0.0
      %vm3064 = vcmp.gt.f32.partialorder %v3032, 0.0
      %vm3065 = vcmp.gt.f32.partialorder %v3033, 0.0
      %vm3066 = vcmp.gt.f32.partialorder %v3034, 0.0
      %vm3067 = vcmp.gt.f32.partialorder %v3035, 0.0
      %vm3068 = vcmp.gt.f32.partialorder %v3036, 0.0
      %v3069 = vmin.f32 %v3005, 0.0
      %v3070 = vmin.f32 %v3006, 0.0
      %v3071 = vmin.f32 %v3007, 0.0
      %v3072 = vmin.f32 %v3008, 0.0
      %v3073 = vmin.f32 %v3009, 0.0
      %v3074 = vmin.f32 %v3010, 0.0
      %v3075 = vmin.f32 %v3011, 0.0
      %v3076 = vmin.f32 %v3012, 0.0
      %v3077 = vmin.f32 %v3013, 0.0
      %v3078 = vmin.f32 %v3014, 0.0
      %v3079 = vmin.f32 %v3015, 0.0
      %v3080 = vmin.f32 %v3016, 0.0
      %v3081 = vmin.f32 %v3017, 0.0
      %v3082 = vmin.f32 %v3018, 0.0
      %v3083 = vmin.f32 %v3019, 0.0
      %v3084 = vmin.f32 %v3020, 0.0
      %v3085 = vmin.f32 %v3021, 0.0
      %v3086 = vmin.f32 %v3022, 0.0
      %v3087 = vmin.f32 %v3023, 0.0
      %v3088 = vmin.f32 %v3024, 0.0
      %v3089 = vmin.f32 %v3025, 0.0
      %v3090 = vmin.f32 %v3026, 0.0
      %v3091 = vmin.f32 %v3027, 0.0
      %v3092 = vmin.f32 %v3028, 0.0
      %v3093 = vmin.f32 %v3029, 0.0
      %v3094 = vmin.f32 %v3030, 0.0
      %v3095 = vmin.f32 %v3031, 0.0
      %v3096 = vmin.f32 %v3032, 0.0
      %v3097 = vmin.f32 %v3033, 0.0
      %v3098 = vmin.f32 %v3034, 0.0
      %v3099 = vmin.f32 %v3035, 0.0
      %v3100 = vmin.f32 %v3036, 0.0
      %v3101 = vmul.f32 %v3069, 1.442695
      %v3102 = vpow.pop %v3101
      %v3103 = vmul.f32 %v3070, 1.442695
      %v3104 = vpow.pop %v3103
      %v3105 = vmul.f32 %v3071, 1.442695
      %v3106 = vpow.pop %v3105
      %v3107 = vmul.f32 %v3072, 1.442695
      %v3108 = vpow.pop %v3107
      %v3109 = vmul.f32 %v3073, 1.442695
      %v3110 = vpow.pop %v3109
      %v3111 = vmul.f32 %v3074, 1.442695
      %v3112 = vpow.pop %v3111
      %v3113 = vmul.f32 %v3075, 1.442695
      %v3114 = vpow.pop %v3113
      %v3115 = vmul.f32 %v3076, 1.442695
      %v3116 = vpow.pop %v3115
      %v3117 = vmul.f32 %v3077, 1.442695
      %v3118 = vpow.pop %v3117
      %v3119 = vmul.f32 %v3078, 1.442695
      %v3120 = vpow.pop %v3119
      %v3121 = vmul.f32 %v3079, 1.442695
      %v3122 = vpow.pop %v3121
      %v3123 = vmul.f32 %v3080, 1.442695
      %v3124 = vpow.pop %v3123
      %v3125 = vmul.f32 %v3081, 1.442695
      %v3126 = vpow.pop %v3125
      %v3127 = vmul.f32 %v3082, 1.442695
      %v3128 = vpow.pop %v3127
      %v3129 = vmul.f32 %v3083, 1.442695
      %v3130 = vpow.pop %v3129
      %v3131 = vmul.f32 %v3084, 1.442695
      %v3132 = vpow.pop %v3131
      %v3133 = vmul.f32 %v3085, 1.442695
      %v3134 = vpow.pop %v3133
      %v3135 = vmul.f32 %v3086, 1.442695
      %v3136 = vpow.pop %v3135
      %v3137 = vmul.f32 %v3087, 1.442695
      %v3138 = vpow.pop %v3137
      %v3139 = vmul.f32 %v3088, 1.442695
      %v3140 = vpow.pop %v3139
      %v3141 = vmul.f32 %v3089, 1.442695
      %v3142 = vpow.pop %v3141
      %v3143 = vmul.f32 %v3090, 1.442695
      %v3144 = vpow.pop %v3143
      %v3145 = vmul.f32 %v3091, 1.442695
      %v3146 = vpow.pop %v3145
      %v3147 = vmul.f32 %v3092, 1.442695
      %v3148 = vpow.pop %v3147
      %v3149 = vmul.f32 %v3093, 1.442695
      %v3150 = vpow.pop %v3149
      %v3151 = vmul.f32 %v3094, 1.442695
      %v3152 = vpow.pop %v3151
      %v3153 = vmul.f32 %v3095, 1.442695
      %v3154 = vpow.pop %v3153
      %v3155 = vmul.f32 %v3096, 1.442695
      %v3156 = vpow.pop %v3155
      %v3157 = vmul.f32 %v3097, 1.442695
      %v3158 = vpow.pop %v3157
      %v3159 = vmul.f32 %v3098, 1.442695
      %v3160 = vpow.pop %v3159
      %v3161 = vmul.f32 %v3099, 1.442695
      %v3162 = vpow.pop %v3161
      %v3163 = vmul.f32 %v3100, 1.442695
      %v3164 = vpow.pop %v3163
      %v3165 = vsub.f32 %v3102, 1.0
      %v3166 = vsub.f32 %v3104, 1.0
      %v3167 = vsub.f32 %v3106, 1.0
      %v3168 = vsub.f32 %v3108, 1.0
      %v3169 = vsub.f32 %v3110, 1.0
      %v3170 = vsub.f32 %v3112, 1.0
      %v3171 = vsub.f32 %v3114, 1.0
      %v3172 = vsub.f32 %v3116, 1.0
      %v3173 = vsub.f32 %v3118, 1.0
      %v3174 = vsub.f32 %v3120, 1.0
      %v3175 = vsub.f32 %v3122, 1.0
      %v3176 = vsub.f32 %v3124, 1.0
      %v3177 = vsub.f32 %v3126, 1.0
      %v3178 = vsub.f32 %v3128, 1.0
      %v3179 = vsub.f32 %v3130, 1.0
      %v3180 = vsub.f32 %v3132, 1.0
      %v3181 = vsub.f32 %v3134, 1.0
      %v3182 = vsub.f32 %v3136, 1.0
      %v3183 = vsub.f32 %v3138, 1.0
      %v3184 = vsub.f32 %v3140, 1.0
      %v3185 = vsub.f32 %v3142, 1.0
      %v3186 = vsub.f32 %v3144, 1.0
      %v3187 = vsub.f32 %v3146, 1.0
      %v3188 = vsub.f32 %v3148, 1.0
      %v3189 = vsub.f32 %v3150, 1.0
      %v3190 = vsub.f32 %v3152, 1.0
      %v3191 = vsub.f32 %v3154, 1.0
      %v3192 = vsub.f32 %v3156, 1.0
      %v3193 = vsub.f32 %v3158, 1.0
      %v3194 = vsub.f32 %v3160, 1.0
      %v3195 = vsub.f32 %v3162, 1.0
      %v3196 = vsub.f32 %v3164, 1.0
      %v3197 = vsel %vm3037, %v3005, %v3165
      %v3198 = vsel %vm3038, %v3006, %v3166
      %v3199 = vsel %vm3039, %v3007, %v3167
      %v3200 = vsel %vm3040, %v3008, %v3168
      %v3201 = vsel %vm3041, %v3009, %v3169
      %v3202 = vsel %vm3042, %v3010, %v3170
      %v3203 = vsel %vm3043, %v3011, %v3171
      %v3204 = vsel %vm3044, %v3012, %v3172
      %v3205 = vsel %vm3045, %v3013, %v3173
      %v3206 = vsel %vm3046, %v3014, %v3174
      %v3207 = vsel %vm3047, %v3015, %v3175
      %v3208 = vsel %vm3048, %v3016, %v3176
      %v3209 = vsel %vm3049, %v3017, %v3177
      %v3210 = vsel %vm3050, %v3018, %v3178
      %v3211 = vsel %vm3051, %v3019, %v3179
      %v3212 = vsel %vm3052, %v3020, %v3180
      %v3213 = vsel %vm3053, %v3021, %v3181
      %v3214 = vsel %vm3054, %v3022, %v3182
      %v3215 = vsel %vm3055, %v3023, %v3183
      %v3216 = vsel %vm3056, %v3024, %v3184
      %v3217 = vsel %vm3057, %v3025, %v3185
      %v3218 = vsel %vm3058, %v3026, %v3186
      %v3219 = vsel %vm3059, %v3027, %v3187
      %v3220 = vsel %vm3060, %v3028, %v3188
      %v3221 = vsel %vm3061, %v3029, %v3189
      %v3222 = vsel %vm3062, %v3030, %v3190
      %v3223 = vsel %vm3063, %v3031, %v3191
      %v3224 = vsel %vm3064, %v3032, %v3192
      %v3225 = vsel %vm3065, %v3033, %v3193
      %v3226 = vsel %vm3066, %v3034, %v3194
      %v3227 = vsel %vm3067, %v3035, %v3195
      %v3228 = vsel %vm3068, %v3036, %v3196
      %vm3229 = vcmask 64512
      %3230 = vst.msk [vmem:[#allocation3] sm:$0xff] %vm3229, 0.0
      %3231 = vst.msk [vmem:[#allocation3 + $0x8] sm:$0xff] %vm3229, 0.0
      %vm3232 = vcmask 58368
      %3233 = vst.msk [vmem:[#allocation3 + $0x10] sm:$0x3] %vm3232, 0.0
      %3234 = vst.msk [vmem:[#allocation3 + $0x18] sm:$0xff] %vm3229, 0.0
      %3235 = vst.msk [vmem:[#allocation3 + $0x20] sm:$0xff] %vm3229, 0.0
      %3236 = vst.msk [vmem:[#allocation3 + $0x28] sm:$0x3] %vm3232, 0.0
      %3237 = vst.msk [vmem:[#allocation3 + $0x30] sm:$0xff] %vm3229, 0.0
      %3238 = vst.msk [vmem:[#allocation3 + $0x38] sm:$0xff] %vm3229, 0.0
      %3239 = vst.msk [vmem:[#allocation3 + $0x40] sm:$0x3] %vm3232, 0.0
      %3240 = vst.msk [vmem:[#allocation3 + $0x48] sm:$0xff] %vm3229, 0.0
      %3241 = vst.msk [vmem:[#allocation3 + $0x50] sm:$0xff] %vm3229, 0.0
      %3242 = vst.msk [vmem:[#allocation3 + $0x58] sm:$0x3] %vm3232, 0.0
      %3243 = vst.msk [vmem:[#allocation3 + $0x60] sm:$0xff] %vm3229, 0.0
      %3244 = vst.msk [vmem:[#allocation3 + $0x68] sm:$0xff] %vm3229, 0.0
      %3245 = vst.msk [vmem:[#allocation3 + $0x70] sm:$0x3] %vm3232, 0.0
      %3246 = vst.msk [vmem:[#allocation3 + $0x78] sm:$0xff] %vm3229, 0.0
      %3247 = vst.msk [vmem:[#allocation3 + $0x80] sm:$0xff] %vm3229, 0.0
      %3248 = vst.msk [vmem:[#allocation3 + $0x88] sm:$0x3] %vm3232, 0.0
      %3249 = vst.msk [vmem:[#allocation3 + $0x90] sm:$0xff] %vm3229, 0.0
      %3250 = vst.msk [vmem:[#allocation3 + $0x98] sm:$0xff] %vm3229, 0.0
      %3251 = vst.msk [vmem:[#allocation3 + $0xa0] sm:$0x3] %vm3232, 0.0
      %3252 = vst.msk [vmem:[#allocation3 + $0xa8] sm:$0xff] %vm3229, 0.0
      %3253 = vst.msk [vmem:[#allocation3 + $0xb0] sm:$0xff] %vm3229, 0.0
      %3254 = vst.msk [vmem:[#allocation3 + $0xb8] sm:$0x3] %vm3232, 0.0
      %3255 = vst.msk [vmem:[#allocation3 + $0xc0] sm:$0xff] %vm3229, 0.0
      %3256 = vst.msk [vmem:[#allocation3 + $0xc8] sm:$0xff] %vm3229, 0.0
      %3257 = vst.msk [vmem:[#allocation3 + $0xd0] sm:$0x3] %vm3232, 0.0
      %3258 = vst.msk [vmem:[#allocation3 + $0xd8] sm:$0xff] %vm3229, 0.0
      %3259 = vst.msk [vmem:[#allocation3 + $0xe0] sm:$0xff] %vm3229, 0.0
      %3260 = vst.msk [vmem:[#allocation3 + $0xe8] sm:$0x3] %vm3232, 0.0
      %3261 = vst.msk [vmem:[#allocation3 + $0xf0] sm:$0xff] %vm3229, 0.0
      %3262 = vst.msk [vmem:[#allocation3 + $0xf8] sm:$0xff] %vm3229, 0.0
      %3263 = vst.msk [vmem:[#allocation3 + $0x100] sm:$0x3] %vm3232, 0.0
      %3264 = vst.msk [vmem:[#allocation3 + $0x108] sm:$0xff] %vm3229, 0.0
      %3265 = vst.msk [vmem:[#allocation3 + $0x110] sm:$0xff] %vm3229, 0.0
      %3266 = vst.msk [vmem:[#allocation3 + $0x118] sm:$0x3] %vm3232, 0.0
      %3267 = vst.msk [vmem:[#allocation3 + $0x120] sm:$0xff] %vm3229, 0.0
      %3268 = vst.msk [vmem:[#allocation3 + $0x128] sm:$0xff] %vm3229, 0.0
      %3269 = vst.msk [vmem:[#allocation3 + $0x130] sm:$0x3] %vm3232, 0.0
      %3270 = vst.msk [vmem:[#allocation3 + $0x138] sm:$0xff] %vm3229, 0.0
      %3271 = vst.msk [vmem:[#allocation3 + $0x140] sm:$0xff] %vm3229, 0.0
      %3272 = vst.msk [vmem:[#allocation3 + $0x148] sm:$0x3] %vm3232, 0.0
      %3273 = vst.msk [vmem:[#allocation3 + $0x150] sm:$0xff] %vm3229, 0.0
      %3274 = vst.msk [vmem:[#allocation3 + $0x158] sm:$0xff] %vm3229, 0.0
      %3275 = vst.msk [vmem:[#allocation3 + $0x160] sm:$0x3] %vm3232, 0.0
      %3276 = vst.msk [vmem:[#allocation3 + $0x168] sm:$0xff] %vm3229, 0.0
      %3277 = vst.msk [vmem:[#allocation3 + $0x170] sm:$0xff] %vm3229, 0.0
      %3278 = vst.msk [vmem:[#allocation3 + $0x178] sm:$0x3] %vm3232, 0.0
      %3279 = vst.msk [vmem:[#allocation3 + $0x180] sm:$0xff] %vm3229, 0.0
      %3280 = vst.msk [vmem:[#allocation3 + $0x188] sm:$0xff] %vm3229, 0.0
      %3281 = vst.msk [vmem:[#allocation3 + $0x190] sm:$0x3] %vm3232, 0.0
      %3282 = vst.msk [vmem:[#allocation3 + $0x198] sm:$0xff] %vm3229, 0.0
      %3283 = vst.msk [vmem:[#allocation3 + $0x1a0] sm:$0xff] %vm3229, 0.0
      %3284 = vst.msk [vmem:[#allocation3 + $0x1a8] sm:$0x3] %vm3232, 0.0
      %s3285 = scalar_lea.vmem [#allocation3], 24
      %3286 = vst.msk [vmem:[%s3285 + $0x1] sm:$0xff] %vm3229, %v3197
      %3287 = vst.msk [vmem:[%s3285 + $0x9] sm:$0xff] %vm3229, %v3198
      %3288 = vst.msk [vmem:[%s3285 + $0x19] sm:$0xff] %vm3229, %v3199
      %3289 = vst.msk [vmem:[%s3285 + $0x21] sm:$0xff] %vm3229, %v3200
      %3290 = vst.msk [vmem:[%s3285 + $0x31] sm:$0xff] %vm3229, %v3201
      %3291 = vst.msk [vmem:[%s3285 + $0x39] sm:$0xff] %vm3229, %v3202
      %3292 = vst.msk [vmem:[%s3285 + $0x49] sm:$0xff] %vm3229, %v3203
      %3293 = vst.msk [vmem:[%s3285 + $0x51] sm:$0xff] %vm3229, %v3204
      %3294 = vst.msk [vmem:[%s3285 + $0x61] sm:$0xff] %vm3229, %v3205
      %3295 = vst.msk [vmem:[%s3285 + $0x69] sm:$0xff] %vm3229, %v3206
      %3296 = vst.msk [vmem:[%s3285 + $0x79] sm:$0xff] %vm3229, %v3207
      %3297 = vst.msk [vmem:[%s3285 + $0x81] sm:$0xff] %vm3229, %v3208
      %3298 = vst.msk [vmem:[%s3285 + $0x91] sm:$0xff] %vm3229, %v3209
      %3299 = vst.msk [vmem:[%s3285 + $0x99] sm:$0xff] %vm3229, %v3210
      %3300 = vst.msk [vmem:[%s3285 + $0xa9] sm:$0xff] %vm3229, %v3211
      %3301 = vst.msk [vmem:[%s3285 + $0xb1] sm:$0xff] %vm3229, %v3212
      %3302 = vst.msk [vmem:[%s3285 + $0xc1] sm:$0xff] %vm3229, %v3213
      %3303 = vst.msk [vmem:[%s3285 + $0xc9] sm:$0xff] %vm3229, %v3214
      %3304 = vst.msk [vmem:[%s3285 + $0xd9] sm:$0xff] %vm3229, %v3215
      %3305 = vst.msk [vmem:[%s3285 + $0xe1] sm:$0xff] %vm3229, %v3216
      %3306 = vst.msk [vmem:[%s3285 + $0xf1] sm:$0xff] %vm3229, %v3217
      %3307 = vst.msk [vmem:[%s3285 + $0xf9] sm:$0xff] %vm3229, %v3218
      %3308 = vst.msk [vmem:[%s3285 + $0x109] sm:$0xff] %vm3229, %v3219
      %3309 = vst.msk [vmem:[%s3285 + $0x111] sm:$0xff] %vm3229, %v3220
      %3310 = vst.msk [vmem:[%s3285 + $0x121] sm:$0xff] %vm3229, %v3221
      %3311 = vst.msk [vmem:[%s3285 + $0x129] sm:$0xff] %vm3229, %v3222
      %3312 = vst.msk [vmem:[%s3285 + $0x139] sm:$0xff] %vm3229, %v3223
      %3313 = vst.msk [vmem:[%s3285 + $0x141] sm:$0xff] %vm3229, %v3224
      %3314 = vst.msk [vmem:[%s3285 + $0x151] sm:$0xff] %vm3229, %v3225
      %3315 = vst.msk [vmem:[%s3285 + $0x159] sm:$0xff] %vm3229, %v3226
      %3316 = vst.msk [vmem:[%s3285 + $0x169] sm:$0xff] %vm3229, %v3227
      %3317 = vst.msk [vmem:[%s3285 + $0x171] sm:$0xff] %vm3229, %v3228
      %v3318 = vld [vmem:[#allocation3] sm:$0xff]
      %v3319 = vld [vmem:[#allocation3 + $0x8] sm:$0xff]
      %v3320 = vld [vmem:[#allocation3 + $0x18] sm:$0xff]
      %v3321 = vld [vmem:[#allocation3 + $0x20] sm:$0xff]
      %v3322 = vld [vmem:[#allocation3 + $0x30] sm:$0xff]
      %v3323 = vld [vmem:[#allocation3 + $0x38] sm:$0xff]
      %v3324 = vld [vmem:[#allocation3 + $0x48] sm:$0xff]
      %v3325 = vld [vmem:[#allocation3 + $0x50] sm:$0xff]
      %v3326 = vld [vmem:[#allocation3 + $0x60] sm:$0xff]
      %v3327 = vld [vmem:[#allocation3 + $0x68] sm:$0xff]
      %v3328 = vld [vmem:[#allocation3 + $0x78] sm:$0xff]
      %v3329 = vld [vmem:[#allocation3 + $0x80] sm:$0xff]
      %v3330 = vld [vmem:[#allocation3 + $0x90] sm:$0xff]
      %v3331 = vld [vmem:[#allocation3 + $0x98] sm:$0xff]
      %v3332 = vld [vmem:[#allocation3 + $0xa8] sm:$0xff]
      %v3333 = vld [vmem:[#allocation3 + $0xb0] sm:$0xff]
      %v3334 = vld [vmem:[#allocation3 + $0xc0] sm:$0xff]
      %v3335 = vld [vmem:[#allocation3 + $0xc8] sm:$0xff]
      %v3336 = vld [vmem:[#allocation3 + $0xd8] sm:$0xff]
      %v3337 = vld [vmem:[#allocation3 + $0xe0] sm:$0xff]
      %v3338 = vld [vmem:[#allocation3 + $0xf0] sm:$0xff]
      %v3339 = vld [vmem:[#allocation3 + $0xf8] sm:$0xff]
      %v3340 = vld [vmem:[#allocation3 + $0x108] sm:$0xff]
      %v3341 = vld [vmem:[#allocation3 + $0x110] sm:$0xff]
      %v3342 = vld [vmem:[#allocation3 + $0x120] sm:$0xff]
      %v3343 = vld [vmem:[#allocation3 + $0x128] sm:$0xff]
      %v3344 = vld [vmem:[#allocation3 + $0x138] sm:$0xff]
      %v3345 = vld [vmem:[#allocation3 + $0x140] sm:$0xff]
      %v3346 = vld [vmem:[#allocation3 + $0x150] sm:$0xff]
      %v3347 = vld [vmem:[#allocation3 + $0x158] sm:$0xff]
      %v3348 = vld [vmem:[#allocation3 + $0x168] sm:$0xff]
      %v3349 = vld [vmem:[#allocation3 + $0x170] sm:$0xff]
      %v3350 = vld [vmem:[%s3] sm:$0xff]
      %v3351 = vld [vmem:[#allocation3 + $0x1] sm:$0xff]
      %v3352 = vld [vmem:[#allocation3 + $0x9] sm:$0xff]
      %v3353 = vld [vmem:[#allocation3 + $0x19] sm:$0xff]
      %v3354 = vld [vmem:[#allocation3 + $0x21] sm:$0xff]
      %v3355 = vld [vmem:[#allocation3 + $0x31] sm:$0xff]
      %v3356 = vld [vmem:[#allocation3 + $0x39] sm:$0xff]
      %v3357 = vld [vmem:[#allocation3 + $0x49] sm:$0xff]
      %v3358 = vld [vmem:[#allocation3 + $0x51] sm:$0xff]
      %v3359 = vld [vmem:[#allocation3 + $0x61] sm:$0xff]
      %v3360 = vld [vmem:[#allocation3 + $0x69] sm:$0xff]
      %v3361 = vld [vmem:[#allocation3 + $0x79] sm:$0xff]
      %v3362 = vld [vmem:[#allocation3 + $0x81] sm:$0xff]
      %v3363 = vld [vmem:[#allocation3 + $0x91] sm:$0xff]
      %v3364 = vld [vmem:[#allocation3 + $0x99] sm:$0xff]
      %v3365 = vld [vmem:[#allocation3 + $0xa9] sm:$0xff]
      %v3366 = vld [vmem:[#allocation3 + $0xb1] sm:$0xff]
      %v3367 = vld [vmem:[#allocation3 + $0xc1] sm:$0xff]
      %v3368 = vld [vmem:[#allocation3 + $0xc9] sm:$0xff]
      %v3369 = vld [vmem:[#allocation3 + $0xd9] sm:$0xff]
      %v3370 = vld [vmem:[#allocation3 + $0xe1] sm:$0xff]
      %v3371 = vld [vmem:[#allocation3 + $0xf1] sm:$0xff]
      %v3372 = vld [vmem:[#allocation3 + $0xf9] sm:$0xff]
      %v3373 = vld [vmem:[#allocation3 + $0x109] sm:$0xff]
      %v3374 = vld [vmem:[#allocation3 + $0x111] sm:$0xff]
      %v3375 = vld [vmem:[#allocation3 + $0x121] sm:$0xff]
      %v3376 = vld [vmem:[#allocation3 + $0x129] sm:$0xff]
      %v3377 = vld [vmem:[#allocation3 + $0x139] sm:$0xff]
      %v3378 = vld [vmem:[#allocation3 + $0x141] sm:$0xff]
      %v3379 = vld [vmem:[#allocation3 + $0x151] sm:$0xff]
      %v3380 = vld [vmem:[#allocation3 + $0x159] sm:$0xff]
      %v3381 = vld [vmem:[#allocation3 + $0x169] sm:$0xff]
      %v3382 = vld [vmem:[#allocation3 + $0x171] sm:$0xff]
      %s3383 = scalar_lea.vmem %s3, 8
      %v3384 = vld [vmem:[%s3383] sm:$0xff]
      %v3386 = vsel %vm3229, %v3351, 0
      %v3389 = vsel %vm3229, %v3352, 0
      %v3392 = vsel %vm3229, %v3353, 0
      %v3395 = vsel %vm3229, %v3354, 0
      %v3398 = vsel %vm3229, %v3355, 0
      %v3401 = vsel %vm3229, %v3356, 0
      %v3404 = vsel %vm3229, %v3357, 0
      %v3407 = vsel %vm3229, %v3358, 0
      %v3410 = vsel %vm3229, %v3359, 0
      %v3413 = vsel %vm3229, %v3360, 0
      %v3416 = vsel %vm3229, %v3361, 0
      %v3419 = vsel %vm3229, %v3362, 0
      %v3422 = vsel %vm3229, %v3363, 0
      %v3425 = vsel %vm3229, %v3364, 0
      %v3428 = vsel %vm3229, %v3365, 0
      %v3431 = vsel %vm3229, %v3366, 0
      %v3434 = vsel %vm3229, %v3367, 0
      %v3437 = vsel %vm3229, %v3368, 0
      %v3440 = vsel %vm3229, %v3369, 0
      %v3443 = vsel %vm3229, %v3370, 0
      %v3446 = vsel %vm3229, %v3371, 0
      %v3449 = vsel %vm3229, %v3372, 0
      %v3452 = vsel %vm3229, %v3373, 0
      %v3455 = vsel %vm3229, %v3374, 0
      %v3458 = vsel %vm3229, %v3375, 0
      %v3461 = vsel %vm3229, %v3376, 0
      %v3464 = vsel %vm3229, %v3377, 0
      %v3467 = vsel %vm3229, %v3378, 0
      %v3470 = vsel %vm3229, %v3379, 0
      %v3473 = vsel %vm3229, %v3380, 0
      %v3476 = vsel %vm3229, %v3381, 0
      %v3479 = vsel %vm3229, %v3382, 0
      %3481 = vmatpush.msra.mxu0 0.0
      %3482 = vmatpush.msra.mxu0 0.0
      %3483 = vmatpush.msra.mxu0 0.0
      %3484 = vmatpush.msra.mxu0 0.0
      %3485 = vmatpush.msra.mxu0 0.0
      %3486 = vmatpush.msra.mxu0 0.0
      %3487 = vmatpush.msra.mxu0 0.0
      %3488 = vmatpush.msra.mxu0 0.0
      %3489 = vmatpush.msra.mxu0 0.0
      %3490 = vmatpush.msra.mxu0 0.0
      %3491 = vmatpush.msra.mxu0 0.0
      %3492 = vmatpush.msra.mxu0 0.0
      %3493 = vmatpush.msra.mxu0 0.0
      %3494 = vmatpush.msra.mxu0 0.0
      %3495 = vmatpush.msra.mxu0 0.0
      %3496 = vmatpush.msra.mxu0 %v3384
      %3497 = vmatmul.f32.gmra.mxu0 %v3386
      %v3498 = vpop.f32.mrf.mxu0
      %v3499 = vadd.f32 0.0, %v3498
      %3500 = vmatmul.f32.gmra.mxu0 %v3389
      %v3501 = vpop.f32.mrf.mxu0
      %v3502 = vadd.f32 0.0, %v3501
      %3503 = vmatmul.f32.gmra.mxu0 %v3392
      %v3504 = vpop.f32.mrf.mxu0
      %v3505 = vadd.f32 0.0, %v3504
      %3506 = vmatmul.f32.gmra.mxu0 %v3395
      %v3507 = vpop.f32.mrf.mxu0
      %v3508 = vadd.f32 0.0, %v3507
      %3509 = vmatmul.f32.gmra.mxu0 %v3398
      %v3510 = vpop.f32.mrf.mxu0
      %v3511 = vadd.f32 0.0, %v3510
      %3512 = vmatmul.f32.gmra.mxu0 %v3401
      %v3513 = vpop.f32.mrf.mxu0
      %v3514 = vadd.f32 0.0, %v3513
      %3515 = vmatmul.f32.gmra.mxu0 %v3404
      %v3516 = vpop.f32.mrf.mxu0
      %v3517 = vadd.f32 0.0, %v3516
      %3518 = vmatmul.f32.gmra.mxu0 %v3407
      %v3519 = vpop.f32.mrf.mxu0
      %v3520 = vadd.f32 0.0, %v3519
      %3521 = vmatmul.f32.gmra.mxu0 %v3410
      %v3522 = vpop.f32.mrf.mxu0
      %v3523 = vadd.f32 0.0, %v3522
      %3524 = vmatmul.f32.gmra.mxu0 %v3413
      %v3525 = vpop.f32.mrf.mxu0
      %v3526 = vadd.f32 0.0, %v3525
      %3527 = vmatmul.f32.gmra.mxu0 %v3416
      %v3528 = vpop.f32.mrf.mxu0
      %v3529 = vadd.f32 0.0, %v3528
      %3530 = vmatmul.f32.gmra.mxu0 %v3419
      %v3531 = vpop.f32.mrf.mxu0
      %v3532 = vadd.f32 0.0, %v3531
      %3533 = vmatmul.f32.gmra.mxu0 %v3422
      %v3534 = vpop.f32.mrf.mxu0
      %v3535 = vadd.f32 0.0, %v3534
      %3536 = vmatmul.f32.gmra.mxu0 %v3425
      %v3537 = vpop.f32.mrf.mxu0
      %v3538 = vadd.f32 0.0, %v3537
      %3539 = vmatmul.f32.gmra.mxu0 %v3428
      %v3540 = vpop.f32.mrf.mxu0
      %v3541 = vadd.f32 0.0, %v3540
      %3542 = vmatmul.f32.gmra.mxu0 %v3431
      %v3543 = vpop.f32.mrf.mxu0
      %v3544 = vadd.f32 0.0, %v3543
      %3545 = vmatmul.f32.gmra.mxu0 %v3434
      %v3546 = vpop.f32.mrf.mxu0
      %v3547 = vadd.f32 0.0, %v3546
      %3548 = vmatmul.f32.gmra.mxu0 %v3437
      %v3549 = vpop.f32.mrf.mxu0
      %v3550 = vadd.f32 0.0, %v3549
      %3551 = vmatmul.f32.gmra.mxu0 %v3440
      %v3552 = vpop.f32.mrf.mxu0
      %v3553 = vadd.f32 0.0, %v3552
      %3554 = vmatmul.f32.gmra.mxu0 %v3443
      %v3555 = vpop.f32.mrf.mxu0
      %v3556 = vadd.f32 0.0, %v3555
      %3557 = vmatmul.f32.gmra.mxu0 %v3446
      %v3558 = vpop.f32.mrf.mxu0
      %v3559 = vadd.f32 0.0, %v3558
      %3560 = vmatmul.f32.gmra.mxu0 %v3449
      %v3561 = vpop.f32.mrf.mxu0
      %v3562 = vadd.f32 0.0, %v3561
      %3563 = vmatmul.f32.gmra.mxu0 %v3452
      %v3564 = vpop.f32.mrf.mxu0
      %v3565 = vadd.f32 0.0, %v3564
      %3566 = vmatmul.f32.gmra.mxu0 %v3455
      %v3567 = vpop.f32.mrf.mxu0
      %v3568 = vadd.f32 0.0, %v3567
      %3569 = vmatmul.f32.gmra.mxu0 %v3458
      %v3570 = vpop.f32.mrf.mxu0
      %v3571 = vadd.f32 0.0, %v3570
      %3572 = vmatmul.f32.gmra.mxu0 %v3461
      %v3573 = vpop.f32.mrf.mxu0
      %v3574 = vadd.f32 0.0, %v3573
      %3575 = vmatmul.f32.gmra.mxu0 %v3464
      %v3576 = vpop.f32.mrf.mxu0
      %v3577 = vadd.f32 0.0, %v3576
      %3578 = vmatmul.f32.gmra.mxu0 %v3467
      %v3579 = vpop.f32.mrf.mxu0
      %v3580 = vadd.f32 0.0, %v3579
      %3581 = vmatmul.f32.gmra.mxu0 %v3470
      %v3582 = vpop.f32.mrf.mxu0
      %v3583 = vadd.f32 0.0, %v3582
      %3584 = vmatmul.f32.gmra.mxu0 %v3473
      %v3585 = vpop.f32.mrf.mxu0
      %v3586 = vadd.f32 0.0, %v3585
      %3587 = vmatmul.f32.gmra.mxu0 %v3476
      %v3588 = vpop.f32.mrf.mxu0
      %v3589 = vadd.f32 0.0, %v3588
      %3590 = vmatmul.f32.gmra.mxu0 %v3479
      %v3591 = vpop.f32.mrf.mxu0
      %v3592 = vadd.f32 0.0, %v3591
      %3593 = vdwg.mxu0
      %v3595 = vsel %vm3229, %v3318, 0
      %v3598 = vsel %vm3229, %v3319, 0
      %v3601 = vsel %vm3229, %v3320, 0
      %v3604 = vsel %vm3229, %v3321, 0
      %v3607 = vsel %vm3229, %v3322, 0
      %v3610 = vsel %vm3229, %v3323, 0
      %v3613 = vsel %vm3229, %v3324, 0
      %v3616 = vsel %vm3229, %v3325, 0
      %v3619 = vsel %vm3229, %v3326, 0
      %v3622 = vsel %vm3229, %v3327, 0
      %v3625 = vsel %vm3229, %v3328, 0
      %v3628 = vsel %vm3229, %v3329, 0
      %v3631 = vsel %vm3229, %v3330, 0
      %v3634 = vsel %vm3229, %v3331, 0
      %v3637 = vsel %vm3229, %v3332, 0
      %v3640 = vsel %vm3229, %v3333, 0
      %v3643 = vsel %vm3229, %v3334, 0
      %v3646 = vsel %vm3229, %v3335, 0
      %v3649 = vsel %vm3229, %v3336, 0
      %v3652 = vsel %vm3229, %v3337, 0
      %v3655 = vsel %vm3229, %v3338, 0
      %v3658 = vsel %vm3229, %v3339, 0
      %v3661 = vsel %vm3229, %v3340, 0
      %v3664 = vsel %vm3229, %v3341, 0
      %v3667 = vsel %vm3229, %v3342, 0
      %v3670 = vsel %vm3229, %v3343, 0
      %v3673 = vsel %vm3229, %v3344, 0
      %v3676 = vsel %vm3229, %v3345, 0
      %v3679 = vsel %vm3229, %v3346, 0
      %v3682 = vsel %vm3229, %v3347, 0
      %v3685 = vsel %vm3229, %v3348, 0
      %v3688 = vsel %vm3229, %v3349, 0
      %3690 = vmatpush.msra.mxu0 0.0
      %3691 = vmatpush.msra.mxu0 0.0
      %3692 = vmatpush.msra.mxu0 0.0
      %3693 = vmatpush.msra.mxu0 0.0
      %3694 = vmatpush.msra.mxu0 0.0
      %3695 = vmatpush.msra.mxu0 0.0
      %3696 = vmatpush.msra.mxu0 0.0
      %3697 = vmatpush.msra.mxu0 0.0
      %3698 = vmatpush.msra.mxu0 0.0
      %3699 = vmatpush.msra.mxu0 0.0
      %3700 = vmatpush.msra.mxu0 0.0
      %3701 = vmatpush.msra.mxu0 0.0
      %3702 = vmatpush.msra.mxu0 0.0
      %3703 = vmatpush.msra.mxu0 0.0
      %3704 = vmatpush.msra.mxu0 0.0
      %3705 = vmatpush.msra.mxu0 %v3350
      %3706 = vmatmul.f32.gmra.mxu0 %v3595
      %v3707 = vpop.f32.mrf.mxu0
      %v3708 = vadd.f32 %v3499, %v3707
      %3709 = vmatmul.f32.gmra.mxu0 %v3598
      %v3710 = vpop.f32.mrf.mxu0
      %v3711 = vadd.f32 %v3502, %v3710
      %3712 = vmatmul.f32.gmra.mxu0 %v3601
      %v3713 = vpop.f32.mrf.mxu0
      %v3714 = vadd.f32 %v3505, %v3713
      %3715 = vmatmul.f32.gmra.mxu0 %v3604
      %v3716 = vpop.f32.mrf.mxu0
      %v3717 = vadd.f32 %v3508, %v3716
      %3718 = vmatmul.f32.gmra.mxu0 %v3607
      %v3719 = vpop.f32.mrf.mxu0
      %v3720 = vadd.f32 %v3511, %v3719
      %3721 = vmatmul.f32.gmra.mxu0 %v3610
      %v3722 = vpop.f32.mrf.mxu0
      %v3723 = vadd.f32 %v3514, %v3722
      %3724 = vmatmul.f32.gmra.mxu0 %v3613
      %v3725 = vpop.f32.mrf.mxu0
      %v3726 = vadd.f32 %v3517, %v3725
      %3727 = vmatmul.f32.gmra.mxu0 %v3616
      %v3728 = vpop.f32.mrf.mxu0
      %v3729 = vadd.f32 %v3520, %v3728
      %3730 = vmatmul.f32.gmra.mxu0 %v3619
      %v3731 = vpop.f32.mrf.mxu0
      %v3732 = vadd.f32 %v3523, %v3731
      %3733 = vmatmul.f32.gmra.mxu0 %v3622
      %v3734 = vpop.f32.mrf.mxu0
      %v3735 = vadd.f32 %v3526, %v3734
      %3736 = vmatmul.f32.gmra.mxu0 %v3625
      %v3737 = vpop.f32.mrf.mxu0
      %v3738 = vadd.f32 %v3529, %v3737
      %3739 = vmatmul.f32.gmra.mxu0 %v3628
      %v3740 = vpop.f32.mrf.mxu0
      %v3741 = vadd.f32 %v3532, %v3740
      %3742 = vmatmul.f32.gmra.mxu0 %v3631
      %v3743 = vpop.f32.mrf.mxu0
      %v3744 = vadd.f32 %v3535, %v3743
      %3745 = vmatmul.f32.gmra.mxu0 %v3634
      %v3746 = vpop.f32.mrf.mxu0
      %v3747 = vadd.f32 %v3538, %v3746
      %3748 = vmatmul.f32.gmra.mxu0 %v3637
      %v3749 = vpop.f32.mrf.mxu0
      %v3750 = vadd.f32 %v3541, %v3749
      %3751 = vmatmul.f32.gmra.mxu0 %v3640
      %v3752 = vpop.f32.mrf.mxu0
      %v3753 = vadd.f32 %v3544, %v3752
      %3754 = vmatmul.f32.gmra.mxu0 %v3643
      %v3755 = vpop.f32.mrf.mxu0
      %v3756 = vadd.f32 %v3547, %v3755
      %3757 = vmatmul.f32.gmra.mxu0 %v3646
      %v3758 = vpop.f32.mrf.mxu0
      %v3759 = vadd.f32 %v3550, %v3758
      %3760 = vmatmul.f32.gmra.mxu0 %v3649
      %v3761 = vpop.f32.mrf.mxu0
      %v3762 = vadd.f32 %v3553, %v3761
      %3763 = vmatmul.f32.gmra.mxu0 %v3652
      %v3764 = vpop.f32.mrf.mxu0
      %v3765 = vadd.f32 %v3556, %v3764
      %3766 = vmatmul.f32.gmra.mxu0 %v3655
      %v3767 = vpop.f32.mrf.mxu0
      %v3768 = vadd.f32 %v3559, %v3767
      %3769 = vmatmul.f32.gmra.mxu0 %v3658
      %v3770 = vpop.f32.mrf.mxu0
      %v3771 = vadd.f32 %v3562, %v3770
      %3772 = vmatmul.f32.gmra.mxu0 %v3661
      %v3773 = vpop.f32.mrf.mxu0
      %v3774 = vadd.f32 %v3565, %v3773
      %3775 = vmatmul.f32.gmra.mxu0 %v3664
      %v3776 = vpop.f32.mrf.mxu0
      %v3777 = vadd.f32 %v3568, %v3776
      %3778 = vmatmul.f32.gmra.mxu0 %v3667
      %v3779 = vpop.f32.mrf.mxu0
      %v3780 = vadd.f32 %v3571, %v3779
      %3781 = vmatmul.f32.gmra.mxu0 %v3670
      %v3782 = vpop.f32.mrf.mxu0
      %v3783 = vadd.f32 %v3574, %v3782
      %3784 = vmatmul.f32.gmra.mxu0 %v3673
      %v3785 = vpop.f32.mrf.mxu0
      %v3786 = vadd.f32 %v3577, %v3785
      %3787 = vmatmul.f32.gmra.mxu0 %v3676
      %v3788 = vpop.f32.mrf.mxu0
      %v3789 = vadd.f32 %v3580, %v3788
      %3790 = vmatmul.f32.gmra.mxu0 %v3679
      %v3791 = vpop.f32.mrf.mxu0
      %v3792 = vadd.f32 %v3583, %v3791
      %3793 = vmatmul.f32.gmra.mxu0 %v3682
      %v3794 = vpop.f32.mrf.mxu0
      %v3795 = vadd.f32 %v3586, %v3794
      %3796 = vmatmul.f32.gmra.mxu0 %v3685
      %v3797 = vpop.f32.mrf.mxu0
      %v3798 = vadd.f32 %v3589, %v3797
      %3799 = vmatmul.f32.gmra.mxu0 %v3688
      %v3800 = vpop.f32.mrf.mxu0
      %v3801 = vadd.f32 %v3592, %v3800
      %3802 = vdwg.mxu0
      %v3803 = vld [vmem:[#allocation3 + $0x2] sm:$0xff]
      %v3804 = vld [vmem:[#allocation3 + $0xa] sm:$0xff]
      %v3805 = vld [vmem:[#allocation3 + $0x1a] sm:$0xff]
      %v3806 = vld [vmem:[#allocation3 + $0x22] sm:$0xff]
      %v3807 = vld [vmem:[#allocation3 + $0x32] sm:$0xff]
      %v3808 = vld [vmem:[#allocation3 + $0x3a] sm:$0xff]
      %v3809 = vld [vmem:[#allocation3 + $0x4a] sm:$0xff]
      %v3810 = vld [vmem:[#allocation3 + $0x52] sm:$0xff]
      %v3811 = vld [vmem:[#allocation3 + $0x62] sm:$0xff]
      %v3812 = vld [vmem:[#allocation3 + $0x6a] sm:$0xff]
      %v3813 = vld [vmem:[#allocation3 + $0x7a] sm:$0xff]
      %v3814 = vld [vmem:[#allocation3 + $0x82] sm:$0xff]
      %v3815 = vld [vmem:[#allocation3 + $0x92] sm:$0xff]
      %v3816 = vld [vmem:[#allocation3 + $0x9a] sm:$0xff]
      %v3817 = vld [vmem:[#allocation3 + $0xaa] sm:$0xff]
      %v3818 = vld [vmem:[#allocation3 + $0xb2] sm:$0xff]
      %v3819 = vld [vmem:[#allocation3 + $0xc2] sm:$0xff]
      %v3820 = vld [vmem:[#allocation3 + $0xca] sm:$0xff]
      %v3821 = vld [vmem:[#allocation3 + $0xda] sm:$0xff]
      %v3822 = vld [vmem:[#allocation3 + $0xe2] sm:$0xff]
      %v3823 = vld [vmem:[#allocation3 + $0xf2] sm:$0xff]
      %v3824 = vld [vmem:[#allocation3 + $0xfa] sm:$0xff]
      %v3825 = vld [vmem:[#allocation3 + $0x10a] sm:$0xff]
      %v3826 = vld [vmem:[#allocation3 + $0x112] sm:$0xff]
      %v3827 = vld [vmem:[#allocation3 + $0x122] sm:$0xff]
      %v3828 = vld [vmem:[#allocation3 + $0x12a] sm:$0xff]
      %v3829 = vld [vmem:[#allocation3 + $0x13a] sm:$0xff]
      %v3830 = vld [vmem:[#allocation3 + $0x142] sm:$0xff]
      %v3831 = vld [vmem:[#allocation3 + $0x152] sm:$0xff]
      %v3832 = vld [vmem:[#allocation3 + $0x15a] sm:$0xff]
      %v3833 = vld [vmem:[#allocation3 + $0x16a] sm:$0xff]
      %v3834 = vld [vmem:[#allocation3 + $0x172] sm:$0xff]
      %s3835 = scalar_lea.vmem %s3, 16
      %v3836 = vld [vmem:[%s3835] sm:$0xff]
      %v3838 = vsel %vm3229, %v3803, 0
      %v3841 = vsel %vm3229, %v3804, 0
      %v3844 = vsel %vm3229, %v3805, 0
      %v3847 = vsel %vm3229, %v3806, 0
      %v3850 = vsel %vm3229, %v3807, 0
      %v3853 = vsel %vm3229, %v3808, 0
      %v3856 = vsel %vm3229, %v3809, 0
      %v3859 = vsel %vm3229, %v3810, 0
      %v3862 = vsel %vm3229, %v3811, 0
      %v3865 = vsel %vm3229, %v3812, 0
      %v3868 = vsel %vm3229, %v3813, 0
      %v3871 = vsel %vm3229, %v3814, 0
      %v3874 = vsel %vm3229, %v3815, 0
      %v3877 = vsel %vm3229, %v3816, 0
      %v3880 = vsel %vm3229, %v3817, 0
      %v3883 = vsel %vm3229, %v3818, 0
      %v3886 = vsel %vm3229, %v3819, 0
      %v3889 = vsel %vm3229, %v3820, 0
      %v3892 = vsel %vm3229, %v3821, 0
      %v3895 = vsel %vm3229, %v3822, 0
      %v3898 = vsel %vm3229, %v3823, 0
      %v3901 = vsel %vm3229, %v3824, 0
      %v3904 = vsel %vm3229, %v3825, 0
      %v3907 = vsel %vm3229, %v3826, 0
      %v3910 = vsel %vm3229, %v3827, 0
      %v3913 = vsel %vm3229, %v3828, 0
      %v3916 = vsel %vm3229, %v3829, 0
      %v3919 = vsel %vm3229, %v3830, 0
      %v3922 = vsel %vm3229, %v3831, 0
      %v3925 = vsel %vm3229, %v3832, 0
      %v3928 = vsel %vm3229, %v3833, 0
      %v3931 = vsel %vm3229, %v3834, 0
      %3933 = vmatpush.msra.mxu0 0.0
      %3934 = vmatpush.msra.mxu0 0.0
      %3935 = vmatpush.msra.mxu0 0.0
      %3936 = vmatpush.msra.mxu0 0.0
      %3937 = vmatpush.msra.mxu0 0.0
      %3938 = vmatpush.msra.mxu0 0.0
      %3939 = vmatpush.msra.mxu0 0.0
      %3940 = vmatpush.msra.mxu0 0.0
      %3941 = vmatpush.msra.mxu0 0.0
      %3942 = vmatpush.msra.mxu0 0.0
      %3943 = vmatpush.msra.mxu0 0.0
      %3944 = vmatpush.msra.mxu0 0.0
      %3945 = vmatpush.msra.mxu0 0.0
      %3946 = vmatpush.msra.mxu0 0.0
      %3947 = vmatpush.msra.mxu0 0.0
      %3948 = vmatpush.msra.mxu0 %v3836
      %3949 = vmatmul.f32.gmra.mxu0 %v3838
      %v3950 = vpop.f32.mrf.mxu0
      %v3951 = vadd.f32 0.0, %v3950
      %3952 = vmatmul.f32.gmra.mxu0 %v3841
      %v3953 = vpop.f32.mrf.mxu0
      %v3954 = vadd.f32 0.0, %v3953
      %3955 = vmatmul.f32.gmra.mxu0 %v3844
      %v3956 = vpop.f32.mrf.mxu0
      %v3957 = vadd.f32 0.0, %v3956
      %3958 = vmatmul.f32.gmra.mxu0 %v3847
      %v3959 = vpop.f32.mrf.mxu0
      %v3960 = vadd.f32 0.0, %v3959
      %3961 = vmatmul.f32.gmra.mxu0 %v3850
      %v3962 = vpop.f32.mrf.mxu0
      %v3963 = vadd.f32 0.0, %v3962
      %3964 = vmatmul.f32.gmra.mxu0 %v3853
      %v3965 = vpop.f32.mrf.mxu0
      %v3966 = vadd.f32 0.0, %v3965
      %3967 = vmatmul.f32.gmra.mxu0 %v3856
      %v3968 = vpop.f32.mrf.mxu0
      %v3969 = vadd.f32 0.0, %v3968
      %3970 = vmatmul.f32.gmra.mxu0 %v3859
      %v3971 = vpop.f32.mrf.mxu0
      %v3972 = vadd.f32 0.0, %v3971
      %3973 = vmatmul.f32.gmra.mxu0 %v3862
      %v3974 = vpop.f32.mrf.mxu0
      %v3975 = vadd.f32 0.0, %v3974
      %3976 = vmatmul.f32.gmra.mxu0 %v3865
      %v3977 = vpop.f32.mrf.mxu0
      %v3978 = vadd.f32 0.0, %v3977
      %3979 = vmatmul.f32.gmra.mxu0 %v3868
      %v3980 = vpop.f32.mrf.mxu0
      %v3981 = vadd.f32 0.0, %v3980
      %3982 = vmatmul.f32.gmra.mxu0 %v3871
      %v3983 = vpop.f32.mrf.mxu0
      %v3984 = vadd.f32 0.0, %v3983
      %3985 = vmatmul.f32.gmra.mxu0 %v3874
      %v3986 = vpop.f32.mrf.mxu0
      %v3987 = vadd.f32 0.0, %v3986
      %3988 = vmatmul.f32.gmra.mxu0 %v3877
      %v3989 = vpop.f32.mrf.mxu0
      %v3990 = vadd.f32 0.0, %v3989
      %3991 = vmatmul.f32.gmra.mxu0 %v3880
      %v3992 = vpop.f32.mrf.mxu0
      %v3993 = vadd.f32 0.0, %v3992
      %3994 = vmatmul.f32.gmra.mxu0 %v3883
      %v3995 = vpop.f32.mrf.mxu0
      %v3996 = vadd.f32 0.0, %v3995
      %3997 = vmatmul.f32.gmra.mxu0 %v3886
      %v3998 = vpop.f32.mrf.mxu0
      %v3999 = vadd.f32 0.0, %v3998
      %4000 = vmatmul.f32.gmra.mxu0 %v3889
      %v4001 = vpop.f32.mrf.mxu0
      %v4002 = vadd.f32 0.0, %v4001
      %4003 = vmatmul.f32.gmra.mxu0 %v3892
      %v4004 = vpop.f32.mrf.mxu0
      %v4005 = vadd.f32 0.0, %v4004
      %4006 = vmatmul.f32.gmra.mxu0 %v3895
      %v4007 = vpop.f32.mrf.mxu0
      %v4008 = vadd.f32 0.0, %v4007
      %4009 = vmatmul.f32.gmra.mxu0 %v3898
      %v4010 = vpop.f32.mrf.mxu0
      %v4011 = vadd.f32 0.0, %v4010
      %4012 = vmatmul.f32.gmra.mxu0 %v3901
      %v4013 = vpop.f32.mrf.mxu0
      %v4014 = vadd.f32 0.0, %v4013
      %4015 = vmatmul.f32.gmra.mxu0 %v3904
      %v4016 = vpop.f32.mrf.mxu0
      %v4017 = vadd.f32 0.0, %v4016
      %4018 = vmatmul.f32.gmra.mxu0 %v3907
      %v4019 = vpop.f32.mrf.mxu0
      %v4020 = vadd.f32 0.0, %v4019
      %4021 = vmatmul.f32.gmra.mxu0 %v3910
      %v4022 = vpop.f32.mrf.mxu0
      %v4023 = vadd.f32 0.0, %v4022
      %4024 = vmatmul.f32.gmra.mxu0 %v3913
      %v4025 = vpop.f32.mrf.mxu0
      %v4026 = vadd.f32 0.0, %v4025
      %4027 = vmatmul.f32.gmra.mxu0 %v3916
      %v4028 = vpop.f32.mrf.mxu0
      %v4029 = vadd.f32 0.0, %v4028
      %4030 = vmatmul.f32.gmra.mxu0 %v3919
      %v4031 = vpop.f32.mrf.mxu0
      %v4032 = vadd.f32 0.0, %v4031
      %4033 = vmatmul.f32.gmra.mxu0 %v3922
      %v4034 = vpop.f32.mrf.mxu0
      %v4035 = vadd.f32 0.0, %v4034
      %4036 = vmatmul.f32.gmra.mxu0 %v3925
      %v4037 = vpop.f32.mrf.mxu0
      %v4038 = vadd.f32 0.0, %v4037
      %4039 = vmatmul.f32.gmra.mxu0 %v3928
      %v4040 = vpop.f32.mrf.mxu0
      %v4041 = vadd.f32 0.0, %v4040
      %4042 = vmatmul.f32.gmra.mxu0 %v3931
      %v4043 = vpop.f32.mrf.mxu0
      %v4044 = vadd.f32 0.0, %v4043
      %4045 = vdwg.mxu0
      %v4046 = vadd.f32 %v3708, %v3951
      %v4047 = vadd.f32 %v3711, %v3954
      %v4048 = vadd.f32 %v3714, %v3957
      %v4049 = vadd.f32 %v3717, %v3960
      %v4050 = vadd.f32 %v3720, %v3963
      %v4051 = vadd.f32 %v3723, %v3966
      %v4052 = vadd.f32 %v3726, %v3969
      %v4053 = vadd.f32 %v3729, %v3972
      %v4054 = vadd.f32 %v3732, %v3975
      %v4055 = vadd.f32 %v3735, %v3978
      %v4056 = vadd.f32 %v3738, %v3981
      %v4057 = vadd.f32 %v3741, %v3984
      %v4058 = vadd.f32 %v3744, %v3987
      %v4059 = vadd.f32 %v3747, %v3990
      %v4060 = vadd.f32 %v3750, %v3993
      %v4061 = vadd.f32 %v3753, %v3996
      %v4062 = vadd.f32 %v3756, %v3999
      %v4063 = vadd.f32 %v3759, %v4002
      %v4064 = vadd.f32 %v3762, %v4005
      %v4065 = vadd.f32 %v3765, %v4008
      %v4066 = vadd.f32 %v3768, %v4011
      %v4067 = vadd.f32 %v3771, %v4014
      %v4068 = vadd.f32 %v3774, %v4017
      %v4069 = vadd.f32 %v3777, %v4020
      %v4070 = vadd.f32 %v3780, %v4023
      %v4071 = vadd.f32 %v3783, %v4026
      %v4072 = vadd.f32 %v3786, %v4029
      %v4073 = vadd.f32 %v3789, %v4032
      %v4074 = vadd.f32 %v3792, %v4035
      %v4075 = vadd.f32 %v3795, %v4038
      %v4076 = vadd.f32 %v3798, %v4041
      %v4077 = vadd.f32 %v3801, %v4044
      %v4078 = vld [vmem:[%s3285] sm:$0xff]
      %v4079 = vld [vmem:[%s3285 + $0x8] sm:$0xff]
      %v4080 = vld [vmem:[%s3285 + $0x18] sm:$0xff]
      %v4081 = vld [vmem:[%s3285 + $0x20] sm:$0xff]
      %v4082 = vld [vmem:[%s3285 + $0x30] sm:$0xff]
      %v4083 = vld [vmem:[%s3285 + $0x38] sm:$0xff]
      %v4084 = vld [vmem:[%s3285 + $0x48] sm:$0xff]
      %v4085 = vld [vmem:[%s3285 + $0x50] sm:$0xff]
      %v4086 = vld [vmem:[%s3285 + $0x60] sm:$0xff]
      %v4087 = vld [vmem:[%s3285 + $0x68] sm:$0xff]
      %v4088 = vld [vmem:[%s3285 + $0x78] sm:$0xff]
      %v4089 = vld [vmem:[%s3285 + $0x80] sm:$0xff]
      %v4090 = vld [vmem:[%s3285 + $0x90] sm:$0xff]
      %v4091 = vld [vmem:[%s3285 + $0x98] sm:$0xff]
      %v4092 = vld [vmem:[%s3285 + $0xa8] sm:$0xff]
      %v4093 = vld [vmem:[%s3285 + $0xb0] sm:$0xff]
      %v4094 = vld [vmem:[%s3285 + $0xc0] sm:$0xff]
      %v4095 = vld [vmem:[%s3285 + $0xc8] sm:$0xff]
      %v4096 = vld [vmem:[%s3285 + $0xd8] sm:$0xff]
      %v4097 = vld [vmem:[%s3285 + $0xe0] sm:$0xff]
      %v4098 = vld [vmem:[%s3285 + $0xf0] sm:$0xff]
      %v4099 = vld [vmem:[%s3285 + $0xf8] sm:$0xff]
      %v4100 = vld [vmem:[%s3285 + $0x108] sm:$0xff]
      %v4101 = vld [vmem:[%s3285 + $0x110] sm:$0xff]
      %v4102 = vld [vmem:[%s3285 + $0x120] sm:$0xff]
      %v4103 = vld [vmem:[%s3285 + $0x128] sm:$0xff]
      %v4104 = vld [vmem:[%s3285 + $0x138] sm:$0xff]
      %v4105 = vld [vmem:[%s3285 + $0x140] sm:$0xff]
      %v4106 = vld [vmem:[%s3285 + $0x150] sm:$0xff]
      %v4107 = vld [vmem:[%s3285 + $0x158] sm:$0xff]
      %v4108 = vld [vmem:[%s3285 + $0x168] sm:$0xff]
      %v4109 = vld [vmem:[%s3285 + $0x170] sm:$0xff]
      %s4110 = scalar_lea.vmem %s3, 24
      %v4111 = vld [vmem:[%s4110] sm:$0xff]
      %v4113 = vsel %vm3229, %v4078, 0
      %v4116 = vsel %vm3229, %v4079, 0
      %v4119 = vsel %vm3229, %v4080, 0
      %v4122 = vsel %vm3229, %v4081, 0
      %v4125 = vsel %vm3229, %v4082, 0
      %v4128 = vsel %vm3229, %v4083, 0
      %v4131 = vsel %vm3229, %v4084, 0
      %v4134 = vsel %vm3229, %v4085, 0
      %v4137 = vsel %vm3229, %v4086, 0
      %v4140 = vsel %vm3229, %v4087, 0
      %v4143 = vsel %vm3229, %v4088, 0
      %v4146 = vsel %vm3229, %v4089, 0
      %v4149 = vsel %vm3229, %v4090, 0
      %v4152 = vsel %vm3229, %v4091, 0
      %v4155 = vsel %vm3229, %v4092, 0
      %v4158 = vsel %vm3229, %v4093, 0
      %v4161 = vsel %vm3229, %v4094, 0
      %v4164 = vsel %vm3229, %v4095, 0
      %v4167 = vsel %vm3229, %v4096, 0
      %v4170 = vsel %vm3229, %v4097, 0
      %v4173 = vsel %vm3229, %v4098, 0
      %v4176 = vsel %vm3229, %v4099, 0
      %v4179 = vsel %vm3229, %v4100, 0
      %v4182 = vsel %vm3229, %v4101, 0
      %v4185 = vsel %vm3229, %v4102, 0
      %v4188 = vsel %vm3229, %v4103, 0
      %v4191 = vsel %vm3229, %v4104, 0
      %v4194 = vsel %vm3229, %v4105, 0
      %v4197 = vsel %vm3229, %v4106, 0
      %v4200 = vsel %vm3229, %v4107, 0
      %v4203 = vsel %vm3229, %v4108, 0
      %v4206 = vsel %vm3229, %v4109, 0
      %4208 = vmatpush.msra.mxu0 0.0
      %4209 = vmatpush.msra.mxu0 0.0
      %4210 = vmatpush.msra.mxu0 0.0
      %4211 = vmatpush.msra.mxu0 0.0
      %4212 = vmatpush.msra.mxu0 0.0
      %4213 = vmatpush.msra.mxu0 0.0
      %4214 = vmatpush.msra.mxu0 0.0
      %4215 = vmatpush.msra.mxu0 0.0
      %4216 = vmatpush.msra.mxu0 0.0
      %4217 = vmatpush.msra.mxu0 0.0
      %4218 = vmatpush.msra.mxu0 0.0
      %4219 = vmatpush.msra.mxu0 0.0
      %4220 = vmatpush.msra.mxu0 0.0
      %4221 = vmatpush.msra.mxu0 0.0
      %4222 = vmatpush.msra.mxu0 0.0
      %4223 = vmatpush.msra.mxu0 %v4111
      %4224 = vmatmul.f32.gmra.mxu0 %v4113
      %v4225 = vpop.f32.mrf.mxu0
      %v4226 = vadd.f32 0.0, %v4225
      %4227 = vmatmul.f32.gmra.mxu0 %v4116
      %v4228 = vpop.f32.mrf.mxu0
      %v4229 = vadd.f32 0.0, %v4228
      %4230 = vmatmul.f32.gmra.mxu0 %v4119
      %v4231 = vpop.f32.mrf.mxu0
      %v4232 = vadd.f32 0.0, %v4231
      %4233 = vmatmul.f32.gmra.mxu0 %v4122
      %v4234 = vpop.f32.mrf.mxu0
      %v4235 = vadd.f32 0.0, %v4234
      %4236 = vmatmul.f32.gmra.mxu0 %v4125
      %v4237 = vpop.f32.mrf.mxu0
      %v4238 = vadd.f32 0.0, %v4237
      %4239 = vmatmul.f32.gmra.mxu0 %v4128
      %v4240 = vpop.f32.mrf.mxu0
      %v4241 = vadd.f32 0.0, %v4240
      %4242 = vmatmul.f32.gmra.mxu0 %v4131
      %v4243 = vpop.f32.mrf.mxu0
      %v4244 = vadd.f32 0.0, %v4243
      %4245 = vmatmul.f32.gmra.mxu0 %v4134
      %v4246 = vpop.f32.mrf.mxu0
      %v4247 = vadd.f32 0.0, %v4246
      %4248 = vmatmul.f32.gmra.mxu0 %v4137
      %v4249 = vpop.f32.mrf.mxu0
      %v4250 = vadd.f32 0.0, %v4249
      %4251 = vmatmul.f32.gmra.mxu0 %v4140
      %v4252 = vpop.f32.mrf.mxu0
      %v4253 = vadd.f32 0.0, %v4252
      %4254 = vmatmul.f32.gmra.mxu0 %v4143
      %v4255 = vpop.f32.mrf.mxu0
      %v4256 = vadd.f32 0.0, %v4255
      %4257 = vmatmul.f32.gmra.mxu0 %v4146
      %v4258 = vpop.f32.mrf.mxu0
      %v4259 = vadd.f32 0.0, %v4258
      %4260 = vmatmul.f32.gmra.mxu0 %v4149
      %v4261 = vpop.f32.mrf.mxu0
      %v4262 = vadd.f32 0.0, %v4261
      %4263 = vmatmul.f32.gmra.mxu0 %v4152
      %v4264 = vpop.f32.mrf.mxu0
      %v4265 = vadd.f32 0.0, %v4264
      %4266 = vmatmul.f32.gmra.mxu0 %v4155
      %v4267 = vpop.f32.mrf.mxu0
      %v4268 = vadd.f32 0.0, %v4267
      %4269 = vmatmul.f32.gmra.mxu0 %v4158
      %v4270 = vpop.f32.mrf.mxu0
      %v4271 = vadd.f32 0.0, %v4270
      %4272 = vmatmul.f32.gmra.mxu0 %v4161
      %v4273 = vpop.f32.mrf.mxu0
      %v4274 = vadd.f32 0.0, %v4273
      %4275 = vmatmul.f32.gmra.mxu0 %v4164
      %v4276 = vpop.f32.mrf.mxu0
      %v4277 = vadd.f32 0.0, %v4276
      %4278 = vmatmul.f32.gmra.mxu0 %v4167
      %v4279 = vpop.f32.mrf.mxu0
      %v4280 = vadd.f32 0.0, %v4279
      %4281 = vmatmul.f32.gmra.mxu0 %v4170
      %v4282 = vpop.f32.mrf.mxu0
      %v4283 = vadd.f32 0.0, %v4282
      %4284 = vmatmul.f32.gmra.mxu0 %v4173
      %v4285 = vpop.f32.mrf.mxu0
      %v4286 = vadd.f32 0.0, %v4285
      %4287 = vmatmul.f32.gmra.mxu0 %v4176
      %v4288 = vpop.f32.mrf.mxu0
      %v4289 = vadd.f32 0.0, %v4288
      %4290 = vmatmul.f32.gmra.mxu0 %v4179
      %v4291 = vpop.f32.mrf.mxu0
      %v4292 = vadd.f32 0.0, %v4291
      %4293 = vmatmul.f32.gmra.mxu0 %v4182
      %v4294 = vpop.f32.mrf.mxu0
      %v4295 = vadd.f32 0.0, %v4294
      %4296 = vmatmul.f32.gmra.mxu0 %v4185
      %v4297 = vpop.f32.mrf.mxu0
      %v4298 = vadd.f32 0.0, %v4297
      %4299 = vmatmul.f32.gmra.mxu0 %v4188
      %v4300 = vpop.f32.mrf.mxu0
      %v4301 = vadd.f32 0.0, %v4300
      %4302 = vmatmul.f32.gmra.mxu0 %v4191
      %v4303 = vpop.f32.mrf.mxu0
      %v4304 = vadd.f32 0.0, %v4303
      %4305 = vmatmul.f32.gmra.mxu0 %v4194
      %v4306 = vpop.f32.mrf.mxu0
      %v4307 = vadd.f32 0.0, %v4306
      %4308 = vmatmul.f32.gmra.mxu0 %v4197
      %v4309 = vpop.f32.mrf.mxu0
      %v4310 = vadd.f32 0.0, %v4309
      %4311 = vmatmul.f32.gmra.mxu0 %v4200
      %v4312 = vpop.f32.mrf.mxu0
      %v4313 = vadd.f32 0.0, %v4312
      %4314 = vmatmul.f32.gmra.mxu0 %v4203
      %v4315 = vpop.f32.mrf.mxu0
      %v4316 = vadd.f32 0.0, %v4315
      %4317 = vmatmul.f32.gmra.mxu0 %v4206
      %v4318 = vpop.f32.mrf.mxu0
      %v4319 = vadd.f32 0.0, %v4318
      %4320 = vdwg.mxu0
      %v4321 = vadd.f32 %v4046, %v4226
      %v4322 = vadd.f32 %v4047, %v4229
      %v4323 = vadd.f32 %v4048, %v4232
      %v4324 = vadd.f32 %v4049, %v4235
      %v4325 = vadd.f32 %v4050, %v4238
      %v4326 = vadd.f32 %v4051, %v4241
      %v4327 = vadd.f32 %v4052, %v4244
      %v4328 = vadd.f32 %v4053, %v4247
      %v4329 = vadd.f32 %v4054, %v4250
      %v4330 = vadd.f32 %v4055, %v4253
      %v4331 = vadd.f32 %v4056, %v4256
      %v4332 = vadd.f32 %v4057, %v4259
      %v4333 = vadd.f32 %v4058, %v4262
      %v4334 = vadd.f32 %v4059, %v4265
      %v4335 = vadd.f32 %v4060, %v4268
      %v4336 = vadd.f32 %v4061, %v4271
      %v4337 = vadd.f32 %v4062, %v4274
      %v4338 = vadd.f32 %v4063, %v4277
      %v4339 = vadd.f32 %v4064, %v4280
      %v4340 = vadd.f32 %v4065, %v4283
      %v4341 = vadd.f32 %v4066, %v4286
      %v4342 = vadd.f32 %v4067, %v4289
      %v4343 = vadd.f32 %v4068, %v4292
      %v4344 = vadd.f32 %v4069, %v4295
      %v4345 = vadd.f32 %v4070, %v4298
      %v4346 = vadd.f32 %v4071, %v4301
      %v4347 = vadd.f32 %v4072, %v4304
      %v4348 = vadd.f32 %v4073, %v4307
      %v4349 = vadd.f32 %v4074, %v4310
      %v4350 = vadd.f32 %v4075, %v4313
      %v4351 = vadd.f32 %v4076, %v4316
      %v4352 = vadd.f32 %v4077, %v4319
      %v4353 = vld [vmem:[%s3285 + $0x1] sm:$0xff]
      %v4354 = vld [vmem:[%s3285 + $0x9] sm:$0xff]
      %v4355 = vld [vmem:[%s3285 + $0x19] sm:$0xff]
      %v4356 = vld [vmem:[%s3285 + $0x21] sm:$0xff]
      %v4357 = vld [vmem:[%s3285 + $0x31] sm:$0xff]
      %v4358 = vld [vmem:[%s3285 + $0x39] sm:$0xff]
      %v4359 = vld [vmem:[%s3285 + $0x49] sm:$0xff]
      %v4360 = vld [vmem:[%s3285 + $0x51] sm:$0xff]
      %v4361 = vld [vmem:[%s3285 + $0x61] sm:$0xff]
      %v4362 = vld [vmem:[%s3285 + $0x69] sm:$0xff]
      %v4363 = vld [vmem:[%s3285 + $0x79] sm:$0xff]
      %v4364 = vld [vmem:[%s3285 + $0x81] sm:$0xff]
      %v4365 = vld [vmem:[%s3285 + $0x91] sm:$0xff]
      %v4366 = vld [vmem:[%s3285 + $0x99] sm:$0xff]
      %v4367 = vld [vmem:[%s3285 + $0xa9] sm:$0xff]
      %v4368 = vld [vmem:[%s3285 + $0xb1] sm:$0xff]
      %v4369 = vld [vmem:[%s3285 + $0xc1] sm:$0xff]
      %v4370 = vld [vmem:[%s3285 + $0xc9] sm:$0xff]
      %v4371 = vld [vmem:[%s3285 + $0xd9] sm:$0xff]
      %v4372 = vld [vmem:[%s3285 + $0xe1] sm:$0xff]
      %v4373 = vld [vmem:[%s3285 + $0xf1] sm:$0xff]
      %v4374 = vld [vmem:[%s3285 + $0xf9] sm:$0xff]
      %v4375 = vld [vmem:[%s3285 + $0x109] sm:$0xff]
      %v4376 = vld [vmem:[%s3285 + $0x111] sm:$0xff]
      %v4377 = vld [vmem:[%s3285 + $0x121] sm:$0xff]
      %v4378 = vld [vmem:[%s3285 + $0x129] sm:$0xff]
      %v4379 = vld [vmem:[%s3285 + $0x139] sm:$0xff]
      %v4380 = vld [vmem:[%s3285 + $0x141] sm:$0xff]
      %v4381 = vld [vmem:[%s3285 + $0x151] sm:$0xff]
      %v4382 = vld [vmem:[%s3285 + $0x159] sm:$0xff]
      %v4383 = vld [vmem:[%s3285 + $0x169] sm:$0xff]
      %v4384 = vld [vmem:[%s3285 + $0x171] sm:$0xff]
      %s4385 = scalar_lea.vmem %s3, 32
      %v4386 = vld [vmem:[%s4385] sm:$0xff]
      %v4388 = vsel %vm3229, %v4353, 0
      %v4391 = vsel %vm3229, %v4354, 0
      %v4394 = vsel %vm3229, %v4355, 0
      %v4397 = vsel %vm3229, %v4356, 0
      %v4400 = vsel %vm3229, %v4357, 0
      %v4403 = vsel %vm3229, %v4358, 0
      %v4406 = vsel %vm3229, %v4359, 0
      %v4409 = vsel %vm3229, %v4360, 0
      %v4412 = vsel %vm3229, %v4361, 0
      %v4415 = vsel %vm3229, %v4362, 0
      %v4418 = vsel %vm3229, %v4363, 0
      %v4421 = vsel %vm3229, %v4364, 0
      %v4424 = vsel %vm3229, %v4365, 0
      %v4427 = vsel %vm3229, %v4366, 0
      %v4430 = vsel %vm3229, %v4367, 0
      %v4433 = vsel %vm3229, %v4368, 0
      %v4436 = vsel %vm3229, %v4369, 0
      %v4439 = vsel %vm3229, %v4370, 0
      %v4442 = vsel %vm3229, %v4371, 0
      %v4445 = vsel %vm3229, %v4372, 0
      %v4448 = vsel %vm3229, %v4373, 0
      %v4451 = vsel %vm3229, %v4374, 0
      %v4454 = vsel %vm3229, %v4375, 0
      %v4457 = vsel %vm3229, %v4376, 0
      %v4460 = vsel %vm3229, %v4377, 0
      %v4463 = vsel %vm3229, %v4378, 0
      %v4466 = vsel %vm3229, %v4379, 0
      %v4469 = vsel %vm3229, %v4380, 0
      %v4472 = vsel %vm3229, %v4381, 0
      %v4475 = vsel %vm3229, %v4382, 0
      %v4478 = vsel %vm3229, %v4383, 0
      %v4481 = vsel %vm3229, %v4384, 0
      %4483 = vmatpush.msra.mxu0 0.0
      %4484 = vmatpush.msra.mxu0 0.0
      %4485 = vmatpush.msra.mxu0 0.0
      %4486 = vmatpush.msra.mxu0 0.0
      %4487 = vmatpush.msra.mxu0 0.0
      %4488 = vmatpush.msra.mxu0 0.0
      %4489 = vmatpush.msra.mxu0 0.0
      %4490 = vmatpush.msra.mxu0 0.0
      %4491 = vmatpush.msra.mxu0 0.0
      %4492 = vmatpush.msra.mxu0 0.0
      %4493 = vmatpush.msra.mxu0 0.0
      %4494 = vmatpush.msra.mxu0 0.0
      %4495 = vmatpush.msra.mxu0 0.0
      %4496 = vmatpush.msra.mxu0 0.0
      %4497 = vmatpush.msra.mxu0 0.0
      %4498 = vmatpush.msra.mxu0 %v4386
      %4499 = vmatmul.f32.gmra.mxu0 %v4388
      %v4500 = vpop.f32.mrf.mxu0
      %v4501 = vadd.f32 0.0, %v4500
      %4502 = vmatmul.f32.gmra.mxu0 %v4391
      %v4503 = vpop.f32.mrf.mxu0
      %v4504 = vadd.f32 0.0, %v4503
      %4505 = vmatmul.f32.gmra.mxu0 %v4394
      %v4506 = vpop.f32.mrf.mxu0
      %v4507 = vadd.f32 0.0, %v4506
      %4508 = vmatmul.f32.gmra.mxu0 %v4397
      %v4509 = vpop.f32.mrf.mxu0
      %v4510 = vadd.f32 0.0, %v4509
      %4511 = vmatmul.f32.gmra.mxu0 %v4400
      %v4512 = vpop.f32.mrf.mxu0
      %v4513 = vadd.f32 0.0, %v4512
      %4514 = vmatmul.f32.gmra.mxu0 %v4403
      %v4515 = vpop.f32.mrf.mxu0
      %v4516 = vadd.f32 0.0, %v4515
      %4517 = vmatmul.f32.gmra.mxu0 %v4406
      %v4518 = vpop.f32.mrf.mxu0
      %v4519 = vadd.f32 0.0, %v4518
      %4520 = vmatmul.f32.gmra.mxu0 %v4409
      %v4521 = vpop.f32.mrf.mxu0
      %v4522 = vadd.f32 0.0, %v4521
      %4523 = vmatmul.f32.gmra.mxu0 %v4412
      %v4524 = vpop.f32.mrf.mxu0
      %v4525 = vadd.f32 0.0, %v4524
      %4526 = vmatmul.f32.gmra.mxu0 %v4415
      %v4527 = vpop.f32.mrf.mxu0
      %v4528 = vadd.f32 0.0, %v4527
      %4529 = vmatmul.f32.gmra.mxu0 %v4418
      %v4530 = vpop.f32.mrf.mxu0
      %v4531 = vadd.f32 0.0, %v4530
      %4532 = vmatmul.f32.gmra.mxu0 %v4421
      %v4533 = vpop.f32.mrf.mxu0
      %v4534 = vadd.f32 0.0, %v4533
      %4535 = vmatmul.f32.gmra.mxu0 %v4424
      %v4536 = vpop.f32.mrf.mxu0
      %v4537 = vadd.f32 0.0, %v4536
      %4538 = vmatmul.f32.gmra.mxu0 %v4427
      %v4539 = vpop.f32.mrf.mxu0
      %v4540 = vadd.f32 0.0, %v4539
      %4541 = vmatmul.f32.gmra.mxu0 %v4430
      %v4542 = vpop.f32.mrf.mxu0
      %v4543 = vadd.f32 0.0, %v4542
      %4544 = vmatmul.f32.gmra.mxu0 %v4433
      %v4545 = vpop.f32.mrf.mxu0
      %v4546 = vadd.f32 0.0, %v4545
      %4547 = vmatmul.f32.gmra.mxu0 %v4436
      %v4548 = vpop.f32.mrf.mxu0
      %v4549 = vadd.f32 0.0, %v4548
      %4550 = vmatmul.f32.gmra.mxu0 %v4439
      %v4551 = vpop.f32.mrf.mxu0
      %v4552 = vadd.f32 0.0, %v4551
      %4553 = vmatmul.f32.gmra.mxu0 %v4442
      %v4554 = vpop.f32.mrf.mxu0
      %v4555 = vadd.f32 0.0, %v4554
      %4556 = vmatmul.f32.gmra.mxu0 %v4445
      %v4557 = vpop.f32.mrf.mxu0
      %v4558 = vadd.f32 0.0, %v4557
      %4559 = vmatmul.f32.gmra.mxu0 %v4448
      %v4560 = vpop.f32.mrf.mxu0
      %v4561 = vadd.f32 0.0, %v4560
      %4562 = vmatmul.f32.gmra.mxu0 %v4451
      %v4563 = vpop.f32.mrf.mxu0
      %v4564 = vadd.f32 0.0, %v4563
      %4565 = vmatmul.f32.gmra.mxu0 %v4454
      %v4566 = vpop.f32.mrf.mxu0
      %v4567 = vadd.f32 0.0, %v4566
      %4568 = vmatmul.f32.gmra.mxu0 %v4457
      %v4569 = vpop.f32.mrf.mxu0
      %v4570 = vadd.f32 0.0, %v4569
      %4571 = vmatmul.f32.gmra.mxu0 %v4460
      %v4572 = vpop.f32.mrf.mxu0
      %v4573 = vadd.f32 0.0, %v4572
      %4574 = vmatmul.f32.gmra.mxu0 %v4463
      %v4575 = vpop.f32.mrf.mxu0
      %v4576 = vadd.f32 0.0, %v4575
      %4577 = vmatmul.f32.gmra.mxu0 %v4466
      %v4578 = vpop.f32.mrf.mxu0
      %v4579 = vadd.f32 0.0, %v4578
      %4580 = vmatmul.f32.gmra.mxu0 %v4469
      %v4581 = vpop.f32.mrf.mxu0
      %v4582 = vadd.f32 0.0, %v4581
      %4583 = vmatmul.f32.gmra.mxu0 %v4472
      %v4584 = vpop.f32.mrf.mxu0
      %v4585 = vadd.f32 0.0, %v4584
      %4586 = vmatmul.f32.gmra.mxu0 %v4475
      %v4587 = vpop.f32.mrf.mxu0
      %v4588 = vadd.f32 0.0, %v4587
      %4589 = vmatmul.f32.gmra.mxu0 %v4478
      %v4590 = vpop.f32.mrf.mxu0
      %v4591 = vadd.f32 0.0, %v4590
      %4592 = vmatmul.f32.gmra.mxu0 %v4481
      %v4593 = vpop.f32.mrf.mxu0
      %v4594 = vadd.f32 0.0, %v4593
      %4595 = vdwg.mxu0
      %v4596 = vadd.f32 %v4321, %v4501
      %v4597 = vadd.f32 %v4322, %v4504
      %v4598 = vadd.f32 %v4323, %v4507
      %v4599 = vadd.f32 %v4324, %v4510
      %v4600 = vadd.f32 %v4325, %v4513
      %v4601 = vadd.f32 %v4326, %v4516
      %v4602 = vadd.f32 %v4327, %v4519
      %v4603 = vadd.f32 %v4328, %v4522
      %v4604 = vadd.f32 %v4329, %v4525
      %v4605 = vadd.f32 %v4330, %v4528
      %v4606 = vadd.f32 %v4331, %v4531
      %v4607 = vadd.f32 %v4332, %v4534
      %v4608 = vadd.f32 %v4333, %v4537
      %v4609 = vadd.f32 %v4334, %v4540
      %v4610 = vadd.f32 %v4335, %v4543
      %v4611 = vadd.f32 %v4336, %v4546
      %v4612 = vadd.f32 %v4337, %v4549
      %v4613 = vadd.f32 %v4338, %v4552
      %v4614 = vadd.f32 %v4339, %v4555
      %v4615 = vadd.f32 %v4340, %v4558
      %v4616 = vadd.f32 %v4341, %v4561
      %v4617 = vadd.f32 %v4342, %v4564
      %v4618 = vadd.f32 %v4343, %v4567
      %v4619 = vadd.f32 %v4344, %v4570
      %v4620 = vadd.f32 %v4345, %v4573
      %v4621 = vadd.f32 %v4346, %v4576
      %v4622 = vadd.f32 %v4347, %v4579
      %v4623 = vadd.f32 %v4348, %v4582
      %v4624 = vadd.f32 %v4349, %v4585
      %v4625 = vadd.f32 %v4350, %v4588
      %v4626 = vadd.f32 %v4351, %v4591
      %v4627 = vadd.f32 %v4352, %v4594
      %v4628 = vld [vmem:[%s3285 + $0x2] sm:$0xff]
      %v4629 = vld [vmem:[%s3285 + $0xa] sm:$0xff]
      %v4630 = vld [vmem:[%s3285 + $0x1a] sm:$0xff]
      %v4631 = vld [vmem:[%s3285 + $0x22] sm:$0xff]
      %v4632 = vld [vmem:[%s3285 + $0x32] sm:$0xff]
      %v4633 = vld [vmem:[%s3285 + $0x3a] sm:$0xff]
      %v4634 = vld [vmem:[%s3285 + $0x4a] sm:$0xff]
      %v4635 = vld [vmem:[%s3285 + $0x52] sm:$0xff]
      %v4636 = vld [vmem:[%s3285 + $0x62] sm:$0xff]
      %v4637 = vld [vmem:[%s3285 + $0x6a] sm:$0xff]
      %v4638 = vld [vmem:[%s3285 + $0x7a] sm:$0xff]
      %v4639 = vld [vmem:[%s3285 + $0x82] sm:$0xff]
      %v4640 = vld [vmem:[%s3285 + $0x92] sm:$0xff]
      %v4641 = vld [vmem:[%s3285 + $0x9a] sm:$0xff]
      %v4642 = vld [vmem:[%s3285 + $0xaa] sm:$0xff]
      %v4643 = vld [vmem:[%s3285 + $0xb2] sm:$0xff]
      %v4644 = vld [vmem:[%s3285 + $0xc2] sm:$0xff]
      %v4645 = vld [vmem:[%s3285 + $0xca] sm:$0xff]
      %v4646 = vld [vmem:[%s3285 + $0xda] sm:$0xff]
      %v4647 = vld [vmem:[%s3285 + $0xe2] sm:$0xff]
      %v4648 = vld [vmem:[%s3285 + $0xf2] sm:$0xff]
      %v4649 = vld [vmem:[%s3285 + $0xfa] sm:$0xff]
      %v4650 = vld [vmem:[%s3285 + $0x10a] sm:$0xff]
      %v4651 = vld [vmem:[%s3285 + $0x112] sm:$0xff]
      %v4652 = vld [vmem:[%s3285 + $0x122] sm:$0xff]
      %v4653 = vld [vmem:[%s3285 + $0x12a] sm:$0xff]
      %v4654 = vld [vmem:[%s3285 + $0x13a] sm:$0xff]
      %v4655 = vld [vmem:[%s3285 + $0x142] sm:$0xff]
      %v4656 = vld [vmem:[%s3285 + $0x152] sm:$0xff]
      %v4657 = vld [vmem:[%s3285 + $0x15a] sm:$0xff]
      %v4658 = vld [vmem:[%s3285 + $0x16a] sm:$0xff]
      %v4659 = vld [vmem:[%s3285 + $0x172] sm:$0xff]
      %s4660 = scalar_lea.vmem %s3, 40
      %v4661 = vld [vmem:[%s4660] sm:$0xff]
      %v4663 = vsel %vm3229, %v4628, 0
      %v4666 = vsel %vm3229, %v4629, 0
      %v4669 = vsel %vm3229, %v4630, 0
      %v4672 = vsel %vm3229, %v4631, 0
      %v4675 = vsel %vm3229, %v4632, 0
      %v4678 = vsel %vm3229, %v4633, 0
      %v4681 = vsel %vm3229, %v4634, 0
      %v4684 = vsel %vm3229, %v4635, 0
      %v4687 = vsel %vm3229, %v4636, 0
      %v4690 = vsel %vm3229, %v4637, 0
      %v4693 = vsel %vm3229, %v4638, 0
      %v4696 = vsel %vm3229, %v4639, 0
      %v4699 = vsel %vm3229, %v4640, 0
      %v4702 = vsel %vm3229, %v4641, 0
      %v4705 = vsel %vm3229, %v4642, 0
      %v4708 = vsel %vm3229, %v4643, 0
      %v4711 = vsel %vm3229, %v4644, 0
      %v4714 = vsel %vm3229, %v4645, 0
      %v4717 = vsel %vm3229, %v4646, 0
      %v4720 = vsel %vm3229, %v4647, 0
      %v4723 = vsel %vm3229, %v4648, 0
      %v4726 = vsel %vm3229, %v4649, 0
      %v4729 = vsel %vm3229, %v4650, 0
      %v4732 = vsel %vm3229, %v4651, 0
      %v4735 = vsel %vm3229, %v4652, 0
      %v4738 = vsel %vm3229, %v4653, 0
      %v4741 = vsel %vm3229, %v4654, 0
      %v4744 = vsel %vm3229, %v4655, 0
      %v4747 = vsel %vm3229, %v4656, 0
      %v4750 = vsel %vm3229, %v4657, 0
      %v4753 = vsel %vm3229, %v4658, 0
      %v4756 = vsel %vm3229, %v4659, 0
      %4758 = vmatpush.msra.mxu0 0.0
      %4759 = vmatpush.msra.mxu0 0.0
      %4760 = vmatpush.msra.mxu0 0.0
      %4761 = vmatpush.msra.mxu0 0.0
      %4762 = vmatpush.msra.mxu0 0.0
      %4763 = vmatpush.msra.mxu0 0.0
      %4764 = vmatpush.msra.mxu0 0.0
      %4765 = vmatpush.msra.mxu0 0.0
      %4766 = vmatpush.msra.mxu0 0.0
      %4767 = vmatpush.msra.mxu0 0.0
      %4768 = vmatpush.msra.mxu0 0.0
      %4769 = vmatpush.msra.mxu0 0.0
      %4770 = vmatpush.msra.mxu0 0.0
      %4771 = vmatpush.msra.mxu0 0.0
      %4772 = vmatpush.msra.mxu0 0.0
      %4773 = vmatpush.msra.mxu0 %v4661
      %4774 = vmatmul.f32.gmra.mxu0 %v4663
      %v4775 = vpop.f32.mrf.mxu0
      %v4776 = vadd.f32 0.0, %v4775
      %4777 = vmatmul.f32.gmra.mxu0 %v4666
      %v4778 = vpop.f32.mrf.mxu0
      %v4779 = vadd.f32 0.0, %v4778
      %4780 = vmatmul.f32.gmra.mxu0 %v4669
      %v4781 = vpop.f32.mrf.mxu0
      %v4782 = vadd.f32 0.0, %v4781
      %4783 = vmatmul.f32.gmra.mxu0 %v4672
      %v4784 = vpop.f32.mrf.mxu0
      %v4785 = vadd.f32 0.0, %v4784
      %4786 = vmatmul.f32.gmra.mxu0 %v4675
      %v4787 = vpop.f32.mrf.mxu0
      %v4788 = vadd.f32 0.0, %v4787
      %4789 = vmatmul.f32.gmra.mxu0 %v4678
      %v4790 = vpop.f32.mrf.mxu0
      %v4791 = vadd.f32 0.0, %v4790
      %4792 = vmatmul.f32.gmra.mxu0 %v4681
      %v4793 = vpop.f32.mrf.mxu0
      %v4794 = vadd.f32 0.0, %v4793
      %4795 = vmatmul.f32.gmra.mxu0 %v4684
      %v4796 = vpop.f32.mrf.mxu0
      %v4797 = vadd.f32 0.0, %v4796
      %4798 = vmatmul.f32.gmra.mxu0 %v4687
      %v4799 = vpop.f32.mrf.mxu0
      %v4800 = vadd.f32 0.0, %v4799
      %4801 = vmatmul.f32.gmra.mxu0 %v4690
      %v4802 = vpop.f32.mrf.mxu0
      %v4803 = vadd.f32 0.0, %v4802
      %4804 = vmatmul.f32.gmra.mxu0 %v4693
      %v4805 = vpop.f32.mrf.mxu0
      %v4806 = vadd.f32 0.0, %v4805
      %4807 = vmatmul.f32.gmra.mxu0 %v4696
      %v4808 = vpop.f32.mrf.mxu0
      %v4809 = vadd.f32 0.0, %v4808
      %4810 = vmatmul.f32.gmra.mxu0 %v4699
      %v4811 = vpop.f32.mrf.mxu0
      %v4812 = vadd.f32 0.0, %v4811
      %4813 = vmatmul.f32.gmra.mxu0 %v4702
      %v4814 = vpop.f32.mrf.mxu0
      %v4815 = vadd.f32 0.0, %v4814
      %4816 = vmatmul.f32.gmra.mxu0 %v4705
      %v4817 = vpop.f32.mrf.mxu0
      %v4818 = vadd.f32 0.0, %v4817
      %4819 = vmatmul.f32.gmra.mxu0 %v4708
      %v4820 = vpop.f32.mrf.mxu0
      %v4821 = vadd.f32 0.0, %v4820
      %4822 = vmatmul.f32.gmra.mxu0 %v4711
      %v4823 = vpop.f32.mrf.mxu0
      %v4824 = vadd.f32 0.0, %v4823
      %4825 = vmatmul.f32.gmra.mxu0 %v4714
      %v4826 = vpop.f32.mrf.mxu0
      %v4827 = vadd.f32 0.0, %v4826
      %4828 = vmatmul.f32.gmra.mxu0 %v4717
      %v4829 = vpop.f32.mrf.mxu0
      %v4830 = vadd.f32 0.0, %v4829
      %4831 = vmatmul.f32.gmra.mxu0 %v4720
      %v4832 = vpop.f32.mrf.mxu0
      %v4833 = vadd.f32 0.0, %v4832
      %4834 = vmatmul.f32.gmra.mxu0 %v4723
      %v4835 = vpop.f32.mrf.mxu0
      %v4836 = vadd.f32 0.0, %v4835
      %4837 = vmatmul.f32.gmra.mxu0 %v4726
      %v4838 = vpop.f32.mrf.mxu0
      %v4839 = vadd.f32 0.0, %v4838
      %4840 = vmatmul.f32.gmra.mxu0 %v4729
      %v4841 = vpop.f32.mrf.mxu0
      %v4842 = vadd.f32 0.0, %v4841
      %4843 = vmatmul.f32.gmra.mxu0 %v4732
      %v4844 = vpop.f32.mrf.mxu0
      %v4845 = vadd.f32 0.0, %v4844
      %4846 = vmatmul.f32.gmra.mxu0 %v4735
      %v4847 = vpop.f32.mrf.mxu0
      %v4848 = vadd.f32 0.0, %v4847
      %4849 = vmatmul.f32.gmra.mxu0 %v4738
      %v4850 = vpop.f32.mrf.mxu0
      %v4851 = vadd.f32 0.0, %v4850
      %4852 = vmatmul.f32.gmra.mxu0 %v4741
      %v4853 = vpop.f32.mrf.mxu0
      %v4854 = vadd.f32 0.0, %v4853
      %4855 = vmatmul.f32.gmra.mxu0 %v4744
      %v4856 = vpop.f32.mrf.mxu0
      %v4857 = vadd.f32 0.0, %v4856
      %4858 = vmatmul.f32.gmra.mxu0 %v4747
      %v4859 = vpop.f32.mrf.mxu0
      %v4860 = vadd.f32 0.0, %v4859
      %4861 = vmatmul.f32.gmra.mxu0 %v4750
      %v4862 = vpop.f32.mrf.mxu0
      %v4863 = vadd.f32 0.0, %v4862
      %4864 = vmatmul.f32.gmra.mxu0 %v4753
      %v4865 = vpop.f32.mrf.mxu0
      %v4866 = vadd.f32 0.0, %v4865
      %4867 = vmatmul.f32.gmra.mxu0 %v4756
      %v4868 = vpop.f32.mrf.mxu0
      %v4869 = vadd.f32 0.0, %v4868
      %4870 = vdwg.mxu0
      %v4871 = vadd.f32 %v4596, %v4776
      %v4872 = vadd.f32 %v4597, %v4779
      %v4873 = vadd.f32 %v4598, %v4782
      %v4874 = vadd.f32 %v4599, %v4785
      %v4875 = vadd.f32 %v4600, %v4788
      %v4876 = vadd.f32 %v4601, %v4791
      %v4877 = vadd.f32 %v4602, %v4794
      %v4878 = vadd.f32 %v4603, %v4797
      %v4879 = vadd.f32 %v4604, %v4800
      %v4880 = vadd.f32 %v4605, %v4803
      %v4881 = vadd.f32 %v4606, %v4806
      %v4882 = vadd.f32 %v4607, %v4809
      %v4883 = vadd.f32 %v4608, %v4812
      %v4884 = vadd.f32 %v4609, %v4815
      %v4885 = vadd.f32 %v4610, %v4818
      %v4886 = vadd.f32 %v4611, %v4821
      %v4887 = vadd.f32 %v4612, %v4824
      %v4888 = vadd.f32 %v4613, %v4827
      %v4889 = vadd.f32 %v4614, %v4830
      %v4890 = vadd.f32 %v4615, %v4833
      %v4891 = vadd.f32 %v4616, %v4836
      %v4892 = vadd.f32 %v4617, %v4839
      %v4893 = vadd.f32 %v4618, %v4842
      %v4894 = vadd.f32 %v4619, %v4845
      %v4895 = vadd.f32 %v4620, %v4848
      %v4896 = vadd.f32 %v4621, %v4851
      %v4897 = vadd.f32 %v4622, %v4854
      %v4898 = vadd.f32 %v4623, %v4857
      %v4899 = vadd.f32 %v4624, %v4860
      %v4900 = vadd.f32 %v4625, %v4863
      %v4901 = vadd.f32 %v4626, %v4866
      %v4902 = vadd.f32 %v4627, %v4869
      %s4903 = scalar_lea.vmem [#allocation3], 48
      %v4904 = vld [vmem:[%s4903] sm:$0xff]
      %v4905 = vld [vmem:[%s4903 + $0x8] sm:$0xff]
      %v4906 = vld [vmem:[%s4903 + $0x18] sm:$0xff]
      %v4907 = vld [vmem:[%s4903 + $0x20] sm:$0xff]
      %v4908 = vld [vmem:[%s4903 + $0x30] sm:$0xff]
      %v4909 = vld [vmem:[%s4903 + $0x38] sm:$0xff]
      %v4910 = vld [vmem:[%s4903 + $0x48] sm:$0xff]
      %v4911 = vld [vmem:[%s4903 + $0x50] sm:$0xff]
      %v4912 = vld [vmem:[%s4903 + $0x60] sm:$0xff]
      %v4913 = vld [vmem:[%s4903 + $0x68] sm:$0xff]
      %v4914 = vld [vmem:[%s4903 + $0x78] sm:$0xff]
      %v4915 = vld [vmem:[%s4903 + $0x80] sm:$0xff]
      %v4916 = vld [vmem:[%s4903 + $0x90] sm:$0xff]
      %v4917 = vld [vmem:[%s4903 + $0x98] sm:$0xff]
      %v4918 = vld [vmem:[%s4903 + $0xa8] sm:$0xff]
      %v4919 = vld [vmem:[%s4903 + $0xb0] sm:$0xff]
      %v4920 = vld [vmem:[%s4903 + $0xc0] sm:$0xff]
      %v4921 = vld [vmem:[%s4903 + $0xc8] sm:$0xff]
      %v4922 = vld [vmem:[%s4903 + $0xd8] sm:$0xff]
      %v4923 = vld [vmem:[%s4903 + $0xe0] sm:$0xff]
      %v4924 = vld [vmem:[%s4903 + $0xf0] sm:$0xff]
      %v4925 = vld [vmem:[%s4903 + $0xf8] sm:$0xff]
      %v4926 = vld [vmem:[%s4903 + $0x108] sm:$0xff]
      %v4927 = vld [vmem:[%s4903 + $0x110] sm:$0xff]
      %v4928 = vld [vmem:[%s4903 + $0x120] sm:$0xff]
      %v4929 = vld [vmem:[%s4903 + $0x128] sm:$0xff]
      %v4930 = vld [vmem:[%s4903 + $0x138] sm:$0xff]
      %v4931 = vld [vmem:[%s4903 + $0x140] sm:$0xff]
      %v4932 = vld [vmem:[%s4903 + $0x150] sm:$0xff]
      %v4933 = vld [vmem:[%s4903 + $0x158] sm:$0xff]
      %v4934 = vld [vmem:[%s4903 + $0x168] sm:$0xff]
      %v4935 = vld [vmem:[%s4903 + $0x170] sm:$0xff]
      %s4936 = scalar_lea.vmem %s3, 48
      %v4937 = vld [vmem:[%s4936] sm:$0xff]
      %v4939 = vsel %vm3229, %v4904, 0
      %v4942 = vsel %vm3229, %v4905, 0
      %v4945 = vsel %vm3229, %v4906, 0
      %v4948 = vsel %vm3229, %v4907, 0
      %v4951 = vsel %vm3229, %v4908, 0
      %v4954 = vsel %vm3229, %v4909, 0
      %v4957 = vsel %vm3229, %v4910, 0
      %v4960 = vsel %vm3229, %v4911, 0
      %v4963 = vsel %vm3229, %v4912, 0
      %v4966 = vsel %vm3229, %v4913, 0
      %v4969 = vsel %vm3229, %v4914, 0
      %v4972 = vsel %vm3229, %v4915, 0
      %v4975 = vsel %vm3229, %v4916, 0
      %v4978 = vsel %vm3229, %v4917, 0
      %v4981 = vsel %vm3229, %v4918, 0
      %v4984 = vsel %vm3229, %v4919, 0
      %v4987 = vsel %vm3229, %v4920, 0
      %v4990 = vsel %vm3229, %v4921, 0
      %v4993 = vsel %vm3229, %v4922, 0
      %v4996 = vsel %vm3229, %v4923, 0
      %v4999 = vsel %vm3229, %v4924, 0
      %v5002 = vsel %vm3229, %v4925, 0
      %v5005 = vsel %vm3229, %v4926, 0
      %v5008 = vsel %vm3229, %v4927, 0
      %v5011 = vsel %vm3229, %v4928, 0
      %v5014 = vsel %vm3229, %v4929, 0
      %v5017 = vsel %vm3229, %v4930, 0
      %v5020 = vsel %vm3229, %v4931, 0
      %v5023 = vsel %vm3229, %v4932, 0
      %v5026 = vsel %vm3229, %v4933, 0
      %v5029 = vsel %vm3229, %v4934, 0
      %v5032 = vsel %vm3229, %v4935, 0
      %5034 = vmatpush.msra.mxu0 0.0
      %5035 = vmatpush.msra.mxu0 0.0
      %5036 = vmatpush.msra.mxu0 0.0
      %5037 = vmatpush.msra.mxu0 0.0
      %5038 = vmatpush.msra.mxu0 0.0
      %5039 = vmatpush.msra.mxu0 0.0
      %5040 = vmatpush.msra.mxu0 0.0
      %5041 = vmatpush.msra.mxu0 0.0
      %5042 = vmatpush.msra.mxu0 0.0
      %5043 = vmatpush.msra.mxu0 0.0
      %5044 = vmatpush.msra.mxu0 0.0
      %5045 = vmatpush.msra.mxu0 0.0
      %5046 = vmatpush.msra.mxu0 0.0
      %5047 = vmatpush.msra.mxu0 0.0
      %5048 = vmatpush.msra.mxu0 0.0
      %5049 = vmatpush.msra.mxu0 %v4937
      %5050 = vmatmul.f32.gmra.mxu0 %v4939
      %v5051 = vpop.f32.mrf.mxu0
      %v5052 = vadd.f32 0.0, %v5051
      %5053 = vmatmul.f32.gmra.mxu0 %v4942
      %v5054 = vpop.f32.mrf.mxu0
      %v5055 = vadd.f32 0.0, %v5054
      %5056 = vmatmul.f32.gmra.mxu0 %v4945
      %v5057 = vpop.f32.mrf.mxu0
      %v5058 = vadd.f32 0.0, %v5057
      %5059 = vmatmul.f32.gmra.mxu0 %v4948
      %v5060 = vpop.f32.mrf.mxu0
      %v5061 = vadd.f32 0.0, %v5060
      %5062 = vmatmul.f32.gmra.mxu0 %v4951
      %v5063 = vpop.f32.mrf.mxu0
      %v5064 = vadd.f32 0.0, %v5063
      %5065 = vmatmul.f32.gmra.mxu0 %v4954
      %v5066 = vpop.f32.mrf.mxu0
      %v5067 = vadd.f32 0.0, %v5066
      %5068 = vmatmul.f32.gmra.mxu0 %v4957
      %v5069 = vpop.f32.mrf.mxu0
      %v5070 = vadd.f32 0.0, %v5069
      %5071 = vmatmul.f32.gmra.mxu0 %v4960
      %v5072 = vpop.f32.mrf.mxu0
      %v5073 = vadd.f32 0.0, %v5072
      %5074 = vmatmul.f32.gmra.mxu0 %v4963
      %v5075 = vpop.f32.mrf.mxu0
      %v5076 = vadd.f32 0.0, %v5075
      %5077 = vmatmul.f32.gmra.mxu0 %v4966
      %v5078 = vpop.f32.mrf.mxu0
      %v5079 = vadd.f32 0.0, %v5078
      %5080 = vmatmul.f32.gmra.mxu0 %v4969
      %v5081 = vpop.f32.mrf.mxu0
      %v5082 = vadd.f32 0.0, %v5081
      %5083 = vmatmul.f32.gmra.mxu0 %v4972
      %v5084 = vpop.f32.mrf.mxu0
      %v5085 = vadd.f32 0.0, %v5084
      %5086 = vmatmul.f32.gmra.mxu0 %v4975
      %v5087 = vpop.f32.mrf.mxu0
      %v5088 = vadd.f32 0.0, %v5087
      %5089 = vmatmul.f32.gmra.mxu0 %v4978
      %v5090 = vpop.f32.mrf.mxu0
      %v5091 = vadd.f32 0.0, %v5090
      %5092 = vmatmul.f32.gmra.mxu0 %v4981
      %v5093 = vpop.f32.mrf.mxu0
      %v5094 = vadd.f32 0.0, %v5093
      %5095 = vmatmul.f32.gmra.mxu0 %v4984
      %v5096 = vpop.f32.mrf.mxu0
      %v5097 = vadd.f32 0.0, %v5096
      %5098 = vmatmul.f32.gmra.mxu0 %v4987
      %v5099 = vpop.f32.mrf.mxu0
      %v5100 = vadd.f32 0.0, %v5099
      %5101 = vmatmul.f32.gmra.mxu0 %v4990
      %v5102 = vpop.f32.mrf.mxu0
      %v5103 = vadd.f32 0.0, %v5102
      %5104 = vmatmul.f32.gmra.mxu0 %v4993
      %v5105 = vpop.f32.mrf.mxu0
      %v5106 = vadd.f32 0.0, %v5105
      %5107 = vmatmul.f32.gmra.mxu0 %v4996
      %v5108 = vpop.f32.mrf.mxu0
      %v5109 = vadd.f32 0.0, %v5108
      %5110 = vmatmul.f32.gmra.mxu0 %v4999
      %v5111 = vpop.f32.mrf.mxu0
      %v5112 = vadd.f32 0.0, %v5111
      %5113 = vmatmul.f32.gmra.mxu0 %v5002
      %v5114 = vpop.f32.mrf.mxu0
      %v5115 = vadd.f32 0.0, %v5114
      %5116 = vmatmul.f32.gmra.mxu0 %v5005
      %v5117 = vpop.f32.mrf.mxu0
      %v5118 = vadd.f32 0.0, %v5117
      %5119 = vmatmul.f32.gmra.mxu0 %v5008
      %v5120 = vpop.f32.mrf.mxu0
      %v5121 = vadd.f32 0.0, %v5120
      %5122 = vmatmul.f32.gmra.mxu0 %v5011
      %v5123 = vpop.f32.mrf.mxu0
      %v5124 = vadd.f32 0.0, %v5123
      %5125 = vmatmul.f32.gmra.mxu0 %v5014
      %v5126 = vpop.f32.mrf.mxu0
      %v5127 = vadd.f32 0.0, %v5126
      %5128 = vmatmul.f32.gmra.mxu0 %v5017
      %v5129 = vpop.f32.mrf.mxu0
      %v5130 = vadd.f32 0.0, %v5129
      %5131 = vmatmul.f32.gmra.mxu0 %v5020
      %v5132 = vpop.f32.mrf.mxu0
      %v5133 = vadd.f32 0.0, %v5132
      %5134 = vmatmul.f32.gmra.mxu0 %v5023
      %v5135 = vpop.f32.mrf.mxu0
      %v5136 = vadd.f32 0.0, %v5135
      %5137 = vmatmul.f32.gmra.mxu0 %v5026
      %v5138 = vpop.f32.mrf.mxu0
      %v5139 = vadd.f32 0.0, %v5138
      %5140 = vmatmul.f32.gmra.mxu0 %v5029
      %v5141 = vpop.f32.mrf.mxu0
      %v5142 = vadd.f32 0.0, %v5141
      %5143 = vmatmul.f32.gmra.mxu0 %v5032
      %v5144 = vpop.f32.mrf.mxu0
      %v5145 = vadd.f32 0.0, %v5144
      %5146 = vdwg.mxu0
      %v5147 = vadd.f32 %v4871, %v5052
      %v5148 = vadd.f32 %v4872, %v5055
      %v5149 = vadd.f32 %v4873, %v5058
      %v5150 = vadd.f32 %v4874, %v5061
      %v5151 = vadd.f32 %v4875, %v5064
      %v5152 = vadd.f32 %v4876, %v5067
      %v5153 = vadd.f32 %v4877, %v5070
      %v5154 = vadd.f32 %v4878, %v5073
      %v5155 = vadd.f32 %v4879, %v5076
      %v5156 = vadd.f32 %v4880, %v5079
      %v5157 = vadd.f32 %v4881, %v5082
      %v5158 = vadd.f32 %v4882, %v5085
      %v5159 = vadd.f32 %v4883, %v5088
      %v5160 = vadd.f32 %v4884, %v5091
      %v5161 = vadd.f32 %v4885, %v5094
      %v5162 = vadd.f32 %v4886, %v5097
      %v5163 = vadd.f32 %v4887, %v5100
      %v5164 = vadd.f32 %v4888, %v5103
      %v5165 = vadd.f32 %v4889, %v5106
      %v5166 = vadd.f32 %v4890, %v5109
      %v5167 = vadd.f32 %v4891, %v5112
      %v5168 = vadd.f32 %v4892, %v5115
      %v5169 = vadd.f32 %v4893, %v5118
      %v5170 = vadd.f32 %v4894, %v5121
      %v5171 = vadd.f32 %v4895, %v5124
      %v5172 = vadd.f32 %v4896, %v5127
      %v5173 = vadd.f32 %v4897, %v5130
      %v5174 = vadd.f32 %v4898, %v5133
      %v5175 = vadd.f32 %v4899, %v5136
      %v5176 = vadd.f32 %v4900, %v5139
      %v5177 = vadd.f32 %v4901, %v5142
      %v5178 = vadd.f32 %v4902, %v5145
      %v5179 = vld [vmem:[%s4903 + $0x1] sm:$0xff]
      %v5180 = vld [vmem:[%s4903 + $0x9] sm:$0xff]
      %v5181 = vld [vmem:[%s4903 + $0x19] sm:$0xff]
      %v5182 = vld [vmem:[%s4903 + $0x21] sm:$0xff]
      %v5183 = vld [vmem:[%s4903 + $0x31] sm:$0xff]
      %v5184 = vld [vmem:[%s4903 + $0x39] sm:$0xff]
      %v5185 = vld [vmem:[%s4903 + $0x49] sm:$0xff]
      %v5186 = vld [vmem:[%s4903 + $0x51] sm:$0xff]
      %v5187 = vld [vmem:[%s4903 + $0x61] sm:$0xff]
      %v5188 = vld [vmem:[%s4903 + $0x69] sm:$0xff]
      %v5189 = vld [vmem:[%s4903 + $0x79] sm:$0xff]
      %v5190 = vld [vmem:[%s4903 + $0x81] sm:$0xff]
      %v5191 = vld [vmem:[%s4903 + $0x91] sm:$0xff]
      %v5192 = vld [vmem:[%s4903 + $0x99] sm:$0xff]
      %v5193 = vld [vmem:[%s4903 + $0xa9] sm:$0xff]
      %v5194 = vld [vmem:[%s4903 + $0xb1] sm:$0xff]
      %v5195 = vld [vmem:[%s4903 + $0xc1] sm:$0xff]
      %v5196 = vld [vmem:[%s4903 + $0xc9] sm:$0xff]
      %v5197 = vld [vmem:[%s4903 + $0xd9] sm:$0xff]
      %v5198 = vld [vmem:[%s4903 + $0xe1] sm:$0xff]
      %v5199 = vld [vmem:[%s4903 + $0xf1] sm:$0xff]
      %v5200 = vld [vmem:[%s4903 + $0xf9] sm:$0xff]
      %v5201 = vld [vmem:[%s4903 + $0x109] sm:$0xff]
      %v5202 = vld [vmem:[%s4903 + $0x111] sm:$0xff]
      %v5203 = vld [vmem:[%s4903 + $0x121] sm:$0xff]
      %v5204 = vld [vmem:[%s4903 + $0x129] sm:$0xff]
      %v5205 = vld [vmem:[%s4903 + $0x139] sm:$0xff]
      %v5206 = vld [vmem:[%s4903 + $0x141] sm:$0xff]
      %v5207 = vld [vmem:[%s4903 + $0x151] sm:$0xff]
      %v5208 = vld [vmem:[%s4903 + $0x159] sm:$0xff]
      %v5209 = vld [vmem:[%s4903 + $0x169] sm:$0xff]
      %v5210 = vld [vmem:[%s4903 + $0x171] sm:$0xff]
      %s5211 = scalar_lea.vmem %s3, 56
      %v5212 = vld [vmem:[%s5211] sm:$0xff]
      %v5214 = vsel %vm3229, %v5179, 0
      %v5217 = vsel %vm3229, %v5180, 0
      %v5220 = vsel %vm3229, %v5181, 0
      %v5223 = vsel %vm3229, %v5182, 0
      %v5226 = vsel %vm3229, %v5183, 0
      %v5229 = vsel %vm3229, %v5184, 0
      %v5232 = vsel %vm3229, %v5185, 0
      %v5235 = vsel %vm3229, %v5186, 0
      %v5238 = vsel %vm3229, %v5187, 0
      %v5241 = vsel %vm3229, %v5188, 0
      %v5244 = vsel %vm3229, %v5189, 0
      %v5247 = vsel %vm3229, %v5190, 0
      %v5250 = vsel %vm3229, %v5191, 0
      %v5253 = vsel %vm3229, %v5192, 0
      %v5256 = vsel %vm3229, %v5193, 0
      %v5259 = vsel %vm3229, %v5194, 0
      %v5262 = vsel %vm3229, %v5195, 0
      %v5265 = vsel %vm3229, %v5196, 0
      %v5268 = vsel %vm3229, %v5197, 0
      %v5271 = vsel %vm3229, %v5198, 0
      %v5274 = vsel %vm3229, %v5199, 0
      %v5277 = vsel %vm3229, %v5200, 0
      %v5280 = vsel %vm3229, %v5201, 0
      %v5283 = vsel %vm3229, %v5202, 0
      %v5286 = vsel %vm3229, %v5203, 0
      %v5289 = vsel %vm3229, %v5204, 0
      %v5292 = vsel %vm3229, %v5205, 0
      %v5295 = vsel %vm3229, %v5206, 0
      %v5298 = vsel %vm3229, %v5207, 0
      %v5301 = vsel %vm3229, %v5208, 0
      %v5304 = vsel %vm3229, %v5209, 0
      %v5307 = vsel %vm3229, %v5210, 0
      %5309 = vmatpush.msra.mxu0 0.0
      %5310 = vmatpush.msra.mxu0 0.0
      %5311 = vmatpush.msra.mxu0 0.0
      %5312 = vmatpush.msra.mxu0 0.0
      %5313 = vmatpush.msra.mxu0 0.0
      %5314 = vmatpush.msra.mxu0 0.0
      %5315 = vmatpush.msra.mxu0 0.0
      %5316 = vmatpush.msra.mxu0 0.0
      %5317 = vmatpush.msra.mxu0 0.0
      %5318 = vmatpush.msra.mxu0 0.0
      %5319 = vmatpush.msra.mxu0 0.0
      %5320 = vmatpush.msra.mxu0 0.0
      %5321 = vmatpush.msra.mxu0 0.0
      %5322 = vmatpush.msra.mxu0 0.0
      %5323 = vmatpush.msra.mxu0 0.0
      %5324 = vmatpush.msra.mxu0 %v5212
      %5325 = vmatmul.f32.gmra.mxu0 %v5214
      %v5326 = vpop.f32.mrf.mxu0
      %v5327 = vadd.f32 0.0, %v5326
      %5328 = vmatmul.f32.gmra.mxu0 %v5217
      %v5329 = vpop.f32.mrf.mxu0
      %v5330 = vadd.f32 0.0, %v5329
      %5331 = vmatmul.f32.gmra.mxu0 %v5220
      %v5332 = vpop.f32.mrf.mxu0
      %v5333 = vadd.f32 0.0, %v5332
      %5334 = vmatmul.f32.gmra.mxu0 %v5223
      %v5335 = vpop.f32.mrf.mxu0
      %v5336 = vadd.f32 0.0, %v5335
      %5337 = vmatmul.f32.gmra.mxu0 %v5226
      %v5338 = vpop.f32.mrf.mxu0
      %v5339 = vadd.f32 0.0, %v5338
      %5340 = vmatmul.f32.gmra.mxu0 %v5229
      %v5341 = vpop.f32.mrf.mxu0
      %v5342 = vadd.f32 0.0, %v5341
      %5343 = vmatmul.f32.gmra.mxu0 %v5232
      %v5344 = vpop.f32.mrf.mxu0
      %v5345 = vadd.f32 0.0, %v5344
      %5346 = vmatmul.f32.gmra.mxu0 %v5235
      %v5347 = vpop.f32.mrf.mxu0
      %v5348 = vadd.f32 0.0, %v5347
      %5349 = vmatmul.f32.gmra.mxu0 %v5238
      %v5350 = vpop.f32.mrf.mxu0
      %v5351 = vadd.f32 0.0, %v5350
      %5352 = vmatmul.f32.gmra.mxu0 %v5241
      %v5353 = vpop.f32.mrf.mxu0
      %v5354 = vadd.f32 0.0, %v5353
      %5355 = vmatmul.f32.gmra.mxu0 %v5244
      %v5356 = vpop.f32.mrf.mxu0
      %v5357 = vadd.f32 0.0, %v5356
      %5358 = vmatmul.f32.gmra.mxu0 %v5247
      %v5359 = vpop.f32.mrf.mxu0
      %v5360 = vadd.f32 0.0, %v5359
      %5361 = vmatmul.f32.gmra.mxu0 %v5250
      %v5362 = vpop.f32.mrf.mxu0
      %v5363 = vadd.f32 0.0, %v5362
      %5364 = vmatmul.f32.gmra.mxu0 %v5253
      %v5365 = vpop.f32.mrf.mxu0
      %v5366 = vadd.f32 0.0, %v5365
      %5367 = vmatmul.f32.gmra.mxu0 %v5256
      %v5368 = vpop.f32.mrf.mxu0
      %v5369 = vadd.f32 0.0, %v5368
      %5370 = vmatmul.f32.gmra.mxu0 %v5259
      %v5371 = vpop.f32.mrf.mxu0
      %v5372 = vadd.f32 0.0, %v5371
      %5373 = vmatmul.f32.gmra.mxu0 %v5262
      %v5374 = vpop.f32.mrf.mxu0
      %v5375 = vadd.f32 0.0, %v5374
      %5376 = vmatmul.f32.gmra.mxu0 %v5265
      %v5377 = vpop.f32.mrf.mxu0
      %v5378 = vadd.f32 0.0, %v5377
      %5379 = vmatmul.f32.gmra.mxu0 %v5268
      %v5380 = vpop.f32.mrf.mxu0
      %v5381 = vadd.f32 0.0, %v5380
      %5382 = vmatmul.f32.gmra.mxu0 %v5271
      %v5383 = vpop.f32.mrf.mxu0
      %v5384 = vadd.f32 0.0, %v5383
      %5385 = vmatmul.f32.gmra.mxu0 %v5274
      %v5386 = vpop.f32.mrf.mxu0
      %v5387 = vadd.f32 0.0, %v5386
      %5388 = vmatmul.f32.gmra.mxu0 %v5277
      %v5389 = vpop.f32.mrf.mxu0
      %v5390 = vadd.f32 0.0, %v5389
      %5391 = vmatmul.f32.gmra.mxu0 %v5280
      %v5392 = vpop.f32.mrf.mxu0
      %v5393 = vadd.f32 0.0, %v5392
      %5394 = vmatmul.f32.gmra.mxu0 %v5283
      %v5395 = vpop.f32.mrf.mxu0
      %v5396 = vadd.f32 0.0, %v5395
      %5397 = vmatmul.f32.gmra.mxu0 %v5286
      %v5398 = vpop.f32.mrf.mxu0
      %v5399 = vadd.f32 0.0, %v5398
      %5400 = vmatmul.f32.gmra.mxu0 %v5289
      %v5401 = vpop.f32.mrf.mxu0
      %v5402 = vadd.f32 0.0, %v5401
      %5403 = vmatmul.f32.gmra.mxu0 %v5292
      %v5404 = vpop.f32.mrf.mxu0
      %v5405 = vadd.f32 0.0, %v5404
      %5406 = vmatmul.f32.gmra.mxu0 %v5295
      %v5407 = vpop.f32.mrf.mxu0
      %v5408 = vadd.f32 0.0, %v5407
      %5409 = vmatmul.f32.gmra.mxu0 %v5298
      %v5410 = vpop.f32.mrf.mxu0
      %v5411 = vadd.f32 0.0, %v5410
      %5412 = vmatmul.f32.gmra.mxu0 %v5301
      %v5413 = vpop.f32.mrf.mxu0
      %v5414 = vadd.f32 0.0, %v5413
      %5415 = vmatmul.f32.gmra.mxu0 %v5304
      %v5416 = vpop.f32.mrf.mxu0
      %v5417 = vadd.f32 0.0, %v5416
      %5418 = vmatmul.f32.gmra.mxu0 %v5307
      %v5419 = vpop.f32.mrf.mxu0
      %v5420 = vadd.f32 0.0, %v5419
      %5421 = vdwg.mxu0
      %v5422 = vadd.f32 %v5147, %v5327
      %v5423 = vadd.f32 %v5148, %v5330
      %v5424 = vadd.f32 %v5149, %v5333
      %v5425 = vadd.f32 %v5150, %v5336
      %v5426 = vadd.f32 %v5151, %v5339
      %v5427 = vadd.f32 %v5152, %v5342
      %v5428 = vadd.f32 %v5153, %v5345
      %v5429 = vadd.f32 %v5154, %v5348
      %v5430 = vadd.f32 %v5155, %v5351
      %v5431 = vadd.f32 %v5156, %v5354
      %v5432 = vadd.f32 %v5157, %v5357
      %v5433 = vadd.f32 %v5158, %v5360
      %v5434 = vadd.f32 %v5159, %v5363
      %v5435 = vadd.f32 %v5160, %v5366
      %v5436 = vadd.f32 %v5161, %v5369
      %v5437 = vadd.f32 %v5162, %v5372
      %v5438 = vadd.f32 %v5163, %v5375
      %v5439 = vadd.f32 %v5164, %v5378
      %v5440 = vadd.f32 %v5165, %v5381
      %v5441 = vadd.f32 %v5166, %v5384
      %v5442 = vadd.f32 %v5167, %v5387
      %v5443 = vadd.f32 %v5168, %v5390
      %v5444 = vadd.f32 %v5169, %v5393
      %v5445 = vadd.f32 %v5170, %v5396
      %v5446 = vadd.f32 %v5171, %v5399
      %v5447 = vadd.f32 %v5172, %v5402
      %v5448 = vadd.f32 %v5173, %v5405
      %v5449 = vadd.f32 %v5174, %v5408
      %v5450 = vadd.f32 %v5175, %v5411
      %v5451 = vadd.f32 %v5176, %v5414
      %v5452 = vadd.f32 %v5177, %v5417
      %v5453 = vadd.f32 %v5178, %v5420
      %v5454 = vld [vmem:[%s4903 + $0x2] sm:$0xff]
      %v5455 = vld [vmem:[%s4903 + $0xa] sm:$0xff]
      %v5456 = vld [vmem:[%s4903 + $0x1a] sm:$0xff]
      %v5457 = vld [vmem:[%s4903 + $0x22] sm:$0xff]
      %v5458 = vld [vmem:[%s4903 + $0x32] sm:$0xff]
      %v5459 = vld [vmem:[%s4903 + $0x3a] sm:$0xff]
      %v5460 = vld [vmem:[%s4903 + $0x4a] sm:$0xff]
      %v5461 = vld [vmem:[%s4903 + $0x52] sm:$0xff]
      %v5462 = vld [vmem:[%s4903 + $0x62] sm:$0xff]
      %v5463 = vld [vmem:[%s4903 + $0x6a] sm:$0xff]
      %v5464 = vld [vmem:[%s4903 + $0x7a] sm:$0xff]
      %v5465 = vld [vmem:[%s4903 + $0x82] sm:$0xff]
      %v5466 = vld [vmem:[%s4903 + $0x92] sm:$0xff]
      %v5467 = vld [vmem:[%s4903 + $0x9a] sm:$0xff]
      %v5468 = vld [vmem:[%s4903 + $0xaa] sm:$0xff]
      %v5469 = vld [vmem:[%s4903 + $0xb2] sm:$0xff]
      %v5470 = vld [vmem:[%s4903 + $0xc2] sm:$0xff]
      %v5471 = vld [vmem:[%s4903 + $0xca] sm:$0xff]
      %v5472 = vld [vmem:[%s4903 + $0xda] sm:$0xff]
      %v5473 = vld [vmem:[%s4903 + $0xe2] sm:$0xff]
      %v5474 = vld [vmem:[%s4903 + $0xf2] sm:$0xff]
      %v5475 = vld [vmem:[%s4903 + $0xfa] sm:$0xff]
      %v5476 = vld [vmem:[%s4903 + $0x10a] sm:$0xff]
      %v5477 = vld [vmem:[%s4903 + $0x112] sm:$0xff]
      %v5478 = vld [vmem:[%s4903 + $0x122] sm:$0xff]
      %v5479 = vld [vmem:[%s4903 + $0x12a] sm:$0xff]
      %v5480 = vld [vmem:[%s4903 + $0x13a] sm:$0xff]
      %v5481 = vld [vmem:[%s4903 + $0x142] sm:$0xff]
      %v5482 = vld [vmem:[%s4903 + $0x152] sm:$0xff]
      %v5483 = vld [vmem:[%s4903 + $0x15a] sm:$0xff]
      %v5484 = vld [vmem:[%s4903 + $0x16a] sm:$0xff]
      %v5485 = vld [vmem:[%s4903 + $0x172] sm:$0xff]
      %s5486 = scalar_lea.vmem %s3, 64
      %v5487 = vld [vmem:[%s5486] sm:$0xff]
      %v5489 = vsel %vm3229, %v5454, 0
      %v5492 = vsel %vm3229, %v5455, 0
      %v5495 = vsel %vm3229, %v5456, 0
      %v5498 = vsel %vm3229, %v5457, 0
      %v5501 = vsel %vm3229, %v5458, 0
      %v5504 = vsel %vm3229, %v5459, 0
      %v5507 = vsel %vm3229, %v5460, 0
      %v5510 = vsel %vm3229, %v5461, 0
      %v5513 = vsel %vm3229, %v5462, 0
      %v5516 = vsel %vm3229, %v5463, 0
      %v5519 = vsel %vm3229, %v5464, 0
      %v5522 = vsel %vm3229, %v5465, 0
      %v5525 = vsel %vm3229, %v5466, 0
      %v5528 = vsel %vm3229, %v5467, 0
      %v5531 = vsel %vm3229, %v5468, 0
      %v5534 = vsel %vm3229, %v5469, 0
      %v5537 = vsel %vm3229, %v5470, 0
      %v5540 = vsel %vm3229, %v5471, 0
      %v5543 = vsel %vm3229, %v5472, 0
      %v5546 = vsel %vm3229, %v5473, 0
      %v5549 = vsel %vm3229, %v5474, 0
      %v5552 = vsel %vm3229, %v5475, 0
      %v5555 = vsel %vm3229, %v5476, 0
      %v5558 = vsel %vm3229, %v5477, 0
      %v5561 = vsel %vm3229, %v5478, 0
      %v5564 = vsel %vm3229, %v5479, 0
      %v5567 = vsel %vm3229, %v5480, 0
      %v5570 = vsel %vm3229, %v5481, 0
      %v5573 = vsel %vm3229, %v5482, 0
      %v5576 = vsel %vm3229, %v5483, 0
      %v5579 = vsel %vm3229, %v5484, 0
      %v5582 = vsel %vm3229, %v5485, 0
      %5584 = vmatpush.msra.mxu0 0.0
      %5585 = vmatpush.msra.mxu0 0.0
      %5586 = vmatpush.msra.mxu0 0.0
      %5587 = vmatpush.msra.mxu0 0.0
      %5588 = vmatpush.msra.mxu0 0.0
      %5589 = vmatpush.msra.mxu0 0.0
      %5590 = vmatpush.msra.mxu0 0.0
      %5591 = vmatpush.msra.mxu0 0.0
      %5592 = vmatpush.msra.mxu0 0.0
      %5593 = vmatpush.msra.mxu0 0.0
      %5594 = vmatpush.msra.mxu0 0.0
      %5595 = vmatpush.msra.mxu0 0.0
      %5596 = vmatpush.msra.mxu0 0.0
      %5597 = vmatpush.msra.mxu0 0.0
      %5598 = vmatpush.msra.mxu0 0.0
      %5599 = vmatpush.msra.mxu0 %v5487
      %5600 = vmatmul.f32.gmra.mxu0 %v5489
      %v5601 = vpop.f32.mrf.mxu0
      %v5602 = vadd.f32 0.0, %v5601
      %5603 = vmatmul.f32.gmra.mxu0 %v5492
      %v5604 = vpop.f32.mrf.mxu0
      %v5605 = vadd.f32 0.0, %v5604
      %5606 = vmatmul.f32.gmra.mxu0 %v5495
      %v5607 = vpop.f32.mrf.mxu0
      %v5608 = vadd.f32 0.0, %v5607
      %5609 = vmatmul.f32.gmra.mxu0 %v5498
      %v5610 = vpop.f32.mrf.mxu0
      %v5611 = vadd.f32 0.0, %v5610
      %5612 = vmatmul.f32.gmra.mxu0 %v5501
      %v5613 = vpop.f32.mrf.mxu0
      %v5614 = vadd.f32 0.0, %v5613
      %5615 = vmatmul.f32.gmra.mxu0 %v5504
      %v5616 = vpop.f32.mrf.mxu0
      %v5617 = vadd.f32 0.0, %v5616
      %5618 = vmatmul.f32.gmra.mxu0 %v5507
      %v5619 = vpop.f32.mrf.mxu0
      %v5620 = vadd.f32 0.0, %v5619
      %5621 = vmatmul.f32.gmra.mxu0 %v5510
      %v5622 = vpop.f32.mrf.mxu0
      %v5623 = vadd.f32 0.0, %v5622
      %5624 = vmatmul.f32.gmra.mxu0 %v5513
      %v5625 = vpop.f32.mrf.mxu0
      %v5626 = vadd.f32 0.0, %v5625
      %5627 = vmatmul.f32.gmra.mxu0 %v5516
      %v5628 = vpop.f32.mrf.mxu0
      %v5629 = vadd.f32 0.0, %v5628
      %5630 = vmatmul.f32.gmra.mxu0 %v5519
      %v5631 = vpop.f32.mrf.mxu0
      %v5632 = vadd.f32 0.0, %v5631
      %5633 = vmatmul.f32.gmra.mxu0 %v5522
      %v5634 = vpop.f32.mrf.mxu0
      %v5635 = vadd.f32 0.0, %v5634
      %5636 = vmatmul.f32.gmra.mxu0 %v5525
      %v5637 = vpop.f32.mrf.mxu0
      %v5638 = vadd.f32 0.0, %v5637
      %5639 = vmatmul.f32.gmra.mxu0 %v5528
      %v5640 = vpop.f32.mrf.mxu0
      %v5641 = vadd.f32 0.0, %v5640
      %5642 = vmatmul.f32.gmra.mxu0 %v5531
      %v5643 = vpop.f32.mrf.mxu0
      %v5644 = vadd.f32 0.0, %v5643
      %5645 = vmatmul.f32.gmra.mxu0 %v5534
      %v5646 = vpop.f32.mrf.mxu0
      %v5647 = vadd.f32 0.0, %v5646
      %5648 = vmatmul.f32.gmra.mxu0 %v5537
      %v5649 = vpop.f32.mrf.mxu0
      %v5650 = vadd.f32 0.0, %v5649
      %5651 = vmatmul.f32.gmra.mxu0 %v5540
      %v5652 = vpop.f32.mrf.mxu0
      %v5653 = vadd.f32 0.0, %v5652
      %5654 = vmatmul.f32.gmra.mxu0 %v5543
      %v5655 = vpop.f32.mrf.mxu0
      %v5656 = vadd.f32 0.0, %v5655
      %5657 = vmatmul.f32.gmra.mxu0 %v5546
      %v5658 = vpop.f32.mrf.mxu0
      %v5659 = vadd.f32 0.0, %v5658
      %5660 = vmatmul.f32.gmra.mxu0 %v5549
      %v5661 = vpop.f32.mrf.mxu0
      %v5662 = vadd.f32 0.0, %v5661
      %5663 = vmatmul.f32.gmra.mxu0 %v5552
      %v5664 = vpop.f32.mrf.mxu0
      %v5665 = vadd.f32 0.0, %v5664
      %5666 = vmatmul.f32.gmra.mxu0 %v5555
      %v5667 = vpop.f32.mrf.mxu0
      %v5668 = vadd.f32 0.0, %v5667
      %5669 = vmatmul.f32.gmra.mxu0 %v5558
      %v5670 = vpop.f32.mrf.mxu0
      %v5671 = vadd.f32 0.0, %v5670
      %5672 = vmatmul.f32.gmra.mxu0 %v5561
      %v5673 = vpop.f32.mrf.mxu0
      %v5674 = vadd.f32 0.0, %v5673
      %5675 = vmatmul.f32.gmra.mxu0 %v5564
      %v5676 = vpop.f32.mrf.mxu0
      %v5677 = vadd.f32 0.0, %v5676
      %5678 = vmatmul.f32.gmra.mxu0 %v5567
      %v5679 = vpop.f32.mrf.mxu0
      %v5680 = vadd.f32 0.0, %v5679
      %5681 = vmatmul.f32.gmra.mxu0 %v5570
      %v5682 = vpop.f32.mrf.mxu0
      %v5683 = vadd.f32 0.0, %v5682
      %5684 = vmatmul.f32.gmra.mxu0 %v5573
      %v5685 = vpop.f32.mrf.mxu0
      %v5686 = vadd.f32 0.0, %v5685
      %5687 = vmatmul.f32.gmra.mxu0 %v5576
      %v5688 = vpop.f32.mrf.mxu0
      %v5689 = vadd.f32 0.0, %v5688
      %5690 = vmatmul.f32.gmra.mxu0 %v5579
      %v5691 = vpop.f32.mrf.mxu0
      %v5692 = vadd.f32 0.0, %v5691
      %5693 = vmatmul.f32.gmra.mxu0 %v5582
      %v5694 = vpop.f32.mrf.mxu0
      %v5695 = vadd.f32 0.0, %v5694
      %5696 = vdwg.mxu0
      %v5697 = vadd.f32 %v5422, %v5602
      %v5698 = vadd.f32 %v5423, %v5605
      %v5699 = vadd.f32 %v5424, %v5608
      %v5700 = vadd.f32 %v5425, %v5611
      %v5701 = vadd.f32 %v5426, %v5614
      %v5702 = vadd.f32 %v5427, %v5617
      %v5703 = vadd.f32 %v5428, %v5620
      %v5704 = vadd.f32 %v5429, %v5623
      %v5705 = vadd.f32 %v5430, %v5626
      %v5706 = vadd.f32 %v5431, %v5629
      %v5707 = vadd.f32 %v5432, %v5632
      %v5708 = vadd.f32 %v5433, %v5635
      %v5709 = vadd.f32 %v5434, %v5638
      %v5710 = vadd.f32 %v5435, %v5641
      %v5711 = vadd.f32 %v5436, %v5644
      %v5712 = vadd.f32 %v5437, %v5647
      %v5713 = vadd.f32 %v5438, %v5650
      %v5714 = vadd.f32 %v5439, %v5653
      %v5715 = vadd.f32 %v5440, %v5656
      %v5716 = vadd.f32 %v5441, %v5659
      %v5717 = vadd.f32 %v5442, %v5662
      %v5718 = vadd.f32 %v5443, %v5665
      %v5719 = vadd.f32 %v5444, %v5668
      %v5720 = vadd.f32 %v5445, %v5671
      %v5721 = vadd.f32 %v5446, %v5674
      %v5722 = vadd.f32 %v5447, %v5677
      %v5723 = vadd.f32 %v5448, %v5680
      %v5724 = vadd.f32 %v5449, %v5683
      %v5725 = vadd.f32 %v5450, %v5686
      %v5726 = vadd.f32 %v5451, %v5689
      %v5727 = vadd.f32 %v5452, %v5692
      %v5728 = vadd.f32 %v5453, %v5695
      %v5729 = vld [vmem:[%s4] sm:$0x1]
      %v5731 = vperm.slane %v5729, 0
      %v5733 = vadd.f32 %v5697, %v5731
      %v5734 = vadd.f32 %v5698, %v5731
      %v5735 = vadd.f32 %v5699, %v5731
      %v5736 = vadd.f32 %v5700, %v5731
      %v5737 = vadd.f32 %v5701, %v5731
      %v5738 = vadd.f32 %v5702, %v5731
      %v5739 = vadd.f32 %v5703, %v5731
      %v5740 = vadd.f32 %v5704, %v5731
      %v5741 = vadd.f32 %v5705, %v5731
      %v5742 = vadd.f32 %v5706, %v5731
      %v5743 = vadd.f32 %v5707, %v5731
      %v5744 = vadd.f32 %v5708, %v5731
      %v5745 = vadd.f32 %v5709, %v5731
      %v5746 = vadd.f32 %v5710, %v5731
      %v5747 = vadd.f32 %v5711, %v5731
      %v5748 = vadd.f32 %v5712, %v5731
      %v5749 = vadd.f32 %v5713, %v5731
      %v5750 = vadd.f32 %v5714, %v5731
      %v5751 = vadd.f32 %v5715, %v5731
      %v5752 = vadd.f32 %v5716, %v5731
      %v5753 = vadd.f32 %v5717, %v5731
      %v5754 = vadd.f32 %v5718, %v5731
      %v5755 = vadd.f32 %v5719, %v5731
      %v5756 = vadd.f32 %v5720, %v5731
      %v5757 = vadd.f32 %v5721, %v5731
      %v5758 = vadd.f32 %v5722, %v5731
      %v5759 = vadd.f32 %v5723, %v5731
      %v5760 = vadd.f32 %v5724, %v5731
      %v5761 = vadd.f32 %v5725, %v5731
      %v5762 = vadd.f32 %v5726, %v5731
      %v5763 = vadd.f32 %v5727, %v5731
      %v5764 = vadd.f32 %v5728, %v5731
      %vm5765 = vcmp.gt.f32.partialorder %v5733, 0.0
      %vm5766 = vcmp.gt.f32.partialorder %v5734, 0.0
      %vm5767 = vcmp.gt.f32.partialorder %v5735, 0.0
      %vm5768 = vcmp.gt.f32.partialorder %v5736, 0.0
      %vm5769 = vcmp.gt.f32.partialorder %v5737, 0.0
      %vm5770 = vcmp.gt.f32.partialorder %v5738, 0.0
      %vm5771 = vcmp.gt.f32.partialorder %v5739, 0.0
      %vm5772 = vcmp.gt.f32.partialorder %v5740, 0.0
      %vm5773 = vcmp.gt.f32.partialorder %v5741, 0.0
      %vm5774 = vcmp.gt.f32.partialorder %v5742, 0.0
      %vm5775 = vcmp.gt.f32.partialorder %v5743, 0.0
      %vm5776 = vcmp.gt.f32.partialorder %v5744, 0.0
      %vm5777 = vcmp.gt.f32.partialorder %v5745, 0.0
      %vm5778 = vcmp.gt.f32.partialorder %v5746, 0.0
      %vm5779 = vcmp.gt.f32.partialorder %v5747, 0.0
      %vm5780 = vcmp.gt.f32.partialorder %v5748, 0.0
      %vm5781 = vcmp.gt.f32.partialorder %v5749, 0.0
      %vm5782 = vcmp.gt.f32.partialorder %v5750, 0.0
      %vm5783 = vcmp.gt.f32.partialorder %v5751, 0.0
      %vm5784 = vcmp.gt.f32.partialorder %v5752, 0.0
      %vm5785 = vcmp.gt.f32.partialorder %v5753, 0.0
      %vm5786 = vcmp.gt.f32.partialorder %v5754, 0.0
      %vm5787 = vcmp.gt.f32.partialorder %v5755, 0.0
      %vm5788 = vcmp.gt.f32.partialorder %v5756, 0.0
      %vm5789 = vcmp.gt.f32.partialorder %v5757, 0.0
      %vm5790 = vcmp.gt.f32.partialorder %v5758, 0.0
      %vm5791 = vcmp.gt.f32.partialorder %v5759, 0.0
      %vm5792 = vcmp.gt.f32.partialorder %v5760, 0.0
      %vm5793 = vcmp.gt.f32.partialorder %v5761, 0.0
      %vm5794 = vcmp.gt.f32.partialorder %v5762, 0.0
      %vm5795 = vcmp.gt.f32.partialorder %v5763, 0.0
      %vm5796 = vcmp.gt.f32.partialorder %v5764, 0.0
      %v5797 = vmin.f32 %v5733, 0.0
      %v5798 = vmin.f32 %v5734, 0.0
      %v5799 = vmin.f32 %v5735, 0.0
      %v5800 = vmin.f32 %v5736, 0.0
      %v5801 = vmin.f32 %v5737, 0.0
      %v5802 = vmin.f32 %v5738, 0.0
      %v5803 = vmin.f32 %v5739, 0.0
      %v5804 = vmin.f32 %v5740, 0.0
      %v5805 = vmin.f32 %v5741, 0.0
      %v5806 = vmin.f32 %v5742, 0.0
      %v5807 = vmin.f32 %v5743, 0.0
      %v5808 = vmin.f32 %v5744, 0.0
      %v5809 = vmin.f32 %v5745, 0.0
      %v5810 = vmin.f32 %v5746, 0.0
      %v5811 = vmin.f32 %v5747, 0.0
      %v5812 = vmin.f32 %v5748, 0.0
      %v5813 = vmin.f32 %v5749, 0.0
      %v5814 = vmin.f32 %v5750, 0.0
      %v5815 = vmin.f32 %v5751, 0.0
      %v5816 = vmin.f32 %v5752, 0.0
      %v5817 = vmin.f32 %v5753, 0.0
      %v5818 = vmin.f32 %v5754, 0.0
      %v5819 = vmin.f32 %v5755, 0.0
      %v5820 = vmin.f32 %v5756, 0.0
      %v5821 = vmin.f32 %v5757, 0.0
      %v5822 = vmin.f32 %v5758, 0.0
      %v5823 = vmin.f32 %v5759, 0.0
      %v5824 = vmin.f32 %v5760, 0.0
      %v5825 = vmin.f32 %v5761, 0.0
      %v5826 = vmin.f32 %v5762, 0.0
      %v5827 = vmin.f32 %v5763, 0.0
      %v5828 = vmin.f32 %v5764, 0.0
      %v5829 = vmul.f32 %v5797, 1.442695
      %v5830 = vpow.pop %v5829
      %v5831 = vmul.f32 %v5798, 1.442695
      %v5832 = vpow.pop %v5831
      %v5833 = vmul.f32 %v5799, 1.442695
      %v5834 = vpow.pop %v5833
      %v5835 = vmul.f32 %v5800, 1.442695
      %v5836 = vpow.pop %v5835
      %v5837 = vmul.f32 %v5801, 1.442695
      %v5838 = vpow.pop %v5837
      %v5839 = vmul.f32 %v5802, 1.442695
      %v5840 = vpow.pop %v5839
      %v5841 = vmul.f32 %v5803, 1.442695
      %v5842 = vpow.pop %v5841
      %v5843 = vmul.f32 %v5804, 1.442695
      %v5844 = vpow.pop %v5843
      %v5845 = vmul.f32 %v5805, 1.442695
      %v5846 = vpow.pop %v5845
      %v5847 = vmul.f32 %v5806, 1.442695
      %v5848 = vpow.pop %v5847
      %v5849 = vmul.f32 %v5807, 1.442695
      %v5850 = vpow.pop %v5849
      %v5851 = vmul.f32 %v5808, 1.442695
      %v5852 = vpow.pop %v5851
      %v5853 = vmul.f32 %v5809, 1.442695
      %v5854 = vpow.pop %v5853
      %v5855 = vmul.f32 %v5810, 1.442695
      %v5856 = vpow.pop %v5855
      %v5857 = vmul.f32 %v5811, 1.442695
      %v5858 = vpow.pop %v5857
      %v5859 = vmul.f32 %v5812, 1.442695
      %v5860 = vpow.pop %v5859
      %v5861 = vmul.f32 %v5813, 1.442695
      %v5862 = vpow.pop %v5861
      %v5863 = vmul.f32 %v5814, 1.442695
      %v5864 = vpow.pop %v5863
      %v5865 = vmul.f32 %v5815, 1.442695
      %v5866 = vpow.pop %v5865
      %v5867 = vmul.f32 %v5816, 1.442695
      %v5868 = vpow.pop %v5867
      %v5869 = vmul.f32 %v5817, 1.442695
      %v5870 = vpow.pop %v5869
      %v5871 = vmul.f32 %v5818, 1.442695
      %v5872 = vpow.pop %v5871
      %v5873 = vmul.f32 %v5819, 1.442695
      %v5874 = vpow.pop %v5873
      %v5875 = vmul.f32 %v5820, 1.442695
      %v5876 = vpow.pop %v5875
      %v5877 = vmul.f32 %v5821, 1.442695
      %v5878 = vpow.pop %v5877
      %v5879 = vmul.f32 %v5822, 1.442695
      %v5880 = vpow.pop %v5879
      %v5881 = vmul.f32 %v5823, 1.442695
      %v5882 = vpow.pop %v5881
      %v5883 = vmul.f32 %v5824, 1.442695
      %v5884 = vpow.pop %v5883
      %v5885 = vmul.f32 %v5825, 1.442695
      %v5886 = vpow.pop %v5885
      %v5887 = vmul.f32 %v5826, 1.442695
      %v5888 = vpow.pop %v5887
      %v5889 = vmul.f32 %v5827, 1.442695
      %v5890 = vpow.pop %v5889
      %v5891 = vmul.f32 %v5828, 1.442695
      %v5892 = vpow.pop %v5891
      %v5893 = vsub.f32 %v5830, 1.0
      %v5894 = vsub.f32 %v5832, 1.0
      %v5895 = vsub.f32 %v5834, 1.0
      %v5896 = vsub.f32 %v5836, 1.0
      %v5897 = vsub.f32 %v5838, 1.0
      %v5898 = vsub.f32 %v5840, 1.0
      %v5899 = vsub.f32 %v5842, 1.0
      %v5900 = vsub.f32 %v5844, 1.0
      %v5901 = vsub.f32 %v5846, 1.0
      %v5902 = vsub.f32 %v5848, 1.0
      %v5903 = vsub.f32 %v5850, 1.0
      %v5904 = vsub.f32 %v5852, 1.0
      %v5905 = vsub.f32 %v5854, 1.0
      %v5906 = vsub.f32 %v5856, 1.0
      %v5907 = vsub.f32 %v5858, 1.0
      %v5908 = vsub.f32 %v5860, 1.0
      %v5909 = vsub.f32 %v5862, 1.0
      %v5910 = vsub.f32 %v5864, 1.0
      %v5911 = vsub.f32 %v5866, 1.0
      %v5912 = vsub.f32 %v5868, 1.0
      %v5913 = vsub.f32 %v5870, 1.0
      %v5914 = vsub.f32 %v5872, 1.0
      %v5915 = vsub.f32 %v5874, 1.0
      %v5916 = vsub.f32 %v5876, 1.0
      %v5917 = vsub.f32 %v5878, 1.0
      %v5918 = vsub.f32 %v5880, 1.0
      %v5919 = vsub.f32 %v5882, 1.0
      %v5920 = vsub.f32 %v5884, 1.0
      %v5921 = vsub.f32 %v5886, 1.0
      %v5922 = vsub.f32 %v5888, 1.0
      %v5923 = vsub.f32 %v5890, 1.0
      %v5924 = vsub.f32 %v5892, 1.0
      %v5925 = vsel %vm5765, %v5733, %v5893
      %v5926 = vsel %vm5766, %v5734, %v5894
      %v5927 = vsel %vm5767, %v5735, %v5895
      %v5928 = vsel %vm5768, %v5736, %v5896
      %v5929 = vsel %vm5769, %v5737, %v5897
      %v5930 = vsel %vm5770, %v5738, %v5898
      %v5931 = vsel %vm5771, %v5739, %v5899
      %v5932 = vsel %vm5772, %v5740, %v5900
      %v5933 = vsel %vm5773, %v5741, %v5901
      %v5934 = vsel %vm5774, %v5742, %v5902
      %v5935 = vsel %vm5775, %v5743, %v5903
      %v5936 = vsel %vm5776, %v5744, %v5904
      %v5937 = vsel %vm5777, %v5745, %v5905
      %v5938 = vsel %vm5778, %v5746, %v5906
      %v5939 = vsel %vm5779, %v5747, %v5907
      %v5940 = vsel %vm5780, %v5748, %v5908
      %v5941 = vsel %vm5781, %v5749, %v5909
      %v5942 = vsel %vm5782, %v5750, %v5910
      %v5943 = vsel %vm5783, %v5751, %v5911
      %v5944 = vsel %vm5784, %v5752, %v5912
      %v5945 = vsel %vm5785, %v5753, %v5913
      %v5946 = vsel %vm5786, %v5754, %v5914
      %v5947 = vsel %vm5787, %v5755, %v5915
      %v5948 = vsel %vm5788, %v5756, %v5916
      %v5949 = vsel %vm5789, %v5757, %v5917
      %v5950 = vsel %vm5790, %v5758, %v5918
      %v5951 = vsel %vm5791, %v5759, %v5919
      %v5952 = vsel %vm5792, %v5760, %v5920
      %v5953 = vsel %vm5793, %v5761, %v5921
      %v5954 = vsel %vm5794, %v5762, %v5922
      %v5955 = vsel %vm5795, %v5763, %v5923
      %v5956 = vsel %vm5796, %v5764, %v5924
      %5957 = vst.msk [vmem:[#allocation3] sm:$0xff] %vm3229, 0.0
      %5958 = vst.msk [vmem:[#allocation3 + $0x8] sm:$0xff] %vm3229, 0.0
      %5959 = vst.msk [vmem:[#allocation3 + $0x10] sm:$0x3] %vm3232, 0.0
      %5960 = vst.msk [vmem:[#allocation3 + $0x18] sm:$0xff] %vm3229, 0.0
      %5961 = vst.msk [vmem:[#allocation3 + $0x20] sm:$0xff] %vm3229, 0.0
      %5962 = vst.msk [vmem:[#allocation3 + $0x28] sm:$0x3] %vm3232, 0.0
      %5963 = vst.msk [vmem:[#allocation3 + $0x30] sm:$0xff] %vm3229, 0.0
      %5964 = vst.msk [vmem:[#allocation3 + $0x38] sm:$0xff] %vm3229, 0.0
      %5965 = vst.msk [vmem:[#allocation3 + $0x40] sm:$0x3] %vm3232, 0.0
      %5966 = vst.msk [vmem:[#allocation3 + $0x48] sm:$0xff] %vm3229, 0.0
      %5967 = vst.msk [vmem:[#allocation3 + $0x50] sm:$0xff] %vm3229, 0.0
      %5968 = vst.msk [vmem:[#allocation3 + $0x58] sm:$0x3] %vm3232, 0.0
      %5969 = vst.msk [vmem:[#allocation3 + $0x60] sm:$0xff] %vm3229, 0.0
      %5970 = vst.msk [vmem:[#allocation3 + $0x68] sm:$0xff] %vm3229, 0.0
      %5971 = vst.msk [vmem:[#allocation3 + $0x70] sm:$0x3] %vm3232, 0.0
      %5972 = vst.msk [vmem:[#allocation3 + $0x78] sm:$0xff] %vm3229, 0.0
      %5973 = vst.msk [vmem:[#allocation3 + $0x80] sm:$0xff] %vm3229, 0.0
      %5974 = vst.msk [vmem:[#allocation3 + $0x88] sm:$0x3] %vm3232, 0.0
      %5975 = vst.msk [vmem:[#allocation3 + $0x90] sm:$0xff] %vm3229, 0.0
      %5976 = vst.msk [vmem:[#allocation3 + $0x98] sm:$0xff] %vm3229, 0.0
      %5977 = vst.msk [vmem:[#allocation3 + $0xa0] sm:$0x3] %vm3232, 0.0
      %5978 = vst.msk [vmem:[#allocation3 + $0xa8] sm:$0xff] %vm3229, 0.0
      %5979 = vst.msk [vmem:[#allocation3 + $0xb0] sm:$0xff] %vm3229, 0.0
      %5980 = vst.msk [vmem:[#allocation3 + $0xb8] sm:$0x3] %vm3232, 0.0
      %5981 = vst.msk [vmem:[#allocation3 + $0xc0] sm:$0xff] %vm3229, 0.0
      %5982 = vst.msk [vmem:[#allocation3 + $0xc8] sm:$0xff] %vm3229, 0.0
      %5983 = vst.msk [vmem:[#allocation3 + $0xd0] sm:$0x3] %vm3232, 0.0
      %5984 = vst.msk [vmem:[#allocation3 + $0xd8] sm:$0xff] %vm3229, 0.0
      %5985 = vst.msk [vmem:[#allocation3 + $0xe0] sm:$0xff] %vm3229, 0.0
      %5986 = vst.msk [vmem:[#allocation3 + $0xe8] sm:$0x3] %vm3232, 0.0
      %5987 = vst.msk [vmem:[#allocation3 + $0xf0] sm:$0xff] %vm3229, 0.0
      %5988 = vst.msk [vmem:[#allocation3 + $0xf8] sm:$0xff] %vm3229, 0.0
      %5989 = vst.msk [vmem:[#allocation3 + $0x100] sm:$0x3] %vm3232, 0.0
      %5990 = vst.msk [vmem:[#allocation3 + $0x108] sm:$0xff] %vm3229, 0.0
      %5991 = vst.msk [vmem:[#allocation3 + $0x110] sm:$0xff] %vm3229, 0.0
      %5992 = vst.msk [vmem:[#allocation3 + $0x118] sm:$0x3] %vm3232, 0.0
      %5993 = vst.msk [vmem:[#allocation3 + $0x120] sm:$0xff] %vm3229, 0.0
      %5994 = vst.msk [vmem:[#allocation3 + $0x128] sm:$0xff] %vm3229, 0.0
      %5995 = vst.msk [vmem:[#allocation3 + $0x130] sm:$0x3] %vm3232, 0.0
      %5996 = vst.msk [vmem:[#allocation3 + $0x138] sm:$0xff] %vm3229, 0.0
      %5997 = vst.msk [vmem:[#allocation3 + $0x140] sm:$0xff] %vm3229, 0.0
      %5998 = vst.msk [vmem:[#allocation3 + $0x148] sm:$0x3] %vm3232, 0.0
      %5999 = vst.msk [vmem:[#allocation3 + $0x150] sm:$0xff] %vm3229, 0.0
      %6000 = vst.msk [vmem:[#allocation3 + $0x158] sm:$0xff] %vm3229, 0.0
      %6001 = vst.msk [vmem:[#allocation3 + $0x160] sm:$0x3] %vm3232, 0.0
      %6002 = vst.msk [vmem:[#allocation3 + $0x168] sm:$0xff] %vm3229, 0.0
      %6003 = vst.msk [vmem:[#allocation3 + $0x170] sm:$0xff] %vm3229, 0.0
      %6004 = vst.msk [vmem:[#allocation3 + $0x178] sm:$0x3] %vm3232, 0.0
      %6005 = vst.msk [vmem:[#allocation3 + $0x180] sm:$0xff] %vm3229, 0.0
      %6006 = vst.msk [vmem:[#allocation3 + $0x188] sm:$0xff] %vm3229, 0.0
      %6007 = vst.msk [vmem:[#allocation3 + $0x190] sm:$0x3] %vm3232, 0.0
      %6008 = vst.msk [vmem:[#allocation3 + $0x198] sm:$0xff] %vm3229, 0.0
      %6009 = vst.msk [vmem:[#allocation3 + $0x1a0] sm:$0xff] %vm3229, 0.0
      %6010 = vst.msk [vmem:[#allocation3 + $0x1a8] sm:$0x3] %vm3232, 0.0
      %6011 = vst.msk [vmem:[%s3285 + $0x1] sm:$0xff] %vm3229, %v5925
      %6012 = vst.msk [vmem:[%s3285 + $0x9] sm:$0xff] %vm3229, %v5926
      %6013 = vst.msk [vmem:[%s3285 + $0x19] sm:$0xff] %vm3229, %v5927
      %6014 = vst.msk [vmem:[%s3285 + $0x21] sm:$0xff] %vm3229, %v5928
      %6015 = vst.msk [vmem:[%s3285 + $0x31] sm:$0xff] %vm3229, %v5929
      %6016 = vst.msk [vmem:[%s3285 + $0x39] sm:$0xff] %vm3229, %v5930
      %6017 = vst.msk [vmem:[%s3285 + $0x49] sm:$0xff] %vm3229, %v5931
      %6018 = vst.msk [vmem:[%s3285 + $0x51] sm:$0xff] %vm3229, %v5932
      %6019 = vst.msk [vmem:[%s3285 + $0x61] sm:$0xff] %vm3229, %v5933
      %6020 = vst.msk [vmem:[%s3285 + $0x69] sm:$0xff] %vm3229, %v5934
      %6021 = vst.msk [vmem:[%s3285 + $0x79] sm:$0xff] %vm3229, %v5935
      %6022 = vst.msk [vmem:[%s3285 + $0x81] sm:$0xff] %vm3229, %v5936
      %6023 = vst.msk [vmem:[%s3285 + $0x91] sm:$0xff] %vm3229, %v5937
      %6024 = vst.msk [vmem:[%s3285 + $0x99] sm:$0xff] %vm3229, %v5938
      %6025 = vst.msk [vmem:[%s3285 + $0xa9] sm:$0xff] %vm3229, %v5939
      %6026 = vst.msk [vmem:[%s3285 + $0xb1] sm:$0xff] %vm3229, %v5940
      %6027 = vst.msk [vmem:[%s3285 + $0xc1] sm:$0xff] %vm3229, %v5941
      %6028 = vst.msk [vmem:[%s3285 + $0xc9] sm:$0xff] %vm3229, %v5942
      %6029 = vst.msk [vmem:[%s3285 + $0xd9] sm:$0xff] %vm3229, %v5943
      %6030 = vst.msk [vmem:[%s3285 + $0xe1] sm:$0xff] %vm3229, %v5944
      %6031 = vst.msk [vmem:[%s3285 + $0xf1] sm:$0xff] %vm3229, %v5945
      %6032 = vst.msk [vmem:[%s3285 + $0xf9] sm:$0xff] %vm3229, %v5946
      %6033 = vst.msk [vmem:[%s3285 + $0x109] sm:$0xff] %vm3229, %v5947
      %6034 = vst.msk [vmem:[%s3285 + $0x111] sm:$0xff] %vm3229, %v5948
      %6035 = vst.msk [vmem:[%s3285 + $0x121] sm:$0xff] %vm3229, %v5949
      %6036 = vst.msk [vmem:[%s3285 + $0x129] sm:$0xff] %vm3229, %v5950
      %6037 = vst.msk [vmem:[%s3285 + $0x139] sm:$0xff] %vm3229, %v5951
      %6038 = vst.msk [vmem:[%s3285 + $0x141] sm:$0xff] %vm3229, %v5952
      %6039 = vst.msk [vmem:[%s3285 + $0x151] sm:$0xff] %vm3229, %v5953
      %6040 = vst.msk [vmem:[%s3285 + $0x159] sm:$0xff] %vm3229, %v5954
      %6041 = vst.msk [vmem:[%s3285 + $0x169] sm:$0xff] %vm3229, %v5955
      %6042 = vst.msk [vmem:[%s3285 + $0x171] sm:$0xff] %vm3229, %v5956
      %v6043 = vld [vmem:[#allocation3] sm:$0xff]
      %v6044 = vld [vmem:[#allocation3 + $0x8] sm:$0xff]
      %v6045 = vld [vmem:[#allocation3 + $0x18] sm:$0xff]
      %v6046 = vld [vmem:[#allocation3 + $0x20] sm:$0xff]
      %v6047 = vld [vmem:[#allocation3 + $0x30] sm:$0xff]
      %v6048 = vld [vmem:[#allocation3 + $0x38] sm:$0xff]
      %v6049 = vld [vmem:[#allocation3 + $0x48] sm:$0xff]
      %v6050 = vld [vmem:[#allocation3 + $0x50] sm:$0xff]
      %v6051 = vld [vmem:[#allocation3 + $0x60] sm:$0xff]
      %v6052 = vld [vmem:[#allocation3 + $0x68] sm:$0xff]
      %v6053 = vld [vmem:[#allocation3 + $0x78] sm:$0xff]
      %v6054 = vld [vmem:[#allocation3 + $0x80] sm:$0xff]
      %v6055 = vld [vmem:[#allocation3 + $0x90] sm:$0xff]
      %v6056 = vld [vmem:[#allocation3 + $0x98] sm:$0xff]
      %v6057 = vld [vmem:[#allocation3 + $0xa8] sm:$0xff]
      %v6058 = vld [vmem:[#allocation3 + $0xb0] sm:$0xff]
      %v6059 = vld [vmem:[#allocation3 + $0xc0] sm:$0xff]
      %v6060 = vld [vmem:[#allocation3 + $0xc8] sm:$0xff]
      %v6061 = vld [vmem:[#allocation3 + $0xd8] sm:$0xff]
      %v6062 = vld [vmem:[#allocation3 + $0xe0] sm:$0xff]
      %v6063 = vld [vmem:[#allocation3 + $0xf0] sm:$0xff]
      %v6064 = vld [vmem:[#allocation3 + $0xf8] sm:$0xff]
      %v6065 = vld [vmem:[#allocation3 + $0x108] sm:$0xff]
      %v6066 = vld [vmem:[#allocation3 + $0x110] sm:$0xff]
      %v6067 = vld [vmem:[#allocation3 + $0x120] sm:$0xff]
      %v6068 = vld [vmem:[#allocation3 + $0x128] sm:$0xff]
      %v6069 = vld [vmem:[#allocation3 + $0x138] sm:$0xff]
      %v6070 = vld [vmem:[#allocation3 + $0x140] sm:$0xff]
      %v6071 = vld [vmem:[#allocation3 + $0x150] sm:$0xff]
      %v6072 = vld [vmem:[#allocation3 + $0x158] sm:$0xff]
      %v6073 = vld [vmem:[#allocation3 + $0x168] sm:$0xff]
      %v6074 = vld [vmem:[#allocation3 + $0x170] sm:$0xff]
      %v6075 = vld [vmem:[%s5] sm:$0xff]
      %v6076 = vld [vmem:[#allocation3 + $0x1] sm:$0xff]
      %v6077 = vld [vmem:[#allocation3 + $0x9] sm:$0xff]
      %v6078 = vld [vmem:[#allocation3 + $0x19] sm:$0xff]
      %v6079 = vld [vmem:[#allocation3 + $0x21] sm:$0xff]
      %v6080 = vld [vmem:[#allocation3 + $0x31] sm:$0xff]
      %v6081 = vld [vmem:[#allocation3 + $0x39] sm:$0xff]
      %v6082 = vld [vmem:[#allocation3 + $0x49] sm:$0xff]
      %v6083 = vld [vmem:[#allocation3 + $0x51] sm:$0xff]
      %v6084 = vld [vmem:[#allocation3 + $0x61] sm:$0xff]
      %v6085 = vld [vmem:[#allocation3 + $0x69] sm:$0xff]
      %v6086 = vld [vmem:[#allocation3 + $0x79] sm:$0xff]
      %v6087 = vld [vmem:[#allocation3 + $0x81] sm:$0xff]
      %v6088 = vld [vmem:[#allocation3 + $0x91] sm:$0xff]
      %v6089 = vld [vmem:[#allocation3 + $0x99] sm:$0xff]
      %v6090 = vld [vmem:[#allocation3 + $0xa9] sm:$0xff]
      %v6091 = vld [vmem:[#allocation3 + $0xb1] sm:$0xff]
      %v6092 = vld [vmem:[#allocation3 + $0xc1] sm:$0xff]
      %v6093 = vld [vmem:[#allocation3 + $0xc9] sm:$0xff]
      %v6094 = vld [vmem:[#allocation3 + $0xd9] sm:$0xff]
      %v6095 = vld [vmem:[#allocation3 + $0xe1] sm:$0xff]
      %v6096 = vld [vmem:[#allocation3 + $0xf1] sm:$0xff]
      %v6097 = vld [vmem:[#allocation3 + $0xf9] sm:$0xff]
      %v6098 = vld [vmem:[#allocation3 + $0x109] sm:$0xff]
      %v6099 = vld [vmem:[#allocation3 + $0x111] sm:$0xff]
      %v6100 = vld [vmem:[#allocation3 + $0x121] sm:$0xff]
      %v6101 = vld [vmem:[#allocation3 + $0x129] sm:$0xff]
      %v6102 = vld [vmem:[#allocation3 + $0x139] sm:$0xff]
      %v6103 = vld [vmem:[#allocation3 + $0x141] sm:$0xff]
      %v6104 = vld [vmem:[#allocation3 + $0x151] sm:$0xff]
      %v6105 = vld [vmem:[#allocation3 + $0x159] sm:$0xff]
      %v6106 = vld [vmem:[#allocation3 + $0x169] sm:$0xff]
      %v6107 = vld [vmem:[#allocation3 + $0x171] sm:$0xff]
      %s6108 = scalar_lea.vmem %s5, 8
      %v6109 = vld [vmem:[%s6108] sm:$0xff]
      %v6111 = vsel %vm3229, %v6076, 0
      %v6114 = vsel %vm3229, %v6077, 0
      %v6117 = vsel %vm3229, %v6078, 0
      %v6120 = vsel %vm3229, %v6079, 0
      %v6123 = vsel %vm3229, %v6080, 0
      %v6126 = vsel %vm3229, %v6081, 0
      %v6129 = vsel %vm3229, %v6082, 0
      %v6132 = vsel %vm3229, %v6083, 0
      %v6135 = vsel %vm3229, %v6084, 0
      %v6138 = vsel %vm3229, %v6085, 0
      %v6141 = vsel %vm3229, %v6086, 0
      %v6144 = vsel %vm3229, %v6087, 0
      %v6147 = vsel %vm3229, %v6088, 0
      %v6150 = vsel %vm3229, %v6089, 0
      %v6153 = vsel %vm3229, %v6090, 0
      %v6156 = vsel %vm3229, %v6091, 0
      %v6159 = vsel %vm3229, %v6092, 0
      %v6162 = vsel %vm3229, %v6093, 0
      %v6165 = vsel %vm3229, %v6094, 0
      %v6168 = vsel %vm3229, %v6095, 0
      %v6171 = vsel %vm3229, %v6096, 0
      %v6174 = vsel %vm3229, %v6097, 0
      %v6177 = vsel %vm3229, %v6098, 0
      %v6180 = vsel %vm3229, %v6099, 0
      %v6183 = vsel %vm3229, %v6100, 0
      %v6186 = vsel %vm3229, %v6101, 0
      %v6189 = vsel %vm3229, %v6102, 0
      %v6192 = vsel %vm3229, %v6103, 0
      %v6195 = vsel %vm3229, %v6104, 0
      %v6198 = vsel %vm3229, %v6105, 0
      %v6201 = vsel %vm3229, %v6106, 0
      %v6204 = vsel %vm3229, %v6107, 0
      %6206 = vmatpush.msra.mxu0 0.0
      %6207 = vmatpush.msra.mxu0 0.0
      %6208 = vmatpush.msra.mxu0 0.0
      %6209 = vmatpush.msra.mxu0 0.0
      %6210 = vmatpush.msra.mxu0 0.0
      %6211 = vmatpush.msra.mxu0 0.0
      %6212 = vmatpush.msra.mxu0 0.0
      %6213 = vmatpush.msra.mxu0 0.0
      %6214 = vmatpush.msra.mxu0 0.0
      %6215 = vmatpush.msra.mxu0 0.0
      %6216 = vmatpush.msra.mxu0 0.0
      %6217 = vmatpush.msra.mxu0 0.0
      %6218 = vmatpush.msra.mxu0 0.0
      %6219 = vmatpush.msra.mxu0 0.0
      %6220 = vmatpush.msra.mxu0 0.0
      %6221 = vmatpush.msra.mxu0 %v6109
      %6222 = vmatmul.f32.gmra.mxu0 %v6111
      %v6223 = vpop.f32.mrf.mxu0
      %v6224 = vadd.f32 0.0, %v6223
      %6225 = vmatmul.f32.gmra.mxu0 %v6114
      %v6226 = vpop.f32.mrf.mxu0
      %v6227 = vadd.f32 0.0, %v6226
      %6228 = vmatmul.f32.gmra.mxu0 %v6117
      %v6229 = vpop.f32.mrf.mxu0
      %v6230 = vadd.f32 0.0, %v6229
      %6231 = vmatmul.f32.gmra.mxu0 %v6120
      %v6232 = vpop.f32.mrf.mxu0
      %v6233 = vadd.f32 0.0, %v6232
      %6234 = vmatmul.f32.gmra.mxu0 %v6123
      %v6235 = vpop.f32.mrf.mxu0
      %v6236 = vadd.f32 0.0, %v6235
      %6237 = vmatmul.f32.gmra.mxu0 %v6126
      %v6238 = vpop.f32.mrf.mxu0
      %v6239 = vadd.f32 0.0, %v6238
      %6240 = vmatmul.f32.gmra.mxu0 %v6129
      %v6241 = vpop.f32.mrf.mxu0
      %v6242 = vadd.f32 0.0, %v6241
      %6243 = vmatmul.f32.gmra.mxu0 %v6132
      %v6244 = vpop.f32.mrf.mxu0
      %v6245 = vadd.f32 0.0, %v6244
      %6246 = vmatmul.f32.gmra.mxu0 %v6135
      %v6247 = vpop.f32.mrf.mxu0
      %v6248 = vadd.f32 0.0, %v6247
      %6249 = vmatmul.f32.gmra.mxu0 %v6138
      %v6250 = vpop.f32.mrf.mxu0
      %v6251 = vadd.f32 0.0, %v6250
      %6252 = vmatmul.f32.gmra.mxu0 %v6141
      %v6253 = vpop.f32.mrf.mxu0
      %v6254 = vadd.f32 0.0, %v6253
      %6255 = vmatmul.f32.gmra.mxu0 %v6144
      %v6256 = vpop.f32.mrf.mxu0
      %v6257 = vadd.f32 0.0, %v6256
      %6258 = vmatmul.f32.gmra.mxu0 %v6147
      %v6259 = vpop.f32.mrf.mxu0
      %v6260 = vadd.f32 0.0, %v6259
      %6261 = vmatmul.f32.gmra.mxu0 %v6150
      %v6262 = vpop.f32.mrf.mxu0
      %v6263 = vadd.f32 0.0, %v6262
      %6264 = vmatmul.f32.gmra.mxu0 %v6153
      %v6265 = vpop.f32.mrf.mxu0
      %v6266 = vadd.f32 0.0, %v6265
      %6267 = vmatmul.f32.gmra.mxu0 %v6156
      %v6268 = vpop.f32.mrf.mxu0
      %v6269 = vadd.f32 0.0, %v6268
      %6270 = vmatmul.f32.gmra.mxu0 %v6159
      %v6271 = vpop.f32.mrf.mxu0
      %v6272 = vadd.f32 0.0, %v6271
      %6273 = vmatmul.f32.gmra.mxu0 %v6162
      %v6274 = vpop.f32.mrf.mxu0
      %v6275 = vadd.f32 0.0, %v6274
      %6276 = vmatmul.f32.gmra.mxu0 %v6165
      %v6277 = vpop.f32.mrf.mxu0
      %v6278 = vadd.f32 0.0, %v6277
      %6279 = vmatmul.f32.gmra.mxu0 %v6168
      %v6280 = vpop.f32.mrf.mxu0
      %v6281 = vadd.f32 0.0, %v6280
      %6282 = vmatmul.f32.gmra.mxu0 %v6171
      %v6283 = vpop.f32.mrf.mxu0
      %v6284 = vadd.f32 0.0, %v6283
      %6285 = vmatmul.f32.gmra.mxu0 %v6174
      %v6286 = vpop.f32.mrf.mxu0
      %v6287 = vadd.f32 0.0, %v6286
      %6288 = vmatmul.f32.gmra.mxu0 %v6177
      %v6289 = vpop.f32.mrf.mxu0
      %v6290 = vadd.f32 0.0, %v6289
      %6291 = vmatmul.f32.gmra.mxu0 %v6180
      %v6292 = vpop.f32.mrf.mxu0
      %v6293 = vadd.f32 0.0, %v6292
      %6294 = vmatmul.f32.gmra.mxu0 %v6183
      %v6295 = vpop.f32.mrf.mxu0
      %v6296 = vadd.f32 0.0, %v6295
      %6297 = vmatmul.f32.gmra.mxu0 %v6186
      %v6298 = vpop.f32.mrf.mxu0
      %v6299 = vadd.f32 0.0, %v6298
      %6300 = vmatmul.f32.gmra.mxu0 %v6189
      %v6301 = vpop.f32.mrf.mxu0
      %v6302 = vadd.f32 0.0, %v6301
      %6303 = vmatmul.f32.gmra.mxu0 %v6192
      %v6304 = vpop.f32.mrf.mxu0
      %v6305 = vadd.f32 0.0, %v6304
      %6306 = vmatmul.f32.gmra.mxu0 %v6195
      %v6307 = vpop.f32.mrf.mxu0
      %v6308 = vadd.f32 0.0, %v6307
      %6309 = vmatmul.f32.gmra.mxu0 %v6198
      %v6310 = vpop.f32.mrf.mxu0
      %v6311 = vadd.f32 0.0, %v6310
      %6312 = vmatmul.f32.gmra.mxu0 %v6201
      %v6313 = vpop.f32.mrf.mxu0
      %v6314 = vadd.f32 0.0, %v6313
      %6315 = vmatmul.f32.gmra.mxu0 %v6204
      %v6316 = vpop.f32.mrf.mxu0
      %v6317 = vadd.f32 0.0, %v6316
      %6318 = vdwg.mxu0
      %v6320 = vsel %vm3229, %v6043, 0
      %v6323 = vsel %vm3229, %v6044, 0
      %v6326 = vsel %vm3229, %v6045, 0
      %v6329 = vsel %vm3229, %v6046, 0
      %v6332 = vsel %vm3229, %v6047, 0
      %v6335 = vsel %vm3229, %v6048, 0
      %v6338 = vsel %vm3229, %v6049, 0
      %v6341 = vsel %vm3229, %v6050, 0
      %v6344 = vsel %vm3229, %v6051, 0
      %v6347 = vsel %vm3229, %v6052, 0
      %v6350 = vsel %vm3229, %v6053, 0
      %v6353 = vsel %vm3229, %v6054, 0
      %v6356 = vsel %vm3229, %v6055, 0
      %v6359 = vsel %vm3229, %v6056, 0
      %v6362 = vsel %vm3229, %v6057, 0
      %v6365 = vsel %vm3229, %v6058, 0
      %v6368 = vsel %vm3229, %v6059, 0
      %v6371 = vsel %vm3229, %v6060, 0
      %v6374 = vsel %vm3229, %v6061, 0
      %v6377 = vsel %vm3229, %v6062, 0
      %v6380 = vsel %vm3229, %v6063, 0
      %v6383 = vsel %vm3229, %v6064, 0
      %v6386 = vsel %vm3229, %v6065, 0
      %v6389 = vsel %vm3229, %v6066, 0
      %v6392 = vsel %vm3229, %v6067, 0
      %v6395 = vsel %vm3229, %v6068, 0
      %v6398 = vsel %vm3229, %v6069, 0
      %v6401 = vsel %vm3229, %v6070, 0
      %v6404 = vsel %vm3229, %v6071, 0
      %v6407 = vsel %vm3229, %v6072, 0
      %v6410 = vsel %vm3229, %v6073, 0
      %v6413 = vsel %vm3229, %v6074, 0
      %6415 = vmatpush.msra.mxu0 0.0
      %6416 = vmatpush.msra.mxu0 0.0
      %6417 = vmatpush.msra.mxu0 0.0
      %6418 = vmatpush.msra.mxu0 0.0
      %6419 = vmatpush.msra.mxu0 0.0
      %6420 = vmatpush.msra.mxu0 0.0
      %6421 = vmatpush.msra.mxu0 0.0
      %6422 = vmatpush.msra.mxu0 0.0
      %6423 = vmatpush.msra.mxu0 0.0
      %6424 = vmatpush.msra.mxu0 0.0
      %6425 = vmatpush.msra.mxu0 0.0
      %6426 = vmatpush.msra.mxu0 0.0
      %6427 = vmatpush.msra.mxu0 0.0
      %6428 = vmatpush.msra.mxu0 0.0
      %6429 = vmatpush.msra.mxu0 0.0
      %6430 = vmatpush.msra.mxu0 %v6075
      %6431 = vmatmul.f32.gmra.mxu0 %v6320
      %v6432 = vpop.f32.mrf.mxu0
      %v6433 = vadd.f32 %v6224, %v6432
      %6434 = vmatmul.f32.gmra.mxu0 %v6323
      %v6435 = vpop.f32.mrf.mxu0
      %v6436 = vadd.f32 %v6227, %v6435
      %6437 = vmatmul.f32.gmra.mxu0 %v6326
      %v6438 = vpop.f32.mrf.mxu0
      %v6439 = vadd.f32 %v6230, %v6438
      %6440 = vmatmul.f32.gmra.mxu0 %v6329
      %v6441 = vpop.f32.mrf.mxu0
      %v6442 = vadd.f32 %v6233, %v6441
      %6443 = vmatmul.f32.gmra.mxu0 %v6332
      %v6444 = vpop.f32.mrf.mxu0
      %v6445 = vadd.f32 %v6236, %v6444
      %6446 = vmatmul.f32.gmra.mxu0 %v6335
      %v6447 = vpop.f32.mrf.mxu0
      %v6448 = vadd.f32 %v6239, %v6447
      %6449 = vmatmul.f32.gmra.mxu0 %v6338
      %v6450 = vpop.f32.mrf.mxu0
      %v6451 = vadd.f32 %v6242, %v6450
      %6452 = vmatmul.f32.gmra.mxu0 %v6341
      %v6453 = vpop.f32.mrf.mxu0
      %v6454 = vadd.f32 %v6245, %v6453
      %6455 = vmatmul.f32.gmra.mxu0 %v6344
      %v6456 = vpop.f32.mrf.mxu0
      %v6457 = vadd.f32 %v6248, %v6456
      %6458 = vmatmul.f32.gmra.mxu0 %v6347
      %v6459 = vpop.f32.mrf.mxu0
      %v6460 = vadd.f32 %v6251, %v6459
      %6461 = vmatmul.f32.gmra.mxu0 %v6350
      %v6462 = vpop.f32.mrf.mxu0
      %v6463 = vadd.f32 %v6254, %v6462
      %6464 = vmatmul.f32.gmra.mxu0 %v6353
      %v6465 = vpop.f32.mrf.mxu0
      %v6466 = vadd.f32 %v6257, %v6465
      %6467 = vmatmul.f32.gmra.mxu0 %v6356
      %v6468 = vpop.f32.mrf.mxu0
      %v6469 = vadd.f32 %v6260, %v6468
      %6470 = vmatmul.f32.gmra.mxu0 %v6359
      %v6471 = vpop.f32.mrf.mxu0
      %v6472 = vadd.f32 %v6263, %v6471
      %6473 = vmatmul.f32.gmra.mxu0 %v6362
      %v6474 = vpop.f32.mrf.mxu0
      %v6475 = vadd.f32 %v6266, %v6474
      %6476 = vmatmul.f32.gmra.mxu0 %v6365
      %v6477 = vpop.f32.mrf.mxu0
      %v6478 = vadd.f32 %v6269, %v6477
      %6479 = vmatmul.f32.gmra.mxu0 %v6368
      %v6480 = vpop.f32.mrf.mxu0
      %v6481 = vadd.f32 %v6272, %v6480
      %6482 = vmatmul.f32.gmra.mxu0 %v6371
      %v6483 = vpop.f32.mrf.mxu0
      %v6484 = vadd.f32 %v6275, %v6483
      %6485 = vmatmul.f32.gmra.mxu0 %v6374
      %v6486 = vpop.f32.mrf.mxu0
      %v6487 = vadd.f32 %v6278, %v6486
      %6488 = vmatmul.f32.gmra.mxu0 %v6377
      %v6489 = vpop.f32.mrf.mxu0
      %v6490 = vadd.f32 %v6281, %v6489
      %6491 = vmatmul.f32.gmra.mxu0 %v6380
      %v6492 = vpop.f32.mrf.mxu0
      %v6493 = vadd.f32 %v6284, %v6492
      %6494 = vmatmul.f32.gmra.mxu0 %v6383
      %v6495 = vpop.f32.mrf.mxu0
      %v6496 = vadd.f32 %v6287, %v6495
      %6497 = vmatmul.f32.gmra.mxu0 %v6386
      %v6498 = vpop.f32.mrf.mxu0
      %v6499 = vadd.f32 %v6290, %v6498
      %6500 = vmatmul.f32.gmra.mxu0 %v6389
      %v6501 = vpop.f32.mrf.mxu0
      %v6502 = vadd.f32 %v6293, %v6501
      %6503 = vmatmul.f32.gmra.mxu0 %v6392
      %v6504 = vpop.f32.mrf.mxu0
      %v6505 = vadd.f32 %v6296, %v6504
      %6506 = vmatmul.f32.gmra.mxu0 %v6395
      %v6507 = vpop.f32.mrf.mxu0
      %v6508 = vadd.f32 %v6299, %v6507
      %6509 = vmatmul.f32.gmra.mxu0 %v6398
      %v6510 = vpop.f32.mrf.mxu0
      %v6511 = vadd.f32 %v6302, %v6510
      %6512 = vmatmul.f32.gmra.mxu0 %v6401
      %v6513 = vpop.f32.mrf.mxu0
      %v6514 = vadd.f32 %v6305, %v6513
      %6515 = vmatmul.f32.gmra.mxu0 %v6404
      %v6516 = vpop.f32.mrf.mxu0
      %v6517 = vadd.f32 %v6308, %v6516
      %6518 = vmatmul.f32.gmra.mxu0 %v6407
      %v6519 = vpop.f32.mrf.mxu0
      %v6520 = vadd.f32 %v6311, %v6519
      %6521 = vmatmul.f32.gmra.mxu0 %v6410
      %v6522 = vpop.f32.mrf.mxu0
      %v6523 = vadd.f32 %v6314, %v6522
      %6524 = vmatmul.f32.gmra.mxu0 %v6413
      %v6525 = vpop.f32.mrf.mxu0
      %v6526 = vadd.f32 %v6317, %v6525
      %6527 = vdwg.mxu0
      %v6528 = vld [vmem:[#allocation3 + $0x2] sm:$0xff]
      %v6529 = vld [vmem:[#allocation3 + $0xa] sm:$0xff]
      %v6530 = vld [vmem:[#allocation3 + $0x1a] sm:$0xff]
      %v6531 = vld [vmem:[#allocation3 + $0x22] sm:$0xff]
      %v6532 = vld [vmem:[#allocation3 + $0x32] sm:$0xff]
      %v6533 = vld [vmem:[#allocation3 + $0x3a] sm:$0xff]
      %v6534 = vld [vmem:[#allocation3 + $0x4a] sm:$0xff]
      %v6535 = vld [vmem:[#allocation3 + $0x52] sm:$0xff]
      %v6536 = vld [vmem:[#allocation3 + $0x62] sm:$0xff]
      %v6537 = vld [vmem:[#allocation3 + $0x6a] sm:$0xff]
      %v6538 = vld [vmem:[#allocation3 + $0x7a] sm:$0xff]
      %v6539 = vld [vmem:[#allocation3 + $0x82] sm:$0xff]
      %v6540 = vld [vmem:[#allocation3 + $0x92] sm:$0xff]
      %v6541 = vld [vmem:[#allocation3 + $0x9a] sm:$0xff]
      %v6542 = vld [vmem:[#allocation3 + $0xaa] sm:$0xff]
      %v6543 = vld [vmem:[#allocation3 + $0xb2] sm:$0xff]
      %v6544 = vld [vmem:[#allocation3 + $0xc2] sm:$0xff]
      %v6545 = vld [vmem:[#allocation3 + $0xca] sm:$0xff]
      %v6546 = vld [vmem:[#allocation3 + $0xda] sm:$0xff]
      %v6547 = vld [vmem:[#allocation3 + $0xe2] sm:$0xff]
      %v6548 = vld [vmem:[#allocation3 + $0xf2] sm:$0xff]
      %v6549 = vld [vmem:[#allocation3 + $0xfa] sm:$0xff]
      %v6550 = vld [vmem:[#allocation3 + $0x10a] sm:$0xff]
      %v6551 = vld [vmem:[#allocation3 + $0x112] sm:$0xff]
      %v6552 = vld [vmem:[#allocation3 + $0x122] sm:$0xff]
      %v6553 = vld [vmem:[#allocation3 + $0x12a] sm:$0xff]
      %v6554 = vld [vmem:[#allocation3 + $0x13a] sm:$0xff]
      %v6555 = vld [vmem:[#allocation3 + $0x142] sm:$0xff]
      %v6556 = vld [vmem:[#allocation3 + $0x152] sm:$0xff]
      %v6557 = vld [vmem:[#allocation3 + $0x15a] sm:$0xff]
      %v6558 = vld [vmem:[#allocation3 + $0x16a] sm:$0xff]
      %v6559 = vld [vmem:[#allocation3 + $0x172] sm:$0xff]
      %s6560 = scalar_lea.vmem %s5, 16
      %v6561 = vld [vmem:[%s6560] sm:$0xff]
      %v6563 = vsel %vm3229, %v6528, 0
      %v6566 = vsel %vm3229, %v6529, 0
      %v6569 = vsel %vm3229, %v6530, 0
      %v6572 = vsel %vm3229, %v6531, 0
      %v6575 = vsel %vm3229, %v6532, 0
      %v6578 = vsel %vm3229, %v6533, 0
      %v6581 = vsel %vm3229, %v6534, 0
      %v6584 = vsel %vm3229, %v6535, 0
      %v6587 = vsel %vm3229, %v6536, 0
      %v6590 = vsel %vm3229, %v6537, 0
      %v6593 = vsel %vm3229, %v6538, 0
      %v6596 = vsel %vm3229, %v6539, 0
      %v6599 = vsel %vm3229, %v6540, 0
      %v6602 = vsel %vm3229, %v6541, 0
      %v6605 = vsel %vm3229, %v6542, 0
      %v6608 = vsel %vm3229, %v6543, 0
      %v6611 = vsel %vm3229, %v6544, 0
      %v6614 = vsel %vm3229, %v6545, 0
      %v6617 = vsel %vm3229, %v6546, 0
      %v6620 = vsel %vm3229, %v6547, 0
      %v6623 = vsel %vm3229, %v6548, 0
      %v6626 = vsel %vm3229, %v6549, 0
      %v6629 = vsel %vm3229, %v6550, 0
      %v6632 = vsel %vm3229, %v6551, 0
      %v6635 = vsel %vm3229, %v6552, 0
      %v6638 = vsel %vm3229, %v6553, 0
      %v6641 = vsel %vm3229, %v6554, 0
      %v6644 = vsel %vm3229, %v6555, 0
      %v6647 = vsel %vm3229, %v6556, 0
      %v6650 = vsel %vm3229, %v6557, 0
      %v6653 = vsel %vm3229, %v6558, 0
      %v6656 = vsel %vm3229, %v6559, 0
      %6658 = vmatpush.msra.mxu0 0.0
      %6659 = vmatpush.msra.mxu0 0.0
      %6660 = vmatpush.msra.mxu0 0.0
      %6661 = vmatpush.msra.mxu0 0.0
      %6662 = vmatpush.msra.mxu0 0.0
      %6663 = vmatpush.msra.mxu0 0.0
      %6664 = vmatpush.msra.mxu0 0.0
      %6665 = vmatpush.msra.mxu0 0.0
      %6666 = vmatpush.msra.mxu0 0.0
      %6667 = vmatpush.msra.mxu0 0.0
      %6668 = vmatpush.msra.mxu0 0.0
      %6669 = vmatpush.msra.mxu0 0.0
      %6670 = vmatpush.msra.mxu0 0.0
      %6671 = vmatpush.msra.mxu0 0.0
      %6672 = vmatpush.msra.mxu0 0.0
      %6673 = vmatpush.msra.mxu0 %v6561
      %6674 = vmatmul.f32.gmra.mxu0 %v6563
      %v6675 = vpop.f32.mrf.mxu0
      %v6676 = vadd.f32 0.0, %v6675
      %6677 = vmatmul.f32.gmra.mxu0 %v6566
      %v6678 = vpop.f32.mrf.mxu0
      %v6679 = vadd.f32 0.0, %v6678
      %6680 = vmatmul.f32.gmra.mxu0 %v6569
      %v6681 = vpop.f32.mrf.mxu0
      %v6682 = vadd.f32 0.0, %v6681
      %6683 = vmatmul.f32.gmra.mxu0 %v6572
      %v6684 = vpop.f32.mrf.mxu0
      %v6685 = vadd.f32 0.0, %v6684
      %6686 = vmatmul.f32.gmra.mxu0 %v6575
      %v6687 = vpop.f32.mrf.mxu0
      %v6688 = vadd.f32 0.0, %v6687
      %6689 = vmatmul.f32.gmra.mxu0 %v6578
      %v6690 = vpop.f32.mrf.mxu0
      %v6691 = vadd.f32 0.0, %v6690
      %6692 = vmatmul.f32.gmra.mxu0 %v6581
      %v6693 = vpop.f32.mrf.mxu0
      %v6694 = vadd.f32 0.0, %v6693
      %6695 = vmatmul.f32.gmra.mxu0 %v6584
      %v6696 = vpop.f32.mrf.mxu0
      %v6697 = vadd.f32 0.0, %v6696
      %6698 = vmatmul.f32.gmra.mxu0 %v6587
      %v6699 = vpop.f32.mrf.mxu0
      %v6700 = vadd.f32 0.0, %v6699
      %6701 = vmatmul.f32.gmra.mxu0 %v6590
      %v6702 = vpop.f32.mrf.mxu0
      %v6703 = vadd.f32 0.0, %v6702
      %6704 = vmatmul.f32.gmra.mxu0 %v6593
      %v6705 = vpop.f32.mrf.mxu0
      %v6706 = vadd.f32 0.0, %v6705
      %6707 = vmatmul.f32.gmra.mxu0 %v6596
      %v6708 = vpop.f32.mrf.mxu0
      %v6709 = vadd.f32 0.0, %v6708
      %6710 = vmatmul.f32.gmra.mxu0 %v6599
      %v6711 = vpop.f32.mrf.mxu0
      %v6712 = vadd.f32 0.0, %v6711
      %6713 = vmatmul.f32.gmra.mxu0 %v6602
      %v6714 = vpop.f32.mrf.mxu0
      %v6715 = vadd.f32 0.0, %v6714
      %6716 = vmatmul.f32.gmra.mxu0 %v6605
      %v6717 = vpop.f32.mrf.mxu0
      %v6718 = vadd.f32 0.0, %v6717
      %6719 = vmatmul.f32.gmra.mxu0 %v6608
      %v6720 = vpop.f32.mrf.mxu0
      %v6721 = vadd.f32 0.0, %v6720
      %6722 = vmatmul.f32.gmra.mxu0 %v6611
      %v6723 = vpop.f32.mrf.mxu0
      %v6724 = vadd.f32 0.0, %v6723
      %6725 = vmatmul.f32.gmra.mxu0 %v6614
      %v6726 = vpop.f32.mrf.mxu0
      %v6727 = vadd.f32 0.0, %v6726
      %6728 = vmatmul.f32.gmra.mxu0 %v6617
      %v6729 = vpop.f32.mrf.mxu0
      %v6730 = vadd.f32 0.0, %v6729
      %6731 = vmatmul.f32.gmra.mxu0 %v6620
      %v6732 = vpop.f32.mrf.mxu0
      %v6733 = vadd.f32 0.0, %v6732
      %6734 = vmatmul.f32.gmra.mxu0 %v6623
      %v6735 = vpop.f32.mrf.mxu0
      %v6736 = vadd.f32 0.0, %v6735
      %6737 = vmatmul.f32.gmra.mxu0 %v6626
      %v6738 = vpop.f32.mrf.mxu0
      %v6739 = vadd.f32 0.0, %v6738
      %6740 = vmatmul.f32.gmra.mxu0 %v6629
      %v6741 = vpop.f32.mrf.mxu0
      %v6742 = vadd.f32 0.0, %v6741
      %6743 = vmatmul.f32.gmra.mxu0 %v6632
      %v6744 = vpop.f32.mrf.mxu0
      %v6745 = vadd.f32 0.0, %v6744
      %6746 = vmatmul.f32.gmra.mxu0 %v6635
      %v6747 = vpop.f32.mrf.mxu0
      %v6748 = vadd.f32 0.0, %v6747
      %6749 = vmatmul.f32.gmra.mxu0 %v6638
      %v6750 = vpop.f32.mrf.mxu0
      %v6751 = vadd.f32 0.0, %v6750
      %6752 = vmatmul.f32.gmra.mxu0 %v6641
      %v6753 = vpop.f32.mrf.mxu0
      %v6754 = vadd.f32 0.0, %v6753
      %6755 = vmatmul.f32.gmra.mxu0 %v6644
      %v6756 = vpop.f32.mrf.mxu0
      %v6757 = vadd.f32 0.0, %v6756
      %6758 = vmatmul.f32.gmra.mxu0 %v6647
      %v6759 = vpop.f32.mrf.mxu0
      %v6760 = vadd.f32 0.0, %v6759
      %6761 = vmatmul.f32.gmra.mxu0 %v6650
      %v6762 = vpop.f32.mrf.mxu0
      %v6763 = vadd.f32 0.0, %v6762
      %6764 = vmatmul.f32.gmra.mxu0 %v6653
      %v6765 = vpop.f32.mrf.mxu0
      %v6766 = vadd.f32 0.0, %v6765
      %6767 = vmatmul.f32.gmra.mxu0 %v6656
      %v6768 = vpop.f32.mrf.mxu0
      %v6769 = vadd.f32 0.0, %v6768
      %6770 = vdwg.mxu0
      %v6771 = vadd.f32 %v6433, %v6676
      %v6772 = vadd.f32 %v6436, %v6679
      %v6773 = vadd.f32 %v6439, %v6682
      %v6774 = vadd.f32 %v6442, %v6685
      %v6775 = vadd.f32 %v6445, %v6688
      %v6776 = vadd.f32 %v6448, %v6691
      %v6777 = vadd.f32 %v6451, %v6694
      %v6778 = vadd.f32 %v6454, %v6697
      %v6779 = vadd.f32 %v6457, %v6700
      %v6780 = vadd.f32 %v6460, %v6703
      %v6781 = vadd.f32 %v6463, %v6706
      %v6782 = vadd.f32 %v6466, %v6709
      %v6783 = vadd.f32 %v6469, %v6712
      %v6784 = vadd.f32 %v6472, %v6715
      %v6785 = vadd.f32 %v6475, %v6718
      %v6786 = vadd.f32 %v6478, %v6721
      %v6787 = vadd.f32 %v6481, %v6724
      %v6788 = vadd.f32 %v6484, %v6727
      %v6789 = vadd.f32 %v6487, %v6730
      %v6790 = vadd.f32 %v6490, %v6733
      %v6791 = vadd.f32 %v6493, %v6736
      %v6792 = vadd.f32 %v6496, %v6739
      %v6793 = vadd.f32 %v6499, %v6742
      %v6794 = vadd.f32 %v6502, %v6745
      %v6795 = vadd.f32 %v6505, %v6748
      %v6796 = vadd.f32 %v6508, %v6751
      %v6797 = vadd.f32 %v6511, %v6754
      %v6798 = vadd.f32 %v6514, %v6757
      %v6799 = vadd.f32 %v6517, %v6760
      %v6800 = vadd.f32 %v6520, %v6763
      %v6801 = vadd.f32 %v6523, %v6766
      %v6802 = vadd.f32 %v6526, %v6769
      %v6803 = vld [vmem:[%s3285] sm:$0xff]
      %v6804 = vld [vmem:[%s3285 + $0x8] sm:$0xff]
      %v6805 = vld [vmem:[%s3285 + $0x18] sm:$0xff]
      %v6806 = vld [vmem:[%s3285 + $0x20] sm:$0xff]
      %v6807 = vld [vmem:[%s3285 + $0x30] sm:$0xff]
      %v6808 = vld [vmem:[%s3285 + $0x38] sm:$0xff]
      %v6809 = vld [vmem:[%s3285 + $0x48] sm:$0xff]
      %v6810 = vld [vmem:[%s3285 + $0x50] sm:$0xff]
      %v6811 = vld [vmem:[%s3285 + $0x60] sm:$0xff]
      %v6812 = vld [vmem:[%s3285 + $0x68] sm:$0xff]
      %v6813 = vld [vmem:[%s3285 + $0x78] sm:$0xff]
      %v6814 = vld [vmem:[%s3285 + $0x80] sm:$0xff]
      %v6815 = vld [vmem:[%s3285 + $0x90] sm:$0xff]
      %v6816 = vld [vmem:[%s3285 + $0x98] sm:$0xff]
      %v6817 = vld [vmem:[%s3285 + $0xa8] sm:$0xff]
      %v6818 = vld [vmem:[%s3285 + $0xb0] sm:$0xff]
      %v6819 = vld [vmem:[%s3285 + $0xc0] sm:$0xff]
      %v6820 = vld [vmem:[%s3285 + $0xc8] sm:$0xff]
      %v6821 = vld [vmem:[%s3285 + $0xd8] sm:$0xff]
      %v6822 = vld [vmem:[%s3285 + $0xe0] sm:$0xff]
      %v6823 = vld [vmem:[%s3285 + $0xf0] sm:$0xff]
      %v6824 = vld [vmem:[%s3285 + $0xf8] sm:$0xff]
      %v6825 = vld [vmem:[%s3285 + $0x108] sm:$0xff]
      %v6826 = vld [vmem:[%s3285 + $0x110] sm:$0xff]
      %v6827 = vld [vmem:[%s3285 + $0x120] sm:$0xff]
      %v6828 = vld [vmem:[%s3285 + $0x128] sm:$0xff]
      %v6829 = vld [vmem:[%s3285 + $0x138] sm:$0xff]
      %v6830 = vld [vmem:[%s3285 + $0x140] sm:$0xff]
      %v6831 = vld [vmem:[%s3285 + $0x150] sm:$0xff]
      %v6832 = vld [vmem:[%s3285 + $0x158] sm:$0xff]
      %v6833 = vld [vmem:[%s3285 + $0x168] sm:$0xff]
      %v6834 = vld [vmem:[%s3285 + $0x170] sm:$0xff]
      %s6835 = scalar_lea.vmem %s5, 24
      %v6836 = vld [vmem:[%s6835] sm:$0xff]
      %v6838 = vsel %vm3229, %v6803, 0
      %v6841 = vsel %vm3229, %v6804, 0
      %v6844 = vsel %vm3229, %v6805, 0
      %v6847 = vsel %vm3229, %v6806, 0
      %v6850 = vsel %vm3229, %v6807, 0
      %v6853 = vsel %vm3229, %v6808, 0
      %v6856 = vsel %vm3229, %v6809, 0
      %v6859 = vsel %vm3229, %v6810, 0
      %v6862 = vsel %vm3229, %v6811, 0
      %v6865 = vsel %vm3229, %v6812, 0
      %v6868 = vsel %vm3229, %v6813, 0
      %v6871 = vsel %vm3229, %v6814, 0
      %v6874 = vsel %vm3229, %v6815, 0
      %v6877 = vsel %vm3229, %v6816, 0
      %v6880 = vsel %vm3229, %v6817, 0
      %v6883 = vsel %vm3229, %v6818, 0
      %v6886 = vsel %vm3229, %v6819, 0
      %v6889 = vsel %vm3229, %v6820, 0
      %v6892 = vsel %vm3229, %v6821, 0
      %v6895 = vsel %vm3229, %v6822, 0
      %v6898 = vsel %vm3229, %v6823, 0
      %v6901 = vsel %vm3229, %v6824, 0
      %v6904 = vsel %vm3229, %v6825, 0
      %v6907 = vsel %vm3229, %v6826, 0
      %v6910 = vsel %vm3229, %v6827, 0
      %v6913 = vsel %vm3229, %v6828, 0
      %v6916 = vsel %vm3229, %v6829, 0
      %v6919 = vsel %vm3229, %v6830, 0
      %v6922 = vsel %vm3229, %v6831, 0
      %v6925 = vsel %vm3229, %v6832, 0
      %v6928 = vsel %vm3229, %v6833, 0
      %v6931 = vsel %vm3229, %v6834, 0
      %6933 = vmatpush.msra.mxu0 0.0
      %6934 = vmatpush.msra.mxu0 0.0
      %6935 = vmatpush.msra.mxu0 0.0
      %6936 = vmatpush.msra.mxu0 0.0
      %6937 = vmatpush.msra.mxu0 0.0
      %6938 = vmatpush.msra.mxu0 0.0
      %6939 = vmatpush.msra.mxu0 0.0
      %6940 = vmatpush.msra.mxu0 0.0
      %6941 = vmatpush.msra.mxu0 0.0
      %6942 = vmatpush.msra.mxu0 0.0
      %6943 = vmatpush.msra.mxu0 0.0
      %6944 = vmatpush.msra.mxu0 0.0
      %6945 = vmatpush.msra.mxu0 0.0
      %6946 = vmatpush.msra.mxu0 0.0
      %6947 = vmatpush.msra.mxu0 0.0
      %6948 = vmatpush.msra.mxu0 %v6836
      %6949 = vmatmul.f32.gmra.mxu0 %v6838
      %v6950 = vpop.f32.mrf.mxu0
      %v6951 = vadd.f32 0.0, %v6950
      %6952 = vmatmul.f32.gmra.mxu0 %v6841
      %v6953 = vpop.f32.mrf.mxu0
      %v6954 = vadd.f32 0.0, %v6953
      %6955 = vmatmul.f32.gmra.mxu0 %v6844
      %v6956 = vpop.f32.mrf.mxu0
      %v6957 = vadd.f32 0.0, %v6956
      %6958 = vmatmul.f32.gmra.mxu0 %v6847
      %v6959 = vpop.f32.mrf.mxu0
      %v6960 = vadd.f32 0.0, %v6959
      %6961 = vmatmul.f32.gmra.mxu0 %v6850
      %v6962 = vpop.f32.mrf.mxu0
      %v6963 = vadd.f32 0.0, %v6962
      %6964 = vmatmul.f32.gmra.mxu0 %v6853
      %v6965 = vpop.f32.mrf.mxu0
      %v6966 = vadd.f32 0.0, %v6965
      %6967 = vmatmul.f32.gmra.mxu0 %v6856
      %v6968 = vpop.f32.mrf.mxu0
      %v6969 = vadd.f32 0.0, %v6968
      %6970 = vmatmul.f32.gmra.mxu0 %v6859
      %v6971 = vpop.f32.mrf.mxu0
      %v6972 = vadd.f32 0.0, %v6971
      %6973 = vmatmul.f32.gmra.mxu0 %v6862
      %v6974 = vpop.f32.mrf.mxu0
      %v6975 = vadd.f32 0.0, %v6974
      %6976 = vmatmul.f32.gmra.mxu0 %v6865
      %v6977 = vpop.f32.mrf.mxu0
      %v6978 = vadd.f32 0.0, %v6977
      %6979 = vmatmul.f32.gmra.mxu0 %v6868
      %v6980 = vpop.f32.mrf.mxu0
      %v6981 = vadd.f32 0.0, %v6980
      %6982 = vmatmul.f32.gmra.mxu0 %v6871
      %v6983 = vpop.f32.mrf.mxu0
      %v6984 = vadd.f32 0.0, %v6983
      %6985 = vmatmul.f32.gmra.mxu0 %v6874
      %v6986 = vpop.f32.mrf.mxu0
      %v6987 = vadd.f32 0.0, %v6986
      %6988 = vmatmul.f32.gmra.mxu0 %v6877
      %v6989 = vpop.f32.mrf.mxu0
      %v6990 = vadd.f32 0.0, %v6989
      %6991 = vmatmul.f32.gmra.mxu0 %v6880
      %v6992 = vpop.f32.mrf.mxu0
      %v6993 = vadd.f32 0.0, %v6992
      %6994 = vmatmul.f32.gmra.mxu0 %v6883
      %v6995 = vpop.f32.mrf.mxu0
      %v6996 = vadd.f32 0.0, %v6995
      %6997 = vmatmul.f32.gmra.mxu0 %v6886
      %v6998 = vpop.f32.mrf.mxu0
      %v6999 = vadd.f32 0.0, %v6998
      %7000 = vmatmul.f32.gmra.mxu0 %v6889
      %v7001 = vpop.f32.mrf.mxu0
      %v7002 = vadd.f32 0.0, %v7001
      %7003 = vmatmul.f32.gmra.mxu0 %v6892
      %v7004 = vpop.f32.mrf.mxu0
      %v7005 = vadd.f32 0.0, %v7004
      %7006 = vmatmul.f32.gmra.mxu0 %v6895
      %v7007 = vpop.f32.mrf.mxu0
      %v7008 = vadd.f32 0.0, %v7007
      %7009 = vmatmul.f32.gmra.mxu0 %v6898
      %v7010 = vpop.f32.mrf.mxu0
      %v7011 = vadd.f32 0.0, %v7010
      %7012 = vmatmul.f32.gmra.mxu0 %v6901
      %v7013 = vpop.f32.mrf.mxu0
      %v7014 = vadd.f32 0.0, %v7013
      %7015 = vmatmul.f32.gmra.mxu0 %v6904
      %v7016 = vpop.f32.mrf.mxu0
      %v7017 = vadd.f32 0.0, %v7016
      %7018 = vmatmul.f32.gmra.mxu0 %v6907
      %v7019 = vpop.f32.mrf.mxu0
      %v7020 = vadd.f32 0.0, %v7019
      %7021 = vmatmul.f32.gmra.mxu0 %v6910
      %v7022 = vpop.f32.mrf.mxu0
      %v7023 = vadd.f32 0.0, %v7022
      %7024 = vmatmul.f32.gmra.mxu0 %v6913
      %v7025 = vpop.f32.mrf.mxu0
      %v7026 = vadd.f32 0.0, %v7025
      %7027 = vmatmul.f32.gmra.mxu0 %v6916
      %v7028 = vpop.f32.mrf.mxu0
      %v7029 = vadd.f32 0.0, %v7028
      %7030 = vmatmul.f32.gmra.mxu0 %v6919
      %v7031 = vpop.f32.mrf.mxu0
      %v7032 = vadd.f32 0.0, %v7031
      %7033 = vmatmul.f32.gmra.mxu0 %v6922
      %v7034 = vpop.f32.mrf.mxu0
      %v7035 = vadd.f32 0.0, %v7034
      %7036 = vmatmul.f32.gmra.mxu0 %v6925
      %v7037 = vpop.f32.mrf.mxu0
      %v7038 = vadd.f32 0.0, %v7037
      %7039 = vmatmul.f32.gmra.mxu0 %v6928
      %v7040 = vpop.f32.mrf.mxu0
      %v7041 = vadd.f32 0.0, %v7040
      %7042 = vmatmul.f32.gmra.mxu0 %v6931
      %v7043 = vpop.f32.mrf.mxu0
      %v7044 = vadd.f32 0.0, %v7043
      %7045 = vdwg.mxu0
      %v7046 = vadd.f32 %v6771, %v6951
      %v7047 = vadd.f32 %v6772, %v6954
      %v7048 = vadd.f32 %v6773, %v6957
      %v7049 = vadd.f32 %v6774, %v6960
      %v7050 = vadd.f32 %v6775, %v6963
      %v7051 = vadd.f32 %v6776, %v6966
      %v7052 = vadd.f32 %v6777, %v6969
      %v7053 = vadd.f32 %v6778, %v6972
      %v7054 = vadd.f32 %v6779, %v6975
      %v7055 = vadd.f32 %v6780, %v6978
      %v7056 = vadd.f32 %v6781, %v6981
      %v7057 = vadd.f32 %v6782, %v6984
      %v7058 = vadd.f32 %v6783, %v6987
      %v7059 = vadd.f32 %v6784, %v6990
      %v7060 = vadd.f32 %v6785, %v6993
      %v7061 = vadd.f32 %v6786, %v6996
      %v7062 = vadd.f32 %v6787, %v6999
      %v7063 = vadd.f32 %v6788, %v7002
      %v7064 = vadd.f32 %v6789, %v7005
      %v7065 = vadd.f32 %v6790, %v7008
      %v7066 = vadd.f32 %v6791, %v7011
      %v7067 = vadd.f32 %v6792, %v7014
      %v7068 = vadd.f32 %v6793, %v7017
      %v7069 = vadd.f32 %v6794, %v7020
      %v7070 = vadd.f32 %v6795, %v7023
      %v7071 = vadd.f32 %v6796, %v7026
      %v7072 = vadd.f32 %v6797, %v7029
      %v7073 = vadd.f32 %v6798, %v7032
      %v7074 = vadd.f32 %v6799, %v7035
      %v7075 = vadd.f32 %v6800, %v7038
      %v7076 = vadd.f32 %v6801, %v7041
      %v7077 = vadd.f32 %v6802, %v7044
      %v7078 = vld [vmem:[%s3285 + $0x1] sm:$0xff]
      %v7079 = vld [vmem:[%s3285 + $0x9] sm:$0xff]
      %v7080 = vld [vmem:[%s3285 + $0x19] sm:$0xff]
      %v7081 = vld [vmem:[%s3285 + $0x21] sm:$0xff]
      %v7082 = vld [vmem:[%s3285 + $0x31] sm:$0xff]
      %v7083 = vld [vmem:[%s3285 + $0x39] sm:$0xff]
      %v7084 = vld [vmem:[%s3285 + $0x49] sm:$0xff]
      %v7085 = vld [vmem:[%s3285 + $0x51] sm:$0xff]
      %v7086 = vld [vmem:[%s3285 + $0x61] sm:$0xff]
      %v7087 = vld [vmem:[%s3285 + $0x69] sm:$0xff]
      %v7088 = vld [vmem:[%s3285 + $0x79] sm:$0xff]
      %v7089 = vld [vmem:[%s3285 + $0x81] sm:$0xff]
      %v7090 = vld [vmem:[%s3285 + $0x91] sm:$0xff]
      %v7091 = vld [vmem:[%s3285 + $0x99] sm:$0xff]
      %v7092 = vld [vmem:[%s3285 + $0xa9] sm:$0xff]
      %v7093 = vld [vmem:[%s3285 + $0xb1] sm:$0xff]
      %v7094 = vld [vmem:[%s3285 + $0xc1] sm:$0xff]
      %v7095 = vld [vmem:[%s3285 + $0xc9] sm:$0xff]
      %v7096 = vld [vmem:[%s3285 + $0xd9] sm:$0xff]
      %v7097 = vld [vmem:[%s3285 + $0xe1] sm:$0xff]
      %v7098 = vld [vmem:[%s3285 + $0xf1] sm:$0xff]
      %v7099 = vld [vmem:[%s3285 + $0xf9] sm:$0xff]
      %v7100 = vld [vmem:[%s3285 + $0x109] sm:$0xff]
      %v7101 = vld [vmem:[%s3285 + $0x111] sm:$0xff]
      %v7102 = vld [vmem:[%s3285 + $0x121] sm:$0xff]
      %v7103 = vld [vmem:[%s3285 + $0x129] sm:$0xff]
      %v7104 = vld [vmem:[%s3285 + $0x139] sm:$0xff]
      %v7105 = vld [vmem:[%s3285 + $0x141] sm:$0xff]
      %v7106 = vld [vmem:[%s3285 + $0x151] sm:$0xff]
      %v7107 = vld [vmem:[%s3285 + $0x159] sm:$0xff]
      %v7108 = vld [vmem:[%s3285 + $0x169] sm:$0xff]
      %v7109 = vld [vmem:[%s3285 + $0x171] sm:$0xff]
      %s7110 = scalar_lea.vmem %s5, 32
      %v7111 = vld [vmem:[%s7110] sm:$0xff]
      %v7113 = vsel %vm3229, %v7078, 0
      %v7116 = vsel %vm3229, %v7079, 0
      %v7119 = vsel %vm3229, %v7080, 0
      %v7122 = vsel %vm3229, %v7081, 0
      %v7125 = vsel %vm3229, %v7082, 0
      %v7128 = vsel %vm3229, %v7083, 0
      %v7131 = vsel %vm3229, %v7084, 0
      %v7134 = vsel %vm3229, %v7085, 0
      %v7137 = vsel %vm3229, %v7086, 0
      %v7140 = vsel %vm3229, %v7087, 0
      %v7143 = vsel %vm3229, %v7088, 0
      %v7146 = vsel %vm3229, %v7089, 0
      %v7149 = vsel %vm3229, %v7090, 0
      %v7152 = vsel %vm3229, %v7091, 0
      %v7155 = vsel %vm3229, %v7092, 0
      %v7158 = vsel %vm3229, %v7093, 0
      %v7161 = vsel %vm3229, %v7094, 0
      %v7164 = vsel %vm3229, %v7095, 0
      %v7167 = vsel %vm3229, %v7096, 0
      %v7170 = vsel %vm3229, %v7097, 0
      %v7173 = vsel %vm3229, %v7098, 0
      %v7176 = vsel %vm3229, %v7099, 0
      %v7179 = vsel %vm3229, %v7100, 0
      %v7182 = vsel %vm3229, %v7101, 0
      %v7185 = vsel %vm3229, %v7102, 0
      %v7188 = vsel %vm3229, %v7103, 0
      %v7191 = vsel %vm3229, %v7104, 0
      %v7194 = vsel %vm3229, %v7105, 0
      %v7197 = vsel %vm3229, %v7106, 0
      %v7200 = vsel %vm3229, %v7107, 0
      %v7203 = vsel %vm3229, %v7108, 0
      %v7206 = vsel %vm3229, %v7109, 0
      %7208 = vmatpush.msra.mxu0 0.0
      %7209 = vmatpush.msra.mxu0 0.0
      %7210 = vmatpush.msra.mxu0 0.0
      %7211 = vmatpush.msra.mxu0 0.0
      %7212 = vmatpush.msra.mxu0 0.0
      %7213 = vmatpush.msra.mxu0 0.0
      %7214 = vmatpush.msra.mxu0 0.0
      %7215 = vmatpush.msra.mxu0 0.0
      %7216 = vmatpush.msra.mxu0 0.0
      %7217 = vmatpush.msra.mxu0 0.0
      %7218 = vmatpush.msra.mxu0 0.0
      %7219 = vmatpush.msra.mxu0 0.0
      %7220 = vmatpush.msra.mxu0 0.0
      %7221 = vmatpush.msra.mxu0 0.0
      %7222 = vmatpush.msra.mxu0 0.0
      %7223 = vmatpush.msra.mxu0 %v7111
      %7224 = vmatmul.f32.gmra.mxu0 %v7113
      %v7225 = vpop.f32.mrf.mxu0
      %v7226 = vadd.f32 0.0, %v7225
      %7227 = vmatmul.f32.gmra.mxu0 %v7116
      %v7228 = vpop.f32.mrf.mxu0
      %v7229 = vadd.f32 0.0, %v7228
      %7230 = vmatmul.f32.gmra.mxu0 %v7119
      %v7231 = vpop.f32.mrf.mxu0
      %v7232 = vadd.f32 0.0, %v7231
      %7233 = vmatmul.f32.gmra.mxu0 %v7122
      %v7234 = vpop.f32.mrf.mxu0
      %v7235 = vadd.f32 0.0, %v7234
      %7236 = vmatmul.f32.gmra.mxu0 %v7125
      %v7237 = vpop.f32.mrf.mxu0
      %v7238 = vadd.f32 0.0, %v7237
      %7239 = vmatmul.f32.gmra.mxu0 %v7128
      %v7240 = vpop.f32.mrf.mxu0
      %v7241 = vadd.f32 0.0, %v7240
      %7242 = vmatmul.f32.gmra.mxu0 %v7131
      %v7243 = vpop.f32.mrf.mxu0
      %v7244 = vadd.f32 0.0, %v7243
      %7245 = vmatmul.f32.gmra.mxu0 %v7134
      %v7246 = vpop.f32.mrf.mxu0
      %v7247 = vadd.f32 0.0, %v7246
      %7248 = vmatmul.f32.gmra.mxu0 %v7137
      %v7249 = vpop.f32.mrf.mxu0
      %v7250 = vadd.f32 0.0, %v7249
      %7251 = vmatmul.f32.gmra.mxu0 %v7140
      %v7252 = vpop.f32.mrf.mxu0
      %v7253 = vadd.f32 0.0, %v7252
      %7254 = vmatmul.f32.gmra.mxu0 %v7143
      %v7255 = vpop.f32.mrf.mxu0
      %v7256 = vadd.f32 0.0, %v7255
      %7257 = vmatmul.f32.gmra.mxu0 %v7146
      %v7258 = vpop.f32.mrf.mxu0
      %v7259 = vadd.f32 0.0, %v7258
      %7260 = vmatmul.f32.gmra.mxu0 %v7149
      %v7261 = vpop.f32.mrf.mxu0
      %v7262 = vadd.f32 0.0, %v7261
      %7263 = vmatmul.f32.gmra.mxu0 %v7152
      %v7264 = vpop.f32.mrf.mxu0
      %v7265 = vadd.f32 0.0, %v7264
      %7266 = vmatmul.f32.gmra.mxu0 %v7155
      %v7267 = vpop.f32.mrf.mxu0
      %v7268 = vadd.f32 0.0, %v7267
      %7269 = vmatmul.f32.gmra.mxu0 %v7158
      %v7270 = vpop.f32.mrf.mxu0
      %v7271 = vadd.f32 0.0, %v7270
      %7272 = vmatmul.f32.gmra.mxu0 %v7161
      %v7273 = vpop.f32.mrf.mxu0
      %v7274 = vadd.f32 0.0, %v7273
      %7275 = vmatmul.f32.gmra.mxu0 %v7164
      %v7276 = vpop.f32.mrf.mxu0
      %v7277 = vadd.f32 0.0, %v7276
      %7278 = vmatmul.f32.gmra.mxu0 %v7167
      %v7279 = vpop.f32.mrf.mxu0
      %v7280 = vadd.f32 0.0, %v7279
      %7281 = vmatmul.f32.gmra.mxu0 %v7170
      %v7282 = vpop.f32.mrf.mxu0
      %v7283 = vadd.f32 0.0, %v7282
      %7284 = vmatmul.f32.gmra.mxu0 %v7173
      %v7285 = vpop.f32.mrf.mxu0
      %v7286 = vadd.f32 0.0, %v7285
      %7287 = vmatmul.f32.gmra.mxu0 %v7176
      %v7288 = vpop.f32.mrf.mxu0
      %v7289 = vadd.f32 0.0, %v7288
      %7290 = vmatmul.f32.gmra.mxu0 %v7179
      %v7291 = vpop.f32.mrf.mxu0
      %v7292 = vadd.f32 0.0, %v7291
      %7293 = vmatmul.f32.gmra.mxu0 %v7182
      %v7294 = vpop.f32.mrf.mxu0
      %v7295 = vadd.f32 0.0, %v7294
      %7296 = vmatmul.f32.gmra.mxu0 %v7185
      %v7297 = vpop.f32.mrf.mxu0
      %v7298 = vadd.f32 0.0, %v7297
      %7299 = vmatmul.f32.gmra.mxu0 %v7188
      %v7300 = vpop.f32.mrf.mxu0
      %v7301 = vadd.f32 0.0, %v7300
      %7302 = vmatmul.f32.gmra.mxu0 %v7191
      %v7303 = vpop.f32.mrf.mxu0
      %v7304 = vadd.f32 0.0, %v7303
      %7305 = vmatmul.f32.gmra.mxu0 %v7194
      %v7306 = vpop.f32.mrf.mxu0
      %v7307 = vadd.f32 0.0, %v7306
      %7308 = vmatmul.f32.gmra.mxu0 %v7197
      %v7309 = vpop.f32.mrf.mxu0
      %v7310 = vadd.f32 0.0, %v7309
      %7311 = vmatmul.f32.gmra.mxu0 %v7200
      %v7312 = vpop.f32.mrf.mxu0
      %v7313 = vadd.f32 0.0, %v7312
      %7314 = vmatmul.f32.gmra.mxu0 %v7203
      %v7315 = vpop.f32.mrf.mxu0
      %v7316 = vadd.f32 0.0, %v7315
      %7317 = vmatmul.f32.gmra.mxu0 %v7206
      %v7318 = vpop.f32.mrf.mxu0
      %v7319 = vadd.f32 0.0, %v7318
      %7320 = vdwg.mxu0
      %v7321 = vadd.f32 %v7046, %v7226
      %v7322 = vadd.f32 %v7047, %v7229
      %v7323 = vadd.f32 %v7048, %v7232
      %v7324 = vadd.f32 %v7049, %v7235
      %v7325 = vadd.f32 %v7050, %v7238
      %v7326 = vadd.f32 %v7051, %v7241
      %v7327 = vadd.f32 %v7052, %v7244
      %v7328 = vadd.f32 %v7053, %v7247
      %v7329 = vadd.f32 %v7054, %v7250
      %v7330 = vadd.f32 %v7055, %v7253
      %v7331 = vadd.f32 %v7056, %v7256
      %v7332 = vadd.f32 %v7057, %v7259
      %v7333 = vadd.f32 %v7058, %v7262
      %v7334 = vadd.f32 %v7059, %v7265
      %v7335 = vadd.f32 %v7060, %v7268
      %v7336 = vadd.f32 %v7061, %v7271
      %v7337 = vadd.f32 %v7062, %v7274
      %v7338 = vadd.f32 %v7063, %v7277
      %v7339 = vadd.f32 %v7064, %v7280
      %v7340 = vadd.f32 %v7065, %v7283
      %v7341 = vadd.f32 %v7066, %v7286
      %v7342 = vadd.f32 %v7067, %v7289
      %v7343 = vadd.f32 %v7068, %v7292
      %v7344 = vadd.f32 %v7069, %v7295
      %v7345 = vadd.f32 %v7070, %v7298
      %v7346 = vadd.f32 %v7071, %v7301
      %v7347 = vadd.f32 %v7072, %v7304
      %v7348 = vadd.f32 %v7073, %v7307
      %v7349 = vadd.f32 %v7074, %v7310
      %v7350 = vadd.f32 %v7075, %v7313
      %v7351 = vadd.f32 %v7076, %v7316
      %v7352 = vadd.f32 %v7077, %v7319
      %v7353 = vld [vmem:[%s3285 + $0x2] sm:$0xff]
      %v7354 = vld [vmem:[%s3285 + $0xa] sm:$0xff]
      %v7355 = vld [vmem:[%s3285 + $0x1a] sm:$0xff]
      %v7356 = vld [vmem:[%s3285 + $0x22] sm:$0xff]
      %v7357 = vld [vmem:[%s3285 + $0x32] sm:$0xff]
      %v7358 = vld [vmem:[%s3285 + $0x3a] sm:$0xff]
      %v7359 = vld [vmem:[%s3285 + $0x4a] sm:$0xff]
      %v7360 = vld [vmem:[%s3285 + $0x52] sm:$0xff]
      %v7361 = vld [vmem:[%s3285 + $0x62] sm:$0xff]
      %v7362 = vld [vmem:[%s3285 + $0x6a] sm:$0xff]
      %v7363 = vld [vmem:[%s3285 + $0x7a] sm:$0xff]
      %v7364 = vld [vmem:[%s3285 + $0x82] sm:$0xff]
      %v7365 = vld [vmem:[%s3285 + $0x92] sm:$0xff]
      %v7366 = vld [vmem:[%s3285 + $0x9a] sm:$0xff]
      %v7367 = vld [vmem:[%s3285 + $0xaa] sm:$0xff]
      %v7368 = vld [vmem:[%s3285 + $0xb2] sm:$0xff]
      %v7369 = vld [vmem:[%s3285 + $0xc2] sm:$0xff]
      %v7370 = vld [vmem:[%s3285 + $0xca] sm:$0xff]
      %v7371 = vld [vmem:[%s3285 + $0xda] sm:$0xff]
      %v7372 = vld [vmem:[%s3285 + $0xe2] sm:$0xff]
      %v7373 = vld [vmem:[%s3285 + $0xf2] sm:$0xff]
      %v7374 = vld [vmem:[%s3285 + $0xfa] sm:$0xff]
      %v7375 = vld [vmem:[%s3285 + $0x10a] sm:$0xff]
      %v7376 = vld [vmem:[%s3285 + $0x112] sm:$0xff]
      %v7377 = vld [vmem:[%s3285 + $0x122] sm:$0xff]
      %v7378 = vld [vmem:[%s3285 + $0x12a] sm:$0xff]
      %v7379 = vld [vmem:[%s3285 + $0x13a] sm:$0xff]
      %v7380 = vld [vmem:[%s3285 + $0x142] sm:$0xff]
      %v7381 = vld [vmem:[%s3285 + $0x152] sm:$0xff]
      %v7382 = vld [vmem:[%s3285 + $0x15a] sm:$0xff]
      %v7383 = vld [vmem:[%s3285 + $0x16a] sm:$0xff]
      %v7384 = vld [vmem:[%s3285 + $0x172] sm:$0xff]
      %s7385 = scalar_lea.vmem %s5, 40
      %v7386 = vld [vmem:[%s7385] sm:$0xff]
      %v7388 = vsel %vm3229, %v7353, 0
      %v7391 = vsel %vm3229, %v7354, 0
      %v7394 = vsel %vm3229, %v7355, 0
      %v7397 = vsel %vm3229, %v7356, 0
      %v7400 = vsel %vm3229, %v7357, 0
      %v7403 = vsel %vm3229, %v7358, 0
      %v7406 = vsel %vm3229, %v7359, 0
      %v7409 = vsel %vm3229, %v7360, 0
      %v7412 = vsel %vm3229, %v7361, 0
      %v7415 = vsel %vm3229, %v7362, 0
      %v7418 = vsel %vm3229, %v7363, 0
      %v7421 = vsel %vm3229, %v7364, 0
      %v7424 = vsel %vm3229, %v7365, 0
      %v7427 = vsel %vm3229, %v7366, 0
      %v7430 = vsel %vm3229, %v7367, 0
      %v7433 = vsel %vm3229, %v7368, 0
      %v7436 = vsel %vm3229, %v7369, 0
      %v7439 = vsel %vm3229, %v7370, 0
      %v7442 = vsel %vm3229, %v7371, 0
      %v7445 = vsel %vm3229, %v7372, 0
      %v7448 = vsel %vm3229, %v7373, 0
      %v7451 = vsel %vm3229, %v7374, 0
      %v7454 = vsel %vm3229, %v7375, 0
      %v7457 = vsel %vm3229, %v7376, 0
      %v7460 = vsel %vm3229, %v7377, 0
      %v7463 = vsel %vm3229, %v7378, 0
      %v7466 = vsel %vm3229, %v7379, 0
      %v7469 = vsel %vm3229, %v7380, 0
      %v7472 = vsel %vm3229, %v7381, 0
      %v7475 = vsel %vm3229, %v7382, 0
      %v7478 = vsel %vm3229, %v7383, 0
      %v7481 = vsel %vm3229, %v7384, 0
      %7483 = vmatpush.msra.mxu0 0.0
      %7484 = vmatpush.msra.mxu0 0.0
      %7485 = vmatpush.msra.mxu0 0.0
      %7486 = vmatpush.msra.mxu0 0.0
      %7487 = vmatpush.msra.mxu0 0.0
      %7488 = vmatpush.msra.mxu0 0.0
      %7489 = vmatpush.msra.mxu0 0.0
      %7490 = vmatpush.msra.mxu0 0.0
      %7491 = vmatpush.msra.mxu0 0.0
      %7492 = vmatpush.msra.mxu0 0.0
      %7493 = vmatpush.msra.mxu0 0.0
      %7494 = vmatpush.msra.mxu0 0.0
      %7495 = vmatpush.msra.mxu0 0.0
      %7496 = vmatpush.msra.mxu0 0.0
      %7497 = vmatpush.msra.mxu0 0.0
      %7498 = vmatpush.msra.mxu0 %v7386
      %7499 = vmatmul.f32.gmra.mxu0 %v7388
      %v7500 = vpop.f32.mrf.mxu0
      %v7501 = vadd.f32 0.0, %v7500
      %7502 = vmatmul.f32.gmra.mxu0 %v7391
      %v7503 = vpop.f32.mrf.mxu0
      %v7504 = vadd.f32 0.0, %v7503
      %7505 = vmatmul.f32.gmra.mxu0 %v7394
      %v7506 = vpop.f32.mrf.mxu0
      %v7507 = vadd.f32 0.0, %v7506
      %7508 = vmatmul.f32.gmra.mxu0 %v7397
      %v7509 = vpop.f32.mrf.mxu0
      %v7510 = vadd.f32 0.0, %v7509
      %7511 = vmatmul.f32.gmra.mxu0 %v7400
      %v7512 = vpop.f32.mrf.mxu0
      %v7513 = vadd.f32 0.0, %v7512
      %7514 = vmatmul.f32.gmra.mxu0 %v7403
      %v7515 = vpop.f32.mrf.mxu0
      %v7516 = vadd.f32 0.0, %v7515
      %7517 = vmatmul.f32.gmra.mxu0 %v7406
      %v7518 = vpop.f32.mrf.mxu0
      %v7519 = vadd.f32 0.0, %v7518
      %7520 = vmatmul.f32.gmra.mxu0 %v7409
      %v7521 = vpop.f32.mrf.mxu0
      %v7522 = vadd.f32 0.0, %v7521
      %7523 = vmatmul.f32.gmra.mxu0 %v7412
      %v7524 = vpop.f32.mrf.mxu0
      %v7525 = vadd.f32 0.0, %v7524
      %7526 = vmatmul.f32.gmra.mxu0 %v7415
      %v7527 = vpop.f32.mrf.mxu0
      %v7528 = vadd.f32 0.0, %v7527
      %7529 = vmatmul.f32.gmra.mxu0 %v7418
      %v7530 = vpop.f32.mrf.mxu0
      %v7531 = vadd.f32 0.0, %v7530
      %7532 = vmatmul.f32.gmra.mxu0 %v7421
      %v7533 = vpop.f32.mrf.mxu0
      %v7534 = vadd.f32 0.0, %v7533
      %7535 = vmatmul.f32.gmra.mxu0 %v7424
      %v7536 = vpop.f32.mrf.mxu0
      %v7537 = vadd.f32 0.0, %v7536
      %7538 = vmatmul.f32.gmra.mxu0 %v7427
      %v7539 = vpop.f32.mrf.mxu0
      %v7540 = vadd.f32 0.0, %v7539
      %7541 = vmatmul.f32.gmra.mxu0 %v7430
      %v7542 = vpop.f32.mrf.mxu0
      %v7543 = vadd.f32 0.0, %v7542
      %7544 = vmatmul.f32.gmra.mxu0 %v7433
      %v7545 = vpop.f32.mrf.mxu0
      %v7546 = vadd.f32 0.0, %v7545
      %7547 = vmatmul.f32.gmra.mxu0 %v7436
      %v7548 = vpop.f32.mrf.mxu0
      %v7549 = vadd.f32 0.0, %v7548
      %7550 = vmatmul.f32.gmra.mxu0 %v7439
      %v7551 = vpop.f32.mrf.mxu0
      %v7552 = vadd.f32 0.0, %v7551
      %7553 = vmatmul.f32.gmra.mxu0 %v7442
      %v7554 = vpop.f32.mrf.mxu0
      %v7555 = vadd.f32 0.0, %v7554
      %7556 = vmatmul.f32.gmra.mxu0 %v7445
      %v7557 = vpop.f32.mrf.mxu0
      %v7558 = vadd.f32 0.0, %v7557
      %7559 = vmatmul.f32.gmra.mxu0 %v7448
      %v7560 = vpop.f32.mrf.mxu0
      %v7561 = vadd.f32 0.0, %v7560
      %7562 = vmatmul.f32.gmra.mxu0 %v7451
      %v7563 = vpop.f32.mrf.mxu0
      %v7564 = vadd.f32 0.0, %v7563
      %7565 = vmatmul.f32.gmra.mxu0 %v7454
      %v7566 = vpop.f32.mrf.mxu0
      %v7567 = vadd.f32 0.0, %v7566
      %7568 = vmatmul.f32.gmra.mxu0 %v7457
      %v7569 = vpop.f32.mrf.mxu0
      %v7570 = vadd.f32 0.0, %v7569
      %7571 = vmatmul.f32.gmra.mxu0 %v7460
      %v7572 = vpop.f32.mrf.mxu0
      %v7573 = vadd.f32 0.0, %v7572
      %7574 = vmatmul.f32.gmra.mxu0 %v7463
      %v7575 = vpop.f32.mrf.mxu0
      %v7576 = vadd.f32 0.0, %v7575
      %7577 = vmatmul.f32.gmra.mxu0 %v7466
      %v7578 = vpop.f32.mrf.mxu0
      %v7579 = vadd.f32 0.0, %v7578
      %7580 = vmatmul.f32.gmra.mxu0 %v7469
      %v7581 = vpop.f32.mrf.mxu0
      %v7582 = vadd.f32 0.0, %v7581
      %7583 = vmatmul.f32.gmra.mxu0 %v7472
      %v7584 = vpop.f32.mrf.mxu0
      %v7585 = vadd.f32 0.0, %v7584
      %7586 = vmatmul.f32.gmra.mxu0 %v7475
      %v7587 = vpop.f32.mrf.mxu0
      %v7588 = vadd.f32 0.0, %v7587
      %7589 = vmatmul.f32.gmra.mxu0 %v7478
      %v7590 = vpop.f32.mrf.mxu0
      %v7591 = vadd.f32 0.0, %v7590
      %7592 = vmatmul.f32.gmra.mxu0 %v7481
      %v7593 = vpop.f32.mrf.mxu0
      %v7594 = vadd.f32 0.0, %v7593
      %7595 = vdwg.mxu0
      %v7596 = vadd.f32 %v7321, %v7501
      %v7597 = vadd.f32 %v7322, %v7504
      %v7598 = vadd.f32 %v7323, %v7507
      %v7599 = vadd.f32 %v7324, %v7510
      %v7600 = vadd.f32 %v7325, %v7513
      %v7601 = vadd.f32 %v7326, %v7516
      %v7602 = vadd.f32 %v7327, %v7519
      %v7603 = vadd.f32 %v7328, %v7522
      %v7604 = vadd.f32 %v7329, %v7525
      %v7605 = vadd.f32 %v7330, %v7528
      %v7606 = vadd.f32 %v7331, %v7531
      %v7607 = vadd.f32 %v7332, %v7534
      %v7608 = vadd.f32 %v7333, %v7537
      %v7609 = vadd.f32 %v7334, %v7540
      %v7610 = vadd.f32 %v7335, %v7543
      %v7611 = vadd.f32 %v7336, %v7546
      %v7612 = vadd.f32 %v7337, %v7549
      %v7613 = vadd.f32 %v7338, %v7552
      %v7614 = vadd.f32 %v7339, %v7555
      %v7615 = vadd.f32 %v7340, %v7558
      %v7616 = vadd.f32 %v7341, %v7561
      %v7617 = vadd.f32 %v7342, %v7564
      %v7618 = vadd.f32 %v7343, %v7567
      %v7619 = vadd.f32 %v7344, %v7570
      %v7620 = vadd.f32 %v7345, %v7573
      %v7621 = vadd.f32 %v7346, %v7576
      %v7622 = vadd.f32 %v7347, %v7579
      %v7623 = vadd.f32 %v7348, %v7582
      %v7624 = vadd.f32 %v7349, %v7585
      %v7625 = vadd.f32 %v7350, %v7588
      %v7626 = vadd.f32 %v7351, %v7591
      %v7627 = vadd.f32 %v7352, %v7594
      %v7628 = vld [vmem:[%s4903] sm:$0xff]
      %v7629 = vld [vmem:[%s4903 + $0x8] sm:$0xff]
      %v7630 = vld [vmem:[%s4903 + $0x18] sm:$0xff]
      %v7631 = vld [vmem:[%s4903 + $0x20] sm:$0xff]
      %v7632 = vld [vmem:[%s4903 + $0x30] sm:$0xff]
      %v7633 = vld [vmem:[%s4903 + $0x38] sm:$0xff]
      %v7634 = vld [vmem:[%s4903 + $0x48] sm:$0xff]
      %v7635 = vld [vmem:[%s4903 + $0x50] sm:$0xff]
      %v7636 = vld [vmem:[%s4903 + $0x60] sm:$0xff]
      %v7637 = vld [vmem:[%s4903 + $0x68] sm:$0xff]
      %v7638 = vld [vmem:[%s4903 + $0x78] sm:$0xff]
      %v7639 = vld [vmem:[%s4903 + $0x80] sm:$0xff]
      %v7640 = vld [vmem:[%s4903 + $0x90] sm:$0xff]
      %v7641 = vld [vmem:[%s4903 + $0x98] sm:$0xff]
      %v7642 = vld [vmem:[%s4903 + $0xa8] sm:$0xff]
      %v7643 = vld [vmem:[%s4903 + $0xb0] sm:$0xff]
      %v7644 = vld [vmem:[%s4903 + $0xc0] sm:$0xff]
      %v7645 = vld [vmem:[%s4903 + $0xc8] sm:$0xff]
      %v7646 = vld [vmem:[%s4903 + $0xd8] sm:$0xff]
      %v7647 = vld [vmem:[%s4903 + $0xe0] sm:$0xff]
      %v7648 = vld [vmem:[%s4903 + $0xf0] sm:$0xff]
      %v7649 = vld [vmem:[%s4903 + $0xf8] sm:$0xff]
      %v7650 = vld [vmem:[%s4903 + $0x108] sm:$0xff]
      %v7651 = vld [vmem:[%s4903 + $0x110] sm:$0xff]
      %v7652 = vld [vmem:[%s4903 + $0x120] sm:$0xff]
      %v7653 = vld [vmem:[%s4903 + $0x128] sm:$0xff]
      %v7654 = vld [vmem:[%s4903 + $0x138] sm:$0xff]
      %v7655 = vld [vmem:[%s4903 + $0x140] sm:$0xff]
      %v7656 = vld [vmem:[%s4903 + $0x150] sm:$0xff]
      %v7657 = vld [vmem:[%s4903 + $0x158] sm:$0xff]
      %v7658 = vld [vmem:[%s4903 + $0x168] sm:$0xff]
      %v7659 = vld [vmem:[%s4903 + $0x170] sm:$0xff]
      %s7660 = scalar_lea.vmem %s5, 48
      %v7661 = vld [vmem:[%s7660] sm:$0xff]
      %v7663 = vsel %vm3229, %v7628, 0
      %v7666 = vsel %vm3229, %v7629, 0
      %v7669 = vsel %vm3229, %v7630, 0
      %v7672 = vsel %vm3229, %v7631, 0
      %v7675 = vsel %vm3229, %v7632, 0
      %v7678 = vsel %vm3229, %v7633, 0
      %v7681 = vsel %vm3229, %v7634, 0
      %v7684 = vsel %vm3229, %v7635, 0
      %v7687 = vsel %vm3229, %v7636, 0
      %v7690 = vsel %vm3229, %v7637, 0
      %v7693 = vsel %vm3229, %v7638, 0
      %v7696 = vsel %vm3229, %v7639, 0
      %v7699 = vsel %vm3229, %v7640, 0
      %v7702 = vsel %vm3229, %v7641, 0
      %v7705 = vsel %vm3229, %v7642, 0
      %v7708 = vsel %vm3229, %v7643, 0
      %v7711 = vsel %vm3229, %v7644, 0
      %v7714 = vsel %vm3229, %v7645, 0
      %v7717 = vsel %vm3229, %v7646, 0
      %v7720 = vsel %vm3229, %v7647, 0
      %v7723 = vsel %vm3229, %v7648, 0
      %v7726 = vsel %vm3229, %v7649, 0
      %v7729 = vsel %vm3229, %v7650, 0
      %v7732 = vsel %vm3229, %v7651, 0
      %v7735 = vsel %vm3229, %v7652, 0
      %v7738 = vsel %vm3229, %v7653, 0
      %v7741 = vsel %vm3229, %v7654, 0
      %v7744 = vsel %vm3229, %v7655, 0
      %v7747 = vsel %vm3229, %v7656, 0
      %v7750 = vsel %vm3229, %v7657, 0
      %v7753 = vsel %vm3229, %v7658, 0
      %v7756 = vsel %vm3229, %v7659, 0
      %7758 = vmatpush.msra.mxu0 0.0
      %7759 = vmatpush.msra.mxu0 0.0
      %7760 = vmatpush.msra.mxu0 0.0
      %7761 = vmatpush.msra.mxu0 0.0
      %7762 = vmatpush.msra.mxu0 0.0
      %7763 = vmatpush.msra.mxu0 0.0
      %7764 = vmatpush.msra.mxu0 0.0
      %7765 = vmatpush.msra.mxu0 0.0
      %7766 = vmatpush.msra.mxu0 0.0
      %7767 = vmatpush.msra.mxu0 0.0
      %7768 = vmatpush.msra.mxu0 0.0
      %7769 = vmatpush.msra.mxu0 0.0
      %7770 = vmatpush.msra.mxu0 0.0
      %7771 = vmatpush.msra.mxu0 0.0
      %7772 = vmatpush.msra.mxu0 0.0
      %7773 = vmatpush.msra.mxu0 %v7661
      %7774 = vmatmul.f32.gmra.mxu0 %v7663
      %v7775 = vpop.f32.mrf.mxu0
      %v7776 = vadd.f32 0.0, %v7775
      %7777 = vmatmul.f32.gmra.mxu0 %v7666
      %v7778 = vpop.f32.mrf.mxu0
      %v7779 = vadd.f32 0.0, %v7778
      %7780 = vmatmul.f32.gmra.mxu0 %v7669
      %v7781 = vpop.f32.mrf.mxu0
      %v7782 = vadd.f32 0.0, %v7781
      %7783 = vmatmul.f32.gmra.mxu0 %v7672
      %v7784 = vpop.f32.mrf.mxu0
      %v7785 = vadd.f32 0.0, %v7784
      %7786 = vmatmul.f32.gmra.mxu0 %v7675
      %v7787 = vpop.f32.mrf.mxu0
      %v7788 = vadd.f32 0.0, %v7787
      %7789 = vmatmul.f32.gmra.mxu0 %v7678
      %v7790 = vpop.f32.mrf.mxu0
      %v7791 = vadd.f32 0.0, %v7790
      %7792 = vmatmul.f32.gmra.mxu0 %v7681
      %v7793 = vpop.f32.mrf.mxu0
      %v7794 = vadd.f32 0.0, %v7793
      %7795 = vmatmul.f32.gmra.mxu0 %v7684
      %v7796 = vpop.f32.mrf.mxu0
      %v7797 = vadd.f32 0.0, %v7796
      %7798 = vmatmul.f32.gmra.mxu0 %v7687
      %v7799 = vpop.f32.mrf.mxu0
      %v7800 = vadd.f32 0.0, %v7799
      %7801 = vmatmul.f32.gmra.mxu0 %v7690
      %v7802 = vpop.f32.mrf.mxu0
      %v7803 = vadd.f32 0.0, %v7802
      %7804 = vmatmul.f32.gmra.mxu0 %v7693
      %v7805 = vpop.f32.mrf.mxu0
      %v7806 = vadd.f32 0.0, %v7805
      %7807 = vmatmul.f32.gmra.mxu0 %v7696
      %v7808 = vpop.f32.mrf.mxu0
      %v7809 = vadd.f32 0.0, %v7808
      %7810 = vmatmul.f32.gmra.mxu0 %v7699
      %v7811 = vpop.f32.mrf.mxu0
      %v7812 = vadd.f32 0.0, %v7811
      %7813 = vmatmul.f32.gmra.mxu0 %v7702
      %v7814 = vpop.f32.mrf.mxu0
      %v7815 = vadd.f32 0.0, %v7814
      %7816 = vmatmul.f32.gmra.mxu0 %v7705
      %v7817 = vpop.f32.mrf.mxu0
      %v7818 = vadd.f32 0.0, %v7817
      %7819 = vmatmul.f32.gmra.mxu0 %v7708
      %v7820 = vpop.f32.mrf.mxu0
      %v7821 = vadd.f32 0.0, %v7820
      %7822 = vmatmul.f32.gmra.mxu0 %v7711
      %v7823 = vpop.f32.mrf.mxu0
      %v7824 = vadd.f32 0.0, %v7823
      %7825 = vmatmul.f32.gmra.mxu0 %v7714
      %v7826 = vpop.f32.mrf.mxu0
      %v7827 = vadd.f32 0.0, %v7826
      %7828 = vmatmul.f32.gmra.mxu0 %v7717
      %v7829 = vpop.f32.mrf.mxu0
      %v7830 = vadd.f32 0.0, %v7829
      %7831 = vmatmul.f32.gmra.mxu0 %v7720
      %v7832 = vpop.f32.mrf.mxu0
      %v7833 = vadd.f32 0.0, %v7832
      %7834 = vmatmul.f32.gmra.mxu0 %v7723
      %v7835 = vpop.f32.mrf.mxu0
      %v7836 = vadd.f32 0.0, %v7835
      %7837 = vmatmul.f32.gmra.mxu0 %v7726
      %v7838 = vpop.f32.mrf.mxu0
      %v7839 = vadd.f32 0.0, %v7838
      %7840 = vmatmul.f32.gmra.mxu0 %v7729
      %v7841 = vpop.f32.mrf.mxu0
      %v7842 = vadd.f32 0.0, %v7841
      %7843 = vmatmul.f32.gmra.mxu0 %v7732
      %v7844 = vpop.f32.mrf.mxu0
      %v7845 = vadd.f32 0.0, %v7844
      %7846 = vmatmul.f32.gmra.mxu0 %v7735
      %v7847 = vpop.f32.mrf.mxu0
      %v7848 = vadd.f32 0.0, %v7847
      %7849 = vmatmul.f32.gmra.mxu0 %v7738
      %v7850 = vpop.f32.mrf.mxu0
      %v7851 = vadd.f32 0.0, %v7850
      %7852 = vmatmul.f32.gmra.mxu0 %v7741
      %v7853 = vpop.f32.mrf.mxu0
      %v7854 = vadd.f32 0.0, %v7853
      %7855 = vmatmul.f32.gmra.mxu0 %v7744
      %v7856 = vpop.f32.mrf.mxu0
      %v7857 = vadd.f32 0.0, %v7856
      %7858 = vmatmul.f32.gmra.mxu0 %v7747
      %v7859 = vpop.f32.mrf.mxu0
      %v7860 = vadd.f32 0.0, %v7859
      %7861 = vmatmul.f32.gmra.mxu0 %v7750
      %v7862 = vpop.f32.mrf.mxu0
      %v7863 = vadd.f32 0.0, %v7862
      %7864 = vmatmul.f32.gmra.mxu0 %v7753
      %v7865 = vpop.f32.mrf.mxu0
      %v7866 = vadd.f32 0.0, %v7865
      %7867 = vmatmul.f32.gmra.mxu0 %v7756
      %v7868 = vpop.f32.mrf.mxu0
      %v7869 = vadd.f32 0.0, %v7868
      %7870 = vdwg.mxu0
      %v7871 = vadd.f32 %v7596, %v7776
      %v7872 = vadd.f32 %v7597, %v7779
      %v7873 = vadd.f32 %v7598, %v7782
      %v7874 = vadd.f32 %v7599, %v7785
      %v7875 = vadd.f32 %v7600, %v7788
      %v7876 = vadd.f32 %v7601, %v7791
      %v7877 = vadd.f32 %v7602, %v7794
      %v7878 = vadd.f32 %v7603, %v7797
      %v7879 = vadd.f32 %v7604, %v7800
      %v7880 = vadd.f32 %v7605, %v7803
      %v7881 = vadd.f32 %v7606, %v7806
      %v7882 = vadd.f32 %v7607, %v7809
      %v7883 = vadd.f32 %v7608, %v7812
      %v7884 = vadd.f32 %v7609, %v7815
      %v7885 = vadd.f32 %v7610, %v7818
      %v7886 = vadd.f32 %v7611, %v7821
      %v7887 = vadd.f32 %v7612, %v7824
      %v7888 = vadd.f32 %v7613, %v7827
      %v7889 = vadd.f32 %v7614, %v7830
      %v7890 = vadd.f32 %v7615, %v7833
      %v7891 = vadd.f32 %v7616, %v7836
      %v7892 = vadd.f32 %v7617, %v7839
      %v7893 = vadd.f32 %v7618, %v7842
      %v7894 = vadd.f32 %v7619, %v7845
      %v7895 = vadd.f32 %v7620, %v7848
      %v7896 = vadd.f32 %v7621, %v7851
      %v7897 = vadd.f32 %v7622, %v7854
      %v7898 = vadd.f32 %v7623, %v7857
      %v7899 = vadd.f32 %v7624, %v7860
      %v7900 = vadd.f32 %v7625, %v7863
      %v7901 = vadd.f32 %v7626, %v7866
      %v7902 = vadd.f32 %v7627, %v7869
      %v7903 = vld [vmem:[%s4903 + $0x1] sm:$0xff]
      %v7904 = vld [vmem:[%s4903 + $0x9] sm:$0xff]
      %v7905 = vld [vmem:[%s4903 + $0x19] sm:$0xff]
      %v7906 = vld [vmem:[%s4903 + $0x21] sm:$0xff]
      %v7907 = vld [vmem:[%s4903 + $0x31] sm:$0xff]
      %v7908 = vld [vmem:[%s4903 + $0x39] sm:$0xff]
      %v7909 = vld [vmem:[%s4903 + $0x49] sm:$0xff]
      %v7910 = vld [vmem:[%s4903 + $0x51] sm:$0xff]
      %v7911 = vld [vmem:[%s4903 + $0x61] sm:$0xff]
      %v7912 = vld [vmem:[%s4903 + $0x69] sm:$0xff]
      %v7913 = vld [vmem:[%s4903 + $0x79] sm:$0xff]
      %v7914 = vld [vmem:[%s4903 + $0x81] sm:$0xff]
      %v7915 = vld [vmem:[%s4903 + $0x91] sm:$0xff]
      %v7916 = vld [vmem:[%s4903 + $0x99] sm:$0xff]
      %v7917 = vld [vmem:[%s4903 + $0xa9] sm:$0xff]
      %v7918 = vld [vmem:[%s4903 + $0xb1] sm:$0xff]
      %v7919 = vld [vmem:[%s4903 + $0xc1] sm:$0xff]
      %v7920 = vld [vmem:[%s4903 + $0xc9] sm:$0xff]
      %v7921 = vld [vmem:[%s4903 + $0xd9] sm:$0xff]
      %v7922 = vld [vmem:[%s4903 + $0xe1] sm:$0xff]
      %v7923 = vld [vmem:[%s4903 + $0xf1] sm:$0xff]
      %v7924 = vld [vmem:[%s4903 + $0xf9] sm:$0xff]
      %v7925 = vld [vmem:[%s4903 + $0x109] sm:$0xff]
      %v7926 = vld [vmem:[%s4903 + $0x111] sm:$0xff]
      %v7927 = vld [vmem:[%s4903 + $0x121] sm:$0xff]
      %v7928 = vld [vmem:[%s4903 + $0x129] sm:$0xff]
      %v7929 = vld [vmem:[%s4903 + $0x139] sm:$0xff]
      %v7930 = vld [vmem:[%s4903 + $0x141] sm:$0xff]
      %v7931 = vld [vmem:[%s4903 + $0x151] sm:$0xff]
      %v7932 = vld [vmem:[%s4903 + $0x159] sm:$0xff]
      %v7933 = vld [vmem:[%s4903 + $0x169] sm:$0xff]
      %v7934 = vld [vmem:[%s4903 + $0x171] sm:$0xff]
      %s7935 = scalar_lea.vmem %s5, 56
      %v7936 = vld [vmem:[%s7935] sm:$0xff]
      %v7938 = vsel %vm3229, %v7903, 0
      %v7941 = vsel %vm3229, %v7904, 0
      %v7944 = vsel %vm3229, %v7905, 0
      %v7947 = vsel %vm3229, %v7906, 0
      %v7950 = vsel %vm3229, %v7907, 0
      %v7953 = vsel %vm3229, %v7908, 0
      %v7956 = vsel %vm3229, %v7909, 0
      %v7959 = vsel %vm3229, %v7910, 0
      %v7962 = vsel %vm3229, %v7911, 0
      %v7965 = vsel %vm3229, %v7912, 0
      %v7968 = vsel %vm3229, %v7913, 0
      %v7971 = vsel %vm3229, %v7914, 0
      %v7974 = vsel %vm3229, %v7915, 0
      %v7977 = vsel %vm3229, %v7916, 0
      %v7980 = vsel %vm3229, %v7917, 0
      %v7983 = vsel %vm3229, %v7918, 0
      %v7986 = vsel %vm3229, %v7919, 0
      %v7989 = vsel %vm3229, %v7920, 0
      %v7992 = vsel %vm3229, %v7921, 0
      %v7995 = vsel %vm3229, %v7922, 0
      %v7998 = vsel %vm3229, %v7923, 0
      %v8001 = vsel %vm3229, %v7924, 0
      %v8004 = vsel %vm3229, %v7925, 0
      %v8007 = vsel %vm3229, %v7926, 0
      %v8010 = vsel %vm3229, %v7927, 0
      %v8013 = vsel %vm3229, %v7928, 0
      %v8016 = vsel %vm3229, %v7929, 0
      %v8019 = vsel %vm3229, %v7930, 0
      %v8022 = vsel %vm3229, %v7931, 0
      %v8025 = vsel %vm3229, %v7932, 0
      %v8028 = vsel %vm3229, %v7933, 0
      %v8031 = vsel %vm3229, %v7934, 0
      %8033 = vmatpush.msra.mxu0 0.0
      %8034 = vmatpush.msra.mxu0 0.0
      %8035 = vmatpush.msra.mxu0 0.0
      %8036 = vmatpush.msra.mxu0 0.0
      %8037 = vmatpush.msra.mxu0 0.0
      %8038 = vmatpush.msra.mxu0 0.0
      %8039 = vmatpush.msra.mxu0 0.0
      %8040 = vmatpush.msra.mxu0 0.0
      %8041 = vmatpush.msra.mxu0 0.0
      %8042 = vmatpush.msra.mxu0 0.0
      %8043 = vmatpush.msra.mxu0 0.0
      %8044 = vmatpush.msra.mxu0 0.0
      %8045 = vmatpush.msra.mxu0 0.0
      %8046 = vmatpush.msra.mxu0 0.0
      %8047 = vmatpush.msra.mxu0 0.0
      %8048 = vmatpush.msra.mxu0 %v7936
      %8049 = vmatmul.f32.gmra.mxu0 %v7938
      %v8050 = vpop.f32.mrf.mxu0
      %v8051 = vadd.f32 0.0, %v8050
      %8052 = vmatmul.f32.gmra.mxu0 %v7941
      %v8053 = vpop.f32.mrf.mxu0
      %v8054 = vadd.f32 0.0, %v8053
      %8055 = vmatmul.f32.gmra.mxu0 %v7944
      %v8056 = vpop.f32.mrf.mxu0
      %v8057 = vadd.f32 0.0, %v8056
      %8058 = vmatmul.f32.gmra.mxu0 %v7947
      %v8059 = vpop.f32.mrf.mxu0
      %v8060 = vadd.f32 0.0, %v8059
      %8061 = vmatmul.f32.gmra.mxu0 %v7950
      %v8062 = vpop.f32.mrf.mxu0
      %v8063 = vadd.f32 0.0, %v8062
      %8064 = vmatmul.f32.gmra.mxu0 %v7953
      %v8065 = vpop.f32.mrf.mxu0
      %v8066 = vadd.f32 0.0, %v8065
      %8067 = vmatmul.f32.gmra.mxu0 %v7956
      %v8068 = vpop.f32.mrf.mxu0
      %v8069 = vadd.f32 0.0, %v8068
      %8070 = vmatmul.f32.gmra.mxu0 %v7959
      %v8071 = vpop.f32.mrf.mxu0
      %v8072 = vadd.f32 0.0, %v8071
      %8073 = vmatmul.f32.gmra.mxu0 %v7962
      %v8074 = vpop.f32.mrf.mxu0
      %v8075 = vadd.f32 0.0, %v8074
      %8076 = vmatmul.f32.gmra.mxu0 %v7965
      %v8077 = vpop.f32.mrf.mxu0
      %v8078 = vadd.f32 0.0, %v8077
      %8079 = vmatmul.f32.gmra.mxu0 %v7968
      %v8080 = vpop.f32.mrf.mxu0
      %v8081 = vadd.f32 0.0, %v8080
      %8082 = vmatmul.f32.gmra.mxu0 %v7971
      %v8083 = vpop.f32.mrf.mxu0
      %v8084 = vadd.f32 0.0, %v8083
      %8085 = vmatmul.f32.gmra.mxu0 %v7974
      %v8086 = vpop.f32.mrf.mxu0
      %v8087 = vadd.f32 0.0, %v8086
      %8088 = vmatmul.f32.gmra.mxu0 %v7977
      %v8089 = vpop.f32.mrf.mxu0
      %v8090 = vadd.f32 0.0, %v8089
      %8091 = vmatmul.f32.gmra.mxu0 %v7980
      %v8092 = vpop.f32.mrf.mxu0
      %v8093 = vadd.f32 0.0, %v8092
      %8094 = vmatmul.f32.gmra.mxu0 %v7983
      %v8095 = vpop.f32.mrf.mxu0
      %v8096 = vadd.f32 0.0, %v8095
      %8097 = vmatmul.f32.gmra.mxu0 %v7986
      %v8098 = vpop.f32.mrf.mxu0
      %v8099 = vadd.f32 0.0, %v8098
      %8100 = vmatmul.f32.gmra.mxu0 %v7989
      %v8101 = vpop.f32.mrf.mxu0
      %v8102 = vadd.f32 0.0, %v8101
      %8103 = vmatmul.f32.gmra.mxu0 %v7992
      %v8104 = vpop.f32.mrf.mxu0
      %v8105 = vadd.f32 0.0, %v8104
      %8106 = vmatmul.f32.gmra.mxu0 %v7995
      %v8107 = vpop.f32.mrf.mxu0
      %v8108 = vadd.f32 0.0, %v8107
      %8109 = vmatmul.f32.gmra.mxu0 %v7998
      %v8110 = vpop.f32.mrf.mxu0
      %v8111 = vadd.f32 0.0, %v8110
      %8112 = vmatmul.f32.gmra.mxu0 %v8001
      %v8113 = vpop.f32.mrf.mxu0
      %v8114 = vadd.f32 0.0, %v8113
      %8115 = vmatmul.f32.gmra.mxu0 %v8004
      %v8116 = vpop.f32.mrf.mxu0
      %v8117 = vadd.f32 0.0, %v8116
      %8118 = vmatmul.f32.gmra.mxu0 %v8007
      %v8119 = vpop.f32.mrf.mxu0
      %v8120 = vadd.f32 0.0, %v8119
      %8121 = vmatmul.f32.gmra.mxu0 %v8010
      %v8122 = vpop.f32.mrf.mxu0
      %v8123 = vadd.f32 0.0, %v8122
      %8124 = vmatmul.f32.gmra.mxu0 %v8013
      %v8125 = vpop.f32.mrf.mxu0
      %v8126 = vadd.f32 0.0, %v8125
      %8127 = vmatmul.f32.gmra.mxu0 %v8016
      %v8128 = vpop.f32.mrf.mxu0
      %v8129 = vadd.f32 0.0, %v8128
      %8130 = vmatmul.f32.gmra.mxu0 %v8019
      %v8131 = vpop.f32.mrf.mxu0
      %v8132 = vadd.f32 0.0, %v8131
      %8133 = vmatmul.f32.gmra.mxu0 %v8022
      %v8134 = vpop.f32.mrf.mxu0
      %v8135 = vadd.f32 0.0, %v8134
      %8136 = vmatmul.f32.gmra.mxu0 %v8025
      %v8137 = vpop.f32.mrf.mxu0
      %v8138 = vadd.f32 0.0, %v8137
      %8139 = vmatmul.f32.gmra.mxu0 %v8028
      %v8140 = vpop.f32.mrf.mxu0
      %v8141 = vadd.f32 0.0, %v8140
      %8142 = vmatmul.f32.gmra.mxu0 %v8031
      %v8143 = vpop.f32.mrf.mxu0
      %v8144 = vadd.f32 0.0, %v8143
      %8145 = vdwg.mxu0
      %v8146 = vadd.f32 %v7871, %v8051
      %v8147 = vadd.f32 %v7872, %v8054
      %v8148 = vadd.f32 %v7873, %v8057
      %v8149 = vadd.f32 %v7874, %v8060
      %v8150 = vadd.f32 %v7875, %v8063
      %v8151 = vadd.f32 %v7876, %v8066
      %v8152 = vadd.f32 %v7877, %v8069
      %v8153 = vadd.f32 %v7878, %v8072
      %v8154 = vadd.f32 %v7879, %v8075
      %v8155 = vadd.f32 %v7880, %v8078
      %v8156 = vadd.f32 %v7881, %v8081
      %v8157 = vadd.f32 %v7882, %v8084
      %v8158 = vadd.f32 %v7883, %v8087
      %v8159 = vadd.f32 %v7884, %v8090
      %v8160 = vadd.f32 %v7885, %v8093
      %v8161 = vadd.f32 %v7886, %v8096
      %v8162 = vadd.f32 %v7887, %v8099
      %v8163 = vadd.f32 %v7888, %v8102
      %v8164 = vadd.f32 %v7889, %v8105
      %v8165 = vadd.f32 %v7890, %v8108
      %v8166 = vadd.f32 %v7891, %v8111
      %v8167 = vadd.f32 %v7892, %v8114
      %v8168 = vadd.f32 %v7893, %v8117
      %v8169 = vadd.f32 %v7894, %v8120
      %v8170 = vadd.f32 %v7895, %v8123
      %v8171 = vadd.f32 %v7896, %v8126
      %v8172 = vadd.f32 %v7897, %v8129
      %v8173 = vadd.f32 %v7898, %v8132
      %v8174 = vadd.f32 %v7899, %v8135
      %v8175 = vadd.f32 %v7900, %v8138
      %v8176 = vadd.f32 %v7901, %v8141
      %v8177 = vadd.f32 %v7902, %v8144
      %v8178 = vld [vmem:[%s4903 + $0x2] sm:$0xff]
      %v8179 = vld [vmem:[%s4903 + $0xa] sm:$0xff]
      %v8180 = vld [vmem:[%s4903 + $0x1a] sm:$0xff]
      %v8181 = vld [vmem:[%s4903 + $0x22] sm:$0xff]
      %v8182 = vld [vmem:[%s4903 + $0x32] sm:$0xff]
      %v8183 = vld [vmem:[%s4903 + $0x3a] sm:$0xff]
      %v8184 = vld [vmem:[%s4903 + $0x4a] sm:$0xff]
      %v8185 = vld [vmem:[%s4903 + $0x52] sm:$0xff]
      %v8186 = vld [vmem:[%s4903 + $0x62] sm:$0xff]
      %v8187 = vld [vmem:[%s4903 + $0x6a] sm:$0xff]
      %v8188 = vld [vmem:[%s4903 + $0x7a] sm:$0xff]
      %v8189 = vld [vmem:[%s4903 + $0x82] sm:$0xff]
      %v8190 = vld [vmem:[%s4903 + $0x92] sm:$0xff]
      %v8191 = vld [vmem:[%s4903 + $0x9a] sm:$0xff]
      %v8192 = vld [vmem:[%s4903 + $0xaa] sm:$0xff]
      %v8193 = vld [vmem:[%s4903 + $0xb2] sm:$0xff]
      %v8194 = vld [vmem:[%s4903 + $0xc2] sm:$0xff]
      %v8195 = vld [vmem:[%s4903 + $0xca] sm:$0xff]
      %v8196 = vld [vmem:[%s4903 + $0xda] sm:$0xff]
      %v8197 = vld [vmem:[%s4903 + $0xe2] sm:$0xff]
      %v8198 = vld [vmem:[%s4903 + $0xf2] sm:$0xff]
      %v8199 = vld [vmem:[%s4903 + $0xfa] sm:$0xff]
      %v8200 = vld [vmem:[%s4903 + $0x10a] sm:$0xff]
      %v8201 = vld [vmem:[%s4903 + $0x112] sm:$0xff]
      %v8202 = vld [vmem:[%s4903 + $0x122] sm:$0xff]
      %v8203 = vld [vmem:[%s4903 + $0x12a] sm:$0xff]
      %v8204 = vld [vmem:[%s4903 + $0x13a] sm:$0xff]
      %v8205 = vld [vmem:[%s4903 + $0x142] sm:$0xff]
      %v8206 = vld [vmem:[%s4903 + $0x152] sm:$0xff]
      %v8207 = vld [vmem:[%s4903 + $0x15a] sm:$0xff]
      %v8208 = vld [vmem:[%s4903 + $0x16a] sm:$0xff]
      %v8209 = vld [vmem:[%s4903 + $0x172] sm:$0xff]
      %s8210 = scalar_lea.vmem %s5, 64
      %v8211 = vld [vmem:[%s8210] sm:$0xff]
      %v8213 = vsel %vm3229, %v8178, 0
      %v8216 = vsel %vm3229, %v8179, 0
      %v8219 = vsel %vm3229, %v8180, 0
      %v8222 = vsel %vm3229, %v8181, 0
      %v8225 = vsel %vm3229, %v8182, 0
      %v8228 = vsel %vm3229, %v8183, 0
      %v8231 = vsel %vm3229, %v8184, 0
      %v8234 = vsel %vm3229, %v8185, 0
      %v8237 = vsel %vm3229, %v8186, 0
      %v8240 = vsel %vm3229, %v8187, 0
      %v8243 = vsel %vm3229, %v8188, 0
      %v8246 = vsel %vm3229, %v8189, 0
      %v8249 = vsel %vm3229, %v8190, 0
      %v8252 = vsel %vm3229, %v8191, 0
      %v8255 = vsel %vm3229, %v8192, 0
      %v8258 = vsel %vm3229, %v8193, 0
      %v8261 = vsel %vm3229, %v8194, 0
      %v8264 = vsel %vm3229, %v8195, 0
      %v8267 = vsel %vm3229, %v8196, 0
      %v8270 = vsel %vm3229, %v8197, 0
      %v8273 = vsel %vm3229, %v8198, 0
      %v8276 = vsel %vm3229, %v8199, 0
      %v8279 = vsel %vm3229, %v8200, 0
      %v8282 = vsel %vm3229, %v8201, 0
      %v8285 = vsel %vm3229, %v8202, 0
      %v8288 = vsel %vm3229, %v8203, 0
      %v8291 = vsel %vm3229, %v8204, 0
      %v8294 = vsel %vm3229, %v8205, 0
      %v8297 = vsel %vm3229, %v8206, 0
      %v8300 = vsel %vm3229, %v8207, 0
      %v8303 = vsel %vm3229, %v8208, 0
      %v8306 = vsel %vm3229, %v8209, 0
      %8308 = vmatpush.msra.mxu0 0.0
      %8309 = vmatpush.msra.mxu0 0.0
      %8310 = vmatpush.msra.mxu0 0.0
      %8311 = vmatpush.msra.mxu0 0.0
      %8312 = vmatpush.msra.mxu0 0.0
      %8313 = vmatpush.msra.mxu0 0.0
      %8314 = vmatpush.msra.mxu0 0.0
      %8315 = vmatpush.msra.mxu0 0.0
      %8316 = vmatpush.msra.mxu0 0.0
      %8317 = vmatpush.msra.mxu0 0.0
      %8318 = vmatpush.msra.mxu0 0.0
      %8319 = vmatpush.msra.mxu0 0.0
      %8320 = vmatpush.msra.mxu0 0.0
      %8321 = vmatpush.msra.mxu0 0.0
      %8322 = vmatpush.msra.mxu0 0.0
      %8323 = vmatpush.msra.mxu0 %v8211
      %8324 = vmatmul.f32.gmra.mxu0 %v8213
      %v8325 = vpop.f32.mrf.mxu0
      %v8326 = vadd.f32 0.0, %v8325
      %8327 = vmatmul.f32.gmra.mxu0 %v8216
      %v8328 = vpop.f32.mrf.mxu0
      %v8329 = vadd.f32 0.0, %v8328
      %8330 = vmatmul.f32.gmra.mxu0 %v8219
      %v8331 = vpop.f32.mrf.mxu0
      %v8332 = vadd.f32 0.0, %v8331
      %8333 = vmatmul.f32.gmra.mxu0 %v8222
      %v8334 = vpop.f32.mrf.mxu0
      %v8335 = vadd.f32 0.0, %v8334
      %8336 = vmatmul.f32.gmra.mxu0 %v8225
      %v8337 = vpop.f32.mrf.mxu0
      %v8338 = vadd.f32 0.0, %v8337
      %8339 = vmatmul.f32.gmra.mxu0 %v8228
      %v8340 = vpop.f32.mrf.mxu0
      %v8341 = vadd.f32 0.0, %v8340
      %8342 = vmatmul.f32.gmra.mxu0 %v8231
      %v8343 = vpop.f32.mrf.mxu0
      %v8344 = vadd.f32 0.0, %v8343
      %8345 = vmatmul.f32.gmra.mxu0 %v8234
      %v8346 = vpop.f32.mrf.mxu0
      %v8347 = vadd.f32 0.0, %v8346
      %8348 = vmatmul.f32.gmra.mxu0 %v8237
      %v8349 = vpop.f32.mrf.mxu0
      %v8350 = vadd.f32 0.0, %v8349
      %8351 = vmatmul.f32.gmra.mxu0 %v8240
      %v8352 = vpop.f32.mrf.mxu0
      %v8353 = vadd.f32 0.0, %v8352
      %8354 = vmatmul.f32.gmra.mxu0 %v8243
      %v8355 = vpop.f32.mrf.mxu0
      %v8356 = vadd.f32 0.0, %v8355
      %8357 = vmatmul.f32.gmra.mxu0 %v8246
      %v8358 = vpop.f32.mrf.mxu0
      %v8359 = vadd.f32 0.0, %v8358
      %8360 = vmatmul.f32.gmra.mxu0 %v8249
      %v8361 = vpop.f32.mrf.mxu0
      %v8362 = vadd.f32 0.0, %v8361
      %8363 = vmatmul.f32.gmra.mxu0 %v8252
      %v8364 = vpop.f32.mrf.mxu0
      %v8365 = vadd.f32 0.0, %v8364
      %8366 = vmatmul.f32.gmra.mxu0 %v8255
      %v8367 = vpop.f32.mrf.mxu0
      %v8368 = vadd.f32 0.0, %v8367
      %8369 = vmatmul.f32.gmra.mxu0 %v8258
      %v8370 = vpop.f32.mrf.mxu0
      %v8371 = vadd.f32 0.0, %v8370
      %8372 = vmatmul.f32.gmra.mxu0 %v8261
      %v8373 = vpop.f32.mrf.mxu0
      %v8374 = vadd.f32 0.0, %v8373
      %8375 = vmatmul.f32.gmra.mxu0 %v8264
      %v8376 = vpop.f32.mrf.mxu0
      %v8377 = vadd.f32 0.0, %v8376
      %8378 = vmatmul.f32.gmra.mxu0 %v8267
      %v8379 = vpop.f32.mrf.mxu0
      %v8380 = vadd.f32 0.0, %v8379
      %8381 = vmatmul.f32.gmra.mxu0 %v8270
      %v8382 = vpop.f32.mrf.mxu0
      %v8383 = vadd.f32 0.0, %v8382
      %8384 = vmatmul.f32.gmra.mxu0 %v8273
      %v8385 = vpop.f32.mrf.mxu0
      %v8386 = vadd.f32 0.0, %v8385
      %8387 = vmatmul.f32.gmra.mxu0 %v8276
      %v8388 = vpop.f32.mrf.mxu0
      %v8389 = vadd.f32 0.0, %v8388
      %8390 = vmatmul.f32.gmra.mxu0 %v8279
      %v8391 = vpop.f32.mrf.mxu0
      %v8392 = vadd.f32 0.0, %v8391
      %8393 = vmatmul.f32.gmra.mxu0 %v8282
      %v8394 = vpop.f32.mrf.mxu0
      %v8395 = vadd.f32 0.0, %v8394
      %8396 = vmatmul.f32.gmra.mxu0 %v8285
      %v8397 = vpop.f32.mrf.mxu0
      %v8398 = vadd.f32 0.0, %v8397
      %8399 = vmatmul.f32.gmra.mxu0 %v8288
      %v8400 = vpop.f32.mrf.mxu0
      %v8401 = vadd.f32 0.0, %v8400
      %8402 = vmatmul.f32.gmra.mxu0 %v8291
      %v8403 = vpop.f32.mrf.mxu0
      %v8404 = vadd.f32 0.0, %v8403
      %8405 = vmatmul.f32.gmra.mxu0 %v8294
      %v8406 = vpop.f32.mrf.mxu0
      %v8407 = vadd.f32 0.0, %v8406
      %8408 = vmatmul.f32.gmra.mxu0 %v8297
      %v8409 = vpop.f32.mrf.mxu0
      %v8410 = vadd.f32 0.0, %v8409
      %8411 = vmatmul.f32.gmra.mxu0 %v8300
      %v8412 = vpop.f32.mrf.mxu0
      %v8413 = vadd.f32 0.0, %v8412
      %8414 = vmatmul.f32.gmra.mxu0 %v8303
      %v8415 = vpop.f32.mrf.mxu0
      %v8416 = vadd.f32 0.0, %v8415
      %8417 = vmatmul.f32.gmra.mxu0 %v8306
      %v8418 = vpop.f32.mrf.mxu0
      %v8419 = vadd.f32 0.0, %v8418
      %8420 = vdwg.mxu0
      %v8421 = vadd.f32 %v8146, %v8326
      %v8422 = vadd.f32 %v8147, %v8329
      %v8423 = vadd.f32 %v8148, %v8332
      %v8424 = vadd.f32 %v8149, %v8335
      %v8425 = vadd.f32 %v8150, %v8338
      %v8426 = vadd.f32 %v8151, %v8341
      %v8427 = vadd.f32 %v8152, %v8344
      %v8428 = vadd.f32 %v8153, %v8347
      %v8429 = vadd.f32 %v8154, %v8350
      %v8430 = vadd.f32 %v8155, %v8353
      %v8431 = vadd.f32 %v8156, %v8356
      %v8432 = vadd.f32 %v8157, %v8359
      %v8433 = vadd.f32 %v8158, %v8362
      %v8434 = vadd.f32 %v8159, %v8365
      %v8435 = vadd.f32 %v8160, %v8368
      %v8436 = vadd.f32 %v8161, %v8371
      %v8437 = vadd.f32 %v8162, %v8374
      %v8438 = vadd.f32 %v8163, %v8377
      %v8439 = vadd.f32 %v8164, %v8380
      %v8440 = vadd.f32 %v8165, %v8383
      %v8441 = vadd.f32 %v8166, %v8386
      %v8442 = vadd.f32 %v8167, %v8389
      %v8443 = vadd.f32 %v8168, %v8392
      %v8444 = vadd.f32 %v8169, %v8395
      %v8445 = vadd.f32 %v8170, %v8398
      %v8446 = vadd.f32 %v8171, %v8401
      %v8447 = vadd.f32 %v8172, %v8404
      %v8448 = vadd.f32 %v8173, %v8407
      %v8449 = vadd.f32 %v8174, %v8410
      %v8450 = vadd.f32 %v8175, %v8413
      %v8451 = vadd.f32 %v8176, %v8416
      %v8452 = vadd.f32 %v8177, %v8419
      %v8453 = vld [vmem:[%s6] sm:$0x1]
      %v8455 = vperm.slane %v8453, 0
      %v8457 = vadd.f32 %v8421, %v8455
      %v8458 = vadd.f32 %v8422, %v8455
      %v8459 = vadd.f32 %v8423, %v8455
      %v8460 = vadd.f32 %v8424, %v8455
      %v8461 = vadd.f32 %v8425, %v8455
      %v8462 = vadd.f32 %v8426, %v8455
      %v8463 = vadd.f32 %v8427, %v8455
      %v8464 = vadd.f32 %v8428, %v8455
      %v8465 = vadd.f32 %v8429, %v8455
      %v8466 = vadd.f32 %v8430, %v8455
      %v8467 = vadd.f32 %v8431, %v8455
      %v8468 = vadd.f32 %v8432, %v8455
      %v8469 = vadd.f32 %v8433, %v8455
      %v8470 = vadd.f32 %v8434, %v8455
      %v8471 = vadd.f32 %v8435, %v8455
      %v8472 = vadd.f32 %v8436, %v8455
      %v8473 = vadd.f32 %v8437, %v8455
      %v8474 = vadd.f32 %v8438, %v8455
      %v8475 = vadd.f32 %v8439, %v8455
      %v8476 = vadd.f32 %v8440, %v8455
      %v8477 = vadd.f32 %v8441, %v8455
      %v8478 = vadd.f32 %v8442, %v8455
      %v8479 = vadd.f32 %v8443, %v8455
      %v8480 = vadd.f32 %v8444, %v8455
      %v8481 = vadd.f32 %v8445, %v8455
      %v8482 = vadd.f32 %v8446, %v8455
      %v8483 = vadd.f32 %v8447, %v8455
      %v8484 = vadd.f32 %v8448, %v8455
      %v8485 = vadd.f32 %v8449, %v8455
      %v8486 = vadd.f32 %v8450, %v8455
      %v8487 = vadd.f32 %v8451, %v8455
      %v8488 = vadd.f32 %v8452, %v8455
      %vm8489 = vcmp.gt.f32.partialorder %v8457, 0.0
      %vm8490 = vcmp.gt.f32.partialorder %v8458, 0.0
      %vm8491 = vcmp.gt.f32.partialorder %v8459, 0.0
      %vm8492 = vcmp.gt.f32.partialorder %v8460, 0.0
      %vm8493 = vcmp.gt.f32.partialorder %v8461, 0.0
      %vm8494 = vcmp.gt.f32.partialorder %v8462, 0.0
      %vm8495 = vcmp.gt.f32.partialorder %v8463, 0.0
      %vm8496 = vcmp.gt.f32.partialorder %v8464, 0.0
      %vm8497 = vcmp.gt.f32.partialorder %v8465, 0.0
      %vm8498 = vcmp.gt.f32.partialorder %v8466, 0.0
      %vm8499 = vcmp.gt.f32.partialorder %v8467, 0.0
      %vm8500 = vcmp.gt.f32.partialorder %v8468, 0.0
      %vm8501 = vcmp.gt.f32.partialorder %v8469, 0.0
      %vm8502 = vcmp.gt.f32.partialorder %v8470, 0.0
      %vm8503 = vcmp.gt.f32.partialorder %v8471, 0.0
      %vm8504 = vcmp.gt.f32.partialorder %v8472, 0.0
      %vm8505 = vcmp.gt.f32.partialorder %v8473, 0.0
      %vm8506 = vcmp.gt.f32.partialorder %v8474, 0.0
      %vm8507 = vcmp.gt.f32.partialorder %v8475, 0.0
      %vm8508 = vcmp.gt.f32.partialorder %v8476, 0.0
      %vm8509 = vcmp.gt.f32.partialorder %v8477, 0.0
      %vm8510 = vcmp.gt.f32.partialorder %v8478, 0.0
      %vm8511 = vcmp.gt.f32.partialorder %v8479, 0.0
      %vm8512 = vcmp.gt.f32.partialorder %v8480, 0.0
      %vm8513 = vcmp.gt.f32.partialorder %v8481, 0.0
      %vm8514 = vcmp.gt.f32.partialorder %v8482, 0.0
      %vm8515 = vcmp.gt.f32.partialorder %v8483, 0.0
      %vm8516 = vcmp.gt.f32.partialorder %v8484, 0.0
      %vm8517 = vcmp.gt.f32.partialorder %v8485, 0.0
      %vm8518 = vcmp.gt.f32.partialorder %v8486, 0.0
      %vm8519 = vcmp.gt.f32.partialorder %v8487, 0.0
      %vm8520 = vcmp.gt.f32.partialorder %v8488, 0.0
      %v8521 = vmin.f32 %v8457, 0.0
      %v8522 = vmin.f32 %v8458, 0.0
      %v8523 = vmin.f32 %v8459, 0.0
      %v8524 = vmin.f32 %v8460, 0.0
      %v8525 = vmin.f32 %v8461, 0.0
      %v8526 = vmin.f32 %v8462, 0.0
      %v8527 = vmin.f32 %v8463, 0.0
      %v8528 = vmin.f32 %v8464, 0.0
      %v8529 = vmin.f32 %v8465, 0.0
      %v8530 = vmin.f32 %v8466, 0.0
      %v8531 = vmin.f32 %v8467, 0.0
      %v8532 = vmin.f32 %v8468, 0.0
      %v8533 = vmin.f32 %v8469, 0.0
      %v8534 = vmin.f32 %v8470, 0.0
      %v8535 = vmin.f32 %v8471, 0.0
      %v8536 = vmin.f32 %v8472, 0.0
      %v8537 = vmin.f32 %v8473, 0.0
      %v8538 = vmin.f32 %v8474, 0.0
      %v8539 = vmin.f32 %v8475, 0.0
      %v8540 = vmin.f32 %v8476, 0.0
      %v8541 = vmin.f32 %v8477, 0.0
      %v8542 = vmin.f32 %v8478, 0.0
      %v8543 = vmin.f32 %v8479, 0.0
      %v8544 = vmin.f32 %v8480, 0.0
      %v8545 = vmin.f32 %v8481, 0.0
      %v8546 = vmin.f32 %v8482, 0.0
      %v8547 = vmin.f32 %v8483, 0.0
      %v8548 = vmin.f32 %v8484, 0.0
      %v8549 = vmin.f32 %v8485, 0.0
      %v8550 = vmin.f32 %v8486, 0.0
      %v8551 = vmin.f32 %v8487, 0.0
      %v8552 = vmin.f32 %v8488, 0.0
      %v8553 = vmul.f32 %v8521, 1.442695
      %v8554 = vpow.pop %v8553
      %v8555 = vmul.f32 %v8522, 1.442695
      %v8556 = vpow.pop %v8555
      %v8557 = vmul.f32 %v8523, 1.442695
      %v8558 = vpow.pop %v8557
      %v8559 = vmul.f32 %v8524, 1.442695
      %v8560 = vpow.pop %v8559
      %v8561 = vmul.f32 %v8525, 1.442695
      %v8562 = vpow.pop %v8561
      %v8563 = vmul.f32 %v8526, 1.442695
      %v8564 = vpow.pop %v8563
      %v8565 = vmul.f32 %v8527, 1.442695
      %v8566 = vpow.pop %v8565
      %v8567 = vmul.f32 %v8528, 1.442695
      %v8568 = vpow.pop %v8567
      %v8569 = vmul.f32 %v8529, 1.442695
      %v8570 = vpow.pop %v8569
      %v8571 = vmul.f32 %v8530, 1.442695
      %v8572 = vpow.pop %v8571
      %v8573 = vmul.f32 %v8531, 1.442695
      %v8574 = vpow.pop %v8573
      %v8575 = vmul.f32 %v8532, 1.442695
      %v8576 = vpow.pop %v8575
      %v8577 = vmul.f32 %v8533, 1.442695
      %v8578 = vpow.pop %v8577
      %v8579 = vmul.f32 %v8534, 1.442695
      %v8580 = vpow.pop %v8579
      %v8581 = vmul.f32 %v8535, 1.442695
      %v8582 = vpow.pop %v8581
      %v8583 = vmul.f32 %v8536, 1.442695
      %v8584 = vpow.pop %v8583
      %v8585 = vmul.f32 %v8537, 1.442695
      %v8586 = vpow.pop %v8585
      %v8587 = vmul.f32 %v8538, 1.442695
      %v8588 = vpow.pop %v8587
      %v8589 = vmul.f32 %v8539, 1.442695
      %v8590 = vpow.pop %v8589
      %v8591 = vmul.f32 %v8540, 1.442695
      %v8592 = vpow.pop %v8591
      %v8593 = vmul.f32 %v8541, 1.442695
      %v8594 = vpow.pop %v8593
      %v8595 = vmul.f32 %v8542, 1.442695
      %v8596 = vpow.pop %v8595
      %v8597 = vmul.f32 %v8543, 1.442695
      %v8598 = vpow.pop %v8597
      %v8599 = vmul.f32 %v8544, 1.442695
      %v8600 = vpow.pop %v8599
      %v8601 = vmul.f32 %v8545, 1.442695
      %v8602 = vpow.pop %v8601
      %v8603 = vmul.f32 %v8546, 1.442695
      %v8604 = vpow.pop %v8603
      %v8605 = vmul.f32 %v8547, 1.442695
      %v8606 = vpow.pop %v8605
      %v8607 = vmul.f32 %v8548, 1.442695
      %v8608 = vpow.pop %v8607
      %v8609 = vmul.f32 %v8549, 1.442695
      %v8610 = vpow.pop %v8609
      %v8611 = vmul.f32 %v8550, 1.442695
      %v8612 = vpow.pop %v8611
      %v8613 = vmul.f32 %v8551, 1.442695
      %v8614 = vpow.pop %v8613
      %v8615 = vmul.f32 %v8552, 1.442695
      %v8616 = vpow.pop %v8615
      %v8617 = vsub.f32 %v8554, 1.0
      %v8618 = vsub.f32 %v8556, 1.0
      %v8619 = vsub.f32 %v8558, 1.0
      %v8620 = vsub.f32 %v8560, 1.0
      %v8621 = vsub.f32 %v8562, 1.0
      %v8622 = vsub.f32 %v8564, 1.0
      %v8623 = vsub.f32 %v8566, 1.0
      %v8624 = vsub.f32 %v8568, 1.0
      %v8625 = vsub.f32 %v8570, 1.0
      %v8626 = vsub.f32 %v8572, 1.0
      %v8627 = vsub.f32 %v8574, 1.0
      %v8628 = vsub.f32 %v8576, 1.0
      %v8629 = vsub.f32 %v8578, 1.0
      %v8630 = vsub.f32 %v8580, 1.0
      %v8631 = vsub.f32 %v8582, 1.0
      %v8632 = vsub.f32 %v8584, 1.0
      %v8633 = vsub.f32 %v8586, 1.0
      %v8634 = vsub.f32 %v8588, 1.0
      %v8635 = vsub.f32 %v8590, 1.0
      %v8636 = vsub.f32 %v8592, 1.0
      %v8637 = vsub.f32 %v8594, 1.0
      %v8638 = vsub.f32 %v8596, 1.0
      %v8639 = vsub.f32 %v8598, 1.0
      %v8640 = vsub.f32 %v8600, 1.0
      %v8641 = vsub.f32 %v8602, 1.0
      %v8642 = vsub.f32 %v8604, 1.0
      %v8643 = vsub.f32 %v8606, 1.0
      %v8644 = vsub.f32 %v8608, 1.0
      %v8645 = vsub.f32 %v8610, 1.0
      %v8646 = vsub.f32 %v8612, 1.0
      %v8647 = vsub.f32 %v8614, 1.0
      %v8648 = vsub.f32 %v8616, 1.0
      %v8649 = vsel %vm8489, %v8457, %v8617
      %v8650 = vsel %vm8490, %v8458, %v8618
      %v8651 = vsel %vm8491, %v8459, %v8619
      %v8652 = vsel %vm8492, %v8460, %v8620
      %v8653 = vsel %vm8493, %v8461, %v8621
      %v8654 = vsel %vm8494, %v8462, %v8622
      %v8655 = vsel %vm8495, %v8463, %v8623
      %v8656 = vsel %vm8496, %v8464, %v8624
      %v8657 = vsel %vm8497, %v8465, %v8625
      %v8658 = vsel %vm8498, %v8466, %v8626
      %v8659 = vsel %vm8499, %v8467, %v8627
      %v8660 = vsel %vm8500, %v8468, %v8628
      %v8661 = vsel %vm8501, %v8469, %v8629
      %v8662 = vsel %vm8502, %v8470, %v8630
      %v8663 = vsel %vm8503, %v8471, %v8631
      %v8664 = vsel %vm8504, %v8472, %v8632
      %v8665 = vsel %vm8505, %v8473, %v8633
      %v8666 = vsel %vm8506, %v8474, %v8634
      %v8667 = vsel %vm8507, %v8475, %v8635
      %v8668 = vsel %vm8508, %v8476, %v8636
      %v8669 = vsel %vm8509, %v8477, %v8637
      %v8670 = vsel %vm8510, %v8478, %v8638
      %v8671 = vsel %vm8511, %v8479, %v8639
      %v8672 = vsel %vm8512, %v8480, %v8640
      %v8673 = vsel %vm8513, %v8481, %v8641
      %v8674 = vsel %vm8514, %v8482, %v8642
      %v8675 = vsel %vm8515, %v8483, %v8643
      %v8676 = vsel %vm8516, %v8484, %v8644
      %v8677 = vsel %vm8517, %v8485, %v8645
      %v8678 = vsel %vm8518, %v8486, %v8646
      %v8679 = vsel %vm8519, %v8487, %v8647
      %v8680 = vsel %vm8520, %v8488, %v8648
      %v8681 = vadd.f32 %v8649, %v8651
      %v8682 = vadd.f32 %v8650, %v8652
      %v8683 = vadd.f32 %v8653, %v8655
      %v8684 = vadd.f32 %v8654, %v8656
      %v8685 = vadd.f32 %v8657, %v8659
      %v8686 = vadd.f32 %v8658, %v8660
      %v8687 = vadd.f32 %v8661, %v8663
      %v8688 = vadd.f32 %v8662, %v8664
      %v8689 = vadd.f32 %v8665, %v8667
      %v8690 = vadd.f32 %v8666, %v8668
      %v8691 = vadd.f32 %v8669, %v8671
      %v8692 = vadd.f32 %v8670, %v8672
      %v8693 = vadd.f32 %v8673, %v8675
      %v8694 = vadd.f32 %v8674, %v8676
      %v8695 = vadd.f32 %v8677, %v8679
      %v8696 = vadd.f32 %v8678, %v8680
      %8697 = vst.msk [vmem:[#allocation4] sm:$0xff] %vm3229, %v8681
      %8698 = vst.msk [vmem:[#allocation4 + $0x8] sm:$0xff] %vm3229, %v8682
      %8699 = vst.msk [vmem:[#allocation4 + $0x10] sm:$0xff] %vm3229, %v8683
      %8700 = vst.msk [vmem:[#allocation4 + $0x18] sm:$0xff] %vm3229, %v8684
      %8701 = vst.msk [vmem:[#allocation4 + $0x20] sm:$0xff] %vm3229, %v8685
      %8702 = vst.msk [vmem:[#allocation4 + $0x28] sm:$0xff] %vm3229, %v8686
      %8703 = vst.msk [vmem:[#allocation4 + $0x30] sm:$0xff] %vm3229, %v8687
      %8704 = vst.msk [vmem:[#allocation4 + $0x38] sm:$0xff] %vm3229, %v8688
      %8705 = vst.msk [vmem:[#allocation4 + $0x40] sm:$0xff] %vm3229, %v8689
      %8706 = vst.msk [vmem:[#allocation4 + $0x48] sm:$0xff] %vm3229, %v8690
      %8707 = vst.msk [vmem:[#allocation4 + $0x50] sm:$0xff] %vm3229, %v8691
      %8708 = vst.msk [vmem:[#allocation4 + $0x58] sm:$0xff] %vm3229, %v8692
      %8709 = vst.msk [vmem:[#allocation4 + $0x60] sm:$0xff] %vm3229, %v8693
      %8710 = vst.msk [vmem:[#allocation4 + $0x68] sm:$0xff] %vm3229, %v8694
      %8711 = vst.msk [vmem:[#allocation4 + $0x70] sm:$0xff] %vm3229, %v8695
      %8712 = vst.msk [vmem:[#allocation4 + $0x78] sm:$0xff] %vm3229, %v8696
      %v8713 = vld [vmem:[#allocation4] ss:$2 sm:$0xff]
      %s8714 = scalar_lea.vmem [#allocation4], 16
      %v8715 = vld [vmem:[%s8714] ss:$2 sm:$0xff]
      %s8716 = scalar_lea.vmem [#allocation4], 32
      %v8717 = vld [vmem:[%s8716] ss:$2 sm:$0xff]
      %s8718 = scalar_lea.vmem [#allocation4], 48
      %v8719 = vld [vmem:[%s8718] ss:$2 sm:$0xff]
      %s8720 = scalar_lea.vmem [#allocation4], 64
      %v8721 = vld [vmem:[%s8720] ss:$2 sm:$0xff]
      %s8722 = scalar_lea.vmem [#allocation4], 80
      %v8723 = vld [vmem:[%s8722] ss:$2 sm:$0xff]
      %s8724 = scalar_lea.vmem [#allocation4], 96
      %v8725 = vld [vmem:[%s8724] ss:$2 sm:$0xff]
      %s8726 = scalar_lea.vmem [#allocation4], 112
      %v8727 = vld [vmem:[%s8726] ss:$2 sm:$0xff]
      %s8728 = scalar_lea.vmem [#allocation4], 1
      %v8729 = vld [vmem:[%s8728] ss:$2 sm:$0xff]
      %s8730 = scalar_lea.vmem [#allocation4], 17
      %v8731 = vld [vmem:[%s8730] ss:$2 sm:$0xff]
      %s8732 = scalar_lea.vmem [#allocation4], 33
      %v8733 = vld [vmem:[%s8732] ss:$2 sm:$0xff]
      %s8734 = scalar_lea.vmem [#allocation4], 49
      %v8735 = vld [vmem:[%s8734] ss:$2 sm:$0xff]
      %s8736 = scalar_lea.vmem [#allocation4], 65
      %v8737 = vld [vmem:[%s8736] ss:$2 sm:$0xff]
      %s8738 = scalar_lea.vmem [#allocation4], 81
      %v8739 = vld [vmem:[%s8738] ss:$2 sm:$0xff]
      %s8740 = scalar_lea.vmem [#allocation4], 97
      %v8741 = vld [vmem:[%s8740] ss:$2 sm:$0xff]
      %s8742 = scalar_lea.vmem [#allocation4], 113
      %v8743 = vld [vmem:[%s8742] ss:$2 sm:$0xff]
      %v8744 = vadd.f32 %v8713, %v8729
      %v8745 = vadd.f32 %v8715, %v8731
      %v8746 = vadd.f32 %v8717, %v8733
      %v8747 = vadd.f32 %v8719, %v8735
      %v8748 = vadd.f32 %v8721, %v8737
      %v8749 = vadd.f32 %v8723, %v8739
      %v8750 = vadd.f32 %v8725, %v8741
      %v8751 = vadd.f32 %v8727, %v8743
      %v8752 = vmul.f32 %v8744, 0.25
      %v8753 = vmul.f32 %v8745, 0.25
      %v8754 = vmul.f32 %v8746, 0.25
      %v8755 = vmul.f32 %v8747, 0.25
      %v8756 = vmul.f32 %v8748, 0.25
      %v8757 = vmul.f32 %v8749, 0.25
      %v8758 = vmul.f32 %v8750, 0.25
      %v8759 = vmul.f32 %v8751, 0.25
      %v8760 = vld [vmem:[%s7] sm:$0xff]
      %v8761 = vld [vmem:[%s8] sm:$0x1]
      %v8763 = vperm.slane %v8761, 0
      %v8766 = vsel %vm3229, %v8752, 0
      %v8769 = vsel %vm3229, %v8753, 0
      %v8772 = vsel %vm3229, %v8754, 0
      %v8775 = vsel %vm3229, %v8755, 0
      %v8778 = vsel %vm3229, %v8756, 0
      %v8781 = vsel %vm3229, %v8757, 0
      %v8784 = vsel %vm3229, %v8758, 0
      %v8787 = vsel %vm3229, %v8759, 0
      %8789 = vmatpush.msra.mxu0 0.0
      %8790 = vmatpush.msra.mxu0 0.0
      %8791 = vmatpush.msra.mxu0 0.0
      %8792 = vmatpush.msra.mxu0 0.0
      %8793 = vmatpush.msra.mxu0 0.0
      %8794 = vmatpush.msra.mxu0 0.0
      %8795 = vmatpush.msra.mxu0 0.0
      %8796 = vmatpush.msra.mxu0 0.0
      %8797 = vmatpush.msra.mxu0 0.0
      %8798 = vmatpush.msra.mxu0 0.0
      %8799 = vmatpush.msra.mxu0 0.0
      %8800 = vmatpush.msra.mxu0 0.0
      %8801 = vmatpush.msra.mxu0 0.0
      %8802 = vmatpush.msra.mxu0 0.0
      %8803 = vmatpush.msra.mxu0 0.0
      %8804 = vmatpush.msra.mxu0 %v8760
      %8805 = vmatmul.f32.gmra.mxu0 %v8766
      %v8806 = vpop.f32.mrf.mxu0
      %v8807 = vadd.f32 %v8763, %v8806
      %8808 = vmatmul.f32.gmra.mxu0 %v8769
      %v8809 = vpop.f32.mrf.mxu0
      %v8810 = vadd.f32 %v8763, %v8809
      %8811 = vmatmul.f32.gmra.mxu0 %v8772
      %v8812 = vpop.f32.mrf.mxu0
      %v8813 = vadd.f32 %v8763, %v8812
      %8814 = vmatmul.f32.gmra.mxu0 %v8775
      %v8815 = vpop.f32.mrf.mxu0
      %v8816 = vadd.f32 %v8763, %v8815
      %8817 = vmatmul.f32.gmra.mxu0 %v8778
      %v8818 = vpop.f32.mrf.mxu0
      %v8819 = vadd.f32 %v8763, %v8818
      %8820 = vmatmul.f32.gmra.mxu0 %v8781
      %v8821 = vpop.f32.mrf.mxu0
      %v8822 = vadd.f32 %v8763, %v8821
      %8823 = vmatmul.f32.gmra.mxu0 %v8784
      %v8824 = vpop.f32.mrf.mxu0
      %v8825 = vadd.f32 %v8763, %v8824
      %8826 = vmatmul.f32.gmra.mxu0 %v8787
      %v8827 = vpop.f32.mrf.mxu0
      %v8828 = vadd.f32 %v8763, %v8827
      %8829 = vdwg.mxu0
      %vm8830 = vcmask 130048
      %8831 = vst.msk [vmem:[#allocation5] sm:$0xff] %vm8830, 0.0
      %vm8832 = vcmask 123904
      %8833 = vst.msk [vmem:[#allocation5 + $0x8] sm:$0x3] %vm8832, 0.0
      %8834 = vst.msk [vmem:[#allocation5 + $0x10] sm:$0xff] %vm8830, 0.0
      %8835 = vst.msk [vmem:[#allocation5 + $0x18] sm:$0x3] %vm8832, 0.0
      %8836 = vst.msk [vmem:[#allocation5 + $0x20] sm:$0xff] %vm8830, 0.0
      %8837 = vst.msk [vmem:[#allocation5 + $0x28] sm:$0x3] %vm8832, 0.0
      %8838 = vst.msk [vmem:[#allocation5 + $0x30] sm:$0xff] %vm8830, 0.0
      %8839 = vst.msk [vmem:[#allocation5 + $0x38] sm:$0x3] %vm8832, 0.0
      %8840 = vst.msk [vmem:[#allocation5 + $0x40] sm:$0xff] %vm8830, 0.0
      %8841 = vst.msk [vmem:[#allocation5 + $0x48] sm:$0x3] %vm8832, 0.0
      %8842 = vst.msk [vmem:[#allocation5 + $0x50] sm:$0xff] %vm8830, 0.0
      %8843 = vst.msk [vmem:[#allocation5 + $0x58] sm:$0x3] %vm8832, 0.0
      %8844 = vst.msk [vmem:[#allocation5 + $0x60] sm:$0xff] %vm8830, 0.0
      %8845 = vst.msk [vmem:[#allocation5 + $0x68] sm:$0x3] %vm8832, 0.0
      %8846 = vst.msk [vmem:[#allocation5 + $0x70] sm:$0xff] %vm8830, 0.0
      %8847 = vst.msk [vmem:[#allocation5 + $0x78] sm:$0x3] %vm8832, 0.0
      %8848 = vst.msk [vmem:[#allocation5 + $0x80] sm:$0xff] %vm8830, 0.0
      %8849 = vst.msk [vmem:[#allocation5 + $0x88] sm:$0x3] %vm8832, 0.0
      %8850 = vst.msk [vmem:[#allocation5 + $0x90] sm:$0xff] %vm8830, 0.0
      %8851 = vst.msk [vmem:[#allocation5 + $0x98] sm:$0x3] %vm8832, 0.0
      %s8852 = scalar_lea.vmem [#allocation5], 16
      %8853 = vst.msk [vmem:[%s8852 + $0x1] sm:$0xff] %vm8830, %v8807
      %8854 = vst.msk [vmem:[%s8852 + $0x11] sm:$0xff] %vm8830, %v8810
      %8855 = vst.msk [vmem:[%s8852 + $0x21] sm:$0xff] %vm8830, %v8813
      %8856 = vst.msk [vmem:[%s8852 + $0x31] sm:$0xff] %vm8830, %v8816
      %8857 = vst.msk [vmem:[%s8852 + $0x41] sm:$0xff] %vm8830, %v8819
      %8858 = vst.msk [vmem:[%s8852 + $0x51] sm:$0xff] %vm8830, %v8822
      %8859 = vst.msk [vmem:[%s8852 + $0x61] sm:$0xff] %vm8830, %v8825
      %8860 = vst.msk [vmem:[%s8852 + $0x71] sm:$0xff] %vm8830, %v8828
      %v8861 = vld [vmem:[#allocation5] sm:$0xff]
      %v8862 = vld [vmem:[#allocation5 + $0x10] sm:$0xff]
      %v8863 = vld [vmem:[#allocation5 + $0x20] sm:$0xff]
      %v8864 = vld [vmem:[#allocation5 + $0x30] sm:$0xff]
      %v8865 = vld [vmem:[#allocation5 + $0x40] sm:$0xff]
      %v8866 = vld [vmem:[#allocation5 + $0x50] sm:$0xff]
      %v8867 = vld [vmem:[#allocation5 + $0x60] sm:$0xff]
      %v8868 = vld [vmem:[#allocation5 + $0x70] sm:$0xff]
      %v8869 = vld [vmem:[%s9] sm:$0xff]
      %v8870 = vld [vmem:[%s9 + $0x8] sm:$0xff]
      %v8871 = vld [vmem:[#allocation5 + $0x1] sm:$0xff]
      %v8872 = vld [vmem:[#allocation5 + $0x11] sm:$0xff]
      %v8873 = vld [vmem:[#allocation5 + $0x21] sm:$0xff]
      %v8874 = vld [vmem:[#allocation5 + $0x31] sm:$0xff]
      %v8875 = vld [vmem:[#allocation5 + $0x41] sm:$0xff]
      %v8876 = vld [vmem:[#allocation5 + $0x51] sm:$0xff]
      %v8877 = vld [vmem:[#allocation5 + $0x61] sm:$0xff]
      %v8878 = vld [vmem:[#allocation5 + $0x71] sm:$0xff]
      %s8879 = scalar_lea.vmem %s9, 16
      %v8880 = vld [vmem:[%s8879] sm:$0xff]
      %v8881 = vld [vmem:[%s8879 + $0x8] sm:$0xff]
      %v8883 = vsel %vm8830, %v8871, 0
      %v8886 = vsel %vm8830, %v8872, 0
      %v8889 = vsel %vm8830, %v8873, 0
      %v8892 = vsel %vm8830, %v8874, 0
      %v8895 = vsel %vm8830, %v8875, 0
      %v8898 = vsel %vm8830, %v8876, 0
      %v8901 = vsel %vm8830, %v8877, 0
      %v8904 = vsel %vm8830, %v8878, 0
      %8906 = vmatpush.msra.mxu0 0.0
      %8907 = vmatpush.msra.mxu0 0.0
      %8908 = vmatpush.msra.mxu0 0.0
      %8909 = vmatpush.msra.mxu0 0.0
      %8910 = vmatpush.msra.mxu0 0.0
      %8911 = vmatpush.msra.mxu0 0.0
      %8912 = vmatpush.msra.mxu0 0.0
      %8913 = vmatpush.msra.mxu0 0.0
      %8914 = vmatpush.msra.mxu0 0.0
      %8915 = vmatpush.msra.mxu0 0.0
      %8916 = vmatpush.msra.mxu0 0.0
      %8917 = vmatpush.msra.mxu0 0.0
      %8918 = vmatpush.msra.mxu0 0.0
      %8919 = vmatpush.msra.mxu0 0.0
      %8920 = vmatpush.msra.mxu0 %v8881
      %8921 = vmatpush.msra.mxu0 %v8880
      %8922 = vmatmul.f32.gmra.mxu0 %v8883
      %v8923 = vpop.f32.mrf.mxu0
      %v8924 = vadd.f32 0.0, %v8923
      %8925 = vmatmul.f32.gmra.mxu0 %v8886
      %v8926 = vpop.f32.mrf.mxu0
      %v8927 = vadd.f32 0.0, %v8926
      %8928 = vmatmul.f32.gmra.mxu0 %v8889
      %v8929 = vpop.f32.mrf.mxu0
      %v8930 = vadd.f32 0.0, %v8929
      %8931 = vmatmul.f32.gmra.mxu0 %v8892
      %v8932 = vpop.f32.mrf.mxu0
      %v8933 = vadd.f32 0.0, %v8932
      %8934 = vmatmul.f32.gmra.mxu0 %v8895
      %v8935 = vpop.f32.mrf.mxu0
      %v8936 = vadd.f32 0.0, %v8935
      %8937 = vmatmul.f32.gmra.mxu0 %v8898
      %v8938 = vpop.f32.mrf.mxu0
      %v8939 = vadd.f32 0.0, %v8938
      %8940 = vmatmul.f32.gmra.mxu0 %v8901
      %v8941 = vpop.f32.mrf.mxu0
      %v8942 = vadd.f32 0.0, %v8941
      %8943 = vmatmul.f32.gmra.mxu0 %v8904
      %v8944 = vpop.f32.mrf.mxu0
      %v8945 = vadd.f32 0.0, %v8944
      %8946 = vdwg.mxu0
      %v8948 = vsel %vm8830, %v8861, 0
      %v8951 = vsel %vm8830, %v8862, 0
      %v8954 = vsel %vm8830, %v8863, 0
      %v8957 = vsel %vm8830, %v8864, 0
      %v8960 = vsel %vm8830, %v8865, 0
      %v8963 = vsel %vm8830, %v8866, 0
      %v8966 = vsel %vm8830, %v8867, 0
      %v8969 = vsel %vm8830, %v8868, 0
      %8971 = vmatpush.msra.mxu0 0.0
      %8972 = vmatpush.msra.mxu0 0.0
      %8973 = vmatpush.msra.mxu0 0.0
      %8974 = vmatpush.msra.mxu0 0.0
      %8975 = vmatpush.msra.mxu0 0.0
      %8976 = vmatpush.msra.mxu0 0.0
      %8977 = vmatpush.msra.mxu0 0.0
      %8978 = vmatpush.msra.mxu0 0.0
      %8979 = vmatpush.msra.mxu0 0.0
      %8980 = vmatpush.msra.mxu0 0.0
      %8981 = vmatpush.msra.mxu0 0.0
      %8982 = vmatpush.msra.mxu0 0.0
      %8983 = vmatpush.msra.mxu0 0.0
      %8984 = vmatpush.msra.mxu0 0.0
      %8985 = vmatpush.msra.mxu0 %v8870
      %8986 = vmatpush.msra.mxu0 %v8869
      %8987 = vmatmul.f32.gmra.mxu0 %v8948
      %v8988 = vpop.f32.mrf.mxu0
      %v8989 = vadd.f32 %v8924, %v8988
      %8990 = vmatmul.f32.gmra.mxu0 %v8951
      %v8991 = vpop.f32.mrf.mxu0
      %v8992 = vadd.f32 %v8927, %v8991
      %8993 = vmatmul.f32.gmra.mxu0 %v8954
      %v8994 = vpop.f32.mrf.mxu0
      %v8995 = vadd.f32 %v8930, %v8994
      %8996 = vmatmul.f32.gmra.mxu0 %v8957
      %v8997 = vpop.f32.mrf.mxu0
      %v8998 = vadd.f32 %v8933, %v8997
      %8999 = vmatmul.f32.gmra.mxu0 %v8960
      %v9000 = vpop.f32.mrf.mxu0
      %v9001 = vadd.f32 %v8936, %v9000
      %9002 = vmatmul.f32.gmra.mxu0 %v8963
      %v9003 = vpop.f32.mrf.mxu0
      %v9004 = vadd.f32 %v8939, %v9003
      %9005 = vmatmul.f32.gmra.mxu0 %v8966
      %v9006 = vpop.f32.mrf.mxu0
      %v9007 = vadd.f32 %v8942, %v9006
      %9008 = vmatmul.f32.gmra.mxu0 %v8969
      %v9009 = vpop.f32.mrf.mxu0
      %v9010 = vadd.f32 %v8945, %v9009
      %9011 = vdwg.mxu0
      %v9012 = vld [vmem:[#allocation5 + $0x2] sm:$0xff]
      %v9013 = vld [vmem:[#allocation5 + $0x12] sm:$0xff]
      %v9014 = vld [vmem:[#allocation5 + $0x22] sm:$0xff]
      %v9015 = vld [vmem:[#allocation5 + $0x32] sm:$0xff]
      %v9016 = vld [vmem:[#allocation5 + $0x42] sm:$0xff]
      %v9017 = vld [vmem:[#allocation5 + $0x52] sm:$0xff]
      %v9018 = vld [vmem:[#allocation5 + $0x62] sm:$0xff]
      %v9019 = vld [vmem:[#allocation5 + $0x72] sm:$0xff]
      %s9020 = scalar_lea.vmem %s9, 32
      %v9021 = vld [vmem:[%s9020] sm:$0xff]
      %v9022 = vld [vmem:[%s9020 + $0x8] sm:$0xff]
      %v9024 = vsel %vm8830, %v9012, 0
      %v9027 = vsel %vm8830, %v9013, 0
      %v9030 = vsel %vm8830, %v9014, 0
      %v9033 = vsel %vm8830, %v9015, 0
      %v9036 = vsel %vm8830, %v9016, 0
      %v9039 = vsel %vm8830, %v9017, 0
      %v9042 = vsel %vm8830, %v9018, 0
      %v9045 = vsel %vm8830, %v9019, 0
      %9047 = vmatpush.msra.mxu0 0.0
      %9048 = vmatpush.msra.mxu0 0.0
      %9049 = vmatpush.msra.mxu0 0.0
      %9050 = vmatpush.msra.mxu0 0.0
      %9051 = vmatpush.msra.mxu0 0.0
      %9052 = vmatpush.msra.mxu0 0.0
      %9053 = vmatpush.msra.mxu0 0.0
      %9054 = vmatpush.msra.mxu0 0.0
      %9055 = vmatpush.msra.mxu0 0.0
      %9056 = vmatpush.msra.mxu0 0.0
      %9057 = vmatpush.msra.mxu0 0.0
      %9058 = vmatpush.msra.mxu0 0.0
      %9059 = vmatpush.msra.mxu0 0.0
      %9060 = vmatpush.msra.mxu0 0.0
      %9061 = vmatpush.msra.mxu0 %v9022
      %9062 = vmatpush.msra.mxu0 %v9021
      %9063 = vmatmul.f32.gmra.mxu0 %v9024
      %v9064 = vpop.f32.mrf.mxu0
      %v9065 = vadd.f32 0.0, %v9064
      %9066 = vmatmul.f32.gmra.mxu0 %v9027
      %v9067 = vpop.f32.mrf.mxu0
      %v9068 = vadd.f32 0.0, %v9067
      %9069 = vmatmul.f32.gmra.mxu0 %v9030
      %v9070 = vpop.f32.mrf.mxu0
      %v9071 = vadd.f32 0.0, %v9070
      %9072 = vmatmul.f32.gmra.mxu0 %v9033
      %v9073 = vpop.f32.mrf.mxu0
      %v9074 = vadd.f32 0.0, %v9073
      %9075 = vmatmul.f32.gmra.mxu0 %v9036
      %v9076 = vpop.f32.mrf.mxu0
      %v9077 = vadd.f32 0.0, %v9076
      %9078 = vmatmul.f32.gmra.mxu0 %v9039
      %v9079 = vpop.f32.mrf.mxu0
      %v9080 = vadd.f32 0.0, %v9079
      %9081 = vmatmul.f32.gmra.mxu0 %v9042
      %v9082 = vpop.f32.mrf.mxu0
      %v9083 = vadd.f32 0.0, %v9082
      %9084 = vmatmul.f32.gmra.mxu0 %v9045
      %v9085 = vpop.f32.mrf.mxu0
      %v9086 = vadd.f32 0.0, %v9085
      %9087 = vdwg.mxu0
      %v9088 = vadd.f32 %v8989, %v9065
      %v9089 = vadd.f32 %v8992, %v9068
      %v9090 = vadd.f32 %v8995, %v9071
      %v9091 = vadd.f32 %v8998, %v9074
      %v9092 = vadd.f32 %v9001, %v9077
      %v9093 = vadd.f32 %v9004, %v9080
      %v9094 = vadd.f32 %v9007, %v9083
      %v9095 = vadd.f32 %v9010, %v9086
      %v9096 = vld [vmem:[%s8852] sm:$0xff]
      %v9097 = vld [vmem:[%s8852 + $0x10] sm:$0xff]
      %v9098 = vld [vmem:[%s8852 + $0x20] sm:$0xff]
      %v9099 = vld [vmem:[%s8852 + $0x30] sm:$0xff]
      %v9100 = vld [vmem:[%s8852 + $0x40] sm:$0xff]
      %v9101 = vld [vmem:[%s8852 + $0x50] sm:$0xff]
      %v9102 = vld [vmem:[%s8852 + $0x60] sm:$0xff]
      %v9103 = vld [vmem:[%s8852 + $0x70] sm:$0xff]
      %s9104 = scalar_lea.vmem %s9, 48
      %v9105 = vld [vmem:[%s9104] sm:$0xff]
      %v9106 = vld [vmem:[%s9104 + $0x8] sm:$0xff]
      %v9108 = vsel %vm8830, %v9096, 0
      %v9111 = vsel %vm8830, %v9097, 0
      %v9114 = vsel %vm8830, %v9098, 0
      %v9117 = vsel %vm8830, %v9099, 0
      %v9120 = vsel %vm8830, %v9100, 0
      %v9123 = vsel %vm8830, %v9101, 0
      %v9126 = vsel %vm8830, %v9102, 0
      %v9129 = vsel %vm8830, %v9103, 0
      %9131 = vmatpush.msra.mxu0 0.0
      %9132 = vmatpush.msra.mxu0 0.0
      %9133 = vmatpush.msra.mxu0 0.0
      %9134 = vmatpush.msra.mxu0 0.0
      %9135 = vmatpush.msra.mxu0 0.0
      %9136 = vmatpush.msra.mxu0 0.0
      %9137 = vmatpush.msra.mxu0 0.0
      %9138 = vmatpush.msra.mxu0 0.0
      %9139 = vmatpush.msra.mxu0 0.0
      %9140 = vmatpush.msra.mxu0 0.0
      %9141 = vmatpush.msra.mxu0 0.0
      %9142 = vmatpush.msra.mxu0 0.0
      %9143 = vmatpush.msra.mxu0 0.0
      %9144 = vmatpush.msra.mxu0 0.0
      %9145 = vmatpush.msra.mxu0 %v9106
      %9146 = vmatpush.msra.mxu0 %v9105
      %9147 = vmatmul.f32.gmra.mxu0 %v9108
      %v9148 = vpop.f32.mrf.mxu0
      %v9149 = vadd.f32 0.0, %v9148
      %9150 = vmatmul.f32.gmra.mxu0 %v9111
      %v9151 = vpop.f32.mrf.mxu0
      %v9152 = vadd.f32 0.0, %v9151
      %9153 = vmatmul.f32.gmra.mxu0 %v9114
      %v9154 = vpop.f32.mrf.mxu0
      %v9155 = vadd.f32 0.0, %v9154
      %9156 = vmatmul.f32.gmra.mxu0 %v9117
      %v9157 = vpop.f32.mrf.mxu0
      %v9158 = vadd.f32 0.0, %v9157
      %9159 = vmatmul.f32.gmra.mxu0 %v9120
      %v9160 = vpop.f32.mrf.mxu0
      %v9161 = vadd.f32 0.0, %v9160
      %9162 = vmatmul.f32.gmra.mxu0 %v9123
      %v9163 = vpop.f32.mrf.mxu0
      %v9164 = vadd.f32 0.0, %v9163
      %9165 = vmatmul.f32.gmra.mxu0 %v9126
      %v9166 = vpop.f32.mrf.mxu0
      %v9167 = vadd.f32 0.0, %v9166
      %9168 = vmatmul.f32.gmra.mxu0 %v9129
      %v9169 = vpop.f32.mrf.mxu0
      %v9170 = vadd.f32 0.0, %v9169
      %9171 = vdwg.mxu0
      %v9172 = vadd.f32 %v9088, %v9149
      %v9173 = vadd.f32 %v9089, %v9152
      %v9174 = vadd.f32 %v9090, %v9155
      %v9175 = vadd.f32 %v9091, %v9158
      %v9176 = vadd.f32 %v9092, %v9161
      %v9177 = vadd.f32 %v9093, %v9164
      %v9178 = vadd.f32 %v9094, %v9167
      %v9179 = vadd.f32 %v9095, %v9170
      %v9180 = vld [vmem:[%s8852 + $0x1] sm:$0xff]
      %v9181 = vld [vmem:[%s8852 + $0x11] sm:$0xff]
      %v9182 = vld [vmem:[%s8852 + $0x21] sm:$0xff]
      %v9183 = vld [vmem:[%s8852 + $0x31] sm:$0xff]
      %v9184 = vld [vmem:[%s8852 + $0x41] sm:$0xff]
      %v9185 = vld [vmem:[%s8852 + $0x51] sm:$0xff]
      %v9186 = vld [vmem:[%s8852 + $0x61] sm:$0xff]
      %v9187 = vld [vmem:[%s8852 + $0x71] sm:$0xff]
      %s9188 = scalar_lea.vmem %s9, 64
      %v9189 = vld [vmem:[%s9188] sm:$0xff]
      %v9190 = vld [vmem:[%s9188 + $0x8] sm:$0xff]
      %v9192 = vsel %vm8830, %v9180, 0
      %v9195 = vsel %vm8830, %v9181, 0
      %v9198 = vsel %vm8830, %v9182, 0
      %v9201 = vsel %vm8830, %v9183, 0
      %v9204 = vsel %vm8830, %v9184, 0
      %v9207 = vsel %vm8830, %v9185, 0
      %v9210 = vsel %vm8830, %v9186, 0
      %v9213 = vsel %vm8830, %v9187, 0
      %9215 = vmatpush.msra.mxu0 0.0
      %9216 = vmatpush.msra.mxu0 0.0
      %9217 = vmatpush.msra.mxu0 0.0
      %9218 = vmatpush.msra.mxu0 0.0
      %9219 = vmatpush.msra.mxu0 0.0
      %9220 = vmatpush.msra.mxu0 0.0
      %9221 = vmatpush.msra.mxu0 0.0
      %9222 = vmatpush.msra.mxu0 0.0
      %9223 = vmatpush.msra.mxu0 0.0
      %9224 = vmatpush.msra.mxu0 0.0
      %9225 = vmatpush.msra.mxu0 0.0
      %9226 = vmatpush.msra.mxu0 0.0
      %9227 = vmatpush.msra.mxu0 0.0
      %9228 = vmatpush.msra.mxu0 0.0
      %9229 = vmatpush.msra.mxu0 %v9190
      %9230 = vmatpush.msra.mxu0 %v9189
      %9231 = vmatmul.f32.gmra.mxu0 %v9192
      %v9232 = vpop.f32.mrf.mxu0
      %v9233 = vadd.f32 0.0, %v9232
      %9234 = vmatmul.f32.gmra.mxu0 %v9195
      %v9235 = vpop.f32.mrf.mxu0
      %v9236 = vadd.f32 0.0, %v9235
      %9237 = vmatmul.f32.gmra.mxu0 %v9198
      %v9238 = vpop.f32.mrf.mxu0
      %v9239 = vadd.f32 0.0, %v9238
      %9240 = vmatmul.f32.gmra.mxu0 %v9201
      %v9241 = vpop.f32.mrf.mxu0
      %v9242 = vadd.f32 0.0, %v9241
      %9243 = vmatmul.f32.gmra.mxu0 %v9204
      %v9244 = vpop.f32.mrf.mxu0
      %v9245 = vadd.f32 0.0, %v9244
      %9246 = vmatmul.f32.gmra.mxu0 %v9207
      %v9247 = vpop.f32.mrf.mxu0
      %v9248 = vadd.f32 0.0, %v9247
      %9249 = vmatmul.f32.gmra.mxu0 %v9210
      %v9250 = vpop.f32.mrf.mxu0
      %v9251 = vadd.f32 0.0, %v9250
      %9252 = vmatmul.f32.gmra.mxu0 %v9213
      %v9253 = vpop.f32.mrf.mxu0
      %v9254 = vadd.f32 0.0, %v9253
      %9255 = vdwg.mxu0
      %v9256 = vadd.f32 %v9172, %v9233
      %v9257 = vadd.f32 %v9173, %v9236
      %v9258 = vadd.f32 %v9174, %v9239
      %v9259 = vadd.f32 %v9175, %v9242
      %v9260 = vadd.f32 %v9176, %v9245
      %v9261 = vadd.f32 %v9177, %v9248
      %v9262 = vadd.f32 %v9178, %v9251
      %v9263 = vadd.f32 %v9179, %v9254
      %v9264 = vld [vmem:[%s8852 + $0x2] sm:$0xff]
      %v9265 = vld [vmem:[%s8852 + $0x12] sm:$0xff]
      %v9266 = vld [vmem:[%s8852 + $0x22] sm:$0xff]
      %v9267 = vld [vmem:[%s8852 + $0x32] sm:$0xff]
      %v9268 = vld [vmem:[%s8852 + $0x42] sm:$0xff]
      %v9269 = vld [vmem:[%s8852 + $0x52] sm:$0xff]
      %v9270 = vld [vmem:[%s8852 + $0x62] sm:$0xff]
      %v9271 = vld [vmem:[%s8852 + $0x72] sm:$0xff]
      %s9272 = scalar_lea.vmem %s9, 80
      %v9273 = vld [vmem:[%s9272] sm:$0xff]
      %v9274 = vld [vmem:[%s9272 + $0x8] sm:$0xff]
      %v9276 = vsel %vm8830, %v9264, 0
      %v9279 = vsel %vm8830, %v9265, 0
      %v9282 = vsel %vm8830, %v9266, 0
      %v9285 = vsel %vm8830, %v9267, 0
      %v9288 = vsel %vm8830, %v9268, 0
      %v9291 = vsel %vm8830, %v9269, 0
      %v9294 = vsel %vm8830, %v9270, 0
      %v9297 = vsel %vm8830, %v9271, 0
      %9299 = vmatpush.msra.mxu0 0.0
      %9300 = vmatpush.msra.mxu0 0.0
      %9301 = vmatpush.msra.mxu0 0.0
      %9302 = vmatpush.msra.mxu0 0.0
      %9303 = vmatpush.msra.mxu0 0.0
      %9304 = vmatpush.msra.mxu0 0.0
      %9305 = vmatpush.msra.mxu0 0.0
      %9306 = vmatpush.msra.mxu0 0.0
      %9307 = vmatpush.msra.mxu0 0.0
      %9308 = vmatpush.msra.mxu0 0.0
      %9309 = vmatpush.msra.mxu0 0.0
      %9310 = vmatpush.msra.mxu0 0.0
      %9311 = vmatpush.msra.mxu0 0.0
      %9312 = vmatpush.msra.mxu0 0.0
      %9313 = vmatpush.msra.mxu0 %v9274
      %9314 = vmatpush.msra.mxu0 %v9273
      %9315 = vmatmul.f32.gmra.mxu0 %v9276
      %v9316 = vpop.f32.mrf.mxu0
      %v9317 = vadd.f32 0.0, %v9316
      %9318 = vmatmul.f32.gmra.mxu0 %v9279
      %v9319 = vpop.f32.mrf.mxu0
      %v9320 = vadd.f32 0.0, %v9319
      %9321 = vmatmul.f32.gmra.mxu0 %v9282
      %v9322 = vpop.f32.mrf.mxu0
      %v9323 = vadd.f32 0.0, %v9322
      %9324 = vmatmul.f32.gmra.mxu0 %v9285
      %v9325 = vpop.f32.mrf.mxu0
      %v9326 = vadd.f32 0.0, %v9325
      %9327 = vmatmul.f32.gmra.mxu0 %v9288
      %v9328 = vpop.f32.mrf.mxu0
      %v9329 = vadd.f32 0.0, %v9328
      %9330 = vmatmul.f32.gmra.mxu0 %v9291
      %v9331 = vpop.f32.mrf.mxu0
      %v9332 = vadd.f32 0.0, %v9331
      %9333 = vmatmul.f32.gmra.mxu0 %v9294
      %v9334 = vpop.f32.mrf.mxu0
      %v9335 = vadd.f32 0.0, %v9334
      %9336 = vmatmul.f32.gmra.mxu0 %v9297
      %v9337 = vpop.f32.mrf.mxu0
      %v9338 = vadd.f32 0.0, %v9337
      %9339 = vdwg.mxu0
      %v9340 = vadd.f32 %v9256, %v9317
      %v9341 = vadd.f32 %v9257, %v9320
      %v9342 = vadd.f32 %v9258, %v9323
      %v9343 = vadd.f32 %v9259, %v9326
      %v9344 = vadd.f32 %v9260, %v9329
      %v9345 = vadd.f32 %v9261, %v9332
      %v9346 = vadd.f32 %v9262, %v9335
      %v9347 = vadd.f32 %v9263, %v9338
      %s9348 = scalar_lea.vmem [#allocation5], 32
      %v9349 = vld [vmem:[%s9348] sm:$0xff]
      %v9350 = vld [vmem:[%s9348 + $0x10] sm:$0xff]
      %v9351 = vld [vmem:[%s9348 + $0x20] sm:$0xff]
      %v9352 = vld [vmem:[%s9348 + $0x30] sm:$0xff]
      %v9353 = vld [vmem:[%s9348 + $0x40] sm:$0xff]
      %v9354 = vld [vmem:[%s9348 + $0x50] sm:$0xff]
      %v9355 = vld [vmem:[%s9348 + $0x60] sm:$0xff]
      %v9356 = vld [vmem:[%s9348 + $0x70] sm:$0xff]
      %s9357 = scalar_lea.vmem %s9, 96
      %v9358 = vld [vmem:[%s9357] sm:$0xff]
      %v9359 = vld [vmem:[%s9357 + $0x8] sm:$0xff]
      %v9361 = vsel %vm8830, %v9349, 0
      %v9364 = vsel %vm8830, %v9350, 0
      %v9367 = vsel %vm8830, %v9351, 0
      %v9370 = vsel %vm8830, %v9352, 0
      %v9373 = vsel %vm8830, %v9353, 0
      %v9376 = vsel %vm8830, %v9354, 0
      %v9379 = vsel %vm8830, %v9355, 0
      %v9382 = vsel %vm8830, %v9356, 0
      %9384 = vmatpush.msra.mxu0 0.0
      %9385 = vmatpush.msra.mxu0 0.0
      %9386 = vmatpush.msra.mxu0 0.0
      %9387 = vmatpush.msra.mxu0 0.0
      %9388 = vmatpush.msra.mxu0 0.0
      %9389 = vmatpush.msra.mxu0 0.0
      %9390 = vmatpush.msra.mxu0 0.0
      %9391 = vmatpush.msra.mxu0 0.0
      %9392 = vmatpush.msra.mxu0 0.0
      %9393 = vmatpush.msra.mxu0 0.0
      %9394 = vmatpush.msra.mxu0 0.0
      %9395 = vmatpush.msra.mxu0 0.0
      %9396 = vmatpush.msra.mxu0 0.0
      %9397 = vmatpush.msra.mxu0 0.0
      %9398 = vmatpush.msra.mxu0 %v9359
      %9399 = vmatpush.msra.mxu0 %v9358
      %9400 = vmatmul.f32.gmra.mxu0 %v9361
      %v9401 = vpop.f32.mrf.mxu0
      %v9402 = vadd.f32 0.0, %v9401
      %9403 = vmatmul.f32.gmra.mxu0 %v9364
      %v9404 = vpop.f32.mrf.mxu0
      %v9405 = vadd.f32 0.0, %v9404
      %9406 = vmatmul.f32.gmra.mxu0 %v9367
      %v9407 = vpop.f32.mrf.mxu0
      %v9408 = vadd.f32 0.0, %v9407
      %9409 = vmatmul.f32.gmra.mxu0 %v9370
      %v9410 = vpop.f32.mrf.mxu0
      %v9411 = vadd.f32 0.0, %v9410
      %9412 = vmatmul.f32.gmra.mxu0 %v9373
      %v9413 = vpop.f32.mrf.mxu0
      %v9414 = vadd.f32 0.0, %v9413
      %9415 = vmatmul.f32.gmra.mxu0 %v9376
      %v9416 = vpop.f32.mrf.mxu0
      %v9417 = vadd.f32 0.0, %v9416
      %9418 = vmatmul.f32.gmra.mxu0 %v9379
      %v9419 = vpop.f32.mrf.mxu0
      %v9420 = vadd.f32 0.0, %v9419
      %9421 = vmatmul.f32.gmra.mxu0 %v9382
      %v9422 = vpop.f32.mrf.mxu0
      %v9423 = vadd.f32 0.0, %v9422
      %9424 = vdwg.mxu0
      %v9425 = vadd.f32 %v9340, %v9402
      %v9426 = vadd.f32 %v9341, %v9405
      %v9427 = vadd.f32 %v9342, %v9408
      %v9428 = vadd.f32 %v9343, %v9411
      %v9429 = vadd.f32 %v9344, %v9414
      %v9430 = vadd.f32 %v9345, %v9417
      %v9431 = vadd.f32 %v9346, %v9420
      %v9432 = vadd.f32 %v9347, %v9423
      %v9433 = vld [vmem:[%s9348 + $0x1] sm:$0xff]
      %v9434 = vld [vmem:[%s9348 + $0x11] sm:$0xff]
      %v9435 = vld [vmem:[%s9348 + $0x21] sm:$0xff]
      %v9436 = vld [vmem:[%s9348 + $0x31] sm:$0xff]
      %v9437 = vld [vmem:[%s9348 + $0x41] sm:$0xff]
      %v9438 = vld [vmem:[%s9348 + $0x51] sm:$0xff]
      %v9439 = vld [vmem:[%s9348 + $0x61] sm:$0xff]
      %v9440 = vld [vmem:[%s9348 + $0x71] sm:$0xff]
      %s9441 = scalar_lea.vmem %s9, 112
      %v9442 = vld [vmem:[%s9441] sm:$0xff]
      %v9443 = vld [vmem:[%s9441 + $0x8] sm:$0xff]
      %v9445 = vsel %vm8830, %v9433, 0
      %v9448 = vsel %vm8830, %v9434, 0
      %v9451 = vsel %vm8830, %v9435, 0
      %v9454 = vsel %vm8830, %v9436, 0
      %v9457 = vsel %vm8830, %v9437, 0
      %v9460 = vsel %vm8830, %v9438, 0
      %v9463 = vsel %vm8830, %v9439, 0
      %v9466 = vsel %vm8830, %v9440, 0
      %9468 = vmatpush.msra.mxu0 0.0
      %9469 = vmatpush.msra.mxu0 0.0
      %9470 = vmatpush.msra.mxu0 0.0
      %9471 = vmatpush.msra.mxu0 0.0
      %9472 = vmatpush.msra.mxu0 0.0
      %9473 = vmatpush.msra.mxu0 0.0
      %9474 = vmatpush.msra.mxu0 0.0
      %9475 = vmatpush.msra.mxu0 0.0
      %9476 = vmatpush.msra.mxu0 0.0
      %9477 = vmatpush.msra.mxu0 0.0
      %9478 = vmatpush.msra.mxu0 0.0
      %9479 = vmatpush.msra.mxu0 0.0
      %9480 = vmatpush.msra.mxu0 0.0
      %9481 = vmatpush.msra.mxu0 0.0
      %9482 = vmatpush.msra.mxu0 %v9443
      %9483 = vmatpush.msra.mxu0 %v9442
      %9484 = vmatmul.f32.gmra.mxu0 %v9445
      %v9485 = vpop.f32.mrf.mxu0
      %v9486 = vadd.f32 0.0, %v9485
      %9487 = vmatmul.f32.gmra.mxu0 %v9448
      %v9488 = vpop.f32.mrf.mxu0
      %v9489 = vadd.f32 0.0, %v9488
      %9490 = vmatmul.f32.gmra.mxu0 %v9451
      %v9491 = vpop.f32.mrf.mxu0
      %v9492 = vadd.f32 0.0, %v9491
      %9493 = vmatmul.f32.gmra.mxu0 %v9454
      %v9494 = vpop.f32.mrf.mxu0
      %v9495 = vadd.f32 0.0, %v9494
      %9496 = vmatmul.f32.gmra.mxu0 %v9457
      %v9497 = vpop.f32.mrf.mxu0
      %v9498 = vadd.f32 0.0, %v9497
      %9499 = vmatmul.f32.gmra.mxu0 %v9460
      %v9500 = vpop.f32.mrf.mxu0
      %v9501 = vadd.f32 0.0, %v9500
      %9502 = vmatmul.f32.gmra.mxu0 %v9463
      %v9503 = vpop.f32.mrf.mxu0
      %v9504 = vadd.f32 0.0, %v9503
      %9505 = vmatmul.f32.gmra.mxu0 %v9466
      %v9506 = vpop.f32.mrf.mxu0
      %v9507 = vadd.f32 0.0, %v9506
      %9508 = vdwg.mxu0
      %v9509 = vadd.f32 %v9425, %v9486
      %v9510 = vadd.f32 %v9426, %v9489
      %v9511 = vadd.f32 %v9427, %v9492
      %v9512 = vadd.f32 %v9428, %v9495
      %v9513 = vadd.f32 %v9429, %v9498
      %v9514 = vadd.f32 %v9430, %v9501
      %v9515 = vadd.f32 %v9431, %v9504
      %v9516 = vadd.f32 %v9432, %v9507
      %v9517 = vld [vmem:[%s9348 + $0x2] sm:$0xff]
      %v9518 = vld [vmem:[%s9348 + $0x12] sm:$0xff]
      %v9519 = vld [vmem:[%s9348 + $0x22] sm:$0xff]
      %v9520 = vld [vmem:[%s9348 + $0x32] sm:$0xff]
      %v9521 = vld [vmem:[%s9348 + $0x42] sm:$0xff]
      %v9522 = vld [vmem:[%s9348 + $0x52] sm:$0xff]
      %v9523 = vld [vmem:[%s9348 + $0x62] sm:$0xff]
      %v9524 = vld [vmem:[%s9348 + $0x72] sm:$0xff]
      %s9525 = scalar_lea.vmem %s9, 128
      %v9526 = vld [vmem:[%s9525] sm:$0xff]
      %v9527 = vld [vmem:[%s9525 + $0x8] sm:$0xff]
      %v9529 = vsel %vm8830, %v9517, 0
      %v9532 = vsel %vm8830, %v9518, 0
      %v9535 = vsel %vm8830, %v9519, 0
      %v9538 = vsel %vm8830, %v9520, 0
      %v9541 = vsel %vm8830, %v9521, 0
      %v9544 = vsel %vm8830, %v9522, 0
      %v9547 = vsel %vm8830, %v9523, 0
      %v9550 = vsel %vm8830, %v9524, 0
      %9552 = vmatpush.msra.mxu0 0.0
      %9553 = vmatpush.msra.mxu0 0.0
      %9554 = vmatpush.msra.mxu0 0.0
      %9555 = vmatpush.msra.mxu0 0.0
      %9556 = vmatpush.msra.mxu0 0.0
      %9557 = vmatpush.msra.mxu0 0.0
      %9558 = vmatpush.msra.mxu0 0.0
      %9559 = vmatpush.msra.mxu0 0.0
      %9560 = vmatpush.msra.mxu0 0.0
      %9561 = vmatpush.msra.mxu0 0.0
      %9562 = vmatpush.msra.mxu0 0.0
      %9563 = vmatpush.msra.mxu0 0.0
      %9564 = vmatpush.msra.mxu0 0.0
      %9565 = vmatpush.msra.mxu0 0.0
      %9566 = vmatpush.msra.mxu0 %v9527
      %9567 = vmatpush.msra.mxu0 %v9526
      %9568 = vmatmul.f32.gmra.mxu0 %v9529
      %v9569 = vpop.f32.mrf.mxu0
      %v9570 = vadd.f32 0.0, %v9569
      %9571 = vmatmul.f32.gmra.mxu0 %v9532
      %v9572 = vpop.f32.mrf.mxu0
      %v9573 = vadd.f32 0.0, %v9572
      %9574 = vmatmul.f32.gmra.mxu0 %v9535
      %v9575 = vpop.f32.mrf.mxu0
      %v9576 = vadd.f32 0.0, %v9575
      %9577 = vmatmul.f32.gmra.mxu0 %v9538
      %v9578 = vpop.f32.mrf.mxu0
      %v9579 = vadd.f32 0.0, %v9578
      %9580 = vmatmul.f32.gmra.mxu0 %v9541
      %v9581 = vpop.f32.mrf.mxu0
      %v9582 = vadd.f32 0.0, %v9581
      %9583 = vmatmul.f32.gmra.mxu0 %v9544
      %v9584 = vpop.f32.mrf.mxu0
      %v9585 = vadd.f32 0.0, %v9584
      %9586 = vmatmul.f32.gmra.mxu0 %v9547
      %v9587 = vpop.f32.mrf.mxu0
      %v9588 = vadd.f32 0.0, %v9587
      %9589 = vmatmul.f32.gmra.mxu0 %v9550
      %v9590 = vpop.f32.mrf.mxu0
      %v9591 = vadd.f32 0.0, %v9590
      %9592 = vdwg.mxu0
      %v9593 = vadd.f32 %v9509, %v9570
      %v9594 = vadd.f32 %v9510, %v9573
      %v9595 = vadd.f32 %v9511, %v9576
      %v9596 = vadd.f32 %v9512, %v9579
      %v9597 = vadd.f32 %v9513, %v9582
      %v9598 = vadd.f32 %v9514, %v9585
      %v9599 = vadd.f32 %v9515, %v9588
      %v9600 = vadd.f32 %v9516, %v9591
      %v9601 = vld [vmem:[%s10] sm:$0x1]
      %v9603 = vperm.slane %v9601, 0
      %v9605 = vadd.f32 %v9593, %v9603
      %v9606 = vadd.f32 %v9594, %v9603
      %v9607 = vadd.f32 %v9595, %v9603
      %v9608 = vadd.f32 %v9596, %v9603
      %v9609 = vadd.f32 %v9597, %v9603
      %v9610 = vadd.f32 %v9598, %v9603
      %v9611 = vadd.f32 %v9599, %v9603
      %v9612 = vadd.f32 %v9600, %v9603
      %vm9613 = vcmp.gt.f32.partialorder %v9605, 0.0
      %vm9614 = vcmp.gt.f32.partialorder %v9606, 0.0
      %vm9615 = vcmp.gt.f32.partialorder %v9607, 0.0
      %vm9616 = vcmp.gt.f32.partialorder %v9608, 0.0
      %vm9617 = vcmp.gt.f32.partialorder %v9609, 0.0
      %vm9618 = vcmp.gt.f32.partialorder %v9610, 0.0
      %vm9619 = vcmp.gt.f32.partialorder %v9611, 0.0
      %vm9620 = vcmp.gt.f32.partialorder %v9612, 0.0
      %v9621 = vmin.f32 %v9605, 0.0
      %v9622 = vmin.f32 %v9606, 0.0
      %v9623 = vmin.f32 %v9607, 0.0
      %v9624 = vmin.f32 %v9608, 0.0
      %v9625 = vmin.f32 %v9609, 0.0
      %v9626 = vmin.f32 %v9610, 0.0
      %v9627 = vmin.f32 %v9611, 0.0
      %v9628 = vmin.f32 %v9612, 0.0
      %v9629 = vmul.f32 %v9621, 1.442695
      %v9630 = vpow.pop %v9629
      %v9631 = vmul.f32 %v9622, 1.442695
      %v9632 = vpow.pop %v9631
      %v9633 = vmul.f32 %v9623, 1.442695
      %v9634 = vpow.pop %v9633
      %v9635 = vmul.f32 %v9624, 1.442695
      %v9636 = vpow.pop %v9635
      %v9637 = vmul.f32 %v9625, 1.442695
      %v9638 = vpow.pop %v9637
      %v9639 = vmul.f32 %v9626, 1.442695
      %v9640 = vpow.pop %v9639
      %v9641 = vmul.f32 %v9627, 1.442695
      %v9642 = vpow.pop %v9641
      %v9643 = vmul.f32 %v9628, 1.442695
      %v9644 = vpow.pop %v9643
      %v9645 = vsub.f32 %v9630, 1.0
      %v9646 = vsub.f32 %v9632, 1.0
      %v9647 = vsub.f32 %v9634, 1.0
      %v9648 = vsub.f32 %v9636, 1.0
      %v9649 = vsub.f32 %v9638, 1.0
      %v9650 = vsub.f32 %v9640, 1.0
      %v9651 = vsub.f32 %v9642, 1.0
      %v9652 = vsub.f32 %v9644, 1.0
      %v9653 = vsel %vm9613, %v9605, %v9645
      %v9654 = vsel %vm9614, %v9606, %v9646
      %v9655 = vsel %vm9615, %v9607, %v9647
      %v9656 = vsel %vm9616, %v9608, %v9648
      %v9657 = vsel %vm9617, %v9609, %v9649
      %v9658 = vsel %vm9618, %v9610, %v9650
      %v9659 = vsel %vm9619, %v9611, %v9651
      %v9660 = vsel %vm9620, %v9612, %v9652
      %9661 = vst.msk [vmem:[#allocation5] sm:$0xff] %vm8830, 0.0
      %9662 = vst.msk [vmem:[#allocation5 + $0x8] sm:$0x3] %vm8832, 0.0
      %9663 = vst.msk [vmem:[#allocation5 + $0x10] sm:$0xff] %vm8830, 0.0
      %9664 = vst.msk [vmem:[#allocation5 + $0x18] sm:$0x3] %vm8832, 0.0
      %9665 = vst.msk [vmem:[#allocation5 + $0x20] sm:$0xff] %vm8830, 0.0
      %9666 = vst.msk [vmem:[#allocation5 + $0x28] sm:$0x3] %vm8832, 0.0
      %9667 = vst.msk [vmem:[#allocation5 + $0x30] sm:$0xff] %vm8830, 0.0
      %9668 = vst.msk [vmem:[#allocation5 + $0x38] sm:$0x3] %vm8832, 0.0
      %9669 = vst.msk [vmem:[#allocation5 + $0x40] sm:$0xff] %vm8830, 0.0
      %9670 = vst.msk [vmem:[#allocation5 + $0x48] sm:$0x3] %vm8832, 0.0
      %9671 = vst.msk [vmem:[#allocation5 + $0x50] sm:$0xff] %vm8830, 0.0
      %9672 = vst.msk [vmem:[#allocation5 + $0x58] sm:$0x3] %vm8832, 0.0
      %9673 = vst.msk [vmem:[#allocation5 + $0x60] sm:$0xff] %vm8830, 0.0
      %9674 = vst.msk [vmem:[#allocation5 + $0x68] sm:$0x3] %vm8832, 0.0
      %9675 = vst.msk [vmem:[#allocation5 + $0x70] sm:$0xff] %vm8830, 0.0
      %9676 = vst.msk [vmem:[#allocation5 + $0x78] sm:$0x3] %vm8832, 0.0
      %9677 = vst.msk [vmem:[#allocation5 + $0x80] sm:$0xff] %vm8830, 0.0
      %9678 = vst.msk [vmem:[#allocation5 + $0x88] sm:$0x3] %vm8832, 0.0
      %9679 = vst.msk [vmem:[#allocation5 + $0x90] sm:$0xff] %vm8830, 0.0
      %9680 = vst.msk [vmem:[#allocation5 + $0x98] sm:$0x3] %vm8832, 0.0
      %9681 = vst.msk [vmem:[%s8852 + $0x1] sm:$0xff] %vm8830, %v9653
      %9682 = vst.msk [vmem:[%s8852 + $0x11] sm:$0xff] %vm8830, %v9654
      %9683 = vst.msk [vmem:[%s8852 + $0x21] sm:$0xff] %vm8830, %v9655
      %9684 = vst.msk [vmem:[%s8852 + $0x31] sm:$0xff] %vm8830, %v9656
      %9685 = vst.msk [vmem:[%s8852 + $0x41] sm:$0xff] %vm8830, %v9657
      %9686 = vst.msk [vmem:[%s8852 + $0x51] sm:$0xff] %vm8830, %v9658
      %9687 = vst.msk [vmem:[%s8852 + $0x61] sm:$0xff] %vm8830, %v9659
      %9688 = vst.msk [vmem:[%s8852 + $0x71] sm:$0xff] %vm8830, %v9660
      %v9689 = vld [vmem:[#allocation5] sm:$0xff]
      %v9690 = vld [vmem:[#allocation5 + $0x10] sm:$0xff]
      %v9691 = vld [vmem:[#allocation5 + $0x20] sm:$0xff]
      %v9692 = vld [vmem:[#allocation5 + $0x30] sm:$0xff]
      %v9693 = vld [vmem:[#allocation5 + $0x40] sm:$0xff]
      %v9694 = vld [vmem:[#allocation5 + $0x50] sm:$0xff]
      %v9695 = vld [vmem:[#allocation5 + $0x60] sm:$0xff]
      %v9696 = vld [vmem:[#allocation5 + $0x70] sm:$0xff]
      %v9697 = vld [vmem:[%s11] sm:$0xff]
      %v9698 = vld [vmem:[%s11 + $0x8] sm:$0xff]
      %v9699 = vld [vmem:[#allocation5 + $0x1] sm:$0xff]
      %v9700 = vld [vmem:[#allocation5 + $0x11] sm:$0xff]
      %v9701 = vld [vmem:[#allocation5 + $0x21] sm:$0xff]
      %v9702 = vld [vmem:[#allocation5 + $0x31] sm:$0xff]
      %v9703 = vld [vmem:[#allocation5 + $0x41] sm:$0xff]
      %v9704 = vld [vmem:[#allocation5 + $0x51] sm:$0xff]
      %v9705 = vld [vmem:[#allocation5 + $0x61] sm:$0xff]
      %v9706 = vld [vmem:[#allocation5 + $0x71] sm:$0xff]
      %s9707 = scalar_lea.vmem %s11, 16
      %v9708 = vld [vmem:[%s9707] sm:$0xff]
      %v9709 = vld [vmem:[%s9707 + $0x8] sm:$0xff]
      %v9711 = vsel %vm8830, %v9699, 0
      %v9714 = vsel %vm8830, %v9700, 0
      %v9717 = vsel %vm8830, %v9701, 0
      %v9720 = vsel %vm8830, %v9702, 0
      %v9723 = vsel %vm8830, %v9703, 0
      %v9726 = vsel %vm8830, %v9704, 0
      %v9729 = vsel %vm8830, %v9705, 0
      %v9732 = vsel %vm8830, %v9706, 0
      %9734 = vmatpush.msra.mxu0 0.0
      %9735 = vmatpush.msra.mxu0 0.0
      %9736 = vmatpush.msra.mxu0 0.0
      %9737 = vmatpush.msra.mxu0 0.0
      %9738 = vmatpush.msra.mxu0 0.0
      %9739 = vmatpush.msra.mxu0 0.0
      %9740 = vmatpush.msra.mxu0 0.0
      %9741 = vmatpush.msra.mxu0 0.0
      %9742 = vmatpush.msra.mxu0 0.0
      %9743 = vmatpush.msra.mxu0 0.0
      %9744 = vmatpush.msra.mxu0 0.0
      %9745 = vmatpush.msra.mxu0 0.0
      %9746 = vmatpush.msra.mxu0 0.0
      %9747 = vmatpush.msra.mxu0 0.0
      %9748 = vmatpush.msra.mxu0 %v9709
      %9749 = vmatpush.msra.mxu0 %v9708
      %9750 = vmatmul.f32.gmra.mxu0 %v9711
      %v9751 = vpop.f32.mrf.mxu0
      %v9752 = vadd.f32 0.0, %v9751
      %9753 = vmatmul.f32.gmra.mxu0 %v9714
      %v9754 = vpop.f32.mrf.mxu0
      %v9755 = vadd.f32 0.0, %v9754
      %9756 = vmatmul.f32.gmra.mxu0 %v9717
      %v9757 = vpop.f32.mrf.mxu0
      %v9758 = vadd.f32 0.0, %v9757
      %9759 = vmatmul.f32.gmra.mxu0 %v9720
      %v9760 = vpop.f32.mrf.mxu0
      %v9761 = vadd.f32 0.0, %v9760
      %9762 = vmatmul.f32.gmra.mxu0 %v9723
      %v9763 = vpop.f32.mrf.mxu0
      %v9764 = vadd.f32 0.0, %v9763
      %9765 = vmatmul.f32.gmra.mxu0 %v9726
      %v9766 = vpop.f32.mrf.mxu0
      %v9767 = vadd.f32 0.0, %v9766
      %9768 = vmatmul.f32.gmra.mxu0 %v9729
      %v9769 = vpop.f32.mrf.mxu0
      %v9770 = vadd.f32 0.0, %v9769
      %9771 = vmatmul.f32.gmra.mxu0 %v9732
      %v9772 = vpop.f32.mrf.mxu0
      %v9773 = vadd.f32 0.0, %v9772
      %9774 = vdwg.mxu0
      %v9776 = vsel %vm8830, %v9689, 0
      %v9779 = vsel %vm8830, %v9690, 0
      %v9782 = vsel %vm8830, %v9691, 0
      %v9785 = vsel %vm8830, %v9692, 0
      %v9788 = vsel %vm8830, %v9693, 0
      %v9791 = vsel %vm8830, %v9694, 0
      %v9794 = vsel %vm8830, %v9695, 0
      %v9797 = vsel %vm8830, %v9696, 0
      %9799 = vmatpush.msra.mxu0 0.0
      %9800 = vmatpush.msra.mxu0 0.0
      %9801 = vmatpush.msra.mxu0 0.0
      %9802 = vmatpush.msra.mxu0 0.0
      %9803 = vmatpush.msra.mxu0 0.0
      %9804 = vmatpush.msra.mxu0 0.0
      %9805 = vmatpush.msra.mxu0 0.0
      %9806 = vmatpush.msra.mxu0 0.0
      %9807 = vmatpush.msra.mxu0 0.0
      %9808 = vmatpush.msra.mxu0 0.0
      %9809 = vmatpush.msra.mxu0 0.0
      %9810 = vmatpush.msra.mxu0 0.0
      %9811 = vmatpush.msra.mxu0 0.0
      %9812 = vmatpush.msra.mxu0 0.0
      %9813 = vmatpush.msra.mxu0 %v9698
      %9814 = vmatpush.msra.mxu0 %v9697
      %9815 = vmatmul.f32.gmra.mxu0 %v9776
      %v9816 = vpop.f32.mrf.mxu0
      %v9817 = vadd.f32 %v9752, %v9816
      %9818 = vmatmul.f32.gmra.mxu0 %v9779
      %v9819 = vpop.f32.mrf.mxu0
      %v9820 = vadd.f32 %v9755, %v9819
      %9821 = vmatmul.f32.gmra.mxu0 %v9782
      %v9822 = vpop.f32.mrf.mxu0
      %v9823 = vadd.f32 %v9758, %v9822
      %9824 = vmatmul.f32.gmra.mxu0 %v9785
      %v9825 = vpop.f32.mrf.mxu0
      %v9826 = vadd.f32 %v9761, %v9825
      %9827 = vmatmul.f32.gmra.mxu0 %v9788
      %v9828 = vpop.f32.mrf.mxu0
      %v9829 = vadd.f32 %v9764, %v9828
      %9830 = vmatmul.f32.gmra.mxu0 %v9791
      %v9831 = vpop.f32.mrf.mxu0
      %v9832 = vadd.f32 %v9767, %v9831
      %9833 = vmatmul.f32.gmra.mxu0 %v9794
      %v9834 = vpop.f32.mrf.mxu0
      %v9835 = vadd.f32 %v9770, %v9834
      %9836 = vmatmul.f32.gmra.mxu0 %v9797
      %v9837 = vpop.f32.mrf.mxu0
      %v9838 = vadd.f32 %v9773, %v9837
      %9839 = vdwg.mxu0
      %v9840 = vld [vmem:[#allocation5 + $0x2] sm:$0xff]
      %v9841 = vld [vmem:[#allocation5 + $0x12] sm:$0xff]
      %v9842 = vld [vmem:[#allocation5 + $0x22] sm:$0xff]
      %v9843 = vld [vmem:[#allocation5 + $0x32] sm:$0xff]
      %v9844 = vld [vmem:[#allocation5 + $0x42] sm:$0xff]
      %v9845 = vld [vmem:[#allocation5 + $0x52] sm:$0xff]
      %v9846 = vld [vmem:[#allocation5 + $0x62] sm:$0xff]
      %v9847 = vld [vmem:[#allocation5 + $0x72] sm:$0xff]
      %s9848 = scalar_lea.vmem %s11, 32
      %v9849 = vld [vmem:[%s9848] sm:$0xff]
      %v9850 = vld [vmem:[%s9848 + $0x8] sm:$0xff]
      %v9852 = vsel %vm8830, %v9840, 0
      %v9855 = vsel %vm8830, %v9841, 0
      %v9858 = vsel %vm8830, %v9842, 0
      %v9861 = vsel %vm8830, %v9843, 0
      %v9864 = vsel %vm8830, %v9844, 0
      %v9867 = vsel %vm8830, %v9845, 0
      %v9870 = vsel %vm8830, %v9846, 0
      %v9873 = vsel %vm8830, %v9847, 0
      %9875 = vmatpush.msra.mxu0 0.0
      %9876 = vmatpush.msra.mxu0 0.0
      %9877 = vmatpush.msra.mxu0 0.0
      %9878 = vmatpush.msra.mxu0 0.0
      %9879 = vmatpush.msra.mxu0 0.0
      %9880 = vmatpush.msra.mxu0 0.0
      %9881 = vmatpush.msra.mxu0 0.0
      %9882 = vmatpush.msra.mxu0 0.0
      %9883 = vmatpush.msra.mxu0 0.0
      %9884 = vmatpush.msra.mxu0 0.0
      %9885 = vmatpush.msra.mxu0 0.0
      %9886 = vmatpush.msra.mxu0 0.0
      %9887 = vmatpush.msra.mxu0 0.0
      %9888 = vmatpush.msra.mxu0 0.0
      %9889 = vmatpush.msra.mxu0 %v9850
      %9890 = vmatpush.msra.mxu0 %v9849
      %9891 = vmatmul.f32.gmra.mxu0 %v9852
      %v9892 = vpop.f32.mrf.mxu0
      %v9893 = vadd.f32 0.0, %v9892
      %9894 = vmatmul.f32.gmra.mxu0 %v9855
      %v9895 = vpop.f32.mrf.mxu0
      %v9896 = vadd.f32 0.0, %v9895
      %9897 = vmatmul.f32.gmra.mxu0 %v9858
      %v9898 = vpop.f32.mrf.mxu0
      %v9899 = vadd.f32 0.0, %v9898
      %9900 = vmatmul.f32.gmra.mxu0 %v9861
      %v9901 = vpop.f32.mrf.mxu0
      %v9902 = vadd.f32 0.0, %v9901
      %9903 = vmatmul.f32.gmra.mxu0 %v9864
      %v9904 = vpop.f32.mrf.mxu0
      %v9905 = vadd.f32 0.0, %v9904
      %9906 = vmatmul.f32.gmra.mxu0 %v9867
      %v9907 = vpop.f32.mrf.mxu0
      %v9908 = vadd.f32 0.0, %v9907
      %9909 = vmatmul.f32.gmra.mxu0 %v9870
      %v9910 = vpop.f32.mrf.mxu0
      %v9911 = vadd.f32 0.0, %v9910
      %9912 = vmatmul.f32.gmra.mxu0 %v9873
      %v9913 = vpop.f32.mrf.mxu0
      %v9914 = vadd.f32 0.0, %v9913
      %9915 = vdwg.mxu0
      %v9916 = vadd.f32 %v9817, %v9893
      %v9917 = vadd.f32 %v9820, %v9896
      %v9918 = vadd.f32 %v9823, %v9899
      %v9919 = vadd.f32 %v9826, %v9902
      %v9920 = vadd.f32 %v9829, %v9905
      %v9921 = vadd.f32 %v9832, %v9908
      %v9922 = vadd.f32 %v9835, %v9911
      %v9923 = vadd.f32 %v9838, %v9914
      %v9924 = vld [vmem:[%s8852] sm:$0xff]
      %v9925 = vld [vmem:[%s8852 + $0x10] sm:$0xff]
      %v9926 = vld [vmem:[%s8852 + $0x20] sm:$0xff]
      %v9927 = vld [vmem:[%s8852 + $0x30] sm:$0xff]
      %v9928 = vld [vmem:[%s8852 + $0x40] sm:$0xff]
      %v9929 = vld [vmem:[%s8852 + $0x50] sm:$0xff]
      %v9930 = vld [vmem:[%s8852 + $0x60] sm:$0xff]
      %v9931 = vld [vmem:[%s8852 + $0x70] sm:$0xff]
      %s9932 = scalar_lea.vmem %s11, 48
      %v9933 = vld [vmem:[%s9932] sm:$0xff]
      %v9934 = vld [vmem:[%s9932 + $0x8] sm:$0xff]
      %v9936 = vsel %vm8830, %v9924, 0
      %v9939 = vsel %vm8830, %v9925, 0
      %v9942 = vsel %vm8830, %v9926, 0
      %v9945 = vsel %vm8830, %v9927, 0
      %v9948 = vsel %vm8830, %v9928, 0
      %v9951 = vsel %vm8830, %v9929, 0
      %v9954 = vsel %vm8830, %v9930, 0
      %v9957 = vsel %vm8830, %v9931, 0
      %9959 = vmatpush.msra.mxu0 0.0
      %9960 = vmatpush.msra.mxu0 0.0
      %9961 = vmatpush.msra.mxu0 0.0
      %9962 = vmatpush.msra.mxu0 0.0
      %9963 = vmatpush.msra.mxu0 0.0
      %9964 = vmatpush.msra.mxu0 0.0
      %9965 = vmatpush.msra.mxu0 0.0
      %9966 = vmatpush.msra.mxu0 0.0
      %9967 = vmatpush.msra.mxu0 0.0
      %9968 = vmatpush.msra.mxu0 0.0
      %9969 = vmatpush.msra.mxu0 0.0
      %9970 = vmatpush.msra.mxu0 0.0
      %9971 = vmatpush.msra.mxu0 0.0
      %9972 = vmatpush.msra.mxu0 0.0
      %9973 = vmatpush.msra.mxu0 %v9934
      %9974 = vmatpush.msra.mxu0 %v9933
      %9975 = vmatmul.f32.gmra.mxu0 %v9936
      %v9976 = vpop.f32.mrf.mxu0
      %v9977 = vadd.f32 0.0, %v9976
      %9978 = vmatmul.f32.gmra.mxu0 %v9939
      %v9979 = vpop.f32.mrf.mxu0
      %v9980 = vadd.f32 0.0, %v9979
      %9981 = vmatmul.f32.gmra.mxu0 %v9942
      %v9982 = vpop.f32.mrf.mxu0
      %v9983 = vadd.f32 0.0, %v9982
      %9984 = vmatmul.f32.gmra.mxu0 %v9945
      %v9985 = vpop.f32.mrf.mxu0
      %v9986 = vadd.f32 0.0, %v9985
      %9987 = vmatmul.f32.gmra.mxu0 %v9948
      %v9988 = vpop.f32.mrf.mxu0
      %v9989 = vadd.f32 0.0, %v9988
      %9990 = vmatmul.f32.gmra.mxu0 %v9951
      %v9991 = vpop.f32.mrf.mxu0
      %v9992 = vadd.f32 0.0, %v9991
      %9993 = vmatmul.f32.gmra.mxu0 %v9954
      %v9994 = vpop.f32.mrf.mxu0
      %v9995 = vadd.f32 0.0, %v9994
      %9996 = vmatmul.f32.gmra.mxu0 %v9957
      %v9997 = vpop.f32.mrf.mxu0
      %v9998 = vadd.f32 0.0, %v9997
      %9999 = vdwg.mxu0
      %v10000 = vadd.f32 %v9916, %v9977
      %v10001 = vadd.f32 %v9917, %v9980
      %v10002 = vadd.f32 %v9918, %v9983
      %v10003 = vadd.f32 %v9919, %v9986
      %v10004 = vadd.f32 %v9920, %v9989
      %v10005 = vadd.f32 %v9921, %v9992
      %v10006 = vadd.f32 %v9922, %v9995
      %v10007 = vadd.f32 %v9923, %v9998
      %v10008 = vld [vmem:[%s8852 + $0x1] sm:$0xff]
      %v10009 = vld [vmem:[%s8852 + $0x11] sm:$0xff]
      %v10010 = vld [vmem:[%s8852 + $0x21] sm:$0xff]
      %v10011 = vld [vmem:[%s8852 + $0x31] sm:$0xff]
      %v10012 = vld [vmem:[%s8852 + $0x41] sm:$0xff]
      %v10013 = vld [vmem:[%s8852 + $0x51] sm:$0xff]
      %v10014 = vld [vmem:[%s8852 + $0x61] sm:$0xff]
      %v10015 = vld [vmem:[%s8852 + $0x71] sm:$0xff]
      %s10016 = scalar_lea.vmem %s11, 64
      %v10017 = vld [vmem:[%s10016] sm:$0xff]
      %v10018 = vld [vmem:[%s10016 + $0x8] sm:$0xff]
      %v10020 = vsel %vm8830, %v10008, 0
      %v10023 = vsel %vm8830, %v10009, 0
      %v10026 = vsel %vm8830, %v10010, 0
      %v10029 = vsel %vm8830, %v10011, 0
      %v10032 = vsel %vm8830, %v10012, 0
      %v10035 = vsel %vm8830, %v10013, 0
      %v10038 = vsel %vm8830, %v10014, 0
      %v10041 = vsel %vm8830, %v10015, 0
      %10043 = vmatpush.msra.mxu0 0.0
      %10044 = vmatpush.msra.mxu0 0.0
      %10045 = vmatpush.msra.mxu0 0.0
      %10046 = vmatpush.msra.mxu0 0.0
      %10047 = vmatpush.msra.mxu0 0.0
      %10048 = vmatpush.msra.mxu0 0.0
      %10049 = vmatpush.msra.mxu0 0.0
      %10050 = vmatpush.msra.mxu0 0.0
      %10051 = vmatpush.msra.mxu0 0.0
      %10052 = vmatpush.msra.mxu0 0.0
      %10053 = vmatpush.msra.mxu0 0.0
      %10054 = vmatpush.msra.mxu0 0.0
      %10055 = vmatpush.msra.mxu0 0.0
      %10056 = vmatpush.msra.mxu0 0.0
      %10057 = vmatpush.msra.mxu0 %v10018
      %10058 = vmatpush.msra.mxu0 %v10017
      %10059 = vmatmul.f32.gmra.mxu0 %v10020
      %v10060 = vpop.f32.mrf.mxu0
      %v10061 = vadd.f32 0.0, %v10060
      %10062 = vmatmul.f32.gmra.mxu0 %v10023
      %v10063 = vpop.f32.mrf.mxu0
      %v10064 = vadd.f32 0.0, %v10063
      %10065 = vmatmul.f32.gmra.mxu0 %v10026
      %v10066 = vpop.f32.mrf.mxu0
      %v10067 = vadd.f32 0.0, %v10066
      %10068 = vmatmul.f32.gmra.mxu0 %v10029
      %v10069 = vpop.f32.mrf.mxu0
      %v10070 = vadd.f32 0.0, %v10069
      %10071 = vmatmul.f32.gmra.mxu0 %v10032
      %v10072 = vpop.f32.mrf.mxu0
      %v10073 = vadd.f32 0.0, %v10072
      %10074 = vmatmul.f32.gmra.mxu0 %v10035
      %v10075 = vpop.f32.mrf.mxu0
      %v10076 = vadd.f32 0.0, %v10075
      %10077 = vmatmul.f32.gmra.mxu0 %v10038
      %v10078 = vpop.f32.mrf.mxu0
      %v10079 = vadd.f32 0.0, %v10078
      %10080 = vmatmul.f32.gmra.mxu0 %v10041
      %v10081 = vpop.f32.mrf.mxu0
      %v10082 = vadd.f32 0.0, %v10081
      %10083 = vdwg.mxu0
      %v10084 = vadd.f32 %v10000, %v10061
      %v10085 = vadd.f32 %v10001, %v10064
      %v10086 = vadd.f32 %v10002, %v10067
      %v10087 = vadd.f32 %v10003, %v10070
      %v10088 = vadd.f32 %v10004, %v10073
      %v10089 = vadd.f32 %v10005, %v10076
      %v10090 = vadd.f32 %v10006, %v10079
      %v10091 = vadd.f32 %v10007, %v10082
      %v10092 = vld [vmem:[%s8852 + $0x2] sm:$0xff]
      %v10093 = vld [vmem:[%s8852 + $0x12] sm:$0xff]
      %v10094 = vld [vmem:[%s8852 + $0x22] sm:$0xff]
      %v10095 = vld [vmem:[%s8852 + $0x32] sm:$0xff]
      %v10096 = vld [vmem:[%s8852 + $0x42] sm:$0xff]
      %v10097 = vld [vmem:[%s8852 + $0x52] sm:$0xff]
      %v10098 = vld [vmem:[%s8852 + $0x62] sm:$0xff]
      %v10099 = vld [vmem:[%s8852 + $0x72] sm:$0xff]
      %s10100 = scalar_lea.vmem %s11, 80
      %v10101 = vld [vmem:[%s10100] sm:$0xff]
      %v10102 = vld [vmem:[%s10100 + $0x8] sm:$0xff]
      %v10104 = vsel %vm8830, %v10092, 0
      %v10107 = vsel %vm8830, %v10093, 0
      %v10110 = vsel %vm8830, %v10094, 0
      %v10113 = vsel %vm8830, %v10095, 0
      %v10116 = vsel %vm8830, %v10096, 0
      %v10119 = vsel %vm8830, %v10097, 0
      %v10122 = vsel %vm8830, %v10098, 0
      %v10125 = vsel %vm8830, %v10099, 0
      %10127 = vmatpush.msra.mxu0 0.0
      %10128 = vmatpush.msra.mxu0 0.0
      %10129 = vmatpush.msra.mxu0 0.0
      %10130 = vmatpush.msra.mxu0 0.0
      %10131 = vmatpush.msra.mxu0 0.0
      %10132 = vmatpush.msra.mxu0 0.0
      %10133 = vmatpush.msra.mxu0 0.0
      %10134 = vmatpush.msra.mxu0 0.0
      %10135 = vmatpush.msra.mxu0 0.0
      %10136 = vmatpush.msra.mxu0 0.0
      %10137 = vmatpush.msra.mxu0 0.0
      %10138 = vmatpush.msra.mxu0 0.0
      %10139 = vmatpush.msra.mxu0 0.0
      %10140 = vmatpush.msra.mxu0 0.0
      %10141 = vmatpush.msra.mxu0 %v10102
      %10142 = vmatpush.msra.mxu0 %v10101
      %10143 = vmatmul.f32.gmra.mxu0 %v10104
      %v10144 = vpop.f32.mrf.mxu0
      %v10145 = vadd.f32 0.0, %v10144
      %10146 = vmatmul.f32.gmra.mxu0 %v10107
      %v10147 = vpop.f32.mrf.mxu0
      %v10148 = vadd.f32 0.0, %v10147
      %10149 = vmatmul.f32.gmra.mxu0 %v10110
      %v10150 = vpop.f32.mrf.mxu0
      %v10151 = vadd.f32 0.0, %v10150
      %10152 = vmatmul.f32.gmra.mxu0 %v10113
      %v10153 = vpop.f32.mrf.mxu0
      %v10154 = vadd.f32 0.0, %v10153
      %10155 = vmatmul.f32.gmra.mxu0 %v10116
      %v10156 = vpop.f32.mrf.mxu0
      %v10157 = vadd.f32 0.0, %v10156
      %10158 = vmatmul.f32.gmra.mxu0 %v10119
      %v10159 = vpop.f32.mrf.mxu0
      %v10160 = vadd.f32 0.0, %v10159
      %10161 = vmatmul.f32.gmra.mxu0 %v10122
      %v10162 = vpop.f32.mrf.mxu0
      %v10163 = vadd.f32 0.0, %v10162
      %10164 = vmatmul.f32.gmra.mxu0 %v10125
      %v10165 = vpop.f32.mrf.mxu0
      %v10166 = vadd.f32 0.0, %v10165
      %10167 = vdwg.mxu0
      %v10168 = vadd.f32 %v10084, %v10145
      %v10169 = vadd.f32 %v10085, %v10148
      %v10170 = vadd.f32 %v10086, %v10151
      %v10171 = vadd.f32 %v10087, %v10154
      %v10172 = vadd.f32 %v10088, %v10157
      %v10173 = vadd.f32 %v10089, %v10160
      %v10174 = vadd.f32 %v10090, %v10163
      %v10175 = vadd.f32 %v10091, %v10166
      %v10176 = vld [vmem:[%s9348] sm:$0xff]
      %v10177 = vld [vmem:[%s9348 + $0x10] sm:$0xff]
      %v10178 = vld [vmem:[%s9348 + $0x20] sm:$0xff]
      %v10179 = vld [vmem:[%s9348 + $0x30] sm:$0xff]
      %v10180 = vld [vmem:[%s9348 + $0x40] sm:$0xff]
      %v10181 = vld [vmem:[%s9348 + $0x50] sm:$0xff]
      %v10182 = vld [vmem:[%s9348 + $0x60] sm:$0xff]
      %v10183 = vld [vmem:[%s9348 + $0x70] sm:$0xff]
      %s10184 = scalar_lea.vmem %s11, 96
      %v10185 = vld [vmem:[%s10184] sm:$0xff]
      %v10186 = vld [vmem:[%s10184 + $0x8] sm:$0xff]
      %v10188 = vsel %vm8830, %v10176, 0
      %v10191 = vsel %vm8830, %v10177, 0
      %v10194 = vsel %vm8830, %v10178, 0
      %v10197 = vsel %vm8830, %v10179, 0
      %v10200 = vsel %vm8830, %v10180, 0
      %v10203 = vsel %vm8830, %v10181, 0
      %v10206 = vsel %vm8830, %v10182, 0
      %v10209 = vsel %vm8830, %v10183, 0
      %10211 = vmatpush.msra.mxu0 0.0
      %10212 = vmatpush.msra.mxu0 0.0
      %10213 = vmatpush.msra.mxu0 0.0
      %10214 = vmatpush.msra.mxu0 0.0
      %10215 = vmatpush.msra.mxu0 0.0
      %10216 = vmatpush.msra.mxu0 0.0
      %10217 = vmatpush.msra.mxu0 0.0
      %10218 = vmatpush.msra.mxu0 0.0
      %10219 = vmatpush.msra.mxu0 0.0
      %10220 = vmatpush.msra.mxu0 0.0
      %10221 = vmatpush.msra.mxu0 0.0
      %10222 = vmatpush.msra.mxu0 0.0
      %10223 = vmatpush.msra.mxu0 0.0
      %10224 = vmatpush.msra.mxu0 0.0
      %10225 = vmatpush.msra.mxu0 %v10186
      %10226 = vmatpush.msra.mxu0 %v10185
      %10227 = vmatmul.f32.gmra.mxu0 %v10188
      %v10228 = vpop.f32.mrf.mxu0
      %v10229 = vadd.f32 0.0, %v10228
      %10230 = vmatmul.f32.gmra.mxu0 %v10191
      %v10231 = vpop.f32.mrf.mxu0
      %v10232 = vadd.f32 0.0, %v10231
      %10233 = vmatmul.f32.gmra.mxu0 %v10194
      %v10234 = vpop.f32.mrf.mxu0
      %v10235 = vadd.f32 0.0, %v10234
      %10236 = vmatmul.f32.gmra.mxu0 %v10197
      %v10237 = vpop.f32.mrf.mxu0
      %v10238 = vadd.f32 0.0, %v10237
      %10239 = vmatmul.f32.gmra.mxu0 %v10200
      %v10240 = vpop.f32.mrf.mxu0
      %v10241 = vadd.f32 0.0, %v10240
      %10242 = vmatmul.f32.gmra.mxu0 %v10203
      %v10243 = vpop.f32.mrf.mxu0
      %v10244 = vadd.f32 0.0, %v10243
      %10245 = vmatmul.f32.gmra.mxu0 %v10206
      %v10246 = vpop.f32.mrf.mxu0
      %v10247 = vadd.f32 0.0, %v10246
      %10248 = vmatmul.f32.gmra.mxu0 %v10209
      %v10249 = vpop.f32.mrf.mxu0
      %v10250 = vadd.f32 0.0, %v10249
      %10251 = vdwg.mxu0
      %v10252 = vadd.f32 %v10168, %v10229
      %v10253 = vadd.f32 %v10169, %v10232
      %v10254 = vadd.f32 %v10170, %v10235
      %v10255 = vadd.f32 %v10171, %v10238
      %v10256 = vadd.f32 %v10172, %v10241
      %v10257 = vadd.f32 %v10173, %v10244
      %v10258 = vadd.f32 %v10174, %v10247
      %v10259 = vadd.f32 %v10175, %v10250
      %v10260 = vld [vmem:[%s9348 + $0x1] sm:$0xff]
      %v10261 = vld [vmem:[%s9348 + $0x11] sm:$0xff]
      %v10262 = vld [vmem:[%s9348 + $0x21] sm:$0xff]
      %v10263 = vld [vmem:[%s9348 + $0x31] sm:$0xff]
      %v10264 = vld [vmem:[%s9348 + $0x41] sm:$0xff]
      %v10265 = vld [vmem:[%s9348 + $0x51] sm:$0xff]
      %v10266 = vld [vmem:[%s9348 + $0x61] sm:$0xff]
      %v10267 = vld [vmem:[%s9348 + $0x71] sm:$0xff]
      %s10268 = scalar_lea.vmem %s11, 112
      %v10269 = vld [vmem:[%s10268] sm:$0xff]
      %v10270 = vld [vmem:[%s10268 + $0x8] sm:$0xff]
      %v10272 = vsel %vm8830, %v10260, 0
      %v10275 = vsel %vm8830, %v10261, 0
      %v10278 = vsel %vm8830, %v10262, 0
      %v10281 = vsel %vm8830, %v10263, 0
      %v10284 = vsel %vm8830, %v10264, 0
      %v10287 = vsel %vm8830, %v10265, 0
      %v10290 = vsel %vm8830, %v10266, 0
      %v10293 = vsel %vm8830, %v10267, 0
      %10295 = vmatpush.msra.mxu0 0.0
      %10296 = vmatpush.msra.mxu0 0.0
      %10297 = vmatpush.msra.mxu0 0.0
      %10298 = vmatpush.msra.mxu0 0.0
      %10299 = vmatpush.msra.mxu0 0.0
      %10300 = vmatpush.msra.mxu0 0.0
      %10301 = vmatpush.msra.mxu0 0.0
      %10302 = vmatpush.msra.mxu0 0.0
      %10303 = vmatpush.msra.mxu0 0.0
      %10304 = vmatpush.msra.mxu0 0.0
      %10305 = vmatpush.msra.mxu0 0.0
      %10306 = vmatpush.msra.mxu0 0.0
      %10307 = vmatpush.msra.mxu0 0.0
      %10308 = vmatpush.msra.mxu0 0.0
      %10309 = vmatpush.msra.mxu0 %v10270
      %10310 = vmatpush.msra.mxu0 %v10269
      %10311 = vmatmul.f32.gmra.mxu0 %v10272
      %v10312 = vpop.f32.mrf.mxu0
      %v10313 = vadd.f32 0.0, %v10312
      %10314 = vmatmul.f32.gmra.mxu0 %v10275
      %v10315 = vpop.f32.mrf.mxu0
      %v10316 = vadd.f32 0.0, %v10315
      %10317 = vmatmul.f32.gmra.mxu0 %v10278
      %v10318 = vpop.f32.mrf.mxu0
      %v10319 = vadd.f32 0.0, %v10318
      %10320 = vmatmul.f32.gmra.mxu0 %v10281
      %v10321 = vpop.f32.mrf.mxu0
      %v10322 = vadd.f32 0.0, %v10321
      %10323 = vmatmul.f32.gmra.mxu0 %v10284
      %v10324 = vpop.f32.mrf.mxu0
      %v10325 = vadd.f32 0.0, %v10324
      %10326 = vmatmul.f32.gmra.mxu0 %v10287
      %v10327 = vpop.f32.mrf.mxu0
      %v10328 = vadd.f32 0.0, %v10327
      %10329 = vmatmul.f32.gmra.mxu0 %v10290
      %v10330 = vpop.f32.mrf.mxu0
      %v10331 = vadd.f32 0.0, %v10330
      %10332 = vmatmul.f32.gmra.mxu0 %v10293
      %v10333 = vpop.f32.mrf.mxu0
      %v10334 = vadd.f32 0.0, %v10333
      %10335 = vdwg.mxu0
      %v10336 = vadd.f32 %v10252, %v10313
      %v10337 = vadd.f32 %v10253, %v10316
      %v10338 = vadd.f32 %v10254, %v10319
      %v10339 = vadd.f32 %v10255, %v10322
      %v10340 = vadd.f32 %v10256, %v10325
      %v10341 = vadd.f32 %v10257, %v10328
      %v10342 = vadd.f32 %v10258, %v10331
      %v10343 = vadd.f32 %v10259, %v10334
      %v10344 = vld [vmem:[%s9348 + $0x2] sm:$0xff]
      %v10345 = vld [vmem:[%s9348 + $0x12] sm:$0xff]
      %v10346 = vld [vmem:[%s9348 + $0x22] sm:$0xff]
      %v10347 = vld [vmem:[%s9348 + $0x32] sm:$0xff]
      %v10348 = vld [vmem:[%s9348 + $0x42] sm:$0xff]
      %v10349 = vld [vmem:[%s9348 + $0x52] sm:$0xff]
      %v10350 = vld [vmem:[%s9348 + $0x62] sm:$0xff]
      %v10351 = vld [vmem:[%s9348 + $0x72] sm:$0xff]
      %s10352 = scalar_lea.vmem %s11, 128
      %v10353 = vld [vmem:[%s10352] sm:$0xff]
      %v10354 = vld [vmem:[%s10352 + $0x8] sm:$0xff]
      %v10356 = vsel %vm8830, %v10344, 0
      %v10359 = vsel %vm8830, %v10345, 0
      %v10362 = vsel %vm8830, %v10346, 0
      %v10365 = vsel %vm8830, %v10347, 0
      %v10368 = vsel %vm8830, %v10348, 0
      %v10371 = vsel %vm8830, %v10349, 0
      %v10374 = vsel %vm8830, %v10350, 0
      %v10377 = vsel %vm8830, %v10351, 0
      %10379 = vmatpush.msra.mxu0 0.0
      %10380 = vmatpush.msra.mxu0 0.0
      %10381 = vmatpush.msra.mxu0 0.0
      %10382 = vmatpush.msra.mxu0 0.0
      %10383 = vmatpush.msra.mxu0 0.0
      %10384 = vmatpush.msra.mxu0 0.0
      %10385 = vmatpush.msra.mxu0 0.0
      %10386 = vmatpush.msra.mxu0 0.0
      %10387 = vmatpush.msra.mxu0 0.0
      %10388 = vmatpush.msra.mxu0 0.0
      %10389 = vmatpush.msra.mxu0 0.0
      %10390 = vmatpush.msra.mxu0 0.0
      %10391 = vmatpush.msra.mxu0 0.0
      %10392 = vmatpush.msra.mxu0 0.0
      %10393 = vmatpush.msra.mxu0 %v10354
      %10394 = vmatpush.msra.mxu0 %v10353
      %10395 = vmatmul.f32.gmra.mxu0 %v10356
      %v10396 = vpop.f32.mrf.mxu0
      %v10397 = vadd.f32 0.0, %v10396
      %10398 = vmatmul.f32.gmra.mxu0 %v10359
      %v10399 = vpop.f32.mrf.mxu0
      %v10400 = vadd.f32 0.0, %v10399
      %10401 = vmatmul.f32.gmra.mxu0 %v10362
      %v10402 = vpop.f32.mrf.mxu0
      %v10403 = vadd.f32 0.0, %v10402
      %10404 = vmatmul.f32.gmra.mxu0 %v10365
      %v10405 = vpop.f32.mrf.mxu0
      %v10406 = vadd.f32 0.0, %v10405
      %10407 = vmatmul.f32.gmra.mxu0 %v10368
      %v10408 = vpop.f32.mrf.mxu0
      %v10409 = vadd.f32 0.0, %v10408
      %10410 = vmatmul.f32.gmra.mxu0 %v10371
      %v10411 = vpop.f32.mrf.mxu0
      %v10412 = vadd.f32 0.0, %v10411
      %10413 = vmatmul.f32.gmra.mxu0 %v10374
      %v10414 = vpop.f32.mrf.mxu0
      %v10415 = vadd.f32 0.0, %v10414
      %10416 = vmatmul.f32.gmra.mxu0 %v10377
      %v10417 = vpop.f32.mrf.mxu0
      %v10418 = vadd.f32 0.0, %v10417
      %10419 = vdwg.mxu0
      %v10420 = vadd.f32 %v10336, %v10397
      %v10421 = vadd.f32 %v10337, %v10400
      %v10422 = vadd.f32 %v10338, %v10403
      %v10423 = vadd.f32 %v10339, %v10406
      %v10424 = vadd.f32 %v10340, %v10409
      %v10425 = vadd.f32 %v10341, %v10412
      %v10426 = vadd.f32 %v10342, %v10415
      %v10427 = vadd.f32 %v10343, %v10418
      %v10428 = vld [vmem:[%s12] sm:$0x1]
      %v10430 = vperm.slane %v10428, 0
      %v10432 = vadd.f32 %v10420, %v10430
      %v10433 = vadd.f32 %v10421, %v10430
      %v10434 = vadd.f32 %v10422, %v10430
      %v10435 = vadd.f32 %v10423, %v10430
      %v10436 = vadd.f32 %v10424, %v10430
      %v10437 = vadd.f32 %v10425, %v10430
      %v10438 = vadd.f32 %v10426, %v10430
      %v10439 = vadd.f32 %v10427, %v10430
      %vm10440 = vcmp.gt.f32.partialorder %v10432, 0.0
      %vm10441 = vcmp.gt.f32.partialorder %v10433, 0.0
      %vm10442 = vcmp.gt.f32.partialorder %v10434, 0.0
      %vm10443 = vcmp.gt.f32.partialorder %v10435, 0.0
      %vm10444 = vcmp.gt.f32.partialorder %v10436, 0.0
      %vm10445 = vcmp.gt.f32.partialorder %v10437, 0.0
      %vm10446 = vcmp.gt.f32.partialorder %v10438, 0.0
      %vm10447 = vcmp.gt.f32.partialorder %v10439, 0.0
      %v10448 = vmin.f32 %v10432, 0.0
      %v10449 = vmin.f32 %v10433, 0.0
      %v10450 = vmin.f32 %v10434, 0.0
      %v10451 = vmin.f32 %v10435, 0.0
      %v10452 = vmin.f32 %v10436, 0.0
      %v10453 = vmin.f32 %v10437, 0.0
      %v10454 = vmin.f32 %v10438, 0.0
      %v10455 = vmin.f32 %v10439, 0.0
      %v10456 = vmul.f32 %v10448, 1.442695
      %v10457 = vpow.pop %v10456
      %v10458 = vmul.f32 %v10449, 1.442695
      %v10459 = vpow.pop %v10458
      %v10460 = vmul.f32 %v10450, 1.442695
      %v10461 = vpow.pop %v10460
      %v10462 = vmul.f32 %v10451, 1.442695
      %v10463 = vpow.pop %v10462
      %v10464 = vmul.f32 %v10452, 1.442695
      %v10465 = vpow.pop %v10464
      %v10466 = vmul.f32 %v10453, 1.442695
      %v10467 = vpow.pop %v10466
      %v10468 = vmul.f32 %v10454, 1.442695
      %v10469 = vpow.pop %v10468
      %v10470 = vmul.f32 %v10455, 1.442695
      %v10471 = vpow.pop %v10470
      %v10472 = vsub.f32 %v10457, 1.0
      %v10473 = vsub.f32 %v10459, 1.0
      %v10474 = vsub.f32 %v10461, 1.0
      %v10475 = vsub.f32 %v10463, 1.0
      %v10476 = vsub.f32 %v10465, 1.0
      %v10477 = vsub.f32 %v10467, 1.0
      %v10478 = vsub.f32 %v10469, 1.0
      %v10479 = vsub.f32 %v10471, 1.0
      %v10480 = vsel %vm10440, %v10432, %v10472
      %v10481 = vsel %vm10441, %v10433, %v10473
      %v10482 = vsel %vm10442, %v10434, %v10474
      %v10483 = vsel %vm10443, %v10435, %v10475
      %v10484 = vsel %vm10444, %v10436, %v10476
      %v10485 = vsel %vm10445, %v10437, %v10477
      %v10486 = vsel %vm10446, %v10438, %v10478
      %v10487 = vsel %vm10447, %v10439, %v10479
      %10488 = vst.msk [vmem:[%s440] sm:$0xff] %vm8830, %v10480
      %10489 = vst.msk [vmem:[%s440 + $0x8] sm:$0xff] %vm8830, %v10481
      %10490 = vst.msk [vmem:[%s440 + $0x10] sm:$0xff] %vm8830, %v10482
      %10491 = vst.msk [vmem:[%s440 + $0x18] sm:$0xff] %vm8830, %v10483
      %10492 = vst.msk [vmem:[%s440 + $0x20] sm:$0xff] %vm8830, %v10484
      %10493 = vst.msk [vmem:[%s440 + $0x28] sm:$0xff] %vm8830, %v10485
      %10494 = vst.msk [vmem:[%s440 + $0x30] sm:$0xff] %vm8830, %v10486
      %10495 = vst.msk [vmem:[%s440 + $0x38] sm:$0xff] %vm8830, %v10487
      %p10496 = scmp.lt.s32.totalorder %s24, 1
      %s10497 = scalar_select %p10496, %s24, 1
      %s10498 = smul.addr %s10497, 8
      %s10499 = smul.addr %s10498, 8
      %s10500 = scalar_lea.vmem %s13, %s10499
      // Predicated region
      $region73: #{encoder_forward.2} parent=71 // pred_check
        %p10501 = pneg %p320
      $region74: #{encoder_forward.2} parent=71 // pred_check_branch
        %10503 = sbr.rel (%p10501) target = $region76
      $region75: #{encoder_forward.2} parent=71 // pred_region
        _
      $region76: #{encoder_forward.2} parent=71 // pred_fallthru
        _
    $region72: #{encoder_forward.2} parent=5 // pred_fallthru
      _
    %p10504 = scmp.le.s32.totalorder 2, %s19
    // Predicated region
    $region77: #{encoder_forward.2} parent=5 // pred_check
      %p10505 = pneg %p10504
    $region78: #{encoder_forward.2} parent=5 // pred_check_branch
      %10507 = sbr.rel (%p10505) target = $region80
    $region79: #{encoder_forward.2} parent=5 // pred_region
      %s10508 = ssub.s32 %s19, 2
      // Predicated region
      $region81: #{encoder_forward.2} parent=79 // pred_check
        %p10509 = pneg %p326
      $region82: #{encoder_forward.2} parent=79 // pred_check_branch
        %10511 = sbr.rel (%p10509) target = $region84
      $region83: #{encoder_forward.2} parent=79 // pred_region
        %p10512 = scmp.lt.s32.totalorder %s25, 1
        %s10513 = scalar_select %p10512, %s25, 1
        %s10514 = smul.addr %s10513, 8
        %s10515 = smul.addr %s10514, 8
        %s10516 = scalar_lea.vmem %s13, %s10515
      $region84: #{encoder_forward.2} parent=79 // pred_fallthru
        _
    $region80: #{encoder_forward.2} parent=5 // pred_fallthru
      _
  $region6: #{encoder_forward.2} parent=0 // loop_footer
    %s23 = sadd.s32 1, %s19
  $region7: #{encoder_forward.2} parent=0 // loop_footer_branch
    %18 = sbr.rel target = $region3
  $region8: #{encoder_forward.2} parent=0 // loop_exit
    _

</llo_original>
